<compile_context>
chip_gen: v7x
topology: tpu7x:2x2x1
jax: 0.10.0
libtpu: 0.0.40
codegen_flags: <defaults>
</compile_context>

<pallas_src>
import jax
import jax.numpy as jnp
from jax.experimental import pallas as pl
from jax.experimental.pallas import tpu as pltpu

NUM_CLASSES = 10
NUM_FRAMES = 10
C_IN, H, W = 3, 64, 64
C_MID = 16
KH = KW = 3
STRIDE = 2
OH = OW = 32
PATCH = C_IN * KH * KW          # 27
NPOS = NUM_FRAMES * OH * OW     # 10240 conv-output positions per clip


# ---------------------------------------------------------------------------
# Pallas kernel: whole-clip CNN (conv -> ReLU -> global mean -> linear head)
# ---------------------------------------------------------------------------
def _video_cnn_kernel(patch_ref, w1_ref, b1_ref, w2_ref, b2_ref, out_ref):
    p = patch_ref[0]                                                      # (27, 10240)

    # conv-as-matmul on the MXU; bias add + ReLU on the VPU
    h = jnp.dot(w1_ref[...], p, preferred_element_type=jnp.float32)      # (16, 10240)
    h = jnp.maximum(h + b1_ref[...], 0.0)

    # global mean over frames*positions as an MXU reduction (ones-vector matmul);
    # the 1/(NUM_FRAMES*OH*OW) scale is folded into w2 by the wrapper.
    ones_col = jnp.ones((NPOS, 1), dtype=jnp.float32)
    feat_sum = jnp.dot(h, ones_col, preferred_element_type=jnp.float32)  # (16, 1)

    # classifier head; single store of this batch's output block
    out_ref[0] = (jnp.dot(w2_ref[...], feat_sum,
                          preferred_element_type=jnp.float32)
                  + b2_ref[...])                                          # (10, 1)


# ---------------------------------------------------------------------------
# Wrapper glue: channel-major im2col + weight prep + pallas_call
# ---------------------------------------------------------------------------
def _im2col_3x3_s2_cmajor(x):
    """(B, 3, F, 64, 64) -> (B, 27, F*OH*OW); patch axis ordered (c, ky, kx)."""
    B = x.shape[0]
    xp = jnp.pad(x, ((0, 0), (0, 0), (0, 0), (1, 1), (1, 1)))       # (B, 3, F, 66, 66)
    taps = []
    for dy in range(KH):
        for dx in range(KW):
            taps.append(xp[:, :, :, dy:dy + H:STRIDE, dx:dx + W:STRIDE])  # (B,3,F,32,32)
    pat = jnp.stack(taps, axis=2)                                   # (B, 3, 9, F, 32, 32)
    return pat.reshape(B, PATCH, NPOS)                              # (B, 27, 10240)


def aggregate_dummy_net(x, conv_w, conv_b, fc_w, fc_b):
    """x: (B, 3, 10, 64, 64) float32 (PyTorch NCTHW). Returns (B, num_classes)."""
    B = x.shape[0]
    assert x.shape[1:] == (C_IN, NUM_FRAMES, H, W), f"bad input shape {x.shape}"

    patches = _im2col_3x3_s2_cmajor(x)                 # (B, 27, 10240)

    # Weights in matmul-ready (PyTorch-native) orientation.
    w1 = conv_w.reshape(C_MID, PATCH)                  # (16, 27)  OIHW flattened (c,kh,kw)
    b1 = conv_b.reshape(C_MID, 1)                      # (16, 1)
    w2 = fc_w * (1.0 / float(NPOS))                    # (10, 16)  pooling scale folded in
    b2 = fc_b.reshape(NUM_CLASSES, 1)                  # (10, 1)

    out = pl.pallas_call(
        _video_cnn_kernel,
        out_shape=jax.ShapeDtypeStruct((B, NUM_CLASSES, 1), jnp.float32),
        grid_spec=pltpu.PrefetchScalarGridSpec(
            num_scalar_prefetch=0,
            grid=(B,),                                  # one step per batch element
            in_specs=[
                pl.BlockSpec((1, PATCH, NPOS), lambda b: (b, 0, 0)),
                pl.BlockSpec((C_MID, PATCH), lambda b: (0, 0)),
                pl.BlockSpec((C_MID, 1), lambda b: (0, 0)),
                pl.BlockSpec((NUM_CLASSES, C_MID), lambda b: (0, 0)),
                pl.BlockSpec((NUM_CLASSES, 1), lambda b: (0, 0)),
            ],
            out_specs=pl.BlockSpec((1, NUM_CLASSES, 1), lambda b: (b, 0, 0)),
        ),
        compiler_params=pltpu.CompilerParams(
            dimension_semantics=("parallel",)),         # v7x: batch split across both TCs
    )(patches, w1, b1, w2, b2)

    return out.reshape(B, NUM_CLASSES)


# ---------------------------------------------------------------------------
# Pure-JAX reference (same DummyCNN definition) for a correctness check
# ---------------------------------------------------------------------------
def reference(x, conv_w, conv_b, fc_w, fc_b):
    B = x.shape[0]
    xr = jnp.transpose(x, (0, 2, 1, 3, 4)).reshape(B * NUM_FRAMES, C_IN, H, W)
    y = jax.lax.conv_general_dilated(
        xr, conv_w, window_strides=(STRIDE, STRIDE), padding=((1, 1), (1, 1)),
        dimension_numbers=("NCHW", "OIHW", "NCHW"))
    y = jnp.maximum(y + conv_b[None, :, None, None], 0.0)
    feat = y.mean(axis=(2, 3))                        # (B*F, 16)
    logits = feat @ fc_w.T + fc_b                     # (B*F, 10)
    return logits.reshape(B, NUM_FRAMES, NUM_CLASSES).mean(axis=1)


if __name__ == "__main__":
    key = jax.random.PRNGKey(0)
    kx, kw1, kb1, kw2, kb2 = jax.random.split(key, 5)

    batch = 2
    x = jax.random.normal(kx, (batch, C_IN, NUM_FRAMES, H, W), dtype=jnp.float32)

    # deterministic synthetic parameters (PyTorch-style shapes)
    conv_w = 0.1 * jax.random.normal(kw1, (C_MID, C_IN, KH, KW), dtype=jnp.float32)  # OIHW
    conv_b = 0.1 * jax.random.normal(kb1, (C_MID,), dtype=jnp.float32)
    fc_w = 0.1 * jax.random.normal(kw2, (NUM_CLASSES, C_MID), dtype=jnp.float32)     # (out, in)
    fc_b = 0.1 * jax.random.normal(kb2, (NUM_CLASSES,), dtype=jnp.float32)

    out = jax.block_until_ready(aggregate_dummy_net(x, conv_w, conv_b, fc_w, fc_b))
    ref = jax.block_until_ready(reference(x, conv_w, conv_b, fc_w, fc_b))

    assert out.shape == (batch, NUM_CLASSES)
    assert jnp.allclose(out, ref, atol=2e-4, rtol=2e-4), (out, ref)

    print("KERNEL_OK")
</pallas_src>

<mosaic_0001>
module attributes {stable_mosaic.version = 11 : i64} {
  func.func @_video_cnn_kernel(%arg0: i32, %arg1: memref<1x27x10240xf32, #tpu.memory_space<vmem>>, %arg2: memref<16x27xf32, #tpu.memory_space<vmem>>, %arg3: memref<16x1xf32, #tpu.memory_space<vmem>>, %arg4: memref<10x16xf32, #tpu.memory_space<vmem>>, %arg5: memref<10x1xf32, #tpu.memory_space<vmem>>, %arg6: memref<1x10x1xf32, #tpu.memory_space<vmem>>) attributes {dimension_semantics = [#tpu.dimension_semantics<parallel>], iteration_bounds = array<i64: 2>, scalar_prefetch = 0 : i64, scratch_operands = 0 : i64, tpu.core_type = #tpu.core_type<tc>, window_params = [{transform_indices = @transform_0, window_bounds = array<i64: 1, 27, 10240>}, {pipeline_mode = #tpu.pipeline_mode<synchronous>, transform_indices = @transform_1, window_bounds = array<i64: 16, 27>}, {pipeline_mode = #tpu.pipeline_mode<synchronous>, transform_indices = @transform_2, window_bounds = array<i64: 16, 1>}, {pipeline_mode = #tpu.pipeline_mode<synchronous>, transform_indices = @transform_3, window_bounds = array<i64: 10, 16>}, {pipeline_mode = #tpu.pipeline_mode<synchronous>, transform_indices = @transform_4, window_bounds = array<i64: 10, 1>}, {transform_indices = @transform_5, window_bounds = array<i64: 1, 10, 1>}]} {
    %c0 = arith.constant 0 : index
    %c0_0 = arith.constant 0 : index
    %c0_1 = arith.constant 0 : index
    %0 = vector.load %arg1[%c0, %c0_0, %c0_1] : memref<1x27x10240xf32, #tpu.memory_space<vmem>>, vector<1x27x10240xf32>
    %1 = vector.shape_cast %0 : vector<1x27x10240xf32> to vector<27x10240xf32>
    %c0_2 = arith.constant 0 : index
    %c0_3 = arith.constant 0 : index
    %2 = vector.load %arg2[%c0_2, %c0_3] : memref<16x27xf32, #tpu.memory_space<vmem>>, vector<16x27xf32>
    %cst = arith.constant dense<0.000000e+00> : vector<16x10240xf32>
    %3 = tpu.matmul %2, %1, %cst {dimension_numbers = #tpu.dot_dimension_numbers<[1], [0], [0], [1], [0, 0, 1, 1], [], []>} : vector<16x27xf32>, vector<27x10240xf32>, vector<16x10240xf32> -> vector<16x10240xf32>
    %c0_4 = arith.constant 0 : index
    %c0_5 = arith.constant 0 : index
    %4 = vector.load %arg3[%c0_4, %c0_5] : memref<16x1xf32, #tpu.memory_space<vmem>>, vector<16x1xf32>
    %5 = vector.broadcast %4 : vector<16x1xf32> to vector<16x10240xf32>
    %6 = arith.addf %3, %5 : vector<16x10240xf32>
    %cst_6 = arith.constant 0.000000e+00 : f32
    %7 = vector.broadcast %cst_6 : f32 to vector<16x10240xf32>
    %8 = arith.maximumf %6, %7 : vector<16x10240xf32>
    %cst_7 = arith.constant 1.000000e+00 : f32
    %9 = vector.broadcast %cst_7 : f32 to vector<10240x1xf32>
    %cst_8 = arith.constant dense<0.000000e+00> : vector<16x1xf32>
    %10 = tpu.matmul %8, %9, %cst_8 {dimension_numbers = #tpu.dot_dimension_numbers<[1], [0], [0], [1], [0, 0, 1, 1], [], []>} : vector<16x10240xf32>, vector<10240x1xf32>, vector<16x1xf32> -> vector<16x1xf32>
    %c0_9 = arith.constant 0 : index
    %c0_10 = arith.constant 0 : index
    %11 = vector.load %arg4[%c0_9, %c0_10] : memref<10x16xf32, #tpu.memory_space<vmem>>, vector<10x16xf32>
    %cst_11 = arith.constant dense<0.000000e+00> : vector<10x1xf32>
    %12 = tpu.matmul %11, %10, %cst_11 {dimension_numbers = #tpu.dot_dimension_numbers<[1], [0], [0], [1], [0, 0, 1, 1], [], []>} : vector<10x16xf32>, vector<16x1xf32>, vector<10x1xf32> -> vector<10x1xf32>
    %c0_12 = arith.constant 0 : index
    %c0_13 = arith.constant 0 : index
    %13 = vector.load %arg5[%c0_12, %c0_13] : memref<10x1xf32, #tpu.memory_space<vmem>>, vector<10x1xf32>
    %14 = arith.addf %12, %13 : vector<10x1xf32>
    %c0_14 = arith.constant 0 : index
    %c0_15 = arith.constant 0 : index
    %c0_16 = arith.constant 0 : index
    %15 = vector.load %arg6[%c0_14, %c0_15, %c0_16] : memref<1x10x1xf32, #tpu.memory_space<vmem>>, vector<1x10x1xf32>
    %16 = vector.shape_cast %15 : vector<1x10x1xf32> to vector<10x1xf32>
    %17 = vector.shape_cast %14 : vector<10x1xf32> to vector<1x10x1xf32>
    tpu.vector_store %arg6[%c0_14, %c0_15, %c0_16], %17 {strides = array<i32>} : memref<1x10x1xf32, #tpu.memory_space<vmem>>, vector<1x10x1xf32>,
    return
  }
  func.func @transform_0(%arg0: i32) -> (i32, i32, i32) {
    %c0_i32 = arith.constant 0 : i32
    %c0_i32_0 = arith.constant 0 : i32
    %c0_i32_1 = arith.constant 0 : i32
    return %arg0, %c0_i32, %c0_i32_0 : i32, i32, i32
  }
  func.func @transform_1(%arg0: i32) -> (i32, i32) {
    %c0_i32 = arith.constant 0 : i32
    %c0_i32_0 = arith.constant 0 : i32
    %c0_i32_1 = arith.constant 0 : i32
    return %c0_i32, %c0_i32_0 : i32, i32
  }
  func.func @transform_2(%arg0: i32) -> (i32, i32) {
    %c0_i32 = arith.constant 0 : i32
    %c0_i32_0 = arith.constant 0 : i32
    %c0_i32_1 = arith.constant 0 : i32
    return %c0_i32, %c0_i32_0 : i32, i32
  }
  func.func @transform_3(%arg0: i32) -> (i32, i32) {
    %c0_i32 = arith.constant 0 : i32
    %c0_i32_0 = arith.constant 0 : i32
    %c0_i32_1 = arith.constant 0 : i32
    return %c0_i32, %c0_i32_0 : i32, i32
  }
  func.func @transform_4(%arg0: i32) -> (i32, i32) {
    %c0_i32 = arith.constant 0 : i32
    %c0_i32_0 = arith.constant 0 : i32
    %c0_i32_1 = arith.constant 0 : i32
    return %c0_i32, %c0_i32_0 : i32, i32
  }
  func.func @transform_5(%arg0: i32) -> (i32, i32, i32) {
    %c0_i32 = arith.constant 0 : i32
    %c0_i32_0 = arith.constant 0 : i32
    %c0_i32_1 = arith.constant 0 : i32
    return %arg0, %c0_i32, %c0_i32_0 : i32, i32, i32
  }
}

</mosaic_0001>

<llo_original>
// kernel: tpu_custom_call.1
$region0: #{tpu_custom_call.1}
  #allocation0 [shape = 'u32[]', space=smem, size = 0x4, offset = 0x4, fixed_abs, tag = 'smem constant byte address 0x4 - core index']
  #allocation1 [shape = 'u32[144,128]{1,0:T(1,128)}', space=vmem, size = 0x12000, scoped, tag = 'internal scratch']
  %s0 = inlined_call_operand.vmem [shape: f32[2,27,10240], index: 0, kind: input, shape index: {}]
  %s1 = inlined_call_operand.vmem [shape: f32[16,27], index: 1, kind: input, shape index: {}]
  %s2 = inlined_call_operand.vmem [shape: f32[16,1], index: 2, kind: input, shape index: {}]
  %s3 = inlined_call_operand.vmem [shape: f32[10,16], index: 3, kind: input, shape index: {}]
  %s4 = inlined_call_operand.vmem [shape: f32[10,1], index: 4, kind: input, shape index: {}]
  %s5 = inlined_call_operand.vmem [shape: f32[2,10,1], index: 5, kind: output, shape index: {}]
  %s6 = sld [smem:[#allocation0]]
  $region53: #{tpu_custom_call.1} parent=0
    _
  %s8 = ssub.s32 1, %s6
  %s9 = scalar_select 0, %s8, %s6
  loop: start=0, step=1, limit=4
  $region2: #{tpu_custom_call.1} parent=0 // loop_pre_header
    _
  $region3: #{tpu_custom_call.1} parent=0 // loop_header
    %s11 = sphi 0, %s15
    %p12 = scmp.ge.s32.totalorder %s11, 4
    %s21 = sphi 0, %s23
    %s24 = sphi 0, %s21
    %s25 = sphi 0, %s24
    %s41 = sphi 0, %s25
    %s45 = sphi 0, %s45
    %s47 = sphi 0, %s45
    %s48 = sphi 0, %s47
    %s62 = sphi 0, %s48
    %s66 = sphi 0, %s66
    %s68 = sphi 0, %s66
    %s69 = sphi 0, %s68
    %s83 = sphi 0, %s69
    %s87 = sphi 0, %s87
    %s89 = sphi 0, %s87
    %s90 = sphi 0, %s89
    %s104 = sphi 0, %s90
    %s108 = sphi 0, %s108
    %s110 = sphi 0, %s108
    %s111 = sphi 0, %s110
    %s125 = sphi 0, %s111
    %s131 = sphi 0, %s133
    %s134 = sphi 0, %s131
    %s135 = sphi 0, %s134
    %s151 = sphi 0, %s135
  $region4: #{tpu_custom_call.1} parent=0 // loop_header_branch
    %14 = sbr.rel (%p12) target = $region8
  $region5: #{tpu_custom_call.1} parent=0 // loop_body
    %s16 = ssub.s32 %s11, 1
    %s17 = ssub.s32 %s11, 2
    %s18 = sadd.s32 %s11, 1
    %s19 = ssub.s32 %s11, %s18
    %p20 = scmp.eq.s32.totalorder %s19, 0
    %s22 = sadd.s32 %s21, 1
    %s23 = scalar_select %p20, %s21, %s22
    %p26 = pneg %p20
    %p27 = scmp.eq.s32.totalorder %s11, 1
    %p28 = por %p26, %p27
    %p29 = scmp.ne.s32.totalorder %s21, %s24
    %p30 = scmp.eq.s32.totalorder %s11, 0
    %p31 = por %p29, %p30
    %p32 = scmp.ne.s32.totalorder %s21, %s24
    %p33 = scmp.eq.s32.totalorder %s16, 1
    %p34 = por %p32, %p33
    %p35 = scmp.ne.s32.totalorder %s24, %s25
    %p36 = scmp.eq.s32.totalorder %s16, 0
    %p37 = por %p35, %p36
    %p38 = scmp.ne.s32.totalorder %s24, %s25
    %p39 = scmp.eq.s32.totalorder %s17, 1
    %p40 = por %p38, %p39
    %p42 = scmp.ne.s32.totalorder %s25, %s41
    %p43 = scmp.eq.s32.totalorder %s17, 0
    %p44 = por %p42, %p43
    %s46 = sadd.s32 %s45, 1
    %p49 = scmp.eq.s32.totalorder %s11, 1
    %p50 = scmp.ne.s32.totalorder %s45, %s47
    %p51 = scmp.eq.s32.totalorder %s11, 0
    %p52 = por %p50, %p51
    %p53 = scmp.ne.s32.totalorder %s45, %s47
    %p54 = scmp.eq.s32.totalorder %s16, 1
    %p55 = por %p53, %p54
    %p56 = scmp.ne.s32.totalorder %s47, %s48
    %p57 = scmp.eq.s32.totalorder %s16, 0
    %p58 = por %p56, %p57
    %p59 = scmp.ne.s32.totalorder %s47, %s48
    %p60 = scmp.eq.s32.totalorder %s17, 1
    %p61 = por %p59, %p60
    %p63 = scmp.ne.s32.totalorder %s48, %s62
    %p64 = scmp.eq.s32.totalorder %s17, 0
    %p65 = por %p63, %p64
    %s67 = sadd.s32 %s66, 1
    %p70 = scmp.eq.s32.totalorder %s11, 1
    %p71 = scmp.ne.s32.totalorder %s66, %s68
    %p72 = scmp.eq.s32.totalorder %s11, 0
    %p73 = por %p71, %p72
    %p74 = scmp.ne.s32.totalorder %s66, %s68
    %p75 = scmp.eq.s32.totalorder %s16, 1
    %p76 = por %p74, %p75
    %p77 = scmp.ne.s32.totalorder %s68, %s69
    %p78 = scmp.eq.s32.totalorder %s16, 0
    %p79 = por %p77, %p78
    %p80 = scmp.ne.s32.totalorder %s68, %s69
    %p81 = scmp.eq.s32.totalorder %s17, 1
    %p82 = por %p80, %p81
    %p84 = scmp.ne.s32.totalorder %s69, %s83
    %p85 = scmp.eq.s32.totalorder %s17, 0
    %p86 = por %p84, %p85
    %s88 = sadd.s32 %s87, 1
    %p91 = scmp.eq.s32.totalorder %s11, 1
    %p92 = scmp.ne.s32.totalorder %s87, %s89
    %p93 = scmp.eq.s32.totalorder %s11, 0
    %p94 = por %p92, %p93
    %p95 = scmp.ne.s32.totalorder %s87, %s89
    %p96 = scmp.eq.s32.totalorder %s16, 1
    %p97 = por %p95, %p96
    %p98 = scmp.ne.s32.totalorder %s89, %s90
    %p99 = scmp.eq.s32.totalorder %s16, 0
    %p100 = por %p98, %p99
    %p101 = scmp.ne.s32.totalorder %s89, %s90
    %p102 = scmp.eq.s32.totalorder %s17, 1
    %p103 = por %p101, %p102
    %p105 = scmp.ne.s32.totalorder %s90, %s104
    %p106 = scmp.eq.s32.totalorder %s17, 0
    %p107 = por %p105, %p106
    %s109 = sadd.s32 %s108, 1
    %p112 = scmp.eq.s32.totalorder %s11, 1
    %p113 = scmp.ne.s32.totalorder %s108, %s110
    %p114 = scmp.eq.s32.totalorder %s11, 0
    %p115 = por %p113, %p114
    %p116 = scmp.ne.s32.totalorder %s108, %s110
    %p117 = scmp.eq.s32.totalorder %s16, 1
    %p118 = por %p116, %p117
    %p119 = scmp.ne.s32.totalorder %s110, %s111
    %p120 = scmp.eq.s32.totalorder %s16, 0
    %p121 = por %p119, %p120
    %p122 = scmp.ne.s32.totalorder %s110, %s111
    %p123 = scmp.eq.s32.totalorder %s17, 1
    %p124 = por %p122, %p123
    %p126 = scmp.ne.s32.totalorder %s111, %s125
    %p127 = scmp.eq.s32.totalorder %s17, 0
    %p128 = por %p126, %p127
    %s129 = ssub.s32 %s11, %s18
    %p130 = scmp.eq.s32.totalorder %s129, 0
    %s132 = sadd.s32 %s131, 1
    %s133 = scalar_select %p130, %s131, %s132
    %p136 = pneg %p130
    %p137 = scmp.eq.s32.totalorder %s11, 1
    %p138 = por %p136, %p137
    %p139 = scmp.ne.s32.totalorder %s131, %s134
    %p140 = scmp.eq.s32.totalorder %s11, 0
    %p141 = por %p139, %p140
    %p142 = scmp.ne.s32.totalorder %s131, %s134
    %p143 = scmp.eq.s32.totalorder %s16, 1
    %p144 = por %p142, %p143
    %p145 = scmp.ne.s32.totalorder %s134, %s135
    %p146 = scmp.eq.s32.totalorder %s16, 0
    %p147 = por %p145, %p146
    %p148 = scmp.ne.s32.totalorder %s134, %s135
    %p149 = scmp.eq.s32.totalorder %s17, 1
    %p150 = por %p148, %p149
    %p152 = scmp.ne.s32.totalorder %s135, %s151
    %p153 = scmp.eq.s32.totalorder %s17, 0
    %p154 = por %p152, %p153
    %p155 = scmp.le.s32.totalorder 1, %s11
    %p156 = scmp.lt.s32.totalorder %s11, 3
    %p157 = pnand %p155, %p156
    %p158 = pneg %p157
    // Predicated region
    $region9: #{tpu_custom_call.1} parent=5 // pred_check
      _
    $region10: #{tpu_custom_call.1} parent=5 // pred_check_branch
      %160 = sbr.rel (%p157) target = $region12
    $region11: #{tpu_custom_call.1} parent=5 // pred_region
      %s161 = ssub.s32 %s11, 1
      // Predicated region
      $region13: #{tpu_custom_call.1} parent=11 // pred_check
        %p162 = pneg %p58
      $region14: #{tpu_custom_call.1} parent=11 // pred_check_branch
        %164 = sbr.rel (%p162) target = $region16
      $region15: #{tpu_custom_call.1} parent=11 // pred_region
        _
      $region16: #{tpu_custom_call.1} parent=11 // pred_fallthru
        _
      // Predicated region
      $region17: #{tpu_custom_call.1} parent=11 // pred_check
        %p165 = pneg %p79
      $region18: #{tpu_custom_call.1} parent=11 // pred_check_branch
        %167 = sbr.rel (%p165) target = $region20
      $region19: #{tpu_custom_call.1} parent=11 // pred_region
        _
      $region20: #{tpu_custom_call.1} parent=11 // pred_fallthru
        _
      // Predicated region
      $region21: #{tpu_custom_call.1} parent=11 // pred_check
        %p168 = pneg %p100
      $region22: #{tpu_custom_call.1} parent=11 // pred_check_branch
        %170 = sbr.rel (%p168) target = $region24
      $region23: #{tpu_custom_call.1} parent=11 // pred_region
        _
      $region24: #{tpu_custom_call.1} parent=11 // pred_fallthru
        _
      // Predicated region
      $region25: #{tpu_custom_call.1} parent=11 // pred_check
        %p171 = pneg %p121
      $region26: #{tpu_custom_call.1} parent=11 // pred_check_branch
        %173 = sbr.rel (%p171) target = $region28
      $region27: #{tpu_custom_call.1} parent=11 // pred_region
        _
      $region28: #{tpu_custom_call.1} parent=11 // pred_fallthru
        _
    $region12: #{tpu_custom_call.1} parent=5 // pred_fallthru
      _
    %p174 = scmp.lt.s32.totalorder %s11, 2
    // Predicated region
    $region29: #{tpu_custom_call.1} parent=5 // pred_check
      %p175 = pneg %p174
    $region30: #{tpu_custom_call.1} parent=5 // pred_check_branch
      %177 = sbr.rel (%p175) target = $region32
    $region31: #{tpu_custom_call.1} parent=5 // pred_region
      // Predicated region
      $region33: #{tpu_custom_call.1} parent=31 // pred_check
        %p178 = pneg %p31
      $region34: #{tpu_custom_call.1} parent=31 // pred_check_branch
        %180 = sbr.rel (%p178) target = $region36
      $region35: #{tpu_custom_call.1} parent=31 // pred_region
        %p181 = scmp.lt.s32.totalorder %s11, 1
        %s182 = scalar_select %p181, %s11, 1
        %s183 = smul.addr %s182, 320
        %s184 = smul.addr %s183, 8
        %s185 = scalar_lea.vmem %s0, %s184
      $region36: #{tpu_custom_call.1} parent=31 // pred_fallthru
        _
    $region32: #{tpu_custom_call.1} parent=5 // pred_fallthru
      _
    %p186 = scmp.le.s32.totalorder 1, %s11
    %p187 = scmp.lt.s32.totalorder %s11, 3
    %p188 = pnand %p186, %p187
    %p189 = pneg %p188
    // Predicated region
    $region37: #{tpu_custom_call.1} parent=5 // pred_check
      _
    $region38: #{tpu_custom_call.1} parent=5 // pred_check_branch
      %191 = sbr.rel (%p188) target = $region40
    $region39: #{tpu_custom_call.1} parent=5 // pred_region
      %s192 = ssub.s32 %s11, 1
      %p193 = scmp.lt.s32.totalorder %s16, 1
      %s194 = scalar_select %p193, %s16, 1
      %s195 = smul.addr %s194, 320
      %s196 = smul.addr %s195, 8
      %s197 = scalar_lea.vmem %s0, %s196
      %p198 = pneg %p37
      %p199 = pneg %p34
      %p200 = pneg %p58
      %p201 = pneg %p55
      %p202 = pneg %p79
      %p203 = pneg %p76
      %p204 = pneg %p100
      %p205 = pneg %p97
      %p206 = pneg %p121
      %p207 = pneg %p118
      %p208 = pneg %p147
      %p209 = pneg %p144
      %p210 = scmp.lt.s32.totalorder %s16, 1
      %s211 = scalar_select %p210, %s16, 1
      %s212 = smul.addr %s211, 2
      %s213 = smul.addr %s212, 8
      %s214 = scalar_lea.vmem %s5, %s213
      %p215 = scmp.lt.s32.totalorder %s16, 1
      %s216 = scalar_select %p215, %s16, 1
      %s217 = smul.addr %s216, 320
      %s218 = smul.addr %s217, 8
      %s219 = scalar_lea.vmem %s0, %s218
      %p220 = scmp.lt.s32.totalorder %s16, 1
      %s221 = scalar_select %p220, %s16, 1
      %s222 = smul.addr %s221, 2
      %s223 = smul.addr %s222, 8
      %s224 = scalar_lea.vmem %s5, %s223
      %v225 = vld [vmem:[%s219] sm:$0xff]
      %v226 = vld [vmem:[%s219 + $0x8] sm:$0xff]
      %v227 = vld [vmem:[%s219 + $0x10] sm:$0xff]
      %v228 = vld [vmem:[%s219 + $0x18] sm:$0xff]
      %v229 = vld [vmem:[%s219 + $0x20] sm:$0xff]
      %v230 = vld [vmem:[%s219 + $0x28] sm:$0xff]
      %v231 = vld [vmem:[%s219 + $0x30] sm:$0xff]
      %v232 = vld [vmem:[%s219 + $0x38] sm:$0xff]
      %v233 = vld [vmem:[%s219 + $0x40] sm:$0xff]
      %v234 = vld [vmem:[%s219 + $0x48] sm:$0xff]
      %v235 = vld [vmem:[%s219 + $0x50] sm:$0xff]
      %v236 = vld [vmem:[%s219 + $0x58] sm:$0xff]
      %v237 = vld [vmem:[%s219 + $0x60] sm:$0xff]
      %v238 = vld [vmem:[%s219 + $0x68] sm:$0xff]
      %v239 = vld [vmem:[%s219 + $0x70] sm:$0xff]
      %v240 = vld [vmem:[%s219 + $0x78] sm:$0xff]
      %v241 = vld [vmem:[%s219 + $0x80] sm:$0xff]
      %v242 = vld [vmem:[%s219 + $0x88] sm:$0xff]
      %v243 = vld [vmem:[%s219 + $0x90] sm:$0xff]
      %v244 = vld [vmem:[%s219 + $0x98] sm:$0xff]
      %v245 = vld [vmem:[%s219 + $0xa0] sm:$0xff]
      %v246 = vld [vmem:[%s219 + $0xa8] sm:$0xff]
      %v247 = vld [vmem:[%s219 + $0xb0] sm:$0xff]
      %v248 = vld [vmem:[%s219 + $0xb8] sm:$0xff]
      %v249 = vld [vmem:[%s219 + $0xc0] sm:$0xff]
      %v250 = vld [vmem:[%s219 + $0xc8] sm:$0xff]
      %v251 = vld [vmem:[%s219 + $0xd0] sm:$0xff]
      %v252 = vld [vmem:[%s219 + $0xd8] sm:$0xff]
      %v253 = vld [vmem:[%s219 + $0xe0] sm:$0xff]
      %v254 = vld [vmem:[%s219 + $0xe8] sm:$0xff]
      %v255 = vld [vmem:[%s219 + $0xf0] sm:$0xff]
      %v256 = vld [vmem:[%s219 + $0xf8] sm:$0xff]
      %v257 = vld [vmem:[%s219 + $0x100] sm:$0xff]
      %v258 = vld [vmem:[%s219 + $0x108] sm:$0xff]
      %v259 = vld [vmem:[%s219 + $0x110] sm:$0xff]
      %v260 = vld [vmem:[%s219 + $0x118] sm:$0xff]
      %v261 = vld [vmem:[%s219 + $0x120] sm:$0xff]
      %v262 = vld [vmem:[%s219 + $0x128] sm:$0xff]
      %v263 = vld [vmem:[%s219 + $0x130] sm:$0xff]
      %v264 = vld [vmem:[%s219 + $0x138] sm:$0xff]
      %v265 = vld [vmem:[%s219 + $0x140] sm:$0xff]
      %v266 = vld [vmem:[%s219 + $0x148] sm:$0xff]
      %v267 = vld [vmem:[%s219 + $0x150] sm:$0xff]
      %v268 = vld [vmem:[%s219 + $0x158] sm:$0xff]
      %v269 = vld [vmem:[%s219 + $0x160] sm:$0xff]
      %v270 = vld [vmem:[%s219 + $0x168] sm:$0xff]
      %v271 = vld [vmem:[%s219 + $0x170] sm:$0xff]
      %v272 = vld [vmem:[%s219 + $0x178] sm:$0xff]
      %v273 = vld [vmem:[%s219 + $0x180] sm:$0xff]
      %v274 = vld [vmem:[%s219 + $0x188] sm:$0xff]
      %v275 = vld [vmem:[%s219 + $0x190] sm:$0xff]
      %v276 = vld [vmem:[%s219 + $0x198] sm:$0xff]
      %v277 = vld [vmem:[%s219 + $0x1a0] sm:$0xff]
      %v278 = vld [vmem:[%s219 + $0x1a8] sm:$0xff]
      %v279 = vld [vmem:[%s219 + $0x1b0] sm:$0xff]
      %v280 = vld [vmem:[%s219 + $0x1b8] sm:$0xff]
      %v281 = vld [vmem:[%s219 + $0x1c0] sm:$0xff]
      %v282 = vld [vmem:[%s219 + $0x1c8] sm:$0xff]
      %v283 = vld [vmem:[%s219 + $0x1d0] sm:$0xff]
      %v284 = vld [vmem:[%s219 + $0x1d8] sm:$0xff]
      %v285 = vld [vmem:[%s219 + $0x1e0] sm:$0xff]
      %v286 = vld [vmem:[%s219 + $0x1e8] sm:$0xff]
      %v287 = vld [vmem:[%s219 + $0x1f0] sm:$0xff]
      %v288 = vld [vmem:[%s219 + $0x1f8] sm:$0xff]
      %v289 = vld [vmem:[%s219 + $0x200] sm:$0xff]
      %v290 = vld [vmem:[%s219 + $0x208] sm:$0xff]
      %v291 = vld [vmem:[%s219 + $0x210] sm:$0xff]
      %v292 = vld [vmem:[%s219 + $0x218] sm:$0xff]
      %v293 = vld [vmem:[%s219 + $0x220] sm:$0xff]
      %v294 = vld [vmem:[%s219 + $0x228] sm:$0xff]
      %v295 = vld [vmem:[%s219 + $0x230] sm:$0xff]
      %v296 = vld [vmem:[%s219 + $0x238] sm:$0xff]
      %v297 = vld [vmem:[%s219 + $0x240] sm:$0xff]
      %v298 = vld [vmem:[%s219 + $0x248] sm:$0xff]
      %v299 = vld [vmem:[%s219 + $0x250] sm:$0xff]
      %v300 = vld [vmem:[%s219 + $0x258] sm:$0xff]
      %v301 = vld [vmem:[%s219 + $0x260] sm:$0xff]
      %v302 = vld [vmem:[%s219 + $0x268] sm:$0xff]
      %v303 = vld [vmem:[%s219 + $0x270] sm:$0xff]
      %v304 = vld [vmem:[%s219 + $0x278] sm:$0xff]
      %v305 = vld [vmem:[%s219 + $0x280] sm:$0xff]
      %v306 = vld [vmem:[%s219 + $0x288] sm:$0xff]
      %v307 = vld [vmem:[%s219 + $0x290] sm:$0xff]
      %v308 = vld [vmem:[%s219 + $0x298] sm:$0xff]
      %v309 = vld [vmem:[%s219 + $0x2a0] sm:$0xff]
      %v310 = vld [vmem:[%s219 + $0x2a8] sm:$0xff]
      %v311 = vld [vmem:[%s219 + $0x2b0] sm:$0xff]
      %v312 = vld [vmem:[%s219 + $0x2b8] sm:$0xff]
      %v313 = vld [vmem:[%s219 + $0x2c0] sm:$0xff]
      %v314 = vld [vmem:[%s219 + $0x2c8] sm:$0xff]
      %v315 = vld [vmem:[%s219 + $0x2d0] sm:$0xff]
      %v316 = vld [vmem:[%s219 + $0x2d8] sm:$0xff]
      %v317 = vld [vmem:[%s219 + $0x2e0] sm:$0xff]
      %v318 = vld [vmem:[%s219 + $0x2e8] sm:$0xff]
      %v319 = vld [vmem:[%s219 + $0x2f0] sm:$0xff]
      %v320 = vld [vmem:[%s219 + $0x2f8] sm:$0xff]
      %v321 = vld [vmem:[%s219 + $0x300] sm:$0xff]
      %v322 = vld [vmem:[%s219 + $0x308] sm:$0xff]
      %v323 = vld [vmem:[%s219 + $0x310] sm:$0xff]
      %v324 = vld [vmem:[%s219 + $0x318] sm:$0xff]
      %v325 = vld [vmem:[%s219 + $0x320] sm:$0xff]
      %v326 = vld [vmem:[%s219 + $0x328] sm:$0xff]
      %v327 = vld [vmem:[%s219 + $0x330] sm:$0xff]
      %v328 = vld [vmem:[%s219 + $0x338] sm:$0xff]
      %v329 = vld [vmem:[%s219 + $0x340] sm:$0xff]
      %v330 = vld [vmem:[%s219 + $0x348] sm:$0xff]
      %v331 = vld [vmem:[%s219 + $0x350] sm:$0xff]
      %v332 = vld [vmem:[%s219 + $0x358] sm:$0xff]
      %v333 = vld [vmem:[%s219 + $0x360] sm:$0xff]
      %v334 = vld [vmem:[%s219 + $0x368] sm:$0xff]
      %v335 = vld [vmem:[%s219 + $0x370] sm:$0xff]
      %v336 = vld [vmem:[%s219 + $0x378] sm:$0xff]
      %v337 = vld [vmem:[%s219 + $0x380] sm:$0xff]
      %v338 = vld [vmem:[%s219 + $0x388] sm:$0xff]
      %v339 = vld [vmem:[%s219 + $0x390] sm:$0xff]
      %v340 = vld [vmem:[%s219 + $0x398] sm:$0xff]
      %v341 = vld [vmem:[%s219 + $0x3a0] sm:$0xff]
      %v342 = vld [vmem:[%s219 + $0x3a8] sm:$0xff]
      %v343 = vld [vmem:[%s219 + $0x3b0] sm:$0xff]
      %v344 = vld [vmem:[%s219 + $0x3b8] sm:$0xff]
      %v345 = vld [vmem:[%s219 + $0x3c0] sm:$0xff]
      %v346 = vld [vmem:[%s219 + $0x3c8] sm:$0xff]
      %v347 = vld [vmem:[%s219 + $0x3d0] sm:$0xff]
      %v348 = vld [vmem:[%s219 + $0x3d8] sm:$0xff]
      %v349 = vld [vmem:[%s219 + $0x3e0] sm:$0xff]
      %v350 = vld [vmem:[%s219 + $0x3e8] sm:$0xff]
      %v351 = vld [vmem:[%s219 + $0x3f0] sm:$0xff]
      %v352 = vld [vmem:[%s219 + $0x3f8] sm:$0xff]
      %v353 = vld [vmem:[%s219 + $0x400] sm:$0xff]
      %v354 = vld [vmem:[%s219 + $0x408] sm:$0xff]
      %v355 = vld [vmem:[%s219 + $0x410] sm:$0xff]
      %v356 = vld [vmem:[%s219 + $0x418] sm:$0xff]
      %v357 = vld [vmem:[%s219 + $0x420] sm:$0xff]
      %v358 = vld [vmem:[%s219 + $0x428] sm:$0xff]
      %v359 = vld [vmem:[%s219 + $0x430] sm:$0xff]
      %v360 = vld [vmem:[%s219 + $0x438] sm:$0xff]
      %v361 = vld [vmem:[%s219 + $0x440] sm:$0xff]
      %v362 = vld [vmem:[%s219 + $0x448] sm:$0xff]
      %v363 = vld [vmem:[%s219 + $0x450] sm:$0xff]
      %v364 = vld [vmem:[%s219 + $0x458] sm:$0xff]
      %v365 = vld [vmem:[%s219 + $0x460] sm:$0xff]
      %v366 = vld [vmem:[%s219 + $0x468] sm:$0xff]
      %v367 = vld [vmem:[%s219 + $0x470] sm:$0xff]
      %v368 = vld [vmem:[%s219 + $0x478] sm:$0xff]
      %v369 = vld [vmem:[%s219 + $0x480] sm:$0xff]
      %v370 = vld [vmem:[%s219 + $0x488] sm:$0xff]
      %v371 = vld [vmem:[%s219 + $0x490] sm:$0xff]
      %v372 = vld [vmem:[%s219 + $0x498] sm:$0xff]
      %v373 = vld [vmem:[%s219 + $0x4a0] sm:$0xff]
      %v374 = vld [vmem:[%s219 + $0x4a8] sm:$0xff]
      %v375 = vld [vmem:[%s219 + $0x4b0] sm:$0xff]
      %v376 = vld [vmem:[%s219 + $0x4b8] sm:$0xff]
      %v377 = vld [vmem:[%s219 + $0x4c0] sm:$0xff]
      %v378 = vld [vmem:[%s219 + $0x4c8] sm:$0xff]
      %v379 = vld [vmem:[%s219 + $0x4d0] sm:$0xff]
      %v380 = vld [vmem:[%s219 + $0x4d8] sm:$0xff]
      %v381 = vld [vmem:[%s219 + $0x4e0] sm:$0xff]
      %v382 = vld [vmem:[%s219 + $0x4e8] sm:$0xff]
      %v383 = vld [vmem:[%s219 + $0x4f0] sm:$0xff]
      %v384 = vld [vmem:[%s219 + $0x4f8] sm:$0xff]
      %v385 = vld [vmem:[%s219 + $0x500] sm:$0xff]
      %v386 = vld [vmem:[%s219 + $0x508] sm:$0xff]
      %v387 = vld [vmem:[%s219 + $0x510] sm:$0xff]
      %v388 = vld [vmem:[%s219 + $0x518] sm:$0xff]
      %v389 = vld [vmem:[%s219 + $0x520] sm:$0xff]
      %v390 = vld [vmem:[%s219 + $0x528] sm:$0xff]
      %v391 = vld [vmem:[%s219 + $0x530] sm:$0xff]
      %v392 = vld [vmem:[%s219 + $0x538] sm:$0xff]
      %v393 = vld [vmem:[%s219 + $0x540] sm:$0xff]
      %v394 = vld [vmem:[%s219 + $0x548] sm:$0xff]
      %v395 = vld [vmem:[%s219 + $0x550] sm:$0xff]
      %v396 = vld [vmem:[%s219 + $0x558] sm:$0xff]
      %v397 = vld [vmem:[%s219 + $0x560] sm:$0xff]
      %v398 = vld [vmem:[%s219 + $0x568] sm:$0xff]
      %v399 = vld [vmem:[%s219 + $0x570] sm:$0xff]
      %v400 = vld [vmem:[%s219 + $0x578] sm:$0xff]
      %v401 = vld [vmem:[%s219 + $0x580] sm:$0xff]
      %v402 = vld [vmem:[%s219 + $0x588] sm:$0xff]
      %v403 = vld [vmem:[%s219 + $0x590] sm:$0xff]
      %v404 = vld [vmem:[%s219 + $0x598] sm:$0xff]
      %v405 = vld [vmem:[%s219 + $0x5a0] sm:$0xff]
      %v406 = vld [vmem:[%s219 + $0x5a8] sm:$0xff]
      %v407 = vld [vmem:[%s219 + $0x5b0] sm:$0xff]
      %v408 = vld [vmem:[%s219 + $0x5b8] sm:$0xff]
      %v409 = vld [vmem:[%s219 + $0x5c0] sm:$0xff]
      %v410 = vld [vmem:[%s219 + $0x5c8] sm:$0xff]
      %v411 = vld [vmem:[%s219 + $0x5d0] sm:$0xff]
      %v412 = vld [vmem:[%s219 + $0x5d8] sm:$0xff]
      %v413 = vld [vmem:[%s219 + $0x5e0] sm:$0xff]
      %v414 = vld [vmem:[%s219 + $0x5e8] sm:$0xff]
      %v415 = vld [vmem:[%s219 + $0x5f0] sm:$0xff]
      %v416 = vld [vmem:[%s219 + $0x5f8] sm:$0xff]
      %v417 = vld [vmem:[%s219 + $0x600] sm:$0xff]
      %v418 = vld [vmem:[%s219 + $0x608] sm:$0xff]
      %v419 = vld [vmem:[%s219 + $0x610] sm:$0xff]
      %v420 = vld [vmem:[%s219 + $0x618] sm:$0xff]
      %v421 = vld [vmem:[%s219 + $0x620] sm:$0xff]
      %v422 = vld [vmem:[%s219 + $0x628] sm:$0xff]
      %v423 = vld [vmem:[%s219 + $0x630] sm:$0xff]
      %v424 = vld [vmem:[%s219 + $0x638] sm:$0xff]
      %v425 = vld [vmem:[%s219 + $0x640] sm:$0xff]
      %v426 = vld [vmem:[%s219 + $0x648] sm:$0xff]
      %v427 = vld [vmem:[%s219 + $0x650] sm:$0xff]
      %v428 = vld [vmem:[%s219 + $0x658] sm:$0xff]
      %v429 = vld [vmem:[%s219 + $0x660] sm:$0xff]
      %v430 = vld [vmem:[%s219 + $0x668] sm:$0xff]
      %v431 = vld [vmem:[%s219 + $0x670] sm:$0xff]
      %v432 = vld [vmem:[%s219 + $0x678] sm:$0xff]
      %v433 = vld [vmem:[%s219 + $0x680] sm:$0xff]
      %v434 = vld [vmem:[%s219 + $0x688] sm:$0xff]
      %v435 = vld [vmem:[%s219 + $0x690] sm:$0xff]
      %v436 = vld [vmem:[%s219 + $0x698] sm:$0xff]
      %v437 = vld [vmem:[%s219 + $0x6a0] sm:$0xff]
      %v438 = vld [vmem:[%s219 + $0x6a8] sm:$0xff]
      %v439 = vld [vmem:[%s219 + $0x6b0] sm:$0xff]
      %v440 = vld [vmem:[%s219 + $0x6b8] sm:$0xff]
      %v441 = vld [vmem:[%s219 + $0x6c0] sm:$0xff]
      %v442 = vld [vmem:[%s219 + $0x6c8] sm:$0xff]
      %v443 = vld [vmem:[%s219 + $0x6d0] sm:$0xff]
      %v444 = vld [vmem:[%s219 + $0x6d8] sm:$0xff]
      %v445 = vld [vmem:[%s219 + $0x6e0] sm:$0xff]
      %v446 = vld [vmem:[%s219 + $0x6e8] sm:$0xff]
      %v447 = vld [vmem:[%s219 + $0x6f0] sm:$0xff]
      %v448 = vld [vmem:[%s219 + $0x6f8] sm:$0xff]
      %v449 = vld [vmem:[%s219 + $0x700] sm:$0xff]
      %v450 = vld [vmem:[%s219 + $0x708] sm:$0xff]
      %v451 = vld [vmem:[%s219 + $0x710] sm:$0xff]
      %v452 = vld [vmem:[%s219 + $0x718] sm:$0xff]
      %v453 = vld [vmem:[%s219 + $0x720] sm:$0xff]
      %v454 = vld [vmem:[%s219 + $0x728] sm:$0xff]
      %v455 = vld [vmem:[%s219 + $0x730] sm:$0xff]
      %v456 = vld [vmem:[%s219 + $0x738] sm:$0xff]
      %v457 = vld [vmem:[%s219 + $0x740] sm:$0xff]
      %v458 = vld [vmem:[%s219 + $0x748] sm:$0xff]
      %v459 = vld [vmem:[%s219 + $0x750] sm:$0xff]
      %v460 = vld [vmem:[%s219 + $0x758] sm:$0xff]
      %v461 = vld [vmem:[%s219 + $0x760] sm:$0xff]
      %v462 = vld [vmem:[%s219 + $0x768] sm:$0xff]
      %v463 = vld [vmem:[%s219 + $0x770] sm:$0xff]
      %v464 = vld [vmem:[%s219 + $0x778] sm:$0xff]
      %v465 = vld [vmem:[%s219 + $0x780] sm:$0x7]
      %v466 = vld [vmem:[%s219 + $0x788] sm:$0x7]
      %v467 = vld [vmem:[%s219 + $0x790] sm:$0x7]
      %v468 = vld [vmem:[%s219 + $0x798] sm:$0x7]
      %v469 = vld [vmem:[%s219 + $0x7a0] sm:$0x7]
      %v470 = vld [vmem:[%s219 + $0x7a8] sm:$0x7]
      %v471 = vld [vmem:[%s219 + $0x7b0] sm:$0x7]
      %v472 = vld [vmem:[%s219 + $0x7b8] sm:$0x7]
      %v473 = vld [vmem:[%s219 + $0x7c0] sm:$0x7]
      %v474 = vld [vmem:[%s219 + $0x7c8] sm:$0x7]
      %v475 = vld [vmem:[%s219 + $0x7d0] sm:$0x7]
      %v476 = vld [vmem:[%s219 + $0x7d8] sm:$0x7]
      %v477 = vld [vmem:[%s219 + $0x7e0] sm:$0x7]
      %v478 = vld [vmem:[%s219 + $0x7e8] sm:$0x7]
      %v479 = vld [vmem:[%s219 + $0x7f0] sm:$0x7]
      %v480 = vld [vmem:[%s219 + $0x7f8] sm:$0x7]
      %v481 = vld [vmem:[%s219 + $0x800] sm:$0x7]
      %v482 = vld [vmem:[%s219 + $0x808] sm:$0x7]
      %v483 = vld [vmem:[%s219 + $0x810] sm:$0x7]
      %v484 = vld [vmem:[%s219 + $0x818] sm:$0x7]
      %v485 = vld [vmem:[%s219 + $0x820] sm:$0x7]
      %v486 = vld [vmem:[%s219 + $0x828] sm:$0x7]
      %v487 = vld [vmem:[%s219 + $0x830] sm:$0x7]
      %v488 = vld [vmem:[%s219 + $0x838] sm:$0x7]
      %v489 = vld [vmem:[%s219 + $0x840] sm:$0x7]
      %v490 = vld [vmem:[%s219 + $0x848] sm:$0x7]
      %v491 = vld [vmem:[%s219 + $0x850] sm:$0x7]
      %v492 = vld [vmem:[%s219 + $0x858] sm:$0x7]
      %v493 = vld [vmem:[%s219 + $0x860] sm:$0x7]
      %v494 = vld [vmem:[%s219 + $0x868] sm:$0x7]
      %v495 = vld [vmem:[%s219 + $0x870] sm:$0x7]
      %v496 = vld [vmem:[%s219 + $0x878] sm:$0x7]
      %v497 = vld [vmem:[%s219 + $0x880] sm:$0x7]
      %v498 = vld [vmem:[%s219 + $0x888] sm:$0x7]
      %v499 = vld [vmem:[%s219 + $0x890] sm:$0x7]
      %v500 = vld [vmem:[%s219 + $0x898] sm:$0x7]
      %v501 = vld [vmem:[%s219 + $0x8a0] sm:$0x7]
      %v502 = vld [vmem:[%s219 + $0x8a8] sm:$0x7]
      %v503 = vld [vmem:[%s219 + $0x8b0] sm:$0x7]
      %v504 = vld [vmem:[%s219 + $0x8b8] sm:$0x7]
      %v505 = vld [vmem:[%s219 + $0x8c0] sm:$0x7]
      %v506 = vld [vmem:[%s219 + $0x8c8] sm:$0x7]
      %v507 = vld [vmem:[%s219 + $0x8d0] sm:$0x7]
      %v508 = vld [vmem:[%s219 + $0x8d8] sm:$0x7]
      %v509 = vld [vmem:[%s219 + $0x8e0] sm:$0x7]
      %v510 = vld [vmem:[%s219 + $0x8e8] sm:$0x7]
      %v511 = vld [vmem:[%s219 + $0x8f0] sm:$0x7]
      %v512 = vld [vmem:[%s219 + $0x8f8] sm:$0x7]
      %v513 = vld [vmem:[%s219 + $0x900] sm:$0x7]
      %v514 = vld [vmem:[%s219 + $0x908] sm:$0x7]
      %v515 = vld [vmem:[%s219 + $0x910] sm:$0x7]
      %v516 = vld [vmem:[%s219 + $0x918] sm:$0x7]
      %v517 = vld [vmem:[%s219 + $0x920] sm:$0x7]
      %v518 = vld [vmem:[%s219 + $0x928] sm:$0x7]
      %v519 = vld [vmem:[%s219 + $0x930] sm:$0x7]
      %v520 = vld [vmem:[%s219 + $0x938] sm:$0x7]
      %v521 = vld [vmem:[%s219 + $0x940] sm:$0x7]
      %v522 = vld [vmem:[%s219 + $0x948] sm:$0x7]
      %v523 = vld [vmem:[%s219 + $0x950] sm:$0x7]
      %v524 = vld [vmem:[%s219 + $0x958] sm:$0x7]
      %v525 = vld [vmem:[%s219 + $0x960] sm:$0x7]
      %v526 = vld [vmem:[%s219 + $0x968] sm:$0x7]
      %v527 = vld [vmem:[%s219 + $0x970] sm:$0x7]
      %v528 = vld [vmem:[%s219 + $0x978] sm:$0x7]
      %v529 = vld [vmem:[%s219 + $0x980] sm:$0x7]
      %v530 = vld [vmem:[%s219 + $0x988] sm:$0x7]
      %v531 = vld [vmem:[%s219 + $0x990] sm:$0x7]
      %v532 = vld [vmem:[%s219 + $0x998] sm:$0x7]
      %v533 = vld [vmem:[%s219 + $0x9a0] sm:$0x7]
      %v534 = vld [vmem:[%s219 + $0x9a8] sm:$0x7]
      %v535 = vld [vmem:[%s219 + $0x9b0] sm:$0x7]
      %v536 = vld [vmem:[%s219 + $0x9b8] sm:$0x7]
      %v537 = vld [vmem:[%s219 + $0x9c0] sm:$0x7]
      %v538 = vld [vmem:[%s219 + $0x9c8] sm:$0x7]
      %v539 = vld [vmem:[%s219 + $0x9d0] sm:$0x7]
      %v540 = vld [vmem:[%s219 + $0x9d8] sm:$0x7]
      %v541 = vld [vmem:[%s219 + $0x9e0] sm:$0x7]
      %v542 = vld [vmem:[%s219 + $0x9e8] sm:$0x7]
      %v543 = vld [vmem:[%s219 + $0x9f0] sm:$0x7]
      %v544 = vld [vmem:[%s219 + $0x9f8] sm:$0x7]
      %v545 = vld [vmem:[%s1] sm:$0xff]
      %v546 = vld [vmem:[%s1 + $0x8] sm:$0xff]
      %v547 = vld [vmem:[%s2] sm:$0xff]
      %v548 = vld [vmem:[%s2 + $0x8] sm:$0xff]
      %550 = vset.pattern.permute.xlu0 0
      %551 = vperm.xlu0 %550, %v547
      %v552 = vpop.permute.xlu0 %551
      %555 = vset.pattern.permute.xlu0 0
      %556 = vperm.xlu0 %555, %v548
      %v557 = vpop.permute.xlu0 %556
      %vm559 = vcmask 220160
      %v561 = vsel %vm559, %v545, 0
      %v564 = vsel %vm559, %v546, 0
      %vm566 = vcmask 1042432
      %v568 = vsel %vm566, %v465, 0
      %v571 = vsel %vm566, %v466, 0
      %v574 = vsel %vm566, %v467, 0
      %v577 = vsel %vm566, %v468, 0
      %v580 = vsel %vm566, %v469, 0
      %v583 = vsel %vm566, %v470, 0
      %v586 = vsel %vm566, %v471, 0
      %v589 = vsel %vm566, %v472, 0
      %v592 = vsel %vm566, %v473, 0
      %v595 = vsel %vm566, %v474, 0
      %v598 = vsel %vm566, %v475, 0
      %v601 = vsel %vm566, %v476, 0
      %v604 = vsel %vm566, %v477, 0
      %v607 = vsel %vm566, %v478, 0
      %v610 = vsel %vm566, %v479, 0
      %v613 = vsel %vm566, %v480, 0
      %v616 = vsel %vm566, %v481, 0
      %v619 = vsel %vm566, %v482, 0
      %v622 = vsel %vm566, %v483, 0
      %v625 = vsel %vm566, %v484, 0
      %v628 = vsel %vm566, %v485, 0
      %v631 = vsel %vm566, %v486, 0
      %v634 = vsel %vm566, %v487, 0
      %v637 = vsel %vm566, %v488, 0
      %v640 = vsel %vm566, %v489, 0
      %v643 = vsel %vm566, %v490, 0
      %v646 = vsel %vm566, %v491, 0
      %v649 = vsel %vm566, %v492, 0
      %v652 = vsel %vm566, %v493, 0
      %v655 = vsel %vm566, %v494, 0
      %v658 = vsel %vm566, %v495, 0
      %v661 = vsel %vm566, %v496, 0
      %v664 = vsel %vm566, %v497, 0
      %v667 = vsel %vm566, %v498, 0
      %v670 = vsel %vm566, %v499, 0
      %v673 = vsel %vm566, %v500, 0
      %v676 = vsel %vm566, %v501, 0
      %v679 = vsel %vm566, %v502, 0
      %v682 = vsel %vm566, %v503, 0
      %v685 = vsel %vm566, %v504, 0
      %v688 = vsel %vm566, %v505, 0
      %v691 = vsel %vm566, %v506, 0
      %v694 = vsel %vm566, %v507, 0
      %v697 = vsel %vm566, %v508, 0
      %v700 = vsel %vm566, %v509, 0
      %v703 = vsel %vm566, %v510, 0
      %v706 = vsel %vm566, %v511, 0
      %v709 = vsel %vm566, %v512, 0
      %v712 = vsel %vm566, %v513, 0
      %v715 = vsel %vm566, %v514, 0
      %v718 = vsel %vm566, %v515, 0
      %v721 = vsel %vm566, %v516, 0
      %v724 = vsel %vm566, %v517, 0
      %v727 = vsel %vm566, %v518, 0
      %v730 = vsel %vm566, %v519, 0
      %v733 = vsel %vm566, %v520, 0
      %v736 = vsel %vm566, %v521, 0
      %v739 = vsel %vm566, %v522, 0
      %v742 = vsel %vm566, %v523, 0
      %v745 = vsel %vm566, %v524, 0
      %v748 = vsel %vm566, %v525, 0
      %v751 = vsel %vm566, %v526, 0
      %v754 = vsel %vm566, %v527, 0
      %v757 = vsel %vm566, %v528, 0
      %v760 = vsel %vm566, %v529, 0
      %v763 = vsel %vm566, %v530, 0
      %v766 = vsel %vm566, %v531, 0
      %v769 = vsel %vm566, %v532, 0
      %v772 = vsel %vm566, %v533, 0
      %v775 = vsel %vm566, %v534, 0
      %v778 = vsel %vm566, %v535, 0
      %v781 = vsel %vm566, %v536, 0
      %v784 = vsel %vm566, %v537, 0
      %v787 = vsel %vm566, %v538, 0
      %v790 = vsel %vm566, %v539, 0
      %v793 = vsel %vm566, %v540, 0
      %v796 = vsel %vm566, %v541, 0
      %v799 = vsel %vm566, %v542, 0
      %v802 = vsel %vm566, %v543, 0
      %v805 = vsel %vm566, %v544, 0
      %807 = vmatprep.subr.mxu0 %v226
      %808 = vmatpush1.msra.mxu0 %v225
      %809 = vmatprep.subr.mxu0 %v306
      %810 = vmatpush1.msra.mxu0 %v305
      %811 = vmatprep.subr.mxu0 %v386
      %812 = vmatpush1.msra.mxu0 %v385
      %813 = vmatprep.subr.mxu0 %v571
      %814 = vmatpush1.msra.mxu0 %v568
      %815 = vmatprep.subr.mxu0 0.0
      %816 = vmatpush1.msra.mxu0 0.0
      %817 = vmatprep.subr.mxu0 0.0
      %818 = vmatpush1.msra.mxu0 0.0
      %819 = vmatprep.subr.mxu0 0.0
      %820 = vmatpush1.msra.mxu0 0.0
      %821 = vmatprep.subr.mxu0 0.0
      %822 = vmatpush1.msra.mxu0 0.0
      %823 = vmatprep.subr.mxu0 0.0
      %824 = vmatpush1.msra.mxu0 0.0
      %825 = vmatprep.subr.mxu0 0.0
      %826 = vmatpush1.msra.mxu0 0.0
      %827 = vmatprep.subr.mxu0 0.0
      %828 = vmatpush1.msra.mxu0 0.0
      %829 = vmatprep.subr.mxu0 0.0
      %830 = vmatpush1.msra.mxu0 0.0
      %831 = vmatprep.subr.mxu0 0.0
      %832 = vmatpush1.msra.mxu0 0.0
      %833 = vmatprep.subr.mxu0 0.0
      %834 = vmatpush1.msra.mxu0 0.0
      %835 = vmatprep.subr.mxu0 0.0
      %836 = vmatpush1.msra.mxu0 0.0
      %837 = vmatprep.subr.mxu0 0.0
      %838 = vmatpush1.msra.mxu0 0.0
      %839 = vmatprep.subr.mxu0 0.0
      %840 = vmatpush1.msra.mxu0 0.0
      %841 = vmatprep.subr.mxu0 0.0
      %842 = vmatpush1.msra.mxu0 0.0
      %843 = vmatprep.subr.mxu0 0.0
      %844 = vmatpush1.msra.mxu0 0.0
      %845 = vmatprep.subr.mxu0 0.0
      %846 = vmatpush1.msra.mxu0 0.0
      %847 = vmatprep.subr.mxu0 0.0
      %848 = vmatpush1.msra.mxu0 0.0
      %849 = vmatprep.subr.mxu0 0.0
      %850 = vmatpush1.msra.mxu0 0.0
      %851 = vmatprep.subr.mxu0 0.0
      %852 = vmatpush1.msra.mxu0 0.0
      %853 = vmatprep.subr.mxu0 0.0
      %854 = vmatpush1.msra.mxu0 0.0
      %855 = vmatprep.subr.mxu0 0.0
      %856 = vmatpush1.msra.mxu0 0.0
      %857 = vmatprep.subr.mxu0 0.0
      %858 = vmatpush1.msra.mxu0 0.0
      %859 = vmatprep.subr.mxu0 0.0
      %860 = vmatpush1.msra.mxu0 0.0
      %861 = vmatprep.subr.mxu0 0.0
      %862 = vmatpush1.msra.mxu0 0.0
      %863 = vmatprep.subr.mxu0 0.0
      %864 = vmatpush1.msra.mxu0 0.0
      %865 = vmatprep.subr.mxu0 0.0
      %866 = vmatpush1.msra.mxu0 0.0
      %867 = vmatprep.subr.mxu0 0.0
      %868 = vmatpush1.msra.mxu0 0.0
      %869 = vmatprep.subr.mxu0 0.0
      %870 = vmatpush1.msra.mxu0 0.0
      %871 = vmatprep.mubr.f32.mxu0 0.0
      %872 = vmatmul.mubr.f32.gmra.mrb[0].mxu0 %v561
      %v873 = vpop.f32.mrb[0].mxu0
      %v874 = vadd.f32 %v552, %v873
      %v875 = vpop.f32.mrb[0].mxu0
      %v876 = vadd.f32 %v552, %v875
      %877 = vmatprep.mubr.f32.mxu0 0.0
      %878 = vmatmul.mubr.f32.gmra.mrb[0].mxu0 %v564
      %v879 = vpop.f32.mrb[0].mxu0
      %v880 = vadd.f32 %v557, %v879
      %v881 = vpop.f32.mrb[0].mxu0
      %v882 = vadd.f32 %v557, %v881
      %883 = vdwg.mxu0
      %884 = vmatprep.subr.mxu0 %v228
      %885 = vmatpush1.msra.mxu0 %v227
      %886 = vmatprep.subr.mxu0 %v308
      %887 = vmatpush1.msra.mxu0 %v307
      %888 = vmatprep.subr.mxu0 %v388
      %889 = vmatpush1.msra.mxu0 %v387
      %890 = vmatprep.subr.mxu0 %v577
      %891 = vmatpush1.msra.mxu0 %v574
      %892 = vmatprep.subr.mxu0 0.0
      %893 = vmatpush1.msra.mxu0 0.0
      %894 = vmatprep.subr.mxu0 0.0
      %895 = vmatpush1.msra.mxu0 0.0
      %896 = vmatprep.subr.mxu0 0.0
      %897 = vmatpush1.msra.mxu0 0.0
      %898 = vmatprep.subr.mxu0 0.0
      %899 = vmatpush1.msra.mxu0 0.0
      %900 = vmatprep.subr.mxu0 0.0
      %901 = vmatpush1.msra.mxu0 0.0
      %902 = vmatprep.subr.mxu0 0.0
      %903 = vmatpush1.msra.mxu0 0.0
      %904 = vmatprep.subr.mxu0 0.0
      %905 = vmatpush1.msra.mxu0 0.0
      %906 = vmatprep.subr.mxu0 0.0
      %907 = vmatpush1.msra.mxu0 0.0
      %908 = vmatprep.subr.mxu0 0.0
      %909 = vmatpush1.msra.mxu0 0.0
      %910 = vmatprep.subr.mxu0 0.0
      %911 = vmatpush1.msra.mxu0 0.0
      %912 = vmatprep.subr.mxu0 0.0
      %913 = vmatpush1.msra.mxu0 0.0
      %914 = vmatprep.subr.mxu0 0.0
      %915 = vmatpush1.msra.mxu0 0.0
      %916 = vmatprep.subr.mxu0 0.0
      %917 = vmatpush1.msra.mxu0 0.0
      %918 = vmatprep.subr.mxu0 0.0
      %919 = vmatpush1.msra.mxu0 0.0
      %920 = vmatprep.subr.mxu0 0.0
      %921 = vmatpush1.msra.mxu0 0.0
      %922 = vmatprep.subr.mxu0 0.0
      %923 = vmatpush1.msra.mxu0 0.0
      %924 = vmatprep.subr.mxu0 0.0
      %925 = vmatpush1.msra.mxu0 0.0
      %926 = vmatprep.subr.mxu0 0.0
      %927 = vmatpush1.msra.mxu0 0.0
      %928 = vmatprep.subr.mxu0 0.0
      %929 = vmatpush1.msra.mxu0 0.0
      %930 = vmatprep.subr.mxu0 0.0
      %931 = vmatpush1.msra.mxu0 0.0
      %932 = vmatprep.subr.mxu0 0.0
      %933 = vmatpush1.msra.mxu0 0.0
      %934 = vmatprep.subr.mxu0 0.0
      %935 = vmatpush1.msra.mxu0 0.0
      %936 = vmatprep.subr.mxu0 0.0
      %937 = vmatpush1.msra.mxu0 0.0
      %938 = vmatprep.subr.mxu0 0.0
      %939 = vmatpush1.msra.mxu0 0.0
      %940 = vmatprep.subr.mxu0 0.0
      %941 = vmatpush1.msra.mxu0 0.0
      %942 = vmatprep.subr.mxu0 0.0
      %943 = vmatpush1.msra.mxu0 0.0
      %944 = vmatprep.subr.mxu0 0.0
      %945 = vmatpush1.msra.mxu0 0.0
      %946 = vmatprep.subr.mxu0 0.0
      %947 = vmatpush1.msra.mxu0 0.0
      %948 = vmatprep.mubr.f32.mxu0 0.0
      %949 = vmatmul.mubr.f32.gmra.mrb[0].mxu0 %v561
      %v950 = vpop.f32.mrb[0].mxu0
      %v951 = vadd.f32 %v552, %v950
      %v952 = vpop.f32.mrb[0].mxu0
      %v953 = vadd.f32 %v552, %v952
      %954 = vmatprep.mubr.f32.mxu0 0.0
      %955 = vmatmul.mubr.f32.gmra.mrb[0].mxu0 %v564
      %v956 = vpop.f32.mrb[0].mxu0
      %v957 = vadd.f32 %v557, %v956
      %v958 = vpop.f32.mrb[0].mxu0
      %v959 = vadd.f32 %v557, %v958
      %960 = vdwg.mxu0
      %961 = vmatprep.subr.mxu0 %v230
      %962 = vmatpush1.msra.mxu0 %v229
      %963 = vmatprep.subr.mxu0 %v310
      %964 = vmatpush1.msra.mxu0 %v309
      %965 = vmatprep.subr.mxu0 %v390
      %966 = vmatpush1.msra.mxu0 %v389
      %967 = vmatprep.subr.mxu0 %v583
      %968 = vmatpush1.msra.mxu0 %v580
      %969 = vmatprep.subr.mxu0 0.0
      %970 = vmatpush1.msra.mxu0 0.0
      %971 = vmatprep.subr.mxu0 0.0
      %972 = vmatpush1.msra.mxu0 0.0
      %973 = vmatprep.subr.mxu0 0.0
      %974 = vmatpush1.msra.mxu0 0.0
      %975 = vmatprep.subr.mxu0 0.0
      %976 = vmatpush1.msra.mxu0 0.0
      %977 = vmatprep.subr.mxu0 0.0
      %978 = vmatpush1.msra.mxu0 0.0
      %979 = vmatprep.subr.mxu0 0.0
      %980 = vmatpush1.msra.mxu0 0.0
      %981 = vmatprep.subr.mxu0 0.0
      %982 = vmatpush1.msra.mxu0 0.0
      %983 = vmatprep.subr.mxu0 0.0
      %984 = vmatpush1.msra.mxu0 0.0
      %985 = vmatprep.subr.mxu0 0.0
      %986 = vmatpush1.msra.mxu0 0.0
      %987 = vmatprep.subr.mxu0 0.0
      %988 = vmatpush1.msra.mxu0 0.0
      %989 = vmatprep.subr.mxu0 0.0
      %990 = vmatpush1.msra.mxu0 0.0
      %991 = vmatprep.subr.mxu0 0.0
      %992 = vmatpush1.msra.mxu0 0.0
      %993 = vmatprep.subr.mxu0 0.0
      %994 = vmatpush1.msra.mxu0 0.0
      %995 = vmatprep.subr.mxu0 0.0
      %996 = vmatpush1.msra.mxu0 0.0
      %997 = vmatprep.subr.mxu0 0.0
      %998 = vmatpush1.msra.mxu0 0.0
      %999 = vmatprep.subr.mxu0 0.0
      %1000 = vmatpush1.msra.mxu0 0.0
      %1001 = vmatprep.subr.mxu0 0.0
      %1002 = vmatpush1.msra.mxu0 0.0
      %1003 = vmatprep.subr.mxu0 0.0
      %1004 = vmatpush1.msra.mxu0 0.0
      %1005 = vmatprep.subr.mxu0 0.0
      %1006 = vmatpush1.msra.mxu0 0.0
      %1007 = vmatprep.subr.mxu0 0.0
      %1008 = vmatpush1.msra.mxu0 0.0
      %1009 = vmatprep.subr.mxu0 0.0
      %1010 = vmatpush1.msra.mxu0 0.0
      %1011 = vmatprep.subr.mxu0 0.0
      %1012 = vmatpush1.msra.mxu0 0.0
      %1013 = vmatprep.subr.mxu0 0.0
      %1014 = vmatpush1.msra.mxu0 0.0
      %1015 = vmatprep.subr.mxu0 0.0
      %1016 = vmatpush1.msra.mxu0 0.0
      %1017 = vmatprep.subr.mxu0 0.0
      %1018 = vmatpush1.msra.mxu0 0.0
      %1019 = vmatprep.subr.mxu0 0.0
      %1020 = vmatpush1.msra.mxu0 0.0
      %1021 = vmatprep.subr.mxu0 0.0
      %1022 = vmatpush1.msra.mxu0 0.0
      %1023 = vmatprep.subr.mxu0 0.0
      %1024 = vmatpush1.msra.mxu0 0.0
      %1025 = vmatprep.mubr.f32.mxu0 0.0
      %1026 = vmatmul.mubr.f32.gmra.mrb[0].mxu0 %v561
      %v1027 = vpop.f32.mrb[0].mxu0
      %v1028 = vadd.f32 %v552, %v1027
      %v1029 = vpop.f32.mrb[0].mxu0
      %v1030 = vadd.f32 %v552, %v1029
      %1031 = vmatprep.mubr.f32.mxu0 0.0
      %1032 = vmatmul.mubr.f32.gmra.mrb[0].mxu0 %v564
      %v1033 = vpop.f32.mrb[0].mxu0
      %v1034 = vadd.f32 %v557, %v1033
      %v1035 = vpop.f32.mrb[0].mxu0
      %v1036 = vadd.f32 %v557, %v1035
      %1037 = vdwg.mxu0
      %1038 = vmatprep.subr.mxu0 %v232
      %1039 = vmatpush1.msra.mxu0 %v231
      %1040 = vmatprep.subr.mxu0 %v312
      %1041 = vmatpush1.msra.mxu0 %v311
      %1042 = vmatprep.subr.mxu0 %v392
      %1043 = vmatpush1.msra.mxu0 %v391
      %1044 = vmatprep.subr.mxu0 %v589
      %1045 = vmatpush1.msra.mxu0 %v586
      %1046 = vmatprep.subr.mxu0 0.0
      %1047 = vmatpush1.msra.mxu0 0.0
      %1048 = vmatprep.subr.mxu0 0.0
      %1049 = vmatpush1.msra.mxu0 0.0
      %1050 = vmatprep.subr.mxu0 0.0
      %1051 = vmatpush1.msra.mxu0 0.0
      %1052 = vmatprep.subr.mxu0 0.0
      %1053 = vmatpush1.msra.mxu0 0.0
      %1054 = vmatprep.subr.mxu0 0.0
      %1055 = vmatpush1.msra.mxu0 0.0
      %1056 = vmatprep.subr.mxu0 0.0
      %1057 = vmatpush1.msra.mxu0 0.0
      %1058 = vmatprep.subr.mxu0 0.0
      %1059 = vmatpush1.msra.mxu0 0.0
      %1060 = vmatprep.subr.mxu0 0.0
      %1061 = vmatpush1.msra.mxu0 0.0
      %1062 = vmatprep.subr.mxu0 0.0
      %1063 = vmatpush1.msra.mxu0 0.0
      %1064 = vmatprep.subr.mxu0 0.0
      %1065 = vmatpush1.msra.mxu0 0.0
      %1066 = vmatprep.subr.mxu0 0.0
      %1067 = vmatpush1.msra.mxu0 0.0
      %1068 = vmatprep.subr.mxu0 0.0
      %1069 = vmatpush1.msra.mxu0 0.0
      %1070 = vmatprep.subr.mxu0 0.0
      %1071 = vmatpush1.msra.mxu0 0.0
      %1072 = vmatprep.subr.mxu0 0.0
      %1073 = vmatpush1.msra.mxu0 0.0
      %1074 = vmatprep.subr.mxu0 0.0
      %1075 = vmatpush1.msra.mxu0 0.0
      %1076 = vmatprep.subr.mxu0 0.0
      %1077 = vmatpush1.msra.mxu0 0.0
      %1078 = vmatprep.subr.mxu0 0.0
      %1079 = vmatpush1.msra.mxu0 0.0
      %1080 = vmatprep.subr.mxu0 0.0
      %1081 = vmatpush1.msra.mxu0 0.0
      %1082 = vmatprep.subr.mxu0 0.0
      %1083 = vmatpush1.msra.mxu0 0.0
      %1084 = vmatprep.subr.mxu0 0.0
      %1085 = vmatpush1.msra.mxu0 0.0
      %1086 = vmatprep.subr.mxu0 0.0
      %1087 = vmatpush1.msra.mxu0 0.0
      %1088 = vmatprep.subr.mxu0 0.0
      %1089 = vmatpush1.msra.mxu0 0.0
      %1090 = vmatprep.subr.mxu0 0.0
      %1091 = vmatpush1.msra.mxu0 0.0
      %1092 = vmatprep.subr.mxu0 0.0
      %1093 = vmatpush1.msra.mxu0 0.0
      %1094 = vmatprep.subr.mxu0 0.0
      %1095 = vmatpush1.msra.mxu0 0.0
      %1096 = vmatprep.subr.mxu0 0.0
      %1097 = vmatpush1.msra.mxu0 0.0
      %1098 = vmatprep.subr.mxu0 0.0
      %1099 = vmatpush1.msra.mxu0 0.0
      %1100 = vmatprep.subr.mxu0 0.0
      %1101 = vmatpush1.msra.mxu0 0.0
      %1102 = vmatprep.mubr.f32.mxu0 0.0
      %1103 = vmatmul.mubr.f32.gmra.mrb[0].mxu0 %v561
      %v1104 = vpop.f32.mrb[0].mxu0
      %v1105 = vadd.f32 %v552, %v1104
      %v1106 = vpop.f32.mrb[0].mxu0
      %v1107 = vadd.f32 %v552, %v1106
      %1108 = vmatprep.mubr.f32.mxu0 0.0
      %1109 = vmatmul.mubr.f32.gmra.mrb[0].mxu0 %v564
      %v1110 = vpop.f32.mrb[0].mxu0
      %v1111 = vadd.f32 %v557, %v1110
      %v1112 = vpop.f32.mrb[0].mxu0
      %v1113 = vadd.f32 %v557, %v1112
      %1114 = vdwg.mxu0
      %1115 = vmatprep.subr.mxu0 %v234
      %1116 = vmatpush1.msra.mxu0 %v233
      %1117 = vmatprep.subr.mxu0 %v314
      %1118 = vmatpush1.msra.mxu0 %v313
      %1119 = vmatprep.subr.mxu0 %v394
      %1120 = vmatpush1.msra.mxu0 %v393
      %1121 = vmatprep.subr.mxu0 %v595
      %1122 = vmatpush1.msra.mxu0 %v592
      %1123 = vmatprep.subr.mxu0 0.0
      %1124 = vmatpush1.msra.mxu0 0.0
      %1125 = vmatprep.subr.mxu0 0.0
      %1126 = vmatpush1.msra.mxu0 0.0
      %1127 = vmatprep.subr.mxu0 0.0
      %1128 = vmatpush1.msra.mxu0 0.0
      %1129 = vmatprep.subr.mxu0 0.0
      %1130 = vmatpush1.msra.mxu0 0.0
      %1131 = vmatprep.subr.mxu0 0.0
      %1132 = vmatpush1.msra.mxu0 0.0
      %1133 = vmatprep.subr.mxu0 0.0
      %1134 = vmatpush1.msra.mxu0 0.0
      %1135 = vmatprep.subr.mxu0 0.0
      %1136 = vmatpush1.msra.mxu0 0.0
      %1137 = vmatprep.subr.mxu0 0.0
      %1138 = vmatpush1.msra.mxu0 0.0
      %1139 = vmatprep.subr.mxu0 0.0
      %1140 = vmatpush1.msra.mxu0 0.0
      %1141 = vmatprep.subr.mxu0 0.0
      %1142 = vmatpush1.msra.mxu0 0.0
      %1143 = vmatprep.subr.mxu0 0.0
      %1144 = vmatpush1.msra.mxu0 0.0
      %1145 = vmatprep.subr.mxu0 0.0
      %1146 = vmatpush1.msra.mxu0 0.0
      %1147 = vmatprep.subr.mxu0 0.0
      %1148 = vmatpush1.msra.mxu0 0.0
      %1149 = vmatprep.subr.mxu0 0.0
      %1150 = vmatpush1.msra.mxu0 0.0
      %1151 = vmatprep.subr.mxu0 0.0
      %1152 = vmatpush1.msra.mxu0 0.0
      %1153 = vmatprep.subr.mxu0 0.0
      %1154 = vmatpush1.msra.mxu0 0.0
      %1155 = vmatprep.subr.mxu0 0.0
      %1156 = vmatpush1.msra.mxu0 0.0
      %1157 = vmatprep.subr.mxu0 0.0
      %1158 = vmatpush1.msra.mxu0 0.0
      %1159 = vmatprep.subr.mxu0 0.0
      %1160 = vmatpush1.msra.mxu0 0.0
      %1161 = vmatprep.subr.mxu0 0.0
      %1162 = vmatpush1.msra.mxu0 0.0
      %1163 = vmatprep.subr.mxu0 0.0
      %1164 = vmatpush1.msra.mxu0 0.0
      %1165 = vmatprep.subr.mxu0 0.0
      %1166 = vmatpush1.msra.mxu0 0.0
      %1167 = vmatprep.subr.mxu0 0.0
      %1168 = vmatpush1.msra.mxu0 0.0
      %1169 = vmatprep.subr.mxu0 0.0
      %1170 = vmatpush1.msra.mxu0 0.0
      %1171 = vmatprep.subr.mxu0 0.0
      %1172 = vmatpush1.msra.mxu0 0.0
      %1173 = vmatprep.subr.mxu0 0.0
      %1174 = vmatpush1.msra.mxu0 0.0
      %1175 = vmatprep.subr.mxu0 0.0
      %1176 = vmatpush1.msra.mxu0 0.0
      %1177 = vmatprep.subr.mxu0 0.0
      %1178 = vmatpush1.msra.mxu0 0.0
      %1179 = vmatprep.mubr.f32.mxu0 0.0
      %1180 = vmatmul.mubr.f32.gmra.mrb[0].mxu0 %v561
      %v1181 = vpop.f32.mrb[0].mxu0
      %v1182 = vadd.f32 %v552, %v1181
      %v1183 = vpop.f32.mrb[0].mxu0
      %v1184 = vadd.f32 %v552, %v1183
      %1185 = vmatprep.mubr.f32.mxu0 0.0
      %1186 = vmatmul.mubr.f32.gmra.mrb[0].mxu0 %v564
      %v1187 = vpop.f32.mrb[0].mxu0
      %v1188 = vadd.f32 %v557, %v1187
      %v1189 = vpop.f32.mrb[0].mxu0
      %v1190 = vadd.f32 %v557, %v1189
      %1191 = vdwg.mxu0
      %1192 = vmatprep.subr.mxu0 %v236
      %1193 = vmatpush1.msra.mxu0 %v235
      %1194 = vmatprep.subr.mxu0 %v316
      %1195 = vmatpush1.msra.mxu0 %v315
      %1196 = vmatprep.subr.mxu0 %v396
      %1197 = vmatpush1.msra.mxu0 %v395
      %1198 = vmatprep.subr.mxu0 %v601
      %1199 = vmatpush1.msra.mxu0 %v598
      %1200 = vmatprep.subr.mxu0 0.0
      %1201 = vmatpush1.msra.mxu0 0.0
      %1202 = vmatprep.subr.mxu0 0.0
      %1203 = vmatpush1.msra.mxu0 0.0
      %1204 = vmatprep.subr.mxu0 0.0
      %1205 = vmatpush1.msra.mxu0 0.0
      %1206 = vmatprep.subr.mxu0 0.0
      %1207 = vmatpush1.msra.mxu0 0.0
      %1208 = vmatprep.subr.mxu0 0.0
      %1209 = vmatpush1.msra.mxu0 0.0
      %1210 = vmatprep.subr.mxu0 0.0
      %1211 = vmatpush1.msra.mxu0 0.0
      %1212 = vmatprep.subr.mxu0 0.0
      %1213 = vmatpush1.msra.mxu0 0.0
      %1214 = vmatprep.subr.mxu0 0.0
      %1215 = vmatpush1.msra.mxu0 0.0
      %1216 = vmatprep.subr.mxu0 0.0
      %1217 = vmatpush1.msra.mxu0 0.0
      %1218 = vmatprep.subr.mxu0 0.0
      %1219 = vmatpush1.msra.mxu0 0.0
      %1220 = vmatprep.subr.mxu0 0.0
      %1221 = vmatpush1.msra.mxu0 0.0
      %1222 = vmatprep.subr.mxu0 0.0
      %1223 = vmatpush1.msra.mxu0 0.0
      %1224 = vmatprep.subr.mxu0 0.0
      %1225 = vmatpush1.msra.mxu0 0.0
      %1226 = vmatprep.subr.mxu0 0.0
      %1227 = vmatpush1.msra.mxu0 0.0
      %1228 = vmatprep.subr.mxu0 0.0
      %1229 = vmatpush1.msra.mxu0 0.0
      %1230 = vmatprep.subr.mxu0 0.0
      %1231 = vmatpush1.msra.mxu0 0.0
      %1232 = vmatprep.subr.mxu0 0.0
      %1233 = vmatpush1.msra.mxu0 0.0
      %1234 = vmatprep.subr.mxu0 0.0
      %1235 = vmatpush1.msra.mxu0 0.0
      %1236 = vmatprep.subr.mxu0 0.0
      %1237 = vmatpush1.msra.mxu0 0.0
      %1238 = vmatprep.subr.mxu0 0.0
      %1239 = vmatpush1.msra.mxu0 0.0
      %1240 = vmatprep.subr.mxu0 0.0
      %1241 = vmatpush1.msra.mxu0 0.0
      %1242 = vmatprep.subr.mxu0 0.0
      %1243 = vmatpush1.msra.mxu0 0.0
      %1244 = vmatprep.subr.mxu0 0.0
      %1245 = vmatpush1.msra.mxu0 0.0
      %1246 = vmatprep.subr.mxu0 0.0
      %1247 = vmatpush1.msra.mxu0 0.0
      %1248 = vmatprep.subr.mxu0 0.0
      %1249 = vmatpush1.msra.mxu0 0.0
      %1250 = vmatprep.subr.mxu0 0.0
      %1251 = vmatpush1.msra.mxu0 0.0
      %1252 = vmatprep.subr.mxu0 0.0
      %1253 = vmatpush1.msra.mxu0 0.0
      %1254 = vmatprep.subr.mxu0 0.0
      %1255 = vmatpush1.msra.mxu0 0.0
      %1256 = vmatprep.mubr.f32.mxu0 0.0
      %1257 = vmatmul.mubr.f32.gmra.mrb[0].mxu0 %v561
      %v1258 = vpop.f32.mrb[0].mxu0
      %v1259 = vadd.f32 %v552, %v1258
      %v1260 = vpop.f32.mrb[0].mxu0
      %v1261 = vadd.f32 %v552, %v1260
      %1262 = vmatprep.mubr.f32.mxu0 0.0
      %1263 = vmatmul.mubr.f32.gmra.mrb[0].mxu0 %v564
      %v1264 = vpop.f32.mrb[0].mxu0
      %v1265 = vadd.f32 %v557, %v1264
      %v1266 = vpop.f32.mrb[0].mxu0
      %v1267 = vadd.f32 %v557, %v1266
      %1268 = vdwg.mxu0
      %1269 = vmatprep.subr.mxu0 %v238
      %1270 = vmatpush1.msra.mxu0 %v237
      %1271 = vmatprep.subr.mxu0 %v318
      %1272 = vmatpush1.msra.mxu0 %v317
      %1273 = vmatprep.subr.mxu0 %v398
      %1274 = vmatpush1.msra.mxu0 %v397
      %1275 = vmatprep.subr.mxu0 %v607
      %1276 = vmatpush1.msra.mxu0 %v604
      %1277 = vmatprep.subr.mxu0 0.0
      %1278 = vmatpush1.msra.mxu0 0.0
      %1279 = vmatprep.subr.mxu0 0.0
      %1280 = vmatpush1.msra.mxu0 0.0
      %1281 = vmatprep.subr.mxu0 0.0
      %1282 = vmatpush1.msra.mxu0 0.0
      %1283 = vmatprep.subr.mxu0 0.0
      %1284 = vmatpush1.msra.mxu0 0.0
      %1285 = vmatprep.subr.mxu0 0.0
      %1286 = vmatpush1.msra.mxu0 0.0
      %1287 = vmatprep.subr.mxu0 0.0
      %1288 = vmatpush1.msra.mxu0 0.0
      %1289 = vmatprep.subr.mxu0 0.0
      %1290 = vmatpush1.msra.mxu0 0.0
      %1291 = vmatprep.subr.mxu0 0.0
      %1292 = vmatpush1.msra.mxu0 0.0
      %1293 = vmatprep.subr.mxu0 0.0
      %1294 = vmatpush1.msra.mxu0 0.0
      %1295 = vmatprep.subr.mxu0 0.0
      %1296 = vmatpush1.msra.mxu0 0.0
      %1297 = vmatprep.subr.mxu0 0.0
      %1298 = vmatpush1.msra.mxu0 0.0
      %1299 = vmatprep.subr.mxu0 0.0
      %1300 = vmatpush1.msra.mxu0 0.0
      %1301 = vmatprep.subr.mxu0 0.0
      %1302 = vmatpush1.msra.mxu0 0.0
      %1303 = vmatprep.subr.mxu0 0.0
      %1304 = vmatpush1.msra.mxu0 0.0
      %1305 = vmatprep.subr.mxu0 0.0
      %1306 = vmatpush1.msra.mxu0 0.0
      %1307 = vmatprep.subr.mxu0 0.0
      %1308 = vmatpush1.msra.mxu0 0.0
      %1309 = vmatprep.subr.mxu0 0.0
      %1310 = vmatpush1.msra.mxu0 0.0
      %1311 = vmatprep.subr.mxu0 0.0
      %1312 = vmatpush1.msra.mxu0 0.0
      %1313 = vmatprep.subr.mxu0 0.0
      %1314 = vmatpush1.msra.mxu0 0.0
      %1315 = vmatprep.subr.mxu0 0.0
      %1316 = vmatpush1.msra.mxu0 0.0
      %1317 = vmatprep.subr.mxu0 0.0
      %1318 = vmatpush1.msra.mxu0 0.0
      %1319 = vmatprep.subr.mxu0 0.0
      %1320 = vmatpush1.msra.mxu0 0.0
      %1321 = vmatprep.subr.mxu0 0.0
      %1322 = vmatpush1.msra.mxu0 0.0
      %1323 = vmatprep.subr.mxu0 0.0
      %1324 = vmatpush1.msra.mxu0 0.0
      %1325 = vmatprep.subr.mxu0 0.0
      %1326 = vmatpush1.msra.mxu0 0.0
      %1327 = vmatprep.subr.mxu0 0.0
      %1328 = vmatpush1.msra.mxu0 0.0
      %1329 = vmatprep.subr.mxu0 0.0
      %1330 = vmatpush1.msra.mxu0 0.0
      %1331 = vmatprep.subr.mxu0 0.0
      %1332 = vmatpush1.msra.mxu0 0.0
      %1333 = vmatprep.mubr.f32.mxu0 0.0
      %1334 = vmatmul.mubr.f32.gmra.mrb[0].mxu0 %v561
      %v1335 = vpop.f32.mrb[0].mxu0
      %v1336 = vadd.f32 %v552, %v1335
      %v1337 = vpop.f32.mrb[0].mxu0
      %v1338 = vadd.f32 %v552, %v1337
      %1339 = vmatprep.mubr.f32.mxu0 0.0
      %1340 = vmatmul.mubr.f32.gmra.mrb[0].mxu0 %v564
      %v1341 = vpop.f32.mrb[0].mxu0
      %v1342 = vadd.f32 %v557, %v1341
      %v1343 = vpop.f32.mrb[0].mxu0
      %v1344 = vadd.f32 %v557, %v1343
      %1345 = vdwg.mxu0
      %1346 = vmatprep.subr.mxu0 %v240
      %1347 = vmatpush1.msra.mxu0 %v239
      %1348 = vmatprep.subr.mxu0 %v320
      %1349 = vmatpush1.msra.mxu0 %v319
      %1350 = vmatprep.subr.mxu0 %v400
      %1351 = vmatpush1.msra.mxu0 %v399
      %1352 = vmatprep.subr.mxu0 %v613
      %1353 = vmatpush1.msra.mxu0 %v610
      %1354 = vmatprep.subr.mxu0 0.0
      %1355 = vmatpush1.msra.mxu0 0.0
      %1356 = vmatprep.subr.mxu0 0.0
      %1357 = vmatpush1.msra.mxu0 0.0
      %1358 = vmatprep.subr.mxu0 0.0
      %1359 = vmatpush1.msra.mxu0 0.0
      %1360 = vmatprep.subr.mxu0 0.0
      %1361 = vmatpush1.msra.mxu0 0.0
      %1362 = vmatprep.subr.mxu0 0.0
      %1363 = vmatpush1.msra.mxu0 0.0
      %1364 = vmatprep.subr.mxu0 0.0
      %1365 = vmatpush1.msra.mxu0 0.0
      %1366 = vmatprep.subr.mxu0 0.0
      %1367 = vmatpush1.msra.mxu0 0.0
      %1368 = vmatprep.subr.mxu0 0.0
      %1369 = vmatpush1.msra.mxu0 0.0
      %1370 = vmatprep.subr.mxu0 0.0
      %1371 = vmatpush1.msra.mxu0 0.0
      %1372 = vmatprep.subr.mxu0 0.0
      %1373 = vmatpush1.msra.mxu0 0.0
      %1374 = vmatprep.subr.mxu0 0.0
      %1375 = vmatpush1.msra.mxu0 0.0
      %1376 = vmatprep.subr.mxu0 0.0
      %1377 = vmatpush1.msra.mxu0 0.0
      %1378 = vmatprep.subr.mxu0 0.0
      %1379 = vmatpush1.msra.mxu0 0.0
      %1380 = vmatprep.subr.mxu0 0.0
      %1381 = vmatpush1.msra.mxu0 0.0
      %1382 = vmatprep.subr.mxu0 0.0
      %1383 = vmatpush1.msra.mxu0 0.0
      %1384 = vmatprep.subr.mxu0 0.0
      %1385 = vmatpush1.msra.mxu0 0.0
      %1386 = vmatprep.subr.mxu0 0.0
      %1387 = vmatpush1.msra.mxu0 0.0
      %1388 = vmatprep.subr.mxu0 0.0
      %1389 = vmatpush1.msra.mxu0 0.0
      %1390 = vmatprep.subr.mxu0 0.0
      %1391 = vmatpush1.msra.mxu0 0.0
      %1392 = vmatprep.subr.mxu0 0.0
      %1393 = vmatpush1.msra.mxu0 0.0
      %1394 = vmatprep.subr.mxu0 0.0
      %1395 = vmatpush1.msra.mxu0 0.0
      %1396 = vmatprep.subr.mxu0 0.0
      %1397 = vmatpush1.msra.mxu0 0.0
      %1398 = vmatprep.subr.mxu0 0.0
      %1399 = vmatpush1.msra.mxu0 0.0
      %1400 = vmatprep.subr.mxu0 0.0
      %1401 = vmatpush1.msra.mxu0 0.0
      %1402 = vmatprep.subr.mxu0 0.0
      %1403 = vmatpush1.msra.mxu0 0.0
      %1404 = vmatprep.subr.mxu0 0.0
      %1405 = vmatpush1.msra.mxu0 0.0
      %1406 = vmatprep.subr.mxu0 0.0
      %1407 = vmatpush1.msra.mxu0 0.0
      %1408 = vmatprep.subr.mxu0 0.0
      %1409 = vmatpush1.msra.mxu0 0.0
      %1410 = vmatprep.mubr.f32.mxu0 0.0
      %1411 = vmatmul.mubr.f32.gmra.mrb[0].mxu0 %v561
      %v1412 = vpop.f32.mrb[0].mxu0
      %v1413 = vadd.f32 %v552, %v1412
      %v1414 = vpop.f32.mrb[0].mxu0
      %v1415 = vadd.f32 %v552, %v1414
      %1416 = vmatprep.mubr.f32.mxu0 0.0
      %1417 = vmatmul.mubr.f32.gmra.mrb[0].mxu0 %v564
      %v1418 = vpop.f32.mrb[0].mxu0
      %v1419 = vadd.f32 %v557, %v1418
      %v1420 = vpop.f32.mrb[0].mxu0
      %v1421 = vadd.f32 %v557, %v1420
      %1422 = vdwg.mxu0
      %1423 = vmatprep.subr.mxu0 %v242
      %1424 = vmatpush1.msra.mxu0 %v241
      %1425 = vmatprep.subr.mxu0 %v322
      %1426 = vmatpush1.msra.mxu0 %v321
      %1427 = vmatprep.subr.mxu0 %v402
      %1428 = vmatpush1.msra.mxu0 %v401
      %1429 = vmatprep.subr.mxu0 %v619
      %1430 = vmatpush1.msra.mxu0 %v616
      %1431 = vmatprep.subr.mxu0 0.0
      %1432 = vmatpush1.msra.mxu0 0.0
      %1433 = vmatprep.subr.mxu0 0.0
      %1434 = vmatpush1.msra.mxu0 0.0
      %1435 = vmatprep.subr.mxu0 0.0
      %1436 = vmatpush1.msra.mxu0 0.0
      %1437 = vmatprep.subr.mxu0 0.0
      %1438 = vmatpush1.msra.mxu0 0.0
      %1439 = vmatprep.subr.mxu0 0.0
      %1440 = vmatpush1.msra.mxu0 0.0
      %1441 = vmatprep.subr.mxu0 0.0
      %1442 = vmatpush1.msra.mxu0 0.0
      %1443 = vmatprep.subr.mxu0 0.0
      %1444 = vmatpush1.msra.mxu0 0.0
      %1445 = vmatprep.subr.mxu0 0.0
      %1446 = vmatpush1.msra.mxu0 0.0
      %1447 = vmatprep.subr.mxu0 0.0
      %1448 = vmatpush1.msra.mxu0 0.0
      %1449 = vmatprep.subr.mxu0 0.0
      %1450 = vmatpush1.msra.mxu0 0.0
      %1451 = vmatprep.subr.mxu0 0.0
      %1452 = vmatpush1.msra.mxu0 0.0
      %1453 = vmatprep.subr.mxu0 0.0
      %1454 = vmatpush1.msra.mxu0 0.0
      %1455 = vmatprep.subr.mxu0 0.0
      %1456 = vmatpush1.msra.mxu0 0.0
      %1457 = vmatprep.subr.mxu0 0.0
      %1458 = vmatpush1.msra.mxu0 0.0
      %1459 = vmatprep.subr.mxu0 0.0
      %1460 = vmatpush1.msra.mxu0 0.0
      %1461 = vmatprep.subr.mxu0 0.0
      %1462 = vmatpush1.msra.mxu0 0.0
      %1463 = vmatprep.subr.mxu0 0.0
      %1464 = vmatpush1.msra.mxu0 0.0
      %1465 = vmatprep.subr.mxu0 0.0
      %1466 = vmatpush1.msra.mxu0 0.0
      %1467 = vmatprep.subr.mxu0 0.0
      %1468 = vmatpush1.msra.mxu0 0.0
      %1469 = vmatprep.subr.mxu0 0.0
      %1470 = vmatpush1.msra.mxu0 0.0
      %1471 = vmatprep.subr.mxu0 0.0
      %1472 = vmatpush1.msra.mxu0 0.0
      %1473 = vmatprep.subr.mxu0 0.0
      %1474 = vmatpush1.msra.mxu0 0.0
      %1475 = vmatprep.subr.mxu0 0.0
      %1476 = vmatpush1.msra.mxu0 0.0
      %1477 = vmatprep.subr.mxu0 0.0
      %1478 = vmatpush1.msra.mxu0 0.0
      %1479 = vmatprep.subr.mxu0 0.0
      %1480 = vmatpush1.msra.mxu0 0.0
      %1481 = vmatprep.subr.mxu0 0.0
      %1482 = vmatpush1.msra.mxu0 0.0
      %1483 = vmatprep.subr.mxu0 0.0
      %1484 = vmatpush1.msra.mxu0 0.0
      %1485 = vmatprep.subr.mxu0 0.0
      %1486 = vmatpush1.msra.mxu0 0.0
      %1487 = vmatprep.mubr.f32.mxu0 0.0
      %1488 = vmatmul.mubr.f32.gmra.mrb[0].mxu0 %v561
      %v1489 = vpop.f32.mrb[0].mxu0
      %v1490 = vadd.f32 %v552, %v1489
      %v1491 = vpop.f32.mrb[0].mxu0
      %v1492 = vadd.f32 %v552, %v1491
      %1493 = vmatprep.mubr.f32.mxu0 0.0
      %1494 = vmatmul.mubr.f32.gmra.mrb[0].mxu0 %v564
      %v1495 = vpop.f32.mrb[0].mxu0
      %v1496 = vadd.f32 %v557, %v1495
      %v1497 = vpop.f32.mrb[0].mxu0
      %v1498 = vadd.f32 %v557, %v1497
      %1499 = vdwg.mxu0
      %1500 = vmatprep.subr.mxu0 %v244
      %1501 = vmatpush1.msra.mxu0 %v243
      %1502 = vmatprep.subr.mxu0 %v324
      %1503 = vmatpush1.msra.mxu0 %v323
      %1504 = vmatprep.subr.mxu0 %v404
      %1505 = vmatpush1.msra.mxu0 %v403
      %1506 = vmatprep.subr.mxu0 %v625
      %1507 = vmatpush1.msra.mxu0 %v622
      %1508 = vmatprep.subr.mxu0 0.0
      %1509 = vmatpush1.msra.mxu0 0.0
      %1510 = vmatprep.subr.mxu0 0.0
      %1511 = vmatpush1.msra.mxu0 0.0
      %1512 = vmatprep.subr.mxu0 0.0
      %1513 = vmatpush1.msra.mxu0 0.0
      %1514 = vmatprep.subr.mxu0 0.0
      %1515 = vmatpush1.msra.mxu0 0.0
      %1516 = vmatprep.subr.mxu0 0.0
      %1517 = vmatpush1.msra.mxu0 0.0
      %1518 = vmatprep.subr.mxu0 0.0
      %1519 = vmatpush1.msra.mxu0 0.0
      %1520 = vmatprep.subr.mxu0 0.0
      %1521 = vmatpush1.msra.mxu0 0.0
      %1522 = vmatprep.subr.mxu0 0.0
      %1523 = vmatpush1.msra.mxu0 0.0
      %1524 = vmatprep.subr.mxu0 0.0
      %1525 = vmatpush1.msra.mxu0 0.0
      %1526 = vmatprep.subr.mxu0 0.0
      %1527 = vmatpush1.msra.mxu0 0.0
      %1528 = vmatprep.subr.mxu0 0.0
      %1529 = vmatpush1.msra.mxu0 0.0
      %1530 = vmatprep.subr.mxu0 0.0
      %1531 = vmatpush1.msra.mxu0 0.0
      %1532 = vmatprep.subr.mxu0 0.0
      %1533 = vmatpush1.msra.mxu0 0.0
      %1534 = vmatprep.subr.mxu0 0.0
      %1535 = vmatpush1.msra.mxu0 0.0
      %1536 = vmatprep.subr.mxu0 0.0
      %1537 = vmatpush1.msra.mxu0 0.0
      %1538 = vmatprep.subr.mxu0 0.0
      %1539 = vmatpush1.msra.mxu0 0.0
      %1540 = vmatprep.subr.mxu0 0.0
      %1541 = vmatpush1.msra.mxu0 0.0
      %1542 = vmatprep.subr.mxu0 0.0
      %1543 = vmatpush1.msra.mxu0 0.0
      %1544 = vmatprep.subr.mxu0 0.0
      %1545 = vmatpush1.msra.mxu0 0.0
      %1546 = vmatprep.subr.mxu0 0.0
      %1547 = vmatpush1.msra.mxu0 0.0
      %1548 = vmatprep.subr.mxu0 0.0
      %1549 = vmatpush1.msra.mxu0 0.0
      %1550 = vmatprep.subr.mxu0 0.0
      %1551 = vmatpush1.msra.mxu0 0.0
      %1552 = vmatprep.subr.mxu0 0.0
      %1553 = vmatpush1.msra.mxu0 0.0
      %1554 = vmatprep.subr.mxu0 0.0
      %1555 = vmatpush1.msra.mxu0 0.0
      %1556 = vmatprep.subr.mxu0 0.0
      %1557 = vmatpush1.msra.mxu0 0.0
      %1558 = vmatprep.subr.mxu0 0.0
      %1559 = vmatpush1.msra.mxu0 0.0
      %1560 = vmatprep.subr.mxu0 0.0
      %1561 = vmatpush1.msra.mxu0 0.0
      %1562 = vmatprep.subr.mxu0 0.0
      %1563 = vmatpush1.msra.mxu0 0.0
      %1564 = vmatprep.mubr.f32.mxu0 0.0
      %1565 = vmatmul.mubr.f32.gmra.mrb[0].mxu0 %v561
      %v1566 = vpop.f32.mrb[0].mxu0
      %v1567 = vadd.f32 %v552, %v1566
      %v1568 = vpop.f32.mrb[0].mxu0
      %v1569 = vadd.f32 %v552, %v1568
      %1570 = vmatprep.mubr.f32.mxu0 0.0
      %1571 = vmatmul.mubr.f32.gmra.mrb[0].mxu0 %v564
      %v1572 = vpop.f32.mrb[0].mxu0
      %v1573 = vadd.f32 %v557, %v1572
      %v1574 = vpop.f32.mrb[0].mxu0
      %v1575 = vadd.f32 %v557, %v1574
      %1576 = vdwg.mxu0
      %1577 = vmatprep.subr.mxu0 %v246
      %1578 = vmatpush1.msra.mxu0 %v245
      %1579 = vmatprep.subr.mxu0 %v326
      %1580 = vmatpush1.msra.mxu0 %v325
      %1581 = vmatprep.subr.mxu0 %v406
      %1582 = vmatpush1.msra.mxu0 %v405
      %1583 = vmatprep.subr.mxu0 %v631
      %1584 = vmatpush1.msra.mxu0 %v628
      %1585 = vmatprep.subr.mxu0 0.0
      %1586 = vmatpush1.msra.mxu0 0.0
      %1587 = vmatprep.subr.mxu0 0.0
      %1588 = vmatpush1.msra.mxu0 0.0
      %1589 = vmatprep.subr.mxu0 0.0
      %1590 = vmatpush1.msra.mxu0 0.0
      %1591 = vmatprep.subr.mxu0 0.0
      %1592 = vmatpush1.msra.mxu0 0.0
      %1593 = vmatprep.subr.mxu0 0.0
      %1594 = vmatpush1.msra.mxu0 0.0
      %1595 = vmatprep.subr.mxu0 0.0
      %1596 = vmatpush1.msra.mxu0 0.0
      %1597 = vmatprep.subr.mxu0 0.0
      %1598 = vmatpush1.msra.mxu0 0.0
      %1599 = vmatprep.subr.mxu0 0.0
      %1600 = vmatpush1.msra.mxu0 0.0
      %1601 = vmatprep.subr.mxu0 0.0
      %1602 = vmatpush1.msra.mxu0 0.0
      %1603 = vmatprep.subr.mxu0 0.0
      %1604 = vmatpush1.msra.mxu0 0.0
      %1605 = vmatprep.subr.mxu0 0.0
      %1606 = vmatpush1.msra.mxu0 0.0
      %1607 = vmatprep.subr.mxu0 0.0
      %1608 = vmatpush1.msra.mxu0 0.0
      %1609 = vmatprep.subr.mxu0 0.0
      %1610 = vmatpush1.msra.mxu0 0.0
      %1611 = vmatprep.subr.mxu0 0.0
      %1612 = vmatpush1.msra.mxu0 0.0
      %1613 = vmatprep.subr.mxu0 0.0
      %1614 = vmatpush1.msra.mxu0 0.0
      %1615 = vmatprep.subr.mxu0 0.0
      %1616 = vmatpush1.msra.mxu0 0.0
      %1617 = vmatprep.subr.mxu0 0.0
      %1618 = vmatpush1.msra.mxu0 0.0
      %1619 = vmatprep.subr.mxu0 0.0
      %1620 = vmatpush1.msra.mxu0 0.0
      %1621 = vmatprep.subr.mxu0 0.0
      %1622 = vmatpush1.msra.mxu0 0.0
      %1623 = vmatprep.subr.mxu0 0.0
      %1624 = vmatpush1.msra.mxu0 0.0
      %1625 = vmatprep.subr.mxu0 0.0
      %1626 = vmatpush1.msra.mxu0 0.0
      %1627 = vmatprep.subr.mxu0 0.0
      %1628 = vmatpush1.msra.mxu0 0.0
      %1629 = vmatprep.subr.mxu0 0.0
      %1630 = vmatpush1.msra.mxu0 0.0
      %1631 = vmatprep.subr.mxu0 0.0
      %1632 = vmatpush1.msra.mxu0 0.0
      %1633 = vmatprep.subr.mxu0 0.0
      %1634 = vmatpush1.msra.mxu0 0.0
      %1635 = vmatprep.subr.mxu0 0.0
      %1636 = vmatpush1.msra.mxu0 0.0
      %1637 = vmatprep.subr.mxu0 0.0
      %1638 = vmatpush1.msra.mxu0 0.0
      %1639 = vmatprep.subr.mxu0 0.0
      %1640 = vmatpush1.msra.mxu0 0.0
      %1641 = vmatprep.mubr.f32.mxu0 0.0
      %1642 = vmatmul.mubr.f32.gmra.mrb[0].mxu0 %v561
      %v1643 = vpop.f32.mrb[0].mxu0
      %v1644 = vadd.f32 %v552, %v1643
      %v1645 = vpop.f32.mrb[0].mxu0
      %v1646 = vadd.f32 %v552, %v1645
      %1647 = vmatprep.mubr.f32.mxu0 0.0
      %1648 = vmatmul.mubr.f32.gmra.mrb[0].mxu0 %v564
      %v1649 = vpop.f32.mrb[0].mxu0
      %v1650 = vadd.f32 %v557, %v1649
      %v1651 = vpop.f32.mrb[0].mxu0
      %v1652 = vadd.f32 %v557, %v1651
      %1653 = vdwg.mxu0
      %1654 = vmatprep.subr.mxu0 %v248
      %1655 = vmatpush1.msra.mxu0 %v247
      %1656 = vmatprep.subr.mxu0 %v328
      %1657 = vmatpush1.msra.mxu0 %v327
      %1658 = vmatprep.subr.mxu0 %v408
      %1659 = vmatpush1.msra.mxu0 %v407
      %1660 = vmatprep.subr.mxu0 %v637
      %1661 = vmatpush1.msra.mxu0 %v634
      %1662 = vmatprep.subr.mxu0 0.0
      %1663 = vmatpush1.msra.mxu0 0.0
      %1664 = vmatprep.subr.mxu0 0.0
      %1665 = vmatpush1.msra.mxu0 0.0
      %1666 = vmatprep.subr.mxu0 0.0
      %1667 = vmatpush1.msra.mxu0 0.0
      %1668 = vmatprep.subr.mxu0 0.0
      %1669 = vmatpush1.msra.mxu0 0.0
      %1670 = vmatprep.subr.mxu0 0.0
      %1671 = vmatpush1.msra.mxu0 0.0
      %1672 = vmatprep.subr.mxu0 0.0
      %1673 = vmatpush1.msra.mxu0 0.0
      %1674 = vmatprep.subr.mxu0 0.0
      %1675 = vmatpush1.msra.mxu0 0.0
      %1676 = vmatprep.subr.mxu0 0.0
      %1677 = vmatpush1.msra.mxu0 0.0
      %1678 = vmatprep.subr.mxu0 0.0
      %1679 = vmatpush1.msra.mxu0 0.0
      %1680 = vmatprep.subr.mxu0 0.0
      %1681 = vmatpush1.msra.mxu0 0.0
      %1682 = vmatprep.subr.mxu0 0.0
      %1683 = vmatpush1.msra.mxu0 0.0
      %1684 = vmatprep.subr.mxu0 0.0
      %1685 = vmatpush1.msra.mxu0 0.0
      %1686 = vmatprep.subr.mxu0 0.0
      %1687 = vmatpush1.msra.mxu0 0.0
      %1688 = vmatprep.subr.mxu0 0.0
      %1689 = vmatpush1.msra.mxu0 0.0
      %1690 = vmatprep.subr.mxu0 0.0
      %1691 = vmatpush1.msra.mxu0 0.0
      %1692 = vmatprep.subr.mxu0 0.0
      %1693 = vmatpush1.msra.mxu0 0.0
      %1694 = vmatprep.subr.mxu0 0.0
      %1695 = vmatpush1.msra.mxu0 0.0
      %1696 = vmatprep.subr.mxu0 0.0
      %1697 = vmatpush1.msra.mxu0 0.0
      %1698 = vmatprep.subr.mxu0 0.0
      %1699 = vmatpush1.msra.mxu0 0.0
      %1700 = vmatprep.subr.mxu0 0.0
      %1701 = vmatpush1.msra.mxu0 0.0
      %1702 = vmatprep.subr.mxu0 0.0
      %1703 = vmatpush1.msra.mxu0 0.0
      %1704 = vmatprep.subr.mxu0 0.0
      %1705 = vmatpush1.msra.mxu0 0.0
      %1706 = vmatprep.subr.mxu0 0.0
      %1707 = vmatpush1.msra.mxu0 0.0
      %1708 = vmatprep.subr.mxu0 0.0
      %1709 = vmatpush1.msra.mxu0 0.0
      %1710 = vmatprep.subr.mxu0 0.0
      %1711 = vmatpush1.msra.mxu0 0.0
      %1712 = vmatprep.subr.mxu0 0.0
      %1713 = vmatpush1.msra.mxu0 0.0
      %1714 = vmatprep.subr.mxu0 0.0
      %1715 = vmatpush1.msra.mxu0 0.0
      %1716 = vmatprep.subr.mxu0 0.0
      %1717 = vmatpush1.msra.mxu0 0.0
      %1718 = vmatprep.mubr.f32.mxu0 0.0
      %1719 = vmatmul.mubr.f32.gmra.mrb[0].mxu0 %v561
      %v1720 = vpop.f32.mrb[0].mxu0
      %v1721 = vadd.f32 %v552, %v1720
      %v1722 = vpop.f32.mrb[0].mxu0
      %v1723 = vadd.f32 %v552, %v1722
      %1724 = vmatprep.mubr.f32.mxu0 0.0
      %1725 = vmatmul.mubr.f32.gmra.mrb[0].mxu0 %v564
      %v1726 = vpop.f32.mrb[0].mxu0
      %v1727 = vadd.f32 %v557, %v1726
      %v1728 = vpop.f32.mrb[0].mxu0
      %v1729 = vadd.f32 %v557, %v1728
      %1730 = vdwg.mxu0
      %1731 = vmatprep.subr.mxu0 %v250
      %1732 = vmatpush1.msra.mxu0 %v249
      %1733 = vmatprep.subr.mxu0 %v330
      %1734 = vmatpush1.msra.mxu0 %v329
      %1735 = vmatprep.subr.mxu0 %v410
      %1736 = vmatpush1.msra.mxu0 %v409
      %1737 = vmatprep.subr.mxu0 %v643
      %1738 = vmatpush1.msra.mxu0 %v640
      %1739 = vmatprep.subr.mxu0 0.0
      %1740 = vmatpush1.msra.mxu0 0.0
      %1741 = vmatprep.subr.mxu0 0.0
      %1742 = vmatpush1.msra.mxu0 0.0
      %1743 = vmatprep.subr.mxu0 0.0
      %1744 = vmatpush1.msra.mxu0 0.0
      %1745 = vmatprep.subr.mxu0 0.0
      %1746 = vmatpush1.msra.mxu0 0.0
      %1747 = vmatprep.subr.mxu0 0.0
      %1748 = vmatpush1.msra.mxu0 0.0
      %1749 = vmatprep.subr.mxu0 0.0
      %1750 = vmatpush1.msra.mxu0 0.0
      %1751 = vmatprep.subr.mxu0 0.0
      %1752 = vmatpush1.msra.mxu0 0.0
      %1753 = vmatprep.subr.mxu0 0.0
      %1754 = vmatpush1.msra.mxu0 0.0
      %1755 = vmatprep.subr.mxu0 0.0
      %1756 = vmatpush1.msra.mxu0 0.0
      %1757 = vmatprep.subr.mxu0 0.0
      %1758 = vmatpush1.msra.mxu0 0.0
      %1759 = vmatprep.subr.mxu0 0.0
      %1760 = vmatpush1.msra.mxu0 0.0
      %1761 = vmatprep.subr.mxu0 0.0
      %1762 = vmatpush1.msra.mxu0 0.0
      %1763 = vmatprep.subr.mxu0 0.0
      %1764 = vmatpush1.msra.mxu0 0.0
      %1765 = vmatprep.subr.mxu0 0.0
      %1766 = vmatpush1.msra.mxu0 0.0
      %1767 = vmatprep.subr.mxu0 0.0
      %1768 = vmatpush1.msra.mxu0 0.0
      %1769 = vmatprep.subr.mxu0 0.0
      %1770 = vmatpush1.msra.mxu0 0.0
      %1771 = vmatprep.subr.mxu0 0.0
      %1772 = vmatpush1.msra.mxu0 0.0
      %1773 = vmatprep.subr.mxu0 0.0
      %1774 = vmatpush1.msra.mxu0 0.0
      %1775 = vmatprep.subr.mxu0 0.0
      %1776 = vmatpush1.msra.mxu0 0.0
      %1777 = vmatprep.subr.mxu0 0.0
      %1778 = vmatpush1.msra.mxu0 0.0
      %1779 = vmatprep.subr.mxu0 0.0
      %1780 = vmatpush1.msra.mxu0 0.0
      %1781 = vmatprep.subr.mxu0 0.0
      %1782 = vmatpush1.msra.mxu0 0.0
      %1783 = vmatprep.subr.mxu0 0.0
      %1784 = vmatpush1.msra.mxu0 0.0
      %1785 = vmatprep.subr.mxu0 0.0
      %1786 = vmatpush1.msra.mxu0 0.0
      %1787 = vmatprep.subr.mxu0 0.0
      %1788 = vmatpush1.msra.mxu0 0.0
      %1789 = vmatprep.subr.mxu0 0.0
      %1790 = vmatpush1.msra.mxu0 0.0
      %1791 = vmatprep.subr.mxu0 0.0
      %1792 = vmatpush1.msra.mxu0 0.0
      %1793 = vmatprep.subr.mxu0 0.0
      %1794 = vmatpush1.msra.mxu0 0.0
      %1795 = vmatprep.mubr.f32.mxu0 0.0
      %1796 = vmatmul.mubr.f32.gmra.mrb[0].mxu0 %v561
      %v1797 = vpop.f32.mrb[0].mxu0
      %v1798 = vadd.f32 %v552, %v1797
      %v1799 = vpop.f32.mrb[0].mxu0
      %v1800 = vadd.f32 %v552, %v1799
      %1801 = vmatprep.mubr.f32.mxu0 0.0
      %1802 = vmatmul.mubr.f32.gmra.mrb[0].mxu0 %v564
      %v1803 = vpop.f32.mrb[0].mxu0
      %v1804 = vadd.f32 %v557, %v1803
      %v1805 = vpop.f32.mrb[0].mxu0
      %v1806 = vadd.f32 %v557, %v1805
      %1807 = vdwg.mxu0
      %1808 = vmatprep.subr.mxu0 %v252
      %1809 = vmatpush1.msra.mxu0 %v251
      %1810 = vmatprep.subr.mxu0 %v332
      %1811 = vmatpush1.msra.mxu0 %v331
      %1812 = vmatprep.subr.mxu0 %v412
      %1813 = vmatpush1.msra.mxu0 %v411
      %1814 = vmatprep.subr.mxu0 %v649
      %1815 = vmatpush1.msra.mxu0 %v646
      %1816 = vmatprep.subr.mxu0 0.0
      %1817 = vmatpush1.msra.mxu0 0.0
      %1818 = vmatprep.subr.mxu0 0.0
      %1819 = vmatpush1.msra.mxu0 0.0
      %1820 = vmatprep.subr.mxu0 0.0
      %1821 = vmatpush1.msra.mxu0 0.0
      %1822 = vmatprep.subr.mxu0 0.0
      %1823 = vmatpush1.msra.mxu0 0.0
      %1824 = vmatprep.subr.mxu0 0.0
      %1825 = vmatpush1.msra.mxu0 0.0
      %1826 = vmatprep.subr.mxu0 0.0
      %1827 = vmatpush1.msra.mxu0 0.0
      %1828 = vmatprep.subr.mxu0 0.0
      %1829 = vmatpush1.msra.mxu0 0.0
      %1830 = vmatprep.subr.mxu0 0.0
      %1831 = vmatpush1.msra.mxu0 0.0
      %1832 = vmatprep.subr.mxu0 0.0
      %1833 = vmatpush1.msra.mxu0 0.0
      %1834 = vmatprep.subr.mxu0 0.0
      %1835 = vmatpush1.msra.mxu0 0.0
      %1836 = vmatprep.subr.mxu0 0.0
      %1837 = vmatpush1.msra.mxu0 0.0
      %1838 = vmatprep.subr.mxu0 0.0
      %1839 = vmatpush1.msra.mxu0 0.0
      %1840 = vmatprep.subr.mxu0 0.0
      %1841 = vmatpush1.msra.mxu0 0.0
      %1842 = vmatprep.subr.mxu0 0.0
      %1843 = vmatpush1.msra.mxu0 0.0
      %1844 = vmatprep.subr.mxu0 0.0
      %1845 = vmatpush1.msra.mxu0 0.0
      %1846 = vmatprep.subr.mxu0 0.0
      %1847 = vmatpush1.msra.mxu0 0.0
      %1848 = vmatprep.subr.mxu0 0.0
      %1849 = vmatpush1.msra.mxu0 0.0
      %1850 = vmatprep.subr.mxu0 0.0
      %1851 = vmatpush1.msra.mxu0 0.0
      %1852 = vmatprep.subr.mxu0 0.0
      %1853 = vmatpush1.msra.mxu0 0.0
      %1854 = vmatprep.subr.mxu0 0.0
      %1855 = vmatpush1.msra.mxu0 0.0
      %1856 = vmatprep.subr.mxu0 0.0
      %1857 = vmatpush1.msra.mxu0 0.0
      %1858 = vmatprep.subr.mxu0 0.0
      %1859 = vmatpush1.msra.mxu0 0.0
      %1860 = vmatprep.subr.mxu0 0.0
      %1861 = vmatpush1.msra.mxu0 0.0
      %1862 = vmatprep.subr.mxu0 0.0
      %1863 = vmatpush1.msra.mxu0 0.0
      %1864 = vmatprep.subr.mxu0 0.0
      %1865 = vmatpush1.msra.mxu0 0.0
      %1866 = vmatprep.subr.mxu0 0.0
      %1867 = vmatpush1.msra.mxu0 0.0
      %1868 = vmatprep.subr.mxu0 0.0
      %1869 = vmatpush1.msra.mxu0 0.0
      %1870 = vmatprep.subr.mxu0 0.0
      %1871 = vmatpush1.msra.mxu0 0.0
      %1872 = vmatprep.mubr.f32.mxu0 0.0
      %1873 = vmatmul.mubr.f32.gmra.mrb[0].mxu0 %v561
      %v1874 = vpop.f32.mrb[0].mxu0
      %v1875 = vadd.f32 %v552, %v1874
      %v1876 = vpop.f32.mrb[0].mxu0
      %v1877 = vadd.f32 %v552, %v1876
      %1878 = vmatprep.mubr.f32.mxu0 0.0
      %1879 = vmatmul.mubr.f32.gmra.mrb[0].mxu0 %v564
      %v1880 = vpop.f32.mrb[0].mxu0
      %v1881 = vadd.f32 %v557, %v1880
      %v1882 = vpop.f32.mrb[0].mxu0
      %v1883 = vadd.f32 %v557, %v1882
      %1884 = vdwg.mxu0
      %1885 = vmatprep.subr.mxu0 %v254
      %1886 = vmatpush1.msra.mxu0 %v253
      %1887 = vmatprep.subr.mxu0 %v334
      %1888 = vmatpush1.msra.mxu0 %v333
      %1889 = vmatprep.subr.mxu0 %v414
      %1890 = vmatpush1.msra.mxu0 %v413
      %1891 = vmatprep.subr.mxu0 %v655
      %1892 = vmatpush1.msra.mxu0 %v652
      %1893 = vmatprep.subr.mxu0 0.0
      %1894 = vmatpush1.msra.mxu0 0.0
      %1895 = vmatprep.subr.mxu0 0.0
      %1896 = vmatpush1.msra.mxu0 0.0
      %1897 = vmatprep.subr.mxu0 0.0
      %1898 = vmatpush1.msra.mxu0 0.0
      %1899 = vmatprep.subr.mxu0 0.0
      %1900 = vmatpush1.msra.mxu0 0.0
      %1901 = vmatprep.subr.mxu0 0.0
      %1902 = vmatpush1.msra.mxu0 0.0
      %1903 = vmatprep.subr.mxu0 0.0
      %1904 = vmatpush1.msra.mxu0 0.0
      %1905 = vmatprep.subr.mxu0 0.0
      %1906 = vmatpush1.msra.mxu0 0.0
      %1907 = vmatprep.subr.mxu0 0.0
      %1908 = vmatpush1.msra.mxu0 0.0
      %1909 = vmatprep.subr.mxu0 0.0
      %1910 = vmatpush1.msra.mxu0 0.0
      %1911 = vmatprep.subr.mxu0 0.0
      %1912 = vmatpush1.msra.mxu0 0.0
      %1913 = vmatprep.subr.mxu0 0.0
      %1914 = vmatpush1.msra.mxu0 0.0
      %1915 = vmatprep.subr.mxu0 0.0
      %1916 = vmatpush1.msra.mxu0 0.0
      %1917 = vmatprep.subr.mxu0 0.0
      %1918 = vmatpush1.msra.mxu0 0.0
      %1919 = vmatprep.subr.mxu0 0.0
      %1920 = vmatpush1.msra.mxu0 0.0
      %1921 = vmatprep.subr.mxu0 0.0
      %1922 = vmatpush1.msra.mxu0 0.0
      %1923 = vmatprep.subr.mxu0 0.0
      %1924 = vmatpush1.msra.mxu0 0.0
      %1925 = vmatprep.subr.mxu0 0.0
      %1926 = vmatpush1.msra.mxu0 0.0
      %1927 = vmatprep.subr.mxu0 0.0
      %1928 = vmatpush1.msra.mxu0 0.0
      %1929 = vmatprep.subr.mxu0 0.0
      %1930 = vmatpush1.msra.mxu0 0.0
      %1931 = vmatprep.subr.mxu0 0.0
      %1932 = vmatpush1.msra.mxu0 0.0
      %1933 = vmatprep.subr.mxu0 0.0
      %1934 = vmatpush1.msra.mxu0 0.0
      %1935 = vmatprep.subr.mxu0 0.0
      %1936 = vmatpush1.msra.mxu0 0.0
      %1937 = vmatprep.subr.mxu0 0.0
      %1938 = vmatpush1.msra.mxu0 0.0
      %1939 = vmatprep.subr.mxu0 0.0
      %1940 = vmatpush1.msra.mxu0 0.0
      %1941 = vmatprep.subr.mxu0 0.0
      %1942 = vmatpush1.msra.mxu0 0.0
      %1943 = vmatprep.subr.mxu0 0.0
      %1944 = vmatpush1.msra.mxu0 0.0
      %1945 = vmatprep.subr.mxu0 0.0
      %1946 = vmatpush1.msra.mxu0 0.0
      %1947 = vmatprep.subr.mxu0 0.0
      %1948 = vmatpush1.msra.mxu0 0.0
      %1949 = vmatprep.mubr.f32.mxu0 0.0
      %1950 = vmatmul.mubr.f32.gmra.mrb[0].mxu0 %v561
      %v1951 = vpop.f32.mrb[0].mxu0
      %v1952 = vadd.f32 %v552, %v1951
      %v1953 = vpop.f32.mrb[0].mxu0
      %v1954 = vadd.f32 %v552, %v1953
      %1955 = vmatprep.mubr.f32.mxu0 0.0
      %1956 = vmatmul.mubr.f32.gmra.mrb[0].mxu0 %v564
      %v1957 = vpop.f32.mrb[0].mxu0
      %v1958 = vadd.f32 %v557, %v1957
      %v1959 = vpop.f32.mrb[0].mxu0
      %v1960 = vadd.f32 %v557, %v1959
      %1961 = vdwg.mxu0
      %1962 = vmatprep.subr.mxu0 %v256
      %1963 = vmatpush1.msra.mxu0 %v255
      %1964 = vmatprep.subr.mxu0 %v336
      %1965 = vmatpush1.msra.mxu0 %v335
      %1966 = vmatprep.subr.mxu0 %v416
      %1967 = vmatpush1.msra.mxu0 %v415
      %1968 = vmatprep.subr.mxu0 %v661
      %1969 = vmatpush1.msra.mxu0 %v658
      %1970 = vmatprep.subr.mxu0 0.0
      %1971 = vmatpush1.msra.mxu0 0.0
      %1972 = vmatprep.subr.mxu0 0.0
      %1973 = vmatpush1.msra.mxu0 0.0
      %1974 = vmatprep.subr.mxu0 0.0
      %1975 = vmatpush1.msra.mxu0 0.0
      %1976 = vmatprep.subr.mxu0 0.0
      %1977 = vmatpush1.msra.mxu0 0.0
      %1978 = vmatprep.subr.mxu0 0.0
      %1979 = vmatpush1.msra.mxu0 0.0
      %1980 = vmatprep.subr.mxu0 0.0
      %1981 = vmatpush1.msra.mxu0 0.0
      %1982 = vmatprep.subr.mxu0 0.0
      %1983 = vmatpush1.msra.mxu0 0.0
      %1984 = vmatprep.subr.mxu0 0.0
      %1985 = vmatpush1.msra.mxu0 0.0
      %1986 = vmatprep.subr.mxu0 0.0
      %1987 = vmatpush1.msra.mxu0 0.0
      %1988 = vmatprep.subr.mxu0 0.0
      %1989 = vmatpush1.msra.mxu0 0.0
      %1990 = vmatprep.subr.mxu0 0.0
      %1991 = vmatpush1.msra.mxu0 0.0
      %1992 = vmatprep.subr.mxu0 0.0
      %1993 = vmatpush1.msra.mxu0 0.0
      %1994 = vmatprep.subr.mxu0 0.0
      %1995 = vmatpush1.msra.mxu0 0.0
      %1996 = vmatprep.subr.mxu0 0.0
      %1997 = vmatpush1.msra.mxu0 0.0
      %1998 = vmatprep.subr.mxu0 0.0
      %1999 = vmatpush1.msra.mxu0 0.0
      %2000 = vmatprep.subr.mxu0 0.0
      %2001 = vmatpush1.msra.mxu0 0.0
      %2002 = vmatprep.subr.mxu0 0.0
      %2003 = vmatpush1.msra.mxu0 0.0
      %2004 = vmatprep.subr.mxu0 0.0
      %2005 = vmatpush1.msra.mxu0 0.0
      %2006 = vmatprep.subr.mxu0 0.0
      %2007 = vmatpush1.msra.mxu0 0.0
      %2008 = vmatprep.subr.mxu0 0.0
      %2009 = vmatpush1.msra.mxu0 0.0
      %2010 = vmatprep.subr.mxu0 0.0
      %2011 = vmatpush1.msra.mxu0 0.0
      %2012 = vmatprep.subr.mxu0 0.0
      %2013 = vmatpush1.msra.mxu0 0.0
      %2014 = vmatprep.subr.mxu0 0.0
      %2015 = vmatpush1.msra.mxu0 0.0
      %2016 = vmatprep.subr.mxu0 0.0
      %2017 = vmatpush1.msra.mxu0 0.0
      %2018 = vmatprep.subr.mxu0 0.0
      %2019 = vmatpush1.msra.mxu0 0.0
      %2020 = vmatprep.subr.mxu0 0.0
      %2021 = vmatpush1.msra.mxu0 0.0
      %2022 = vmatprep.subr.mxu0 0.0
      %2023 = vmatpush1.msra.mxu0 0.0
      %2024 = vmatprep.subr.mxu0 0.0
      %2025 = vmatpush1.msra.mxu0 0.0
      %2026 = vmatprep.mubr.f32.mxu0 0.0
      %2027 = vmatmul.mubr.f32.gmra.mrb[0].mxu0 %v561
      %v2028 = vpop.f32.mrb[0].mxu0
      %v2029 = vadd.f32 %v552, %v2028
      %v2030 = vpop.f32.mrb[0].mxu0
      %v2031 = vadd.f32 %v552, %v2030
      %2032 = vmatprep.mubr.f32.mxu0 0.0
      %2033 = vmatmul.mubr.f32.gmra.mrb[0].mxu0 %v564
      %v2034 = vpop.f32.mrb[0].mxu0
      %v2035 = vadd.f32 %v557, %v2034
      %v2036 = vpop.f32.mrb[0].mxu0
      %v2037 = vadd.f32 %v557, %v2036
      %2038 = vdwg.mxu0
      %2039 = vmatprep.subr.mxu0 %v258
      %2040 = vmatpush1.msra.mxu0 %v257
      %2041 = vmatprep.subr.mxu0 %v338
      %2042 = vmatpush1.msra.mxu0 %v337
      %2043 = vmatprep.subr.mxu0 %v418
      %2044 = vmatpush1.msra.mxu0 %v417
      %2045 = vmatprep.subr.mxu0 %v667
      %2046 = vmatpush1.msra.mxu0 %v664
      %2047 = vmatprep.subr.mxu0 0.0
      %2048 = vmatpush1.msra.mxu0 0.0
      %2049 = vmatprep.subr.mxu0 0.0
      %2050 = vmatpush1.msra.mxu0 0.0
      %2051 = vmatprep.subr.mxu0 0.0
      %2052 = vmatpush1.msra.mxu0 0.0
      %2053 = vmatprep.subr.mxu0 0.0
      %2054 = vmatpush1.msra.mxu0 0.0
      %2055 = vmatprep.subr.mxu0 0.0
      %2056 = vmatpush1.msra.mxu0 0.0
      %2057 = vmatprep.subr.mxu0 0.0
      %2058 = vmatpush1.msra.mxu0 0.0
      %2059 = vmatprep.subr.mxu0 0.0
      %2060 = vmatpush1.msra.mxu0 0.0
      %2061 = vmatprep.subr.mxu0 0.0
      %2062 = vmatpush1.msra.mxu0 0.0
      %2063 = vmatprep.subr.mxu0 0.0
      %2064 = vmatpush1.msra.mxu0 0.0
      %2065 = vmatprep.subr.mxu0 0.0
      %2066 = vmatpush1.msra.mxu0 0.0
      %2067 = vmatprep.subr.mxu0 0.0
      %2068 = vmatpush1.msra.mxu0 0.0
      %2069 = vmatprep.subr.mxu0 0.0
      %2070 = vmatpush1.msra.mxu0 0.0
      %2071 = vmatprep.subr.mxu0 0.0
      %2072 = vmatpush1.msra.mxu0 0.0
      %2073 = vmatprep.subr.mxu0 0.0
      %2074 = vmatpush1.msra.mxu0 0.0
      %2075 = vmatprep.subr.mxu0 0.0
      %2076 = vmatpush1.msra.mxu0 0.0
      %2077 = vmatprep.subr.mxu0 0.0
      %2078 = vmatpush1.msra.mxu0 0.0
      %2079 = vmatprep.subr.mxu0 0.0
      %2080 = vmatpush1.msra.mxu0 0.0
      %2081 = vmatprep.subr.mxu0 0.0
      %2082 = vmatpush1.msra.mxu0 0.0
      %2083 = vmatprep.subr.mxu0 0.0
      %2084 = vmatpush1.msra.mxu0 0.0
      %2085 = vmatprep.subr.mxu0 0.0
      %2086 = vmatpush1.msra.mxu0 0.0
      %2087 = vmatprep.subr.mxu0 0.0
      %2088 = vmatpush1.msra.mxu0 0.0
      %2089 = vmatprep.subr.mxu0 0.0
      %2090 = vmatpush1.msra.mxu0 0.0
      %2091 = vmatprep.subr.mxu0 0.0
      %2092 = vmatpush1.msra.mxu0 0.0
      %2093 = vmatprep.subr.mxu0 0.0
      %2094 = vmatpush1.msra.mxu0 0.0
      %2095 = vmatprep.subr.mxu0 0.0
      %2096 = vmatpush1.msra.mxu0 0.0
      %2097 = vmatprep.subr.mxu0 0.0
      %2098 = vmatpush1.msra.mxu0 0.0
      %2099 = vmatprep.subr.mxu0 0.0
      %2100 = vmatpush1.msra.mxu0 0.0
      %2101 = vmatprep.subr.mxu0 0.0
      %2102 = vmatpush1.msra.mxu0 0.0
      %2103 = vmatprep.mubr.f32.mxu0 0.0
      %2104 = vmatmul.mubr.f32.gmra.mrb[0].mxu0 %v561
      %v2105 = vpop.f32.mrb[0].mxu0
      %v2106 = vadd.f32 %v552, %v2105
      %v2107 = vpop.f32.mrb[0].mxu0
      %v2108 = vadd.f32 %v552, %v2107
      %2109 = vmatprep.mubr.f32.mxu0 0.0
      %2110 = vmatmul.mubr.f32.gmra.mrb[0].mxu0 %v564
      %v2111 = vpop.f32.mrb[0].mxu0
      %v2112 = vadd.f32 %v557, %v2111
      %v2113 = vpop.f32.mrb[0].mxu0
      %v2114 = vadd.f32 %v557, %v2113
      %2115 = vdwg.mxu0
      %2116 = vmatprep.subr.mxu0 %v260
      %2117 = vmatpush1.msra.mxu0 %v259
      %2118 = vmatprep.subr.mxu0 %v340
      %2119 = vmatpush1.msra.mxu0 %v339
      %2120 = vmatprep.subr.mxu0 %v420
      %2121 = vmatpush1.msra.mxu0 %v419
      %2122 = vmatprep.subr.mxu0 %v673
      %2123 = vmatpush1.msra.mxu0 %v670
      %2124 = vmatprep.subr.mxu0 0.0
      %2125 = vmatpush1.msra.mxu0 0.0
      %2126 = vmatprep.subr.mxu0 0.0
      %2127 = vmatpush1.msra.mxu0 0.0
      %2128 = vmatprep.subr.mxu0 0.0
      %2129 = vmatpush1.msra.mxu0 0.0
      %2130 = vmatprep.subr.mxu0 0.0
      %2131 = vmatpush1.msra.mxu0 0.0
      %2132 = vmatprep.subr.mxu0 0.0
      %2133 = vmatpush1.msra.mxu0 0.0
      %2134 = vmatprep.subr.mxu0 0.0
      %2135 = vmatpush1.msra.mxu0 0.0
      %2136 = vmatprep.subr.mxu0 0.0
      %2137 = vmatpush1.msra.mxu0 0.0
      %2138 = vmatprep.subr.mxu0 0.0
      %2139 = vmatpush1.msra.mxu0 0.0
      %2140 = vmatprep.subr.mxu0 0.0
      %2141 = vmatpush1.msra.mxu0 0.0
      %2142 = vmatprep.subr.mxu0 0.0
      %2143 = vmatpush1.msra.mxu0 0.0
      %2144 = vmatprep.subr.mxu0 0.0
      %2145 = vmatpush1.msra.mxu0 0.0
      %2146 = vmatprep.subr.mxu0 0.0
      %2147 = vmatpush1.msra.mxu0 0.0
      %2148 = vmatprep.subr.mxu0 0.0
      %2149 = vmatpush1.msra.mxu0 0.0
      %2150 = vmatprep.subr.mxu0 0.0
      %2151 = vmatpush1.msra.mxu0 0.0
      %2152 = vmatprep.subr.mxu0 0.0
      %2153 = vmatpush1.msra.mxu0 0.0
      %2154 = vmatprep.subr.mxu0 0.0
      %2155 = vmatpush1.msra.mxu0 0.0
      %2156 = vmatprep.subr.mxu0 0.0
      %2157 = vmatpush1.msra.mxu0 0.0
      %2158 = vmatprep.subr.mxu0 0.0
      %2159 = vmatpush1.msra.mxu0 0.0
      %2160 = vmatprep.subr.mxu0 0.0
      %2161 = vmatpush1.msra.mxu0 0.0
      %2162 = vmatprep.subr.mxu0 0.0
      %2163 = vmatpush1.msra.mxu0 0.0
      %2164 = vmatprep.subr.mxu0 0.0
      %2165 = vmatpush1.msra.mxu0 0.0
      %2166 = vmatprep.subr.mxu0 0.0
      %2167 = vmatpush1.msra.mxu0 0.0
      %2168 = vmatprep.subr.mxu0 0.0
      %2169 = vmatpush1.msra.mxu0 0.0
      %2170 = vmatprep.subr.mxu0 0.0
      %2171 = vmatpush1.msra.mxu0 0.0
      %2172 = vmatprep.subr.mxu0 0.0
      %2173 = vmatpush1.msra.mxu0 0.0
      %2174 = vmatprep.subr.mxu0 0.0
      %2175 = vmatpush1.msra.mxu0 0.0
      %2176 = vmatprep.subr.mxu0 0.0
      %2177 = vmatpush1.msra.mxu0 0.0
      %2178 = vmatprep.subr.mxu0 0.0
      %2179 = vmatpush1.msra.mxu0 0.0
      %2180 = vmatprep.mubr.f32.mxu0 0.0
      %2181 = vmatmul.mubr.f32.gmra.mrb[0].mxu0 %v561
      %v2182 = vpop.f32.mrb[0].mxu0
      %v2183 = vadd.f32 %v552, %v2182
      %v2184 = vpop.f32.mrb[0].mxu0
      %v2185 = vadd.f32 %v552, %v2184
      %2186 = vmatprep.mubr.f32.mxu0 0.0
      %2187 = vmatmul.mubr.f32.gmra.mrb[0].mxu0 %v564
      %v2188 = vpop.f32.mrb[0].mxu0
      %v2189 = vadd.f32 %v557, %v2188
      %v2190 = vpop.f32.mrb[0].mxu0
      %v2191 = vadd.f32 %v557, %v2190
      %2192 = vdwg.mxu0
      %2193 = vmatprep.subr.mxu0 %v262
      %2194 = vmatpush1.msra.mxu0 %v261
      %2195 = vmatprep.subr.mxu0 %v342
      %2196 = vmatpush1.msra.mxu0 %v341
      %2197 = vmatprep.subr.mxu0 %v422
      %2198 = vmatpush1.msra.mxu0 %v421
      %2199 = vmatprep.subr.mxu0 %v679
      %2200 = vmatpush1.msra.mxu0 %v676
      %2201 = vmatprep.subr.mxu0 0.0
      %2202 = vmatpush1.msra.mxu0 0.0
      %2203 = vmatprep.subr.mxu0 0.0
      %2204 = vmatpush1.msra.mxu0 0.0
      %2205 = vmatprep.subr.mxu0 0.0
      %2206 = vmatpush1.msra.mxu0 0.0
      %2207 = vmatprep.subr.mxu0 0.0
      %2208 = vmatpush1.msra.mxu0 0.0
      %2209 = vmatprep.subr.mxu0 0.0
      %2210 = vmatpush1.msra.mxu0 0.0
      %2211 = vmatprep.subr.mxu0 0.0
      %2212 = vmatpush1.msra.mxu0 0.0
      %2213 = vmatprep.subr.mxu0 0.0
      %2214 = vmatpush1.msra.mxu0 0.0
      %2215 = vmatprep.subr.mxu0 0.0
      %2216 = vmatpush1.msra.mxu0 0.0
      %2217 = vmatprep.subr.mxu0 0.0
      %2218 = vmatpush1.msra.mxu0 0.0
      %2219 = vmatprep.subr.mxu0 0.0
      %2220 = vmatpush1.msra.mxu0 0.0
      %2221 = vmatprep.subr.mxu0 0.0
      %2222 = vmatpush1.msra.mxu0 0.0
      %2223 = vmatprep.subr.mxu0 0.0
      %2224 = vmatpush1.msra.mxu0 0.0
      %2225 = vmatprep.subr.mxu0 0.0
      %2226 = vmatpush1.msra.mxu0 0.0
      %2227 = vmatprep.subr.mxu0 0.0
      %2228 = vmatpush1.msra.mxu0 0.0
      %2229 = vmatprep.subr.mxu0 0.0
      %2230 = vmatpush1.msra.mxu0 0.0
      %2231 = vmatprep.subr.mxu0 0.0
      %2232 = vmatpush1.msra.mxu0 0.0
      %2233 = vmatprep.subr.mxu0 0.0
      %2234 = vmatpush1.msra.mxu0 0.0
      %2235 = vmatprep.subr.mxu0 0.0
      %2236 = vmatpush1.msra.mxu0 0.0
      %2237 = vmatprep.subr.mxu0 0.0
      %2238 = vmatpush1.msra.mxu0 0.0
      %2239 = vmatprep.subr.mxu0 0.0
      %2240 = vmatpush1.msra.mxu0 0.0
      %2241 = vmatprep.subr.mxu0 0.0
      %2242 = vmatpush1.msra.mxu0 0.0
      %2243 = vmatprep.subr.mxu0 0.0
      %2244 = vmatpush1.msra.mxu0 0.0
      %2245 = vmatprep.subr.mxu0 0.0
      %2246 = vmatpush1.msra.mxu0 0.0
      %2247 = vmatprep.subr.mxu0 0.0
      %2248 = vmatpush1.msra.mxu0 0.0
      %2249 = vmatprep.subr.mxu0 0.0
      %2250 = vmatpush1.msra.mxu0 0.0
      %2251 = vmatprep.subr.mxu0 0.0
      %2252 = vmatpush1.msra.mxu0 0.0
      %2253 = vmatprep.subr.mxu0 0.0
      %2254 = vmatpush1.msra.mxu0 0.0
      %2255 = vmatprep.subr.mxu0 0.0
      %2256 = vmatpush1.msra.mxu0 0.0
      %2257 = vmatprep.mubr.f32.mxu0 0.0
      %2258 = vmatmul.mubr.f32.gmra.mrb[0].mxu0 %v561
      %v2259 = vpop.f32.mrb[0].mxu0
      %v2260 = vadd.f32 %v552, %v2259
      %v2261 = vpop.f32.mrb[0].mxu0
      %v2262 = vadd.f32 %v552, %v2261
      %2263 = vmatprep.mubr.f32.mxu0 0.0
      %2264 = vmatmul.mubr.f32.gmra.mrb[0].mxu0 %v564
      %v2265 = vpop.f32.mrb[0].mxu0
      %v2266 = vadd.f32 %v557, %v2265
      %v2267 = vpop.f32.mrb[0].mxu0
      %v2268 = vadd.f32 %v557, %v2267
      %2269 = vdwg.mxu0
      %2270 = vmatprep.subr.mxu0 %v264
      %2271 = vmatpush1.msra.mxu0 %v263
      %2272 = vmatprep.subr.mxu0 %v344
      %2273 = vmatpush1.msra.mxu0 %v343
      %2274 = vmatprep.subr.mxu0 %v424
      %2275 = vmatpush1.msra.mxu0 %v423
      %2276 = vmatprep.subr.mxu0 %v685
      %2277 = vmatpush1.msra.mxu0 %v682
      %2278 = vmatprep.subr.mxu0 0.0
      %2279 = vmatpush1.msra.mxu0 0.0
      %2280 = vmatprep.subr.mxu0 0.0
      %2281 = vmatpush1.msra.mxu0 0.0
      %2282 = vmatprep.subr.mxu0 0.0
      %2283 = vmatpush1.msra.mxu0 0.0
      %2284 = vmatprep.subr.mxu0 0.0
      %2285 = vmatpush1.msra.mxu0 0.0
      %2286 = vmatprep.subr.mxu0 0.0
      %2287 = vmatpush1.msra.mxu0 0.0
      %2288 = vmatprep.subr.mxu0 0.0
      %2289 = vmatpush1.msra.mxu0 0.0
      %2290 = vmatprep.subr.mxu0 0.0
      %2291 = vmatpush1.msra.mxu0 0.0
      %2292 = vmatprep.subr.mxu0 0.0
      %2293 = vmatpush1.msra.mxu0 0.0
      %2294 = vmatprep.subr.mxu0 0.0
      %2295 = vmatpush1.msra.mxu0 0.0
      %2296 = vmatprep.subr.mxu0 0.0
      %2297 = vmatpush1.msra.mxu0 0.0
      %2298 = vmatprep.subr.mxu0 0.0
      %2299 = vmatpush1.msra.mxu0 0.0
      %2300 = vmatprep.subr.mxu0 0.0
      %2301 = vmatpush1.msra.mxu0 0.0
      %2302 = vmatprep.subr.mxu0 0.0
      %2303 = vmatpush1.msra.mxu0 0.0
      %2304 = vmatprep.subr.mxu0 0.0
      %2305 = vmatpush1.msra.mxu0 0.0
      %2306 = vmatprep.subr.mxu0 0.0
      %2307 = vmatpush1.msra.mxu0 0.0
      %2308 = vmatprep.subr.mxu0 0.0
      %2309 = vmatpush1.msra.mxu0 0.0
      %2310 = vmatprep.subr.mxu0 0.0
      %2311 = vmatpush1.msra.mxu0 0.0
      %2312 = vmatprep.subr.mxu0 0.0
      %2313 = vmatpush1.msra.mxu0 0.0
      %2314 = vmatprep.subr.mxu0 0.0
      %2315 = vmatpush1.msra.mxu0 0.0
      %2316 = vmatprep.subr.mxu0 0.0
      %2317 = vmatpush1.msra.mxu0 0.0
      %2318 = vmatprep.subr.mxu0 0.0
      %2319 = vmatpush1.msra.mxu0 0.0
      %2320 = vmatprep.subr.mxu0 0.0
      %2321 = vmatpush1.msra.mxu0 0.0
      %2322 = vmatprep.subr.mxu0 0.0
      %2323 = vmatpush1.msra.mxu0 0.0
      %2324 = vmatprep.subr.mxu0 0.0
      %2325 = vmatpush1.msra.mxu0 0.0
      %2326 = vmatprep.subr.mxu0 0.0
      %2327 = vmatpush1.msra.mxu0 0.0
      %2328 = vmatprep.subr.mxu0 0.0
      %2329 = vmatpush1.msra.mxu0 0.0
      %2330 = vmatprep.subr.mxu0 0.0
      %2331 = vmatpush1.msra.mxu0 0.0
      %2332 = vmatprep.subr.mxu0 0.0
      %2333 = vmatpush1.msra.mxu0 0.0
      %2334 = vmatprep.mubr.f32.mxu0 0.0
      %2335 = vmatmul.mubr.f32.gmra.mrb[0].mxu0 %v561
      %v2336 = vpop.f32.mrb[0].mxu0
      %v2337 = vadd.f32 %v552, %v2336
      %v2338 = vpop.f32.mrb[0].mxu0
      %v2339 = vadd.f32 %v552, %v2338
      %2340 = vmatprep.mubr.f32.mxu0 0.0
      %2341 = vmatmul.mubr.f32.gmra.mrb[0].mxu0 %v564
      %v2342 = vpop.f32.mrb[0].mxu0
      %v2343 = vadd.f32 %v557, %v2342
      %v2344 = vpop.f32.mrb[0].mxu0
      %v2345 = vadd.f32 %v557, %v2344
      %2346 = vdwg.mxu0
      %2347 = vmatprep.subr.mxu0 %v266
      %2348 = vmatpush1.msra.mxu0 %v265
      %2349 = vmatprep.subr.mxu0 %v346
      %2350 = vmatpush1.msra.mxu0 %v345
      %2351 = vmatprep.subr.mxu0 %v426
      %2352 = vmatpush1.msra.mxu0 %v425
      %2353 = vmatprep.subr.mxu0 %v691
      %2354 = vmatpush1.msra.mxu0 %v688
      %2355 = vmatprep.subr.mxu0 0.0
      %2356 = vmatpush1.msra.mxu0 0.0
      %2357 = vmatprep.subr.mxu0 0.0
      %2358 = vmatpush1.msra.mxu0 0.0
      %2359 = vmatprep.subr.mxu0 0.0
      %2360 = vmatpush1.msra.mxu0 0.0
      %2361 = vmatprep.subr.mxu0 0.0
      %2362 = vmatpush1.msra.mxu0 0.0
      %2363 = vmatprep.subr.mxu0 0.0
      %2364 = vmatpush1.msra.mxu0 0.0
      %2365 = vmatprep.subr.mxu0 0.0
      %2366 = vmatpush1.msra.mxu0 0.0
      %2367 = vmatprep.subr.mxu0 0.0
      %2368 = vmatpush1.msra.mxu0 0.0
      %2369 = vmatprep.subr.mxu0 0.0
      %2370 = vmatpush1.msra.mxu0 0.0
      %2371 = vmatprep.subr.mxu0 0.0
      %2372 = vmatpush1.msra.mxu0 0.0
      %2373 = vmatprep.subr.mxu0 0.0
      %2374 = vmatpush1.msra.mxu0 0.0
      %2375 = vmatprep.subr.mxu0 0.0
      %2376 = vmatpush1.msra.mxu0 0.0
      %2377 = vmatprep.subr.mxu0 0.0
      %2378 = vmatpush1.msra.mxu0 0.0
      %2379 = vmatprep.subr.mxu0 0.0
      %2380 = vmatpush1.msra.mxu0 0.0
      %2381 = vmatprep.subr.mxu0 0.0
      %2382 = vmatpush1.msra.mxu0 0.0
      %2383 = vmatprep.subr.mxu0 0.0
      %2384 = vmatpush1.msra.mxu0 0.0
      %2385 = vmatprep.subr.mxu0 0.0
      %2386 = vmatpush1.msra.mxu0 0.0
      %2387 = vmatprep.subr.mxu0 0.0
      %2388 = vmatpush1.msra.mxu0 0.0
      %2389 = vmatprep.subr.mxu0 0.0
      %2390 = vmatpush1.msra.mxu0 0.0
      %2391 = vmatprep.subr.mxu0 0.0
      %2392 = vmatpush1.msra.mxu0 0.0
      %2393 = vmatprep.subr.mxu0 0.0
      %2394 = vmatpush1.msra.mxu0 0.0
      %2395 = vmatprep.subr.mxu0 0.0
      %2396 = vmatpush1.msra.mxu0 0.0
      %2397 = vmatprep.subr.mxu0 0.0
      %2398 = vmatpush1.msra.mxu0 0.0
      %2399 = vmatprep.subr.mxu0 0.0
      %2400 = vmatpush1.msra.mxu0 0.0
      %2401 = vmatprep.subr.mxu0 0.0
      %2402 = vmatpush1.msra.mxu0 0.0
      %2403 = vmatprep.subr.mxu0 0.0
      %2404 = vmatpush1.msra.mxu0 0.0
      %2405 = vmatprep.subr.mxu0 0.0
      %2406 = vmatpush1.msra.mxu0 0.0
      %2407 = vmatprep.subr.mxu0 0.0
      %2408 = vmatpush1.msra.mxu0 0.0
      %2409 = vmatprep.subr.mxu0 0.0
      %2410 = vmatpush1.msra.mxu0 0.0
      %2411 = vmatprep.mubr.f32.mxu0 0.0
      %2412 = vmatmul.mubr.f32.gmra.mrb[0].mxu0 %v561
      %v2413 = vpop.f32.mrb[0].mxu0
      %v2414 = vadd.f32 %v552, %v2413
      %v2415 = vpop.f32.mrb[0].mxu0
      %v2416 = vadd.f32 %v552, %v2415
      %2417 = vmatprep.mubr.f32.mxu0 0.0
      %2418 = vmatmul.mubr.f32.gmra.mrb[0].mxu0 %v564
      %v2419 = vpop.f32.mrb[0].mxu0
      %v2420 = vadd.f32 %v557, %v2419
      %v2421 = vpop.f32.mrb[0].mxu0
      %v2422 = vadd.f32 %v557, %v2421
      %2423 = vdwg.mxu0
      %2424 = vmatprep.subr.mxu0 %v268
      %2425 = vmatpush1.msra.mxu0 %v267
      %2426 = vmatprep.subr.mxu0 %v348
      %2427 = vmatpush1.msra.mxu0 %v347
      %2428 = vmatprep.subr.mxu0 %v428
      %2429 = vmatpush1.msra.mxu0 %v427
      %2430 = vmatprep.subr.mxu0 %v697
      %2431 = vmatpush1.msra.mxu0 %v694
      %2432 = vmatprep.subr.mxu0 0.0
      %2433 = vmatpush1.msra.mxu0 0.0
      %2434 = vmatprep.subr.mxu0 0.0
      %2435 = vmatpush1.msra.mxu0 0.0
      %2436 = vmatprep.subr.mxu0 0.0
      %2437 = vmatpush1.msra.mxu0 0.0
      %2438 = vmatprep.subr.mxu0 0.0
      %2439 = vmatpush1.msra.mxu0 0.0
      %2440 = vmatprep.subr.mxu0 0.0
      %2441 = vmatpush1.msra.mxu0 0.0
      %2442 = vmatprep.subr.mxu0 0.0
      %2443 = vmatpush1.msra.mxu0 0.0
      %2444 = vmatprep.subr.mxu0 0.0
      %2445 = vmatpush1.msra.mxu0 0.0
      %2446 = vmatprep.subr.mxu0 0.0
      %2447 = vmatpush1.msra.mxu0 0.0
      %2448 = vmatprep.subr.mxu0 0.0
      %2449 = vmatpush1.msra.mxu0 0.0
      %2450 = vmatprep.subr.mxu0 0.0
      %2451 = vmatpush1.msra.mxu0 0.0
      %2452 = vmatprep.subr.mxu0 0.0
      %2453 = vmatpush1.msra.mxu0 0.0
      %2454 = vmatprep.subr.mxu0 0.0
      %2455 = vmatpush1.msra.mxu0 0.0
      %2456 = vmatprep.subr.mxu0 0.0
      %2457 = vmatpush1.msra.mxu0 0.0
      %2458 = vmatprep.subr.mxu0 0.0
      %2459 = vmatpush1.msra.mxu0 0.0
      %2460 = vmatprep.subr.mxu0 0.0
      %2461 = vmatpush1.msra.mxu0 0.0
      %2462 = vmatprep.subr.mxu0 0.0
      %2463 = vmatpush1.msra.mxu0 0.0
      %2464 = vmatprep.subr.mxu0 0.0
      %2465 = vmatpush1.msra.mxu0 0.0
      %2466 = vmatprep.subr.mxu0 0.0
      %2467 = vmatpush1.msra.mxu0 0.0
      %2468 = vmatprep.subr.mxu0 0.0
      %2469 = vmatpush1.msra.mxu0 0.0
      %2470 = vmatprep.subr.mxu0 0.0
      %2471 = vmatpush1.msra.mxu0 0.0
      %2472 = vmatprep.subr.mxu0 0.0
      %2473 = vmatpush1.msra.mxu0 0.0
      %2474 = vmatprep.subr.mxu0 0.0
      %2475 = vmatpush1.msra.mxu0 0.0
      %2476 = vmatprep.subr.mxu0 0.0
      %2477 = vmatpush1.msra.mxu0 0.0
      %2478 = vmatprep.subr.mxu0 0.0
      %2479 = vmatpush1.msra.mxu0 0.0
      %2480 = vmatprep.subr.mxu0 0.0
      %2481 = vmatpush1.msra.mxu0 0.0
      %2482 = vmatprep.subr.mxu0 0.0
      %2483 = vmatpush1.msra.mxu0 0.0
      %2484 = vmatprep.subr.mxu0 0.0
      %2485 = vmatpush1.msra.mxu0 0.0
      %2486 = vmatprep.subr.mxu0 0.0
      %2487 = vmatpush1.msra.mxu0 0.0
      %2488 = vmatprep.mubr.f32.mxu0 0.0
      %2489 = vmatmul.mubr.f32.gmra.mrb[0].mxu0 %v561
      %v2490 = vpop.f32.mrb[0].mxu0
      %v2491 = vadd.f32 %v552, %v2490
      %v2492 = vpop.f32.mrb[0].mxu0
      %v2493 = vadd.f32 %v552, %v2492
      %2494 = vmatprep.mubr.f32.mxu0 0.0
      %2495 = vmatmul.mubr.f32.gmra.mrb[0].mxu0 %v564
      %v2496 = vpop.f32.mrb[0].mxu0
      %v2497 = vadd.f32 %v557, %v2496
      %v2498 = vpop.f32.mrb[0].mxu0
      %v2499 = vadd.f32 %v557, %v2498
      %2500 = vdwg.mxu0
      %2501 = vmatprep.subr.mxu0 %v270
      %2502 = vmatpush1.msra.mxu0 %v269
      %2503 = vmatprep.subr.mxu0 %v350
      %2504 = vmatpush1.msra.mxu0 %v349
      %2505 = vmatprep.subr.mxu0 %v430
      %2506 = vmatpush1.msra.mxu0 %v429
      %2507 = vmatprep.subr.mxu0 %v703
      %2508 = vmatpush1.msra.mxu0 %v700
      %2509 = vmatprep.subr.mxu0 0.0
      %2510 = vmatpush1.msra.mxu0 0.0
      %2511 = vmatprep.subr.mxu0 0.0
      %2512 = vmatpush1.msra.mxu0 0.0
      %2513 = vmatprep.subr.mxu0 0.0
      %2514 = vmatpush1.msra.mxu0 0.0
      %2515 = vmatprep.subr.mxu0 0.0
      %2516 = vmatpush1.msra.mxu0 0.0
      %2517 = vmatprep.subr.mxu0 0.0
      %2518 = vmatpush1.msra.mxu0 0.0
      %2519 = vmatprep.subr.mxu0 0.0
      %2520 = vmatpush1.msra.mxu0 0.0
      %2521 = vmatprep.subr.mxu0 0.0
      %2522 = vmatpush1.msra.mxu0 0.0
      %2523 = vmatprep.subr.mxu0 0.0
      %2524 = vmatpush1.msra.mxu0 0.0
      %2525 = vmatprep.subr.mxu0 0.0
      %2526 = vmatpush1.msra.mxu0 0.0
      %2527 = vmatprep.subr.mxu0 0.0
      %2528 = vmatpush1.msra.mxu0 0.0
      %2529 = vmatprep.subr.mxu0 0.0
      %2530 = vmatpush1.msra.mxu0 0.0
      %2531 = vmatprep.subr.mxu0 0.0
      %2532 = vmatpush1.msra.mxu0 0.0
      %2533 = vmatprep.subr.mxu0 0.0
      %2534 = vmatpush1.msra.mxu0 0.0
      %2535 = vmatprep.subr.mxu0 0.0
      %2536 = vmatpush1.msra.mxu0 0.0
      %2537 = vmatprep.subr.mxu0 0.0
      %2538 = vmatpush1.msra.mxu0 0.0
      %2539 = vmatprep.subr.mxu0 0.0
      %2540 = vmatpush1.msra.mxu0 0.0
      %2541 = vmatprep.subr.mxu0 0.0
      %2542 = vmatpush1.msra.mxu0 0.0
      %2543 = vmatprep.subr.mxu0 0.0
      %2544 = vmatpush1.msra.mxu0 0.0
      %2545 = vmatprep.subr.mxu0 0.0
      %2546 = vmatpush1.msra.mxu0 0.0
      %2547 = vmatprep.subr.mxu0 0.0
      %2548 = vmatpush1.msra.mxu0 0.0
      %2549 = vmatprep.subr.mxu0 0.0
      %2550 = vmatpush1.msra.mxu0 0.0
      %2551 = vmatprep.subr.mxu0 0.0
      %2552 = vmatpush1.msra.mxu0 0.0
      %2553 = vmatprep.subr.mxu0 0.0
      %2554 = vmatpush1.msra.mxu0 0.0
      %2555 = vmatprep.subr.mxu0 0.0
      %2556 = vmatpush1.msra.mxu0 0.0
      %2557 = vmatprep.subr.mxu0 0.0
      %2558 = vmatpush1.msra.mxu0 0.0
      %2559 = vmatprep.subr.mxu0 0.0
      %2560 = vmatpush1.msra.mxu0 0.0
      %2561 = vmatprep.subr.mxu0 0.0
      %2562 = vmatpush1.msra.mxu0 0.0
      %2563 = vmatprep.subr.mxu0 0.0
      %2564 = vmatpush1.msra.mxu0 0.0
      %2565 = vmatprep.mubr.f32.mxu0 0.0
      %2566 = vmatmul.mubr.f32.gmra.mrb[0].mxu0 %v561
      %v2567 = vpop.f32.mrb[0].mxu0
      %v2568 = vadd.f32 %v552, %v2567
      %v2569 = vpop.f32.mrb[0].mxu0
      %v2570 = vadd.f32 %v552, %v2569
      %2571 = vmatprep.mubr.f32.mxu0 0.0
      %2572 = vmatmul.mubr.f32.gmra.mrb[0].mxu0 %v564
      %v2573 = vpop.f32.mrb[0].mxu0
      %v2574 = vadd.f32 %v557, %v2573
      %v2575 = vpop.f32.mrb[0].mxu0
      %v2576 = vadd.f32 %v557, %v2575
      %2577 = vdwg.mxu0
      %2578 = vmatprep.subr.mxu0 %v272
      %2579 = vmatpush1.msra.mxu0 %v271
      %2580 = vmatprep.subr.mxu0 %v352
      %2581 = vmatpush1.msra.mxu0 %v351
      %2582 = vmatprep.subr.mxu0 %v432
      %2583 = vmatpush1.msra.mxu0 %v431
      %2584 = vmatprep.subr.mxu0 %v709
      %2585 = vmatpush1.msra.mxu0 %v706
      %2586 = vmatprep.subr.mxu0 0.0
      %2587 = vmatpush1.msra.mxu0 0.0
      %2588 = vmatprep.subr.mxu0 0.0
      %2589 = vmatpush1.msra.mxu0 0.0
      %2590 = vmatprep.subr.mxu0 0.0
      %2591 = vmatpush1.msra.mxu0 0.0
      %2592 = vmatprep.subr.mxu0 0.0
      %2593 = vmatpush1.msra.mxu0 0.0
      %2594 = vmatprep.subr.mxu0 0.0
      %2595 = vmatpush1.msra.mxu0 0.0
      %2596 = vmatprep.subr.mxu0 0.0
      %2597 = vmatpush1.msra.mxu0 0.0
      %2598 = vmatprep.subr.mxu0 0.0
      %2599 = vmatpush1.msra.mxu0 0.0
      %2600 = vmatprep.subr.mxu0 0.0
      %2601 = vmatpush1.msra.mxu0 0.0
      %2602 = vmatprep.subr.mxu0 0.0
      %2603 = vmatpush1.msra.mxu0 0.0
      %2604 = vmatprep.subr.mxu0 0.0
      %2605 = vmatpush1.msra.mxu0 0.0
      %2606 = vmatprep.subr.mxu0 0.0
      %2607 = vmatpush1.msra.mxu0 0.0
      %2608 = vmatprep.subr.mxu0 0.0
      %2609 = vmatpush1.msra.mxu0 0.0
      %2610 = vmatprep.subr.mxu0 0.0
      %2611 = vmatpush1.msra.mxu0 0.0
      %2612 = vmatprep.subr.mxu0 0.0
      %2613 = vmatpush1.msra.mxu0 0.0
      %2614 = vmatprep.subr.mxu0 0.0
      %2615 = vmatpush1.msra.mxu0 0.0
      %2616 = vmatprep.subr.mxu0 0.0
      %2617 = vmatpush1.msra.mxu0 0.0
      %2618 = vmatprep.subr.mxu0 0.0
      %2619 = vmatpush1.msra.mxu0 0.0
      %2620 = vmatprep.subr.mxu0 0.0
      %2621 = vmatpush1.msra.mxu0 0.0
      %2622 = vmatprep.subr.mxu0 0.0
      %2623 = vmatpush1.msra.mxu0 0.0
      %2624 = vmatprep.subr.mxu0 0.0
      %2625 = vmatpush1.msra.mxu0 0.0
      %2626 = vmatprep.subr.mxu0 0.0
      %2627 = vmatpush1.msra.mxu0 0.0
      %2628 = vmatprep.subr.mxu0 0.0
      %2629 = vmatpush1.msra.mxu0 0.0
      %2630 = vmatprep.subr.mxu0 0.0
      %2631 = vmatpush1.msra.mxu0 0.0
      %2632 = vmatprep.subr.mxu0 0.0
      %2633 = vmatpush1.msra.mxu0 0.0
      %2634 = vmatprep.subr.mxu0 0.0
      %2635 = vmatpush1.msra.mxu0 0.0
      %2636 = vmatprep.subr.mxu0 0.0
      %2637 = vmatpush1.msra.mxu0 0.0
      %2638 = vmatprep.subr.mxu0 0.0
      %2639 = vmatpush1.msra.mxu0 0.0
      %2640 = vmatprep.subr.mxu0 0.0
      %2641 = vmatpush1.msra.mxu0 0.0
      %2642 = vmatprep.mubr.f32.mxu0 0.0
      %2643 = vmatmul.mubr.f32.gmra.mrb[0].mxu0 %v561
      %v2644 = vpop.f32.mrb[0].mxu0
      %v2645 = vadd.f32 %v552, %v2644
      %v2646 = vpop.f32.mrb[0].mxu0
      %v2647 = vadd.f32 %v552, %v2646
      %2648 = vmatprep.mubr.f32.mxu0 0.0
      %2649 = vmatmul.mubr.f32.gmra.mrb[0].mxu0 %v564
      %v2650 = vpop.f32.mrb[0].mxu0
      %v2651 = vadd.f32 %v557, %v2650
      %v2652 = vpop.f32.mrb[0].mxu0
      %v2653 = vadd.f32 %v557, %v2652
      %2654 = vdwg.mxu0
      %2655 = vmatprep.subr.mxu0 %v274
      %2656 = vmatpush1.msra.mxu0 %v273
      %2657 = vmatprep.subr.mxu0 %v354
      %2658 = vmatpush1.msra.mxu0 %v353
      %2659 = vmatprep.subr.mxu0 %v434
      %2660 = vmatpush1.msra.mxu0 %v433
      %2661 = vmatprep.subr.mxu0 %v715
      %2662 = vmatpush1.msra.mxu0 %v712
      %2663 = vmatprep.subr.mxu0 0.0
      %2664 = vmatpush1.msra.mxu0 0.0
      %2665 = vmatprep.subr.mxu0 0.0
      %2666 = vmatpush1.msra.mxu0 0.0
      %2667 = vmatprep.subr.mxu0 0.0
      %2668 = vmatpush1.msra.mxu0 0.0
      %2669 = vmatprep.subr.mxu0 0.0
      %2670 = vmatpush1.msra.mxu0 0.0
      %2671 = vmatprep.subr.mxu0 0.0
      %2672 = vmatpush1.msra.mxu0 0.0
      %2673 = vmatprep.subr.mxu0 0.0
      %2674 = vmatpush1.msra.mxu0 0.0
      %2675 = vmatprep.subr.mxu0 0.0
      %2676 = vmatpush1.msra.mxu0 0.0
      %2677 = vmatprep.subr.mxu0 0.0
      %2678 = vmatpush1.msra.mxu0 0.0
      %2679 = vmatprep.subr.mxu0 0.0
      %2680 = vmatpush1.msra.mxu0 0.0
      %2681 = vmatprep.subr.mxu0 0.0
      %2682 = vmatpush1.msra.mxu0 0.0
      %2683 = vmatprep.subr.mxu0 0.0
      %2684 = vmatpush1.msra.mxu0 0.0
      %2685 = vmatprep.subr.mxu0 0.0
      %2686 = vmatpush1.msra.mxu0 0.0
      %2687 = vmatprep.subr.mxu0 0.0
      %2688 = vmatpush1.msra.mxu0 0.0
      %2689 = vmatprep.subr.mxu0 0.0
      %2690 = vmatpush1.msra.mxu0 0.0
      %2691 = vmatprep.subr.mxu0 0.0
      %2692 = vmatpush1.msra.mxu0 0.0
      %2693 = vmatprep.subr.mxu0 0.0
      %2694 = vmatpush1.msra.mxu0 0.0
      %2695 = vmatprep.subr.mxu0 0.0
      %2696 = vmatpush1.msra.mxu0 0.0
      %2697 = vmatprep.subr.mxu0 0.0
      %2698 = vmatpush1.msra.mxu0 0.0
      %2699 = vmatprep.subr.mxu0 0.0
      %2700 = vmatpush1.msra.mxu0 0.0
      %2701 = vmatprep.subr.mxu0 0.0
      %2702 = vmatpush1.msra.mxu0 0.0
      %2703 = vmatprep.subr.mxu0 0.0
      %2704 = vmatpush1.msra.mxu0 0.0
      %2705 = vmatprep.subr.mxu0 0.0
      %2706 = vmatpush1.msra.mxu0 0.0
      %2707 = vmatprep.subr.mxu0 0.0
      %2708 = vmatpush1.msra.mxu0 0.0
      %2709 = vmatprep.subr.mxu0 0.0
      %2710 = vmatpush1.msra.mxu0 0.0
      %2711 = vmatprep.subr.mxu0 0.0
      %2712 = vmatpush1.msra.mxu0 0.0
      %2713 = vmatprep.subr.mxu0 0.0
      %2714 = vmatpush1.msra.mxu0 0.0
      %2715 = vmatprep.subr.mxu0 0.0
      %2716 = vmatpush1.msra.mxu0 0.0
      %2717 = vmatprep.subr.mxu0 0.0
      %2718 = vmatpush1.msra.mxu0 0.0
      %2719 = vmatprep.mubr.f32.mxu0 0.0
      %2720 = vmatmul.mubr.f32.gmra.mrb[0].mxu0 %v561
      %v2721 = vpop.f32.mrb[0].mxu0
      %v2722 = vadd.f32 %v552, %v2721
      %v2723 = vpop.f32.mrb[0].mxu0
      %v2724 = vadd.f32 %v552, %v2723
      %2725 = vmatprep.mubr.f32.mxu0 0.0
      %2726 = vmatmul.mubr.f32.gmra.mrb[0].mxu0 %v564
      %v2727 = vpop.f32.mrb[0].mxu0
      %v2728 = vadd.f32 %v557, %v2727
      %v2729 = vpop.f32.mrb[0].mxu0
      %v2730 = vadd.f32 %v557, %v2729
      %2731 = vdwg.mxu0
      %2732 = vmatprep.subr.mxu0 %v276
      %2733 = vmatpush1.msra.mxu0 %v275
      %2734 = vmatprep.subr.mxu0 %v356
      %2735 = vmatpush1.msra.mxu0 %v355
      %2736 = vmatprep.subr.mxu0 %v436
      %2737 = vmatpush1.msra.mxu0 %v435
      %2738 = vmatprep.subr.mxu0 %v721
      %2739 = vmatpush1.msra.mxu0 %v718
      %2740 = vmatprep.subr.mxu0 0.0
      %2741 = vmatpush1.msra.mxu0 0.0
      %2742 = vmatprep.subr.mxu0 0.0
      %2743 = vmatpush1.msra.mxu0 0.0
      %2744 = vmatprep.subr.mxu0 0.0
      %2745 = vmatpush1.msra.mxu0 0.0
      %2746 = vmatprep.subr.mxu0 0.0
      %2747 = vmatpush1.msra.mxu0 0.0
      %2748 = vmatprep.subr.mxu0 0.0
      %2749 = vmatpush1.msra.mxu0 0.0
      %2750 = vmatprep.subr.mxu0 0.0
      %2751 = vmatpush1.msra.mxu0 0.0
      %2752 = vmatprep.subr.mxu0 0.0
      %2753 = vmatpush1.msra.mxu0 0.0
      %2754 = vmatprep.subr.mxu0 0.0
      %2755 = vmatpush1.msra.mxu0 0.0
      %2756 = vmatprep.subr.mxu0 0.0
      %2757 = vmatpush1.msra.mxu0 0.0
      %2758 = vmatprep.subr.mxu0 0.0
      %2759 = vmatpush1.msra.mxu0 0.0
      %2760 = vmatprep.subr.mxu0 0.0
      %2761 = vmatpush1.msra.mxu0 0.0
      %2762 = vmatprep.subr.mxu0 0.0
      %2763 = vmatpush1.msra.mxu0 0.0
      %2764 = vmatprep.subr.mxu0 0.0
      %2765 = vmatpush1.msra.mxu0 0.0
      %2766 = vmatprep.subr.mxu0 0.0
      %2767 = vmatpush1.msra.mxu0 0.0
      %2768 = vmatprep.subr.mxu0 0.0
      %2769 = vmatpush1.msra.mxu0 0.0
      %2770 = vmatprep.subr.mxu0 0.0
      %2771 = vmatpush1.msra.mxu0 0.0
      %2772 = vmatprep.subr.mxu0 0.0
      %2773 = vmatpush1.msra.mxu0 0.0
      %2774 = vmatprep.subr.mxu0 0.0
      %2775 = vmatpush1.msra.mxu0 0.0
      %2776 = vmatprep.subr.mxu0 0.0
      %2777 = vmatpush1.msra.mxu0 0.0
      %2778 = vmatprep.subr.mxu0 0.0
      %2779 = vmatpush1.msra.mxu0 0.0
      %2780 = vmatprep.subr.mxu0 0.0
      %2781 = vmatpush1.msra.mxu0 0.0
      %2782 = vmatprep.subr.mxu0 0.0
      %2783 = vmatpush1.msra.mxu0 0.0
      %2784 = vmatprep.subr.mxu0 0.0
      %2785 = vmatpush1.msra.mxu0 0.0
      %2786 = vmatprep.subr.mxu0 0.0
      %2787 = vmatpush1.msra.mxu0 0.0
      %2788 = vmatprep.subr.mxu0 0.0
      %2789 = vmatpush1.msra.mxu0 0.0
      %2790 = vmatprep.subr.mxu0 0.0
      %2791 = vmatpush1.msra.mxu0 0.0
      %2792 = vmatprep.subr.mxu0 0.0
      %2793 = vmatpush1.msra.mxu0 0.0
      %2794 = vmatprep.subr.mxu0 0.0
      %2795 = vmatpush1.msra.mxu0 0.0
      %2796 = vmatprep.mubr.f32.mxu0 0.0
      %2797 = vmatmul.mubr.f32.gmra.mrb[0].mxu0 %v561
      %v2798 = vpop.f32.mrb[0].mxu0
      %v2799 = vadd.f32 %v552, %v2798
      %v2800 = vpop.f32.mrb[0].mxu0
      %v2801 = vadd.f32 %v552, %v2800
      %2802 = vmatprep.mubr.f32.mxu0 0.0
      %2803 = vmatmul.mubr.f32.gmra.mrb[0].mxu0 %v564
      %v2804 = vpop.f32.mrb[0].mxu0
      %v2805 = vadd.f32 %v557, %v2804
      %v2806 = vpop.f32.mrb[0].mxu0
      %v2807 = vadd.f32 %v557, %v2806
      %2808 = vdwg.mxu0
      %2809 = vmatprep.subr.mxu0 %v278
      %2810 = vmatpush1.msra.mxu0 %v277
      %2811 = vmatprep.subr.mxu0 %v358
      %2812 = vmatpush1.msra.mxu0 %v357
      %2813 = vmatprep.subr.mxu0 %v438
      %2814 = vmatpush1.msra.mxu0 %v437
      %2815 = vmatprep.subr.mxu0 %v727
      %2816 = vmatpush1.msra.mxu0 %v724
      %2817 = vmatprep.subr.mxu0 0.0
      %2818 = vmatpush1.msra.mxu0 0.0
      %2819 = vmatprep.subr.mxu0 0.0
      %2820 = vmatpush1.msra.mxu0 0.0
      %2821 = vmatprep.subr.mxu0 0.0
      %2822 = vmatpush1.msra.mxu0 0.0
      %2823 = vmatprep.subr.mxu0 0.0
      %2824 = vmatpush1.msra.mxu0 0.0
      %2825 = vmatprep.subr.mxu0 0.0
      %2826 = vmatpush1.msra.mxu0 0.0
      %2827 = vmatprep.subr.mxu0 0.0
      %2828 = vmatpush1.msra.mxu0 0.0
      %2829 = vmatprep.subr.mxu0 0.0
      %2830 = vmatpush1.msra.mxu0 0.0
      %2831 = vmatprep.subr.mxu0 0.0
      %2832 = vmatpush1.msra.mxu0 0.0
      %2833 = vmatprep.subr.mxu0 0.0
      %2834 = vmatpush1.msra.mxu0 0.0
      %2835 = vmatprep.subr.mxu0 0.0
      %2836 = vmatpush1.msra.mxu0 0.0
      %2837 = vmatprep.subr.mxu0 0.0
      %2838 = vmatpush1.msra.mxu0 0.0
      %2839 = vmatprep.subr.mxu0 0.0
      %2840 = vmatpush1.msra.mxu0 0.0
      %2841 = vmatprep.subr.mxu0 0.0
      %2842 = vmatpush1.msra.mxu0 0.0
      %2843 = vmatprep.subr.mxu0 0.0
      %2844 = vmatpush1.msra.mxu0 0.0
      %2845 = vmatprep.subr.mxu0 0.0
      %2846 = vmatpush1.msra.mxu0 0.0
      %2847 = vmatprep.subr.mxu0 0.0
      %2848 = vmatpush1.msra.mxu0 0.0
      %2849 = vmatprep.subr.mxu0 0.0
      %2850 = vmatpush1.msra.mxu0 0.0
      %2851 = vmatprep.subr.mxu0 0.0
      %2852 = vmatpush1.msra.mxu0 0.0
      %2853 = vmatprep.subr.mxu0 0.0
      %2854 = vmatpush1.msra.mxu0 0.0
      %2855 = vmatprep.subr.mxu0 0.0
      %2856 = vmatpush1.msra.mxu0 0.0
      %2857 = vmatprep.subr.mxu0 0.0
      %2858 = vmatpush1.msra.mxu0 0.0
      %2859 = vmatprep.subr.mxu0 0.0
      %2860 = vmatpush1.msra.mxu0 0.0
      %2861 = vmatprep.subr.mxu0 0.0
      %2862 = vmatpush1.msra.mxu0 0.0
      %2863 = vmatprep.subr.mxu0 0.0
      %2864 = vmatpush1.msra.mxu0 0.0
      %2865 = vmatprep.subr.mxu0 0.0
      %2866 = vmatpush1.msra.mxu0 0.0
      %2867 = vmatprep.subr.mxu0 0.0
      %2868 = vmatpush1.msra.mxu0 0.0
      %2869 = vmatprep.subr.mxu0 0.0
      %2870 = vmatpush1.msra.mxu0 0.0
      %2871 = vmatprep.subr.mxu0 0.0
      %2872 = vmatpush1.msra.mxu0 0.0
      %2873 = vmatprep.mubr.f32.mxu0 0.0
      %2874 = vmatmul.mubr.f32.gmra.mrb[0].mxu0 %v561
      %v2875 = vpop.f32.mrb[0].mxu0
      %v2876 = vadd.f32 %v552, %v2875
      %v2877 = vpop.f32.mrb[0].mxu0
      %v2878 = vadd.f32 %v552, %v2877
      %2879 = vmatprep.mubr.f32.mxu0 0.0
      %2880 = vmatmul.mubr.f32.gmra.mrb[0].mxu0 %v564
      %v2881 = vpop.f32.mrb[0].mxu0
      %v2882 = vadd.f32 %v557, %v2881
      %v2883 = vpop.f32.mrb[0].mxu0
      %v2884 = vadd.f32 %v557, %v2883
      %2885 = vdwg.mxu0
      %2886 = vmatprep.subr.mxu0 %v280
      %2887 = vmatpush1.msra.mxu0 %v279
      %2888 = vmatprep.subr.mxu0 %v360
      %2889 = vmatpush1.msra.mxu0 %v359
      %2890 = vmatprep.subr.mxu0 %v440
      %2891 = vmatpush1.msra.mxu0 %v439
      %2892 = vmatprep.subr.mxu0 %v733
      %2893 = vmatpush1.msra.mxu0 %v730
      %2894 = vmatprep.subr.mxu0 0.0
      %2895 = vmatpush1.msra.mxu0 0.0
      %2896 = vmatprep.subr.mxu0 0.0
      %2897 = vmatpush1.msra.mxu0 0.0
      %2898 = vmatprep.subr.mxu0 0.0
      %2899 = vmatpush1.msra.mxu0 0.0
      %2900 = vmatprep.subr.mxu0 0.0
      %2901 = vmatpush1.msra.mxu0 0.0
      %2902 = vmatprep.subr.mxu0 0.0
      %2903 = vmatpush1.msra.mxu0 0.0
      %2904 = vmatprep.subr.mxu0 0.0
      %2905 = vmatpush1.msra.mxu0 0.0
      %2906 = vmatprep.subr.mxu0 0.0
      %2907 = vmatpush1.msra.mxu0 0.0
      %2908 = vmatprep.subr.mxu0 0.0
      %2909 = vmatpush1.msra.mxu0 0.0
      %2910 = vmatprep.subr.mxu0 0.0
      %2911 = vmatpush1.msra.mxu0 0.0
      %2912 = vmatprep.subr.mxu0 0.0
      %2913 = vmatpush1.msra.mxu0 0.0
      %2914 = vmatprep.subr.mxu0 0.0
      %2915 = vmatpush1.msra.mxu0 0.0
      %2916 = vmatprep.subr.mxu0 0.0
      %2917 = vmatpush1.msra.mxu0 0.0
      %2918 = vmatprep.subr.mxu0 0.0
      %2919 = vmatpush1.msra.mxu0 0.0
      %2920 = vmatprep.subr.mxu0 0.0
      %2921 = vmatpush1.msra.mxu0 0.0
      %2922 = vmatprep.subr.mxu0 0.0
      %2923 = vmatpush1.msra.mxu0 0.0
      %2924 = vmatprep.subr.mxu0 0.0
      %2925 = vmatpush1.msra.mxu0 0.0
      %2926 = vmatprep.subr.mxu0 0.0
      %2927 = vmatpush1.msra.mxu0 0.0
      %2928 = vmatprep.subr.mxu0 0.0
      %2929 = vmatpush1.msra.mxu0 0.0
      %2930 = vmatprep.subr.mxu0 0.0
      %2931 = vmatpush1.msra.mxu0 0.0
      %2932 = vmatprep.subr.mxu0 0.0
      %2933 = vmatpush1.msra.mxu0 0.0
      %2934 = vmatprep.subr.mxu0 0.0
      %2935 = vmatpush1.msra.mxu0 0.0
      %2936 = vmatprep.subr.mxu0 0.0
      %2937 = vmatpush1.msra.mxu0 0.0
      %2938 = vmatprep.subr.mxu0 0.0
      %2939 = vmatpush1.msra.mxu0 0.0
      %2940 = vmatprep.subr.mxu0 0.0
      %2941 = vmatpush1.msra.mxu0 0.0
      %2942 = vmatprep.subr.mxu0 0.0
      %2943 = vmatpush1.msra.mxu0 0.0
      %2944 = vmatprep.subr.mxu0 0.0
      %2945 = vmatpush1.msra.mxu0 0.0
      %2946 = vmatprep.subr.mxu0 0.0
      %2947 = vmatpush1.msra.mxu0 0.0
      %2948 = vmatprep.subr.mxu0 0.0
      %2949 = vmatpush1.msra.mxu0 0.0
      %2950 = vmatprep.mubr.f32.mxu0 0.0
      %2951 = vmatmul.mubr.f32.gmra.mrb[0].mxu0 %v561
      %v2952 = vpop.f32.mrb[0].mxu0
      %v2953 = vadd.f32 %v552, %v2952
      %v2954 = vpop.f32.mrb[0].mxu0
      %v2955 = vadd.f32 %v552, %v2954
      %2956 = vmatprep.mubr.f32.mxu0 0.0
      %2957 = vmatmul.mubr.f32.gmra.mrb[0].mxu0 %v564
      %v2958 = vpop.f32.mrb[0].mxu0
      %v2959 = vadd.f32 %v557, %v2958
      %v2960 = vpop.f32.mrb[0].mxu0
      %v2961 = vadd.f32 %v557, %v2960
      %2962 = vdwg.mxu0
      %2963 = vmatprep.subr.mxu0 %v282
      %2964 = vmatpush1.msra.mxu0 %v281
      %2965 = vmatprep.subr.mxu0 %v362
      %2966 = vmatpush1.msra.mxu0 %v361
      %2967 = vmatprep.subr.mxu0 %v442
      %2968 = vmatpush1.msra.mxu0 %v441
      %2969 = vmatprep.subr.mxu0 %v739
      %2970 = vmatpush1.msra.mxu0 %v736
      %2971 = vmatprep.subr.mxu0 0.0
      %2972 = vmatpush1.msra.mxu0 0.0
      %2973 = vmatprep.subr.mxu0 0.0
      %2974 = vmatpush1.msra.mxu0 0.0
      %2975 = vmatprep.subr.mxu0 0.0
      %2976 = vmatpush1.msra.mxu0 0.0
      %2977 = vmatprep.subr.mxu0 0.0
      %2978 = vmatpush1.msra.mxu0 0.0
      %2979 = vmatprep.subr.mxu0 0.0
      %2980 = vmatpush1.msra.mxu0 0.0
      %2981 = vmatprep.subr.mxu0 0.0
      %2982 = vmatpush1.msra.mxu0 0.0
      %2983 = vmatprep.subr.mxu0 0.0
      %2984 = vmatpush1.msra.mxu0 0.0
      %2985 = vmatprep.subr.mxu0 0.0
      %2986 = vmatpush1.msra.mxu0 0.0
      %2987 = vmatprep.subr.mxu0 0.0
      %2988 = vmatpush1.msra.mxu0 0.0
      %2989 = vmatprep.subr.mxu0 0.0
      %2990 = vmatpush1.msra.mxu0 0.0
      %2991 = vmatprep.subr.mxu0 0.0
      %2992 = vmatpush1.msra.mxu0 0.0
      %2993 = vmatprep.subr.mxu0 0.0
      %2994 = vmatpush1.msra.mxu0 0.0
      %2995 = vmatprep.subr.mxu0 0.0
      %2996 = vmatpush1.msra.mxu0 0.0
      %2997 = vmatprep.subr.mxu0 0.0
      %2998 = vmatpush1.msra.mxu0 0.0
      %2999 = vmatprep.subr.mxu0 0.0
      %3000 = vmatpush1.msra.mxu0 0.0
      %3001 = vmatprep.subr.mxu0 0.0
      %3002 = vmatpush1.msra.mxu0 0.0
      %3003 = vmatprep.subr.mxu0 0.0
      %3004 = vmatpush1.msra.mxu0 0.0
      %3005 = vmatprep.subr.mxu0 0.0
      %3006 = vmatpush1.msra.mxu0 0.0
      %3007 = vmatprep.subr.mxu0 0.0
      %3008 = vmatpush1.msra.mxu0 0.0
      %3009 = vmatprep.subr.mxu0 0.0
      %3010 = vmatpush1.msra.mxu0 0.0
      %3011 = vmatprep.subr.mxu0 0.0
      %3012 = vmatpush1.msra.mxu0 0.0
      %3013 = vmatprep.subr.mxu0 0.0
      %3014 = vmatpush1.msra.mxu0 0.0
      %3015 = vmatprep.subr.mxu0 0.0
      %3016 = vmatpush1.msra.mxu0 0.0
      %3017 = vmatprep.subr.mxu0 0.0
      %3018 = vmatpush1.msra.mxu0 0.0
      %3019 = vmatprep.subr.mxu0 0.0
      %3020 = vmatpush1.msra.mxu0 0.0
      %3021 = vmatprep.subr.mxu0 0.0
      %3022 = vmatpush1.msra.mxu0 0.0
      %3023 = vmatprep.subr.mxu0 0.0
      %3024 = vmatpush1.msra.mxu0 0.0
      %3025 = vmatprep.subr.mxu0 0.0
      %3026 = vmatpush1.msra.mxu0 0.0
      %3027 = vmatprep.mubr.f32.mxu0 0.0
      %3028 = vmatmul.mubr.f32.gmra.mrb[0].mxu0 %v561
      %v3029 = vpop.f32.mrb[0].mxu0
      %v3030 = vadd.f32 %v552, %v3029
      %v3031 = vpop.f32.mrb[0].mxu0
      %v3032 = vadd.f32 %v552, %v3031
      %3033 = vmatprep.mubr.f32.mxu0 0.0
      %3034 = vmatmul.mubr.f32.gmra.mrb[0].mxu0 %v564
      %v3035 = vpop.f32.mrb[0].mxu0
      %v3036 = vadd.f32 %v557, %v3035
      %v3037 = vpop.f32.mrb[0].mxu0
      %v3038 = vadd.f32 %v557, %v3037
      %3039 = vdwg.mxu0
      %3040 = vmatprep.subr.mxu0 %v284
      %3041 = vmatpush1.msra.mxu0 %v283
      %3042 = vmatprep.subr.mxu0 %v364
      %3043 = vmatpush1.msra.mxu0 %v363
      %3044 = vmatprep.subr.mxu0 %v444
      %3045 = vmatpush1.msra.mxu0 %v443
      %3046 = vmatprep.subr.mxu0 %v745
      %3047 = vmatpush1.msra.mxu0 %v742
      %3048 = vmatprep.subr.mxu0 0.0
      %3049 = vmatpush1.msra.mxu0 0.0
      %3050 = vmatprep.subr.mxu0 0.0
      %3051 = vmatpush1.msra.mxu0 0.0
      %3052 = vmatprep.subr.mxu0 0.0
      %3053 = vmatpush1.msra.mxu0 0.0
      %3054 = vmatprep.subr.mxu0 0.0
      %3055 = vmatpush1.msra.mxu0 0.0
      %3056 = vmatprep.subr.mxu0 0.0
      %3057 = vmatpush1.msra.mxu0 0.0
      %3058 = vmatprep.subr.mxu0 0.0
      %3059 = vmatpush1.msra.mxu0 0.0
      %3060 = vmatprep.subr.mxu0 0.0
      %3061 = vmatpush1.msra.mxu0 0.0
      %3062 = vmatprep.subr.mxu0 0.0
      %3063 = vmatpush1.msra.mxu0 0.0
      %3064 = vmatprep.subr.mxu0 0.0
      %3065 = vmatpush1.msra.mxu0 0.0
      %3066 = vmatprep.subr.mxu0 0.0
      %3067 = vmatpush1.msra.mxu0 0.0
      %3068 = vmatprep.subr.mxu0 0.0
      %3069 = vmatpush1.msra.mxu0 0.0
      %3070 = vmatprep.subr.mxu0 0.0
      %3071 = vmatpush1.msra.mxu0 0.0
      %3072 = vmatprep.subr.mxu0 0.0
      %3073 = vmatpush1.msra.mxu0 0.0
      %3074 = vmatprep.subr.mxu0 0.0
      %3075 = vmatpush1.msra.mxu0 0.0
      %3076 = vmatprep.subr.mxu0 0.0
      %3077 = vmatpush1.msra.mxu0 0.0
      %3078 = vmatprep.subr.mxu0 0.0
      %3079 = vmatpush1.msra.mxu0 0.0
      %3080 = vmatprep.subr.mxu0 0.0
      %3081 = vmatpush1.msra.mxu0 0.0
      %3082 = vmatprep.subr.mxu0 0.0
      %3083 = vmatpush1.msra.mxu0 0.0
      %3084 = vmatprep.subr.mxu0 0.0
      %3085 = vmatpush1.msra.mxu0 0.0
      %3086 = vmatprep.subr.mxu0 0.0
      %3087 = vmatpush1.msra.mxu0 0.0
      %3088 = vmatprep.subr.mxu0 0.0
      %3089 = vmatpush1.msra.mxu0 0.0
      %3090 = vmatprep.subr.mxu0 0.0
      %3091 = vmatpush1.msra.mxu0 0.0
      %3092 = vmatprep.subr.mxu0 0.0
      %3093 = vmatpush1.msra.mxu0 0.0
      %3094 = vmatprep.subr.mxu0 0.0
      %3095 = vmatpush1.msra.mxu0 0.0
      %3096 = vmatprep.subr.mxu0 0.0
      %3097 = vmatpush1.msra.mxu0 0.0
      %3098 = vmatprep.subr.mxu0 0.0
      %3099 = vmatpush1.msra.mxu0 0.0
      %3100 = vmatprep.subr.mxu0 0.0
      %3101 = vmatpush1.msra.mxu0 0.0
      %3102 = vmatprep.subr.mxu0 0.0
      %3103 = vmatpush1.msra.mxu0 0.0
      %3104 = vmatprep.mubr.f32.mxu0 0.0
      %3105 = vmatmul.mubr.f32.gmra.mrb[0].mxu0 %v561
      %v3106 = vpop.f32.mrb[0].mxu0
      %v3107 = vadd.f32 %v552, %v3106
      %v3108 = vpop.f32.mrb[0].mxu0
      %v3109 = vadd.f32 %v552, %v3108
      %3110 = vmatprep.mubr.f32.mxu0 0.0
      %3111 = vmatmul.mubr.f32.gmra.mrb[0].mxu0 %v564
      %v3112 = vpop.f32.mrb[0].mxu0
      %v3113 = vadd.f32 %v557, %v3112
      %v3114 = vpop.f32.mrb[0].mxu0
      %v3115 = vadd.f32 %v557, %v3114
      %3116 = vdwg.mxu0
      %3117 = vmatprep.subr.mxu0 %v286
      %3118 = vmatpush1.msra.mxu0 %v285
      %3119 = vmatprep.subr.mxu0 %v366
      %3120 = vmatpush1.msra.mxu0 %v365
      %3121 = vmatprep.subr.mxu0 %v446
      %3122 = vmatpush1.msra.mxu0 %v445
      %3123 = vmatprep.subr.mxu0 %v751
      %3124 = vmatpush1.msra.mxu0 %v748
      %3125 = vmatprep.subr.mxu0 0.0
      %3126 = vmatpush1.msra.mxu0 0.0
      %3127 = vmatprep.subr.mxu0 0.0
      %3128 = vmatpush1.msra.mxu0 0.0
      %3129 = vmatprep.subr.mxu0 0.0
      %3130 = vmatpush1.msra.mxu0 0.0
      %3131 = vmatprep.subr.mxu0 0.0
      %3132 = vmatpush1.msra.mxu0 0.0
      %3133 = vmatprep.subr.mxu0 0.0
      %3134 = vmatpush1.msra.mxu0 0.0
      %3135 = vmatprep.subr.mxu0 0.0
      %3136 = vmatpush1.msra.mxu0 0.0
      %3137 = vmatprep.subr.mxu0 0.0
      %3138 = vmatpush1.msra.mxu0 0.0
      %3139 = vmatprep.subr.mxu0 0.0
      %3140 = vmatpush1.msra.mxu0 0.0
      %3141 = vmatprep.subr.mxu0 0.0
      %3142 = vmatpush1.msra.mxu0 0.0
      %3143 = vmatprep.subr.mxu0 0.0
      %3144 = vmatpush1.msra.mxu0 0.0
      %3145 = vmatprep.subr.mxu0 0.0
      %3146 = vmatpush1.msra.mxu0 0.0
      %3147 = vmatprep.subr.mxu0 0.0
      %3148 = vmatpush1.msra.mxu0 0.0
      %3149 = vmatprep.subr.mxu0 0.0
      %3150 = vmatpush1.msra.mxu0 0.0
      %3151 = vmatprep.subr.mxu0 0.0
      %3152 = vmatpush1.msra.mxu0 0.0
      %3153 = vmatprep.subr.mxu0 0.0
      %3154 = vmatpush1.msra.mxu0 0.0
      %3155 = vmatprep.subr.mxu0 0.0
      %3156 = vmatpush1.msra.mxu0 0.0
      %3157 = vmatprep.subr.mxu0 0.0
      %3158 = vmatpush1.msra.mxu0 0.0
      %3159 = vmatprep.subr.mxu0 0.0
      %3160 = vmatpush1.msra.mxu0 0.0
      %3161 = vmatprep.subr.mxu0 0.0
      %3162 = vmatpush1.msra.mxu0 0.0
      %3163 = vmatprep.subr.mxu0 0.0
      %3164 = vmatpush1.msra.mxu0 0.0
      %3165 = vmatprep.subr.mxu0 0.0
      %3166 = vmatpush1.msra.mxu0 0.0
      %3167 = vmatprep.subr.mxu0 0.0
      %3168 = vmatpush1.msra.mxu0 0.0
      %3169 = vmatprep.subr.mxu0 0.0
      %3170 = vmatpush1.msra.mxu0 0.0
      %3171 = vmatprep.subr.mxu0 0.0
      %3172 = vmatpush1.msra.mxu0 0.0
      %3173 = vmatprep.subr.mxu0 0.0
      %3174 = vmatpush1.msra.mxu0 0.0
      %3175 = vmatprep.subr.mxu0 0.0
      %3176 = vmatpush1.msra.mxu0 0.0
      %3177 = vmatprep.subr.mxu0 0.0
      %3178 = vmatpush1.msra.mxu0 0.0
      %3179 = vmatprep.subr.mxu0 0.0
      %3180 = vmatpush1.msra.mxu0 0.0
      %3181 = vmatprep.mubr.f32.mxu0 0.0
      %3182 = vmatmul.mubr.f32.gmra.mrb[0].mxu0 %v561
      %v3183 = vpop.f32.mrb[0].mxu0
      %v3184 = vadd.f32 %v552, %v3183
      %v3185 = vpop.f32.mrb[0].mxu0
      %v3186 = vadd.f32 %v552, %v3185
      %3187 = vmatprep.mubr.f32.mxu0 0.0
      %3188 = vmatmul.mubr.f32.gmra.mrb[0].mxu0 %v564
      %v3189 = vpop.f32.mrb[0].mxu0
      %v3190 = vadd.f32 %v557, %v3189
      %v3191 = vpop.f32.mrb[0].mxu0
      %v3192 = vadd.f32 %v557, %v3191
      %3193 = vdwg.mxu0
      %3194 = vmatprep.subr.mxu0 %v288
      %3195 = vmatpush1.msra.mxu0 %v287
      %3196 = vmatprep.subr.mxu0 %v368
      %3197 = vmatpush1.msra.mxu0 %v367
      %3198 = vmatprep.subr.mxu0 %v448
      %3199 = vmatpush1.msra.mxu0 %v447
      %3200 = vmatprep.subr.mxu0 %v757
      %3201 = vmatpush1.msra.mxu0 %v754
      %3202 = vmatprep.subr.mxu0 0.0
      %3203 = vmatpush1.msra.mxu0 0.0
      %3204 = vmatprep.subr.mxu0 0.0
      %3205 = vmatpush1.msra.mxu0 0.0
      %3206 = vmatprep.subr.mxu0 0.0
      %3207 = vmatpush1.msra.mxu0 0.0
      %3208 = vmatprep.subr.mxu0 0.0
      %3209 = vmatpush1.msra.mxu0 0.0
      %3210 = vmatprep.subr.mxu0 0.0
      %3211 = vmatpush1.msra.mxu0 0.0
      %3212 = vmatprep.subr.mxu0 0.0
      %3213 = vmatpush1.msra.mxu0 0.0
      %3214 = vmatprep.subr.mxu0 0.0
      %3215 = vmatpush1.msra.mxu0 0.0
      %3216 = vmatprep.subr.mxu0 0.0
      %3217 = vmatpush1.msra.mxu0 0.0
      %3218 = vmatprep.subr.mxu0 0.0
      %3219 = vmatpush1.msra.mxu0 0.0
      %3220 = vmatprep.subr.mxu0 0.0
      %3221 = vmatpush1.msra.mxu0 0.0
      %3222 = vmatprep.subr.mxu0 0.0
      %3223 = vmatpush1.msra.mxu0 0.0
      %3224 = vmatprep.subr.mxu0 0.0
      %3225 = vmatpush1.msra.mxu0 0.0
      %3226 = vmatprep.subr.mxu0 0.0
      %3227 = vmatpush1.msra.mxu0 0.0
      %3228 = vmatprep.subr.mxu0 0.0
      %3229 = vmatpush1.msra.mxu0 0.0
      %3230 = vmatprep.subr.mxu0 0.0
      %3231 = vmatpush1.msra.mxu0 0.0
      %3232 = vmatprep.subr.mxu0 0.0
      %3233 = vmatpush1.msra.mxu0 0.0
      %3234 = vmatprep.subr.mxu0 0.0
      %3235 = vmatpush1.msra.mxu0 0.0
      %3236 = vmatprep.subr.mxu0 0.0
      %3237 = vmatpush1.msra.mxu0 0.0
      %3238 = vmatprep.subr.mxu0 0.0
      %3239 = vmatpush1.msra.mxu0 0.0
      %3240 = vmatprep.subr.mxu0 0.0
      %3241 = vmatpush1.msra.mxu0 0.0
      %3242 = vmatprep.subr.mxu0 0.0
      %3243 = vmatpush1.msra.mxu0 0.0
      %3244 = vmatprep.subr.mxu0 0.0
      %3245 = vmatpush1.msra.mxu0 0.0
      %3246 = vmatprep.subr.mxu0 0.0
      %3247 = vmatpush1.msra.mxu0 0.0
      %3248 = vmatprep.subr.mxu0 0.0
      %3249 = vmatpush1.msra.mxu0 0.0
      %3250 = vmatprep.subr.mxu0 0.0
      %3251 = vmatpush1.msra.mxu0 0.0
      %3252 = vmatprep.subr.mxu0 0.0
      %3253 = vmatpush1.msra.mxu0 0.0
      %3254 = vmatprep.subr.mxu0 0.0
      %3255 = vmatpush1.msra.mxu0 0.0
      %3256 = vmatprep.subr.mxu0 0.0
      %3257 = vmatpush1.msra.mxu0 0.0
      %3258 = vmatprep.mubr.f32.mxu0 0.0
      %3259 = vmatmul.mubr.f32.gmra.mrb[0].mxu0 %v561
      %v3260 = vpop.f32.mrb[0].mxu0
      %v3261 = vadd.f32 %v552, %v3260
      %v3262 = vpop.f32.mrb[0].mxu0
      %v3263 = vadd.f32 %v552, %v3262
      %3264 = vmatprep.mubr.f32.mxu0 0.0
      %3265 = vmatmul.mubr.f32.gmra.mrb[0].mxu0 %v564
      %v3266 = vpop.f32.mrb[0].mxu0
      %v3267 = vadd.f32 %v557, %v3266
      %v3268 = vpop.f32.mrb[0].mxu0
      %v3269 = vadd.f32 %v557, %v3268
      %3270 = vdwg.mxu0
      %3271 = vmatprep.subr.mxu0 %v290
      %3272 = vmatpush1.msra.mxu0 %v289
      %3273 = vmatprep.subr.mxu0 %v370
      %3274 = vmatpush1.msra.mxu0 %v369
      %3275 = vmatprep.subr.mxu0 %v450
      %3276 = vmatpush1.msra.mxu0 %v449
      %3277 = vmatprep.subr.mxu0 %v763
      %3278 = vmatpush1.msra.mxu0 %v760
      %3279 = vmatprep.subr.mxu0 0.0
      %3280 = vmatpush1.msra.mxu0 0.0
      %3281 = vmatprep.subr.mxu0 0.0
      %3282 = vmatpush1.msra.mxu0 0.0
      %3283 = vmatprep.subr.mxu0 0.0
      %3284 = vmatpush1.msra.mxu0 0.0
      %3285 = vmatprep.subr.mxu0 0.0
      %3286 = vmatpush1.msra.mxu0 0.0
      %3287 = vmatprep.subr.mxu0 0.0
      %3288 = vmatpush1.msra.mxu0 0.0
      %3289 = vmatprep.subr.mxu0 0.0
      %3290 = vmatpush1.msra.mxu0 0.0
      %3291 = vmatprep.subr.mxu0 0.0
      %3292 = vmatpush1.msra.mxu0 0.0
      %3293 = vmatprep.subr.mxu0 0.0
      %3294 = vmatpush1.msra.mxu0 0.0
      %3295 = vmatprep.subr.mxu0 0.0
      %3296 = vmatpush1.msra.mxu0 0.0
      %3297 = vmatprep.subr.mxu0 0.0
      %3298 = vmatpush1.msra.mxu0 0.0
      %3299 = vmatprep.subr.mxu0 0.0
      %3300 = vmatpush1.msra.mxu0 0.0
      %3301 = vmatprep.subr.mxu0 0.0
      %3302 = vmatpush1.msra.mxu0 0.0
      %3303 = vmatprep.subr.mxu0 0.0
      %3304 = vmatpush1.msra.mxu0 0.0
      %3305 = vmatprep.subr.mxu0 0.0
      %3306 = vmatpush1.msra.mxu0 0.0
      %3307 = vmatprep.subr.mxu0 0.0
      %3308 = vmatpush1.msra.mxu0 0.0
      %3309 = vmatprep.subr.mxu0 0.0
      %3310 = vmatpush1.msra.mxu0 0.0
      %3311 = vmatprep.subr.mxu0 0.0
      %3312 = vmatpush1.msra.mxu0 0.0
      %3313 = vmatprep.subr.mxu0 0.0
      %3314 = vmatpush1.msra.mxu0 0.0
      %3315 = vmatprep.subr.mxu0 0.0
      %3316 = vmatpush1.msra.mxu0 0.0
      %3317 = vmatprep.subr.mxu0 0.0
      %3318 = vmatpush1.msra.mxu0 0.0
      %3319 = vmatprep.subr.mxu0 0.0
      %3320 = vmatpush1.msra.mxu0 0.0
      %3321 = vmatprep.subr.mxu0 0.0
      %3322 = vmatpush1.msra.mxu0 0.0
      %3323 = vmatprep.subr.mxu0 0.0
      %3324 = vmatpush1.msra.mxu0 0.0
      %3325 = vmatprep.subr.mxu0 0.0
      %3326 = vmatpush1.msra.mxu0 0.0
      %3327 = vmatprep.subr.mxu0 0.0
      %3328 = vmatpush1.msra.mxu0 0.0
      %3329 = vmatprep.subr.mxu0 0.0
      %3330 = vmatpush1.msra.mxu0 0.0
      %3331 = vmatprep.subr.mxu0 0.0
      %3332 = vmatpush1.msra.mxu0 0.0
      %3333 = vmatprep.subr.mxu0 0.0
      %3334 = vmatpush1.msra.mxu0 0.0
      %3335 = vmatprep.mubr.f32.mxu0 0.0
      %3336 = vmatmul.mubr.f32.gmra.mrb[0].mxu0 %v561
      %v3337 = vpop.f32.mrb[0].mxu0
      %v3338 = vadd.f32 %v552, %v3337
      %v3339 = vpop.f32.mrb[0].mxu0
      %v3340 = vadd.f32 %v552, %v3339
      %3341 = vmatprep.mubr.f32.mxu0 0.0
      %3342 = vmatmul.mubr.f32.gmra.mrb[0].mxu0 %v564
      %v3343 = vpop.f32.mrb[0].mxu0
      %v3344 = vadd.f32 %v557, %v3343
      %v3345 = vpop.f32.mrb[0].mxu0
      %v3346 = vadd.f32 %v557, %v3345
      %3347 = vdwg.mxu0
      %3348 = vmatprep.subr.mxu0 %v292
      %3349 = vmatpush1.msra.mxu0 %v291
      %3350 = vmatprep.subr.mxu0 %v372
      %3351 = vmatpush1.msra.mxu0 %v371
      %3352 = vmatprep.subr.mxu0 %v452
      %3353 = vmatpush1.msra.mxu0 %v451
      %3354 = vmatprep.subr.mxu0 %v769
      %3355 = vmatpush1.msra.mxu0 %v766
      %3356 = vmatprep.subr.mxu0 0.0
      %3357 = vmatpush1.msra.mxu0 0.0
      %3358 = vmatprep.subr.mxu0 0.0
      %3359 = vmatpush1.msra.mxu0 0.0
      %3360 = vmatprep.subr.mxu0 0.0
      %3361 = vmatpush1.msra.mxu0 0.0
      %3362 = vmatprep.subr.mxu0 0.0
      %3363 = vmatpush1.msra.mxu0 0.0
      %3364 = vmatprep.subr.mxu0 0.0
      %3365 = vmatpush1.msra.mxu0 0.0
      %3366 = vmatprep.subr.mxu0 0.0
      %3367 = vmatpush1.msra.mxu0 0.0
      %3368 = vmatprep.subr.mxu0 0.0
      %3369 = vmatpush1.msra.mxu0 0.0
      %3370 = vmatprep.subr.mxu0 0.0
      %3371 = vmatpush1.msra.mxu0 0.0
      %3372 = vmatprep.subr.mxu0 0.0
      %3373 = vmatpush1.msra.mxu0 0.0
      %3374 = vmatprep.subr.mxu0 0.0
      %3375 = vmatpush1.msra.mxu0 0.0
      %3376 = vmatprep.subr.mxu0 0.0
      %3377 = vmatpush1.msra.mxu0 0.0
      %3378 = vmatprep.subr.mxu0 0.0
      %3379 = vmatpush1.msra.mxu0 0.0
      %3380 = vmatprep.subr.mxu0 0.0
      %3381 = vmatpush1.msra.mxu0 0.0
      %3382 = vmatprep.subr.mxu0 0.0
      %3383 = vmatpush1.msra.mxu0 0.0
      %3384 = vmatprep.subr.mxu0 0.0
      %3385 = vmatpush1.msra.mxu0 0.0
      %3386 = vmatprep.subr.mxu0 0.0
      %3387 = vmatpush1.msra.mxu0 0.0
      %3388 = vmatprep.subr.mxu0 0.0
      %3389 = vmatpush1.msra.mxu0 0.0
      %3390 = vmatprep.subr.mxu0 0.0
      %3391 = vmatpush1.msra.mxu0 0.0
      %3392 = vmatprep.subr.mxu0 0.0
      %3393 = vmatpush1.msra.mxu0 0.0
      %3394 = vmatprep.subr.mxu0 0.0
      %3395 = vmatpush1.msra.mxu0 0.0
      %3396 = vmatprep.subr.mxu0 0.0
      %3397 = vmatpush1.msra.mxu0 0.0
      %3398 = vmatprep.subr.mxu0 0.0
      %3399 = vmatpush1.msra.mxu0 0.0
      %3400 = vmatprep.subr.mxu0 0.0
      %3401 = vmatpush1.msra.mxu0 0.0
      %3402 = vmatprep.subr.mxu0 0.0
      %3403 = vmatpush1.msra.mxu0 0.0
      %3404 = vmatprep.subr.mxu0 0.0
      %3405 = vmatpush1.msra.mxu0 0.0
      %3406 = vmatprep.subr.mxu0 0.0
      %3407 = vmatpush1.msra.mxu0 0.0
      %3408 = vmatprep.subr.mxu0 0.0
      %3409 = vmatpush1.msra.mxu0 0.0
      %3410 = vmatprep.subr.mxu0 0.0
      %3411 = vmatpush1.msra.mxu0 0.0
      %3412 = vmatprep.mubr.f32.mxu0 0.0
      %3413 = vmatmul.mubr.f32.gmra.mrb[0].mxu0 %v561
      %v3414 = vpop.f32.mrb[0].mxu0
      %v3415 = vadd.f32 %v552, %v3414
      %v3416 = vpop.f32.mrb[0].mxu0
      %v3417 = vadd.f32 %v552, %v3416
      %3418 = vmatprep.mubr.f32.mxu0 0.0
      %3419 = vmatmul.mubr.f32.gmra.mrb[0].mxu0 %v564
      %v3420 = vpop.f32.mrb[0].mxu0
      %v3421 = vadd.f32 %v557, %v3420
      %v3422 = vpop.f32.mrb[0].mxu0
      %v3423 = vadd.f32 %v557, %v3422
      %3424 = vdwg.mxu0
      %3425 = vmatprep.subr.mxu0 %v294
      %3426 = vmatpush1.msra.mxu0 %v293
      %3427 = vmatprep.subr.mxu0 %v374
      %3428 = vmatpush1.msra.mxu0 %v373
      %3429 = vmatprep.subr.mxu0 %v454
      %3430 = vmatpush1.msra.mxu0 %v453
      %3431 = vmatprep.subr.mxu0 %v775
      %3432 = vmatpush1.msra.mxu0 %v772
      %3433 = vmatprep.subr.mxu0 0.0
      %3434 = vmatpush1.msra.mxu0 0.0
      %3435 = vmatprep.subr.mxu0 0.0
      %3436 = vmatpush1.msra.mxu0 0.0
      %3437 = vmatprep.subr.mxu0 0.0
      %3438 = vmatpush1.msra.mxu0 0.0
      %3439 = vmatprep.subr.mxu0 0.0
      %3440 = vmatpush1.msra.mxu0 0.0
      %3441 = vmatprep.subr.mxu0 0.0
      %3442 = vmatpush1.msra.mxu0 0.0
      %3443 = vmatprep.subr.mxu0 0.0
      %3444 = vmatpush1.msra.mxu0 0.0
      %3445 = vmatprep.subr.mxu0 0.0
      %3446 = vmatpush1.msra.mxu0 0.0
      %3447 = vmatprep.subr.mxu0 0.0
      %3448 = vmatpush1.msra.mxu0 0.0
      %3449 = vmatprep.subr.mxu0 0.0
      %3450 = vmatpush1.msra.mxu0 0.0
      %3451 = vmatprep.subr.mxu0 0.0
      %3452 = vmatpush1.msra.mxu0 0.0
      %3453 = vmatprep.subr.mxu0 0.0
      %3454 = vmatpush1.msra.mxu0 0.0
      %3455 = vmatprep.subr.mxu0 0.0
      %3456 = vmatpush1.msra.mxu0 0.0
      %3457 = vmatprep.subr.mxu0 0.0
      %3458 = vmatpush1.msra.mxu0 0.0
      %3459 = vmatprep.subr.mxu0 0.0
      %3460 = vmatpush1.msra.mxu0 0.0
      %3461 = vmatprep.subr.mxu0 0.0
      %3462 = vmatpush1.msra.mxu0 0.0
      %3463 = vmatprep.subr.mxu0 0.0
      %3464 = vmatpush1.msra.mxu0 0.0
      %3465 = vmatprep.subr.mxu0 0.0
      %3466 = vmatpush1.msra.mxu0 0.0
      %3467 = vmatprep.subr.mxu0 0.0
      %3468 = vmatpush1.msra.mxu0 0.0
      %3469 = vmatprep.subr.mxu0 0.0
      %3470 = vmatpush1.msra.mxu0 0.0
      %3471 = vmatprep.subr.mxu0 0.0
      %3472 = vmatpush1.msra.mxu0 0.0
      %3473 = vmatprep.subr.mxu0 0.0
      %3474 = vmatpush1.msra.mxu0 0.0
      %3475 = vmatprep.subr.mxu0 0.0
      %3476 = vmatpush1.msra.mxu0 0.0
      %3477 = vmatprep.subr.mxu0 0.0
      %3478 = vmatpush1.msra.mxu0 0.0
      %3479 = vmatprep.subr.mxu0 0.0
      %3480 = vmatpush1.msra.mxu0 0.0
      %3481 = vmatprep.subr.mxu0 0.0
      %3482 = vmatpush1.msra.mxu0 0.0
      %3483 = vmatprep.subr.mxu0 0.0
      %3484 = vmatpush1.msra.mxu0 0.0
      %3485 = vmatprep.subr.mxu0 0.0
      %3486 = vmatpush1.msra.mxu0 0.0
      %3487 = vmatprep.subr.mxu0 0.0
      %3488 = vmatpush1.msra.mxu0 0.0
      %3489 = vmatprep.mubr.f32.mxu0 0.0
      %3490 = vmatmul.mubr.f32.gmra.mrb[0].mxu0 %v561
      %v3491 = vpop.f32.mrb[0].mxu0
      %v3492 = vadd.f32 %v552, %v3491
      %v3493 = vpop.f32.mrb[0].mxu0
      %v3494 = vadd.f32 %v552, %v3493
      %3495 = vmatprep.mubr.f32.mxu0 0.0
      %3496 = vmatmul.mubr.f32.gmra.mrb[0].mxu0 %v564
      %v3497 = vpop.f32.mrb[0].mxu0
      %v3498 = vadd.f32 %v557, %v3497
      %v3499 = vpop.f32.mrb[0].mxu0
      %v3500 = vadd.f32 %v557, %v3499
      %3501 = vdwg.mxu0
      %3502 = vmatprep.subr.mxu0 %v296
      %3503 = vmatpush1.msra.mxu0 %v295
      %3504 = vmatprep.subr.mxu0 %v376
      %3505 = vmatpush1.msra.mxu0 %v375
      %3506 = vmatprep.subr.mxu0 %v456
      %3507 = vmatpush1.msra.mxu0 %v455
      %3508 = vmatprep.subr.mxu0 %v781
      %3509 = vmatpush1.msra.mxu0 %v778
      %3510 = vmatprep.subr.mxu0 0.0
      %3511 = vmatpush1.msra.mxu0 0.0
      %3512 = vmatprep.subr.mxu0 0.0
      %3513 = vmatpush1.msra.mxu0 0.0
      %3514 = vmatprep.subr.mxu0 0.0
      %3515 = vmatpush1.msra.mxu0 0.0
      %3516 = vmatprep.subr.mxu0 0.0
      %3517 = vmatpush1.msra.mxu0 0.0
      %3518 = vmatprep.subr.mxu0 0.0
      %3519 = vmatpush1.msra.mxu0 0.0
      %3520 = vmatprep.subr.mxu0 0.0
      %3521 = vmatpush1.msra.mxu0 0.0
      %3522 = vmatprep.subr.mxu0 0.0
      %3523 = vmatpush1.msra.mxu0 0.0
      %3524 = vmatprep.subr.mxu0 0.0
      %3525 = vmatpush1.msra.mxu0 0.0
      %3526 = vmatprep.subr.mxu0 0.0
      %3527 = vmatpush1.msra.mxu0 0.0
      %3528 = vmatprep.subr.mxu0 0.0
      %3529 = vmatpush1.msra.mxu0 0.0
      %3530 = vmatprep.subr.mxu0 0.0
      %3531 = vmatpush1.msra.mxu0 0.0
      %3532 = vmatprep.subr.mxu0 0.0
      %3533 = vmatpush1.msra.mxu0 0.0
      %3534 = vmatprep.subr.mxu0 0.0
      %3535 = vmatpush1.msra.mxu0 0.0
      %3536 = vmatprep.subr.mxu0 0.0
      %3537 = vmatpush1.msra.mxu0 0.0
      %3538 = vmatprep.subr.mxu0 0.0
      %3539 = vmatpush1.msra.mxu0 0.0
      %3540 = vmatprep.subr.mxu0 0.0
      %3541 = vmatpush1.msra.mxu0 0.0
      %3542 = vmatprep.subr.mxu0 0.0
      %3543 = vmatpush1.msra.mxu0 0.0
      %3544 = vmatprep.subr.mxu0 0.0
      %3545 = vmatpush1.msra.mxu0 0.0
      %3546 = vmatprep.subr.mxu0 0.0
      %3547 = vmatpush1.msra.mxu0 0.0
      %3548 = vmatprep.subr.mxu0 0.0
      %3549 = vmatpush1.msra.mxu0 0.0
      %3550 = vmatprep.subr.mxu0 0.0
      %3551 = vmatpush1.msra.mxu0 0.0
      %3552 = vmatprep.subr.mxu0 0.0
      %3553 = vmatpush1.msra.mxu0 0.0
      %3554 = vmatprep.subr.mxu0 0.0
      %3555 = vmatpush1.msra.mxu0 0.0
      %3556 = vmatprep.subr.mxu0 0.0
      %3557 = vmatpush1.msra.mxu0 0.0
      %3558 = vmatprep.subr.mxu0 0.0
      %3559 = vmatpush1.msra.mxu0 0.0
      %3560 = vmatprep.subr.mxu0 0.0
      %3561 = vmatpush1.msra.mxu0 0.0
      %3562 = vmatprep.subr.mxu0 0.0
      %3563 = vmatpush1.msra.mxu0 0.0
      %3564 = vmatprep.subr.mxu0 0.0
      %3565 = vmatpush1.msra.mxu0 0.0
      %3566 = vmatprep.mubr.f32.mxu0 0.0
      %3567 = vmatmul.mubr.f32.gmra.mrb[0].mxu0 %v561
      %v3568 = vpop.f32.mrb[0].mxu0
      %v3569 = vadd.f32 %v552, %v3568
      %v3570 = vpop.f32.mrb[0].mxu0
      %v3571 = vadd.f32 %v552, %v3570
      %3572 = vmatprep.mubr.f32.mxu0 0.0
      %3573 = vmatmul.mubr.f32.gmra.mrb[0].mxu0 %v564
      %v3574 = vpop.f32.mrb[0].mxu0
      %v3575 = vadd.f32 %v557, %v3574
      %v3576 = vpop.f32.mrb[0].mxu0
      %v3577 = vadd.f32 %v557, %v3576
      %3578 = vdwg.mxu0
      %3579 = vmatprep.subr.mxu0 %v298
      %3580 = vmatpush1.msra.mxu0 %v297
      %3581 = vmatprep.subr.mxu0 %v378
      %3582 = vmatpush1.msra.mxu0 %v377
      %3583 = vmatprep.subr.mxu0 %v458
      %3584 = vmatpush1.msra.mxu0 %v457
      %3585 = vmatprep.subr.mxu0 %v787
      %3586 = vmatpush1.msra.mxu0 %v784
      %3587 = vmatprep.subr.mxu0 0.0
      %3588 = vmatpush1.msra.mxu0 0.0
      %3589 = vmatprep.subr.mxu0 0.0
      %3590 = vmatpush1.msra.mxu0 0.0
      %3591 = vmatprep.subr.mxu0 0.0
      %3592 = vmatpush1.msra.mxu0 0.0
      %3593 = vmatprep.subr.mxu0 0.0
      %3594 = vmatpush1.msra.mxu0 0.0
      %3595 = vmatprep.subr.mxu0 0.0
      %3596 = vmatpush1.msra.mxu0 0.0
      %3597 = vmatprep.subr.mxu0 0.0
      %3598 = vmatpush1.msra.mxu0 0.0
      %3599 = vmatprep.subr.mxu0 0.0
      %3600 = vmatpush1.msra.mxu0 0.0
      %3601 = vmatprep.subr.mxu0 0.0
      %3602 = vmatpush1.msra.mxu0 0.0
      %3603 = vmatprep.subr.mxu0 0.0
      %3604 = vmatpush1.msra.mxu0 0.0
      %3605 = vmatprep.subr.mxu0 0.0
      %3606 = vmatpush1.msra.mxu0 0.0
      %3607 = vmatprep.subr.mxu0 0.0
      %3608 = vmatpush1.msra.mxu0 0.0
      %3609 = vmatprep.subr.mxu0 0.0
      %3610 = vmatpush1.msra.mxu0 0.0
      %3611 = vmatprep.subr.mxu0 0.0
      %3612 = vmatpush1.msra.mxu0 0.0
      %3613 = vmatprep.subr.mxu0 0.0
      %3614 = vmatpush1.msra.mxu0 0.0
      %3615 = vmatprep.subr.mxu0 0.0
      %3616 = vmatpush1.msra.mxu0 0.0
      %3617 = vmatprep.subr.mxu0 0.0
      %3618 = vmatpush1.msra.mxu0 0.0
      %3619 = vmatprep.subr.mxu0 0.0
      %3620 = vmatpush1.msra.mxu0 0.0
      %3621 = vmatprep.subr.mxu0 0.0
      %3622 = vmatpush1.msra.mxu0 0.0
      %3623 = vmatprep.subr.mxu0 0.0
      %3624 = vmatpush1.msra.mxu0 0.0
      %3625 = vmatprep.subr.mxu0 0.0
      %3626 = vmatpush1.msra.mxu0 0.0
      %3627 = vmatprep.subr.mxu0 0.0
      %3628 = vmatpush1.msra.mxu0 0.0
      %3629 = vmatprep.subr.mxu0 0.0
      %3630 = vmatpush1.msra.mxu0 0.0
      %3631 = vmatprep.subr.mxu0 0.0
      %3632 = vmatpush1.msra.mxu0 0.0
      %3633 = vmatprep.subr.mxu0 0.0
      %3634 = vmatpush1.msra.mxu0 0.0
      %3635 = vmatprep.subr.mxu0 0.0
      %3636 = vmatpush1.msra.mxu0 0.0
      %3637 = vmatprep.subr.mxu0 0.0
      %3638 = vmatpush1.msra.mxu0 0.0
      %3639 = vmatprep.subr.mxu0 0.0
      %3640 = vmatpush1.msra.mxu0 0.0
      %3641 = vmatprep.subr.mxu0 0.0
      %3642 = vmatpush1.msra.mxu0 0.0
      %3643 = vmatprep.mubr.f32.mxu0 0.0
      %3644 = vmatmul.mubr.f32.gmra.mrb[0].mxu0 %v561
      %v3645 = vpop.f32.mrb[0].mxu0
      %v3646 = vadd.f32 %v552, %v3645
      %v3647 = vpop.f32.mrb[0].mxu0
      %v3648 = vadd.f32 %v552, %v3647
      %3649 = vmatprep.mubr.f32.mxu0 0.0
      %3650 = vmatmul.mubr.f32.gmra.mrb[0].mxu0 %v564
      %v3651 = vpop.f32.mrb[0].mxu0
      %v3652 = vadd.f32 %v557, %v3651
      %v3653 = vpop.f32.mrb[0].mxu0
      %v3654 = vadd.f32 %v557, %v3653
      %3655 = vdwg.mxu0
      %3656 = vmatprep.subr.mxu0 %v300
      %3657 = vmatpush1.msra.mxu0 %v299
      %3658 = vmatprep.subr.mxu0 %v380
      %3659 = vmatpush1.msra.mxu0 %v379
      %3660 = vmatprep.subr.mxu0 %v460
      %3661 = vmatpush1.msra.mxu0 %v459
      %3662 = vmatprep.subr.mxu0 %v793
      %3663 = vmatpush1.msra.mxu0 %v790
      %3664 = vmatprep.subr.mxu0 0.0
      %3665 = vmatpush1.msra.mxu0 0.0
      %3666 = vmatprep.subr.mxu0 0.0
      %3667 = vmatpush1.msra.mxu0 0.0
      %3668 = vmatprep.subr.mxu0 0.0
      %3669 = vmatpush1.msra.mxu0 0.0
      %3670 = vmatprep.subr.mxu0 0.0
      %3671 = vmatpush1.msra.mxu0 0.0
      %3672 = vmatprep.subr.mxu0 0.0
      %3673 = vmatpush1.msra.mxu0 0.0
      %3674 = vmatprep.subr.mxu0 0.0
      %3675 = vmatpush1.msra.mxu0 0.0
      %3676 = vmatprep.subr.mxu0 0.0
      %3677 = vmatpush1.msra.mxu0 0.0
      %3678 = vmatprep.subr.mxu0 0.0
      %3679 = vmatpush1.msra.mxu0 0.0
      %3680 = vmatprep.subr.mxu0 0.0
      %3681 = vmatpush1.msra.mxu0 0.0
      %3682 = vmatprep.subr.mxu0 0.0
      %3683 = vmatpush1.msra.mxu0 0.0
      %3684 = vmatprep.subr.mxu0 0.0
      %3685 = vmatpush1.msra.mxu0 0.0
      %3686 = vmatprep.subr.mxu0 0.0
      %3687 = vmatpush1.msra.mxu0 0.0
      %3688 = vmatprep.subr.mxu0 0.0
      %3689 = vmatpush1.msra.mxu0 0.0
      %3690 = vmatprep.subr.mxu0 0.0
      %3691 = vmatpush1.msra.mxu0 0.0
      %3692 = vmatprep.subr.mxu0 0.0
      %3693 = vmatpush1.msra.mxu0 0.0
      %3694 = vmatprep.subr.mxu0 0.0
      %3695 = vmatpush1.msra.mxu0 0.0
      %3696 = vmatprep.subr.mxu0 0.0
      %3697 = vmatpush1.msra.mxu0 0.0
      %3698 = vmatprep.subr.mxu0 0.0
      %3699 = vmatpush1.msra.mxu0 0.0
      %3700 = vmatprep.subr.mxu0 0.0
      %3701 = vmatpush1.msra.mxu0 0.0
      %3702 = vmatprep.subr.mxu0 0.0
      %3703 = vmatpush1.msra.mxu0 0.0
      %3704 = vmatprep.subr.mxu0 0.0
      %3705 = vmatpush1.msra.mxu0 0.0
      %3706 = vmatprep.subr.mxu0 0.0
      %3707 = vmatpush1.msra.mxu0 0.0
      %3708 = vmatprep.subr.mxu0 0.0
      %3709 = vmatpush1.msra.mxu0 0.0
      %3710 = vmatprep.subr.mxu0 0.0
      %3711 = vmatpush1.msra.mxu0 0.0
      %3712 = vmatprep.subr.mxu0 0.0
      %3713 = vmatpush1.msra.mxu0 0.0
      %3714 = vmatprep.subr.mxu0 0.0
      %3715 = vmatpush1.msra.mxu0 0.0
      %3716 = vmatprep.subr.mxu0 0.0
      %3717 = vmatpush1.msra.mxu0 0.0
      %3718 = vmatprep.subr.mxu0 0.0
      %3719 = vmatpush1.msra.mxu0 0.0
      %3720 = vmatprep.mubr.f32.mxu0 0.0
      %3721 = vmatmul.mubr.f32.gmra.mrb[0].mxu0 %v561
      %v3722 = vpop.f32.mrb[0].mxu0
      %v3723 = vadd.f32 %v552, %v3722
      %v3724 = vpop.f32.mrb[0].mxu0
      %v3725 = vadd.f32 %v552, %v3724
      %3726 = vmatprep.mubr.f32.mxu0 0.0
      %3727 = vmatmul.mubr.f32.gmra.mrb[0].mxu0 %v564
      %v3728 = vpop.f32.mrb[0].mxu0
      %v3729 = vadd.f32 %v557, %v3728
      %v3730 = vpop.f32.mrb[0].mxu0
      %v3731 = vadd.f32 %v557, %v3730
      %3732 = vdwg.mxu0
      %3733 = vmatprep.subr.mxu0 %v302
      %3734 = vmatpush1.msra.mxu0 %v301
      %3735 = vmatprep.subr.mxu0 %v382
      %3736 = vmatpush1.msra.mxu0 %v381
      %3737 = vmatprep.subr.mxu0 %v462
      %3738 = vmatpush1.msra.mxu0 %v461
      %3739 = vmatprep.subr.mxu0 %v799
      %3740 = vmatpush1.msra.mxu0 %v796
      %3741 = vmatprep.subr.mxu0 0.0
      %3742 = vmatpush1.msra.mxu0 0.0
      %3743 = vmatprep.subr.mxu0 0.0
      %3744 = vmatpush1.msra.mxu0 0.0
      %3745 = vmatprep.subr.mxu0 0.0
      %3746 = vmatpush1.msra.mxu0 0.0
      %3747 = vmatprep.subr.mxu0 0.0
      %3748 = vmatpush1.msra.mxu0 0.0
      %3749 = vmatprep.subr.mxu0 0.0
      %3750 = vmatpush1.msra.mxu0 0.0
      %3751 = vmatprep.subr.mxu0 0.0
      %3752 = vmatpush1.msra.mxu0 0.0
      %3753 = vmatprep.subr.mxu0 0.0
      %3754 = vmatpush1.msra.mxu0 0.0
      %3755 = vmatprep.subr.mxu0 0.0
      %3756 = vmatpush1.msra.mxu0 0.0
      %3757 = vmatprep.subr.mxu0 0.0
      %3758 = vmatpush1.msra.mxu0 0.0
      %3759 = vmatprep.subr.mxu0 0.0
      %3760 = vmatpush1.msra.mxu0 0.0
      %3761 = vmatprep.subr.mxu0 0.0
      %3762 = vmatpush1.msra.mxu0 0.0
      %3763 = vmatprep.subr.mxu0 0.0
      %3764 = vmatpush1.msra.mxu0 0.0
      %3765 = vmatprep.subr.mxu0 0.0
      %3766 = vmatpush1.msra.mxu0 0.0
      %3767 = vmatprep.subr.mxu0 0.0
      %3768 = vmatpush1.msra.mxu0 0.0
      %3769 = vmatprep.subr.mxu0 0.0
      %3770 = vmatpush1.msra.mxu0 0.0
      %3771 = vmatprep.subr.mxu0 0.0
      %3772 = vmatpush1.msra.mxu0 0.0
      %3773 = vmatprep.subr.mxu0 0.0
      %3774 = vmatpush1.msra.mxu0 0.0
      %3775 = vmatprep.subr.mxu0 0.0
      %3776 = vmatpush1.msra.mxu0 0.0
      %3777 = vmatprep.subr.mxu0 0.0
      %3778 = vmatpush1.msra.mxu0 0.0
      %3779 = vmatprep.subr.mxu0 0.0
      %3780 = vmatpush1.msra.mxu0 0.0
      %3781 = vmatprep.subr.mxu0 0.0
      %3782 = vmatpush1.msra.mxu0 0.0
      %3783 = vmatprep.subr.mxu0 0.0
      %3784 = vmatpush1.msra.mxu0 0.0
      %3785 = vmatprep.subr.mxu0 0.0
      %3786 = vmatpush1.msra.mxu0 0.0
      %3787 = vmatprep.subr.mxu0 0.0
      %3788 = vmatpush1.msra.mxu0 0.0
      %3789 = vmatprep.subr.mxu0 0.0
      %3790 = vmatpush1.msra.mxu0 0.0
      %3791 = vmatprep.subr.mxu0 0.0
      %3792 = vmatpush1.msra.mxu0 0.0
      %3793 = vmatprep.subr.mxu0 0.0
      %3794 = vmatpush1.msra.mxu0 0.0
      %3795 = vmatprep.subr.mxu0 0.0
      %3796 = vmatpush1.msra.mxu0 0.0
      %3797 = vmatprep.mubr.f32.mxu0 0.0
      %3798 = vmatmul.mubr.f32.gmra.mrb[0].mxu0 %v561
      %v3799 = vpop.f32.mrb[0].mxu0
      %v3800 = vadd.f32 %v552, %v3799
      %v3801 = vpop.f32.mrb[0].mxu0
      %v3802 = vadd.f32 %v552, %v3801
      %3803 = vmatprep.mubr.f32.mxu0 0.0
      %3804 = vmatmul.mubr.f32.gmra.mrb[0].mxu0 %v564
      %v3805 = vpop.f32.mrb[0].mxu0
      %v3806 = vadd.f32 %v557, %v3805
      %v3807 = vpop.f32.mrb[0].mxu0
      %v3808 = vadd.f32 %v557, %v3807
      %3809 = vdwg.mxu0
      %3810 = vmatprep.subr.mxu0 %v304
      %3811 = vmatpush1.msra.mxu0 %v303
      %3812 = vmatprep.subr.mxu0 %v384
      %3813 = vmatpush1.msra.mxu0 %v383
      %3814 = vmatprep.subr.mxu0 %v464
      %3815 = vmatpush1.msra.mxu0 %v463
      %3816 = vmatprep.subr.mxu0 %v805
      %3817 = vmatpush1.msra.mxu0 %v802
      %3818 = vmatprep.subr.mxu0 0.0
      %3819 = vmatpush1.msra.mxu0 0.0
      %3820 = vmatprep.subr.mxu0 0.0
      %3821 = vmatpush1.msra.mxu0 0.0
      %3822 = vmatprep.subr.mxu0 0.0
      %3823 = vmatpush1.msra.mxu0 0.0
      %3824 = vmatprep.subr.mxu0 0.0
      %3825 = vmatpush1.msra.mxu0 0.0
      %3826 = vmatprep.subr.mxu0 0.0
      %3827 = vmatpush1.msra.mxu0 0.0
      %3828 = vmatprep.subr.mxu0 0.0
      %3829 = vmatpush1.msra.mxu0 0.0
      %3830 = vmatprep.subr.mxu0 0.0
      %3831 = vmatpush1.msra.mxu0 0.0
      %3832 = vmatprep.subr.mxu0 0.0
      %3833 = vmatpush1.msra.mxu0 0.0
      %3834 = vmatprep.subr.mxu0 0.0
      %3835 = vmatpush1.msra.mxu0 0.0
      %3836 = vmatprep.subr.mxu0 0.0
      %3837 = vmatpush1.msra.mxu0 0.0
      %3838 = vmatprep.subr.mxu0 0.0
      %3839 = vmatpush1.msra.mxu0 0.0
      %3840 = vmatprep.subr.mxu0 0.0
      %3841 = vmatpush1.msra.mxu0 0.0
      %3842 = vmatprep.subr.mxu0 0.0
      %3843 = vmatpush1.msra.mxu0 0.0
      %3844 = vmatprep.subr.mxu0 0.0
      %3845 = vmatpush1.msra.mxu0 0.0
      %3846 = vmatprep.subr.mxu0 0.0
      %3847 = vmatpush1.msra.mxu0 0.0
      %3848 = vmatprep.subr.mxu0 0.0
      %3849 = vmatpush1.msra.mxu0 0.0
      %3850 = vmatprep.subr.mxu0 0.0
      %3851 = vmatpush1.msra.mxu0 0.0
      %3852 = vmatprep.subr.mxu0 0.0
      %3853 = vmatpush1.msra.mxu0 0.0
      %3854 = vmatprep.subr.mxu0 0.0
      %3855 = vmatpush1.msra.mxu0 0.0
      %3856 = vmatprep.subr.mxu0 0.0
      %3857 = vmatpush1.msra.mxu0 0.0
      %3858 = vmatprep.subr.mxu0 0.0
      %3859 = vmatpush1.msra.mxu0 0.0
      %3860 = vmatprep.subr.mxu0 0.0
      %3861 = vmatpush1.msra.mxu0 0.0
      %3862 = vmatprep.subr.mxu0 0.0
      %3863 = vmatpush1.msra.mxu0 0.0
      %3864 = vmatprep.subr.mxu0 0.0
      %3865 = vmatpush1.msra.mxu0 0.0
      %3866 = vmatprep.subr.mxu0 0.0
      %3867 = vmatpush1.msra.mxu0 0.0
      %3868 = vmatprep.subr.mxu0 0.0
      %3869 = vmatpush1.msra.mxu0 0.0
      %3870 = vmatprep.subr.mxu0 0.0
      %3871 = vmatpush1.msra.mxu0 0.0
      %3872 = vmatprep.subr.mxu0 0.0
      %3873 = vmatpush1.msra.mxu0 0.0
      %3874 = vmatprep.mubr.f32.mxu0 0.0
      %3875 = vmatmul.mubr.f32.gmra.mrb[0].mxu0 %v561
      %v3876 = vpop.f32.mrb[0].mxu0
      %v3877 = vadd.f32 %v552, %v3876
      %v3878 = vpop.f32.mrb[0].mxu0
      %v3879 = vadd.f32 %v552, %v3878
      %3880 = vmatprep.mubr.f32.mxu0 0.0
      %3881 = vmatmul.mubr.f32.gmra.mrb[0].mxu0 %v564
      %v3882 = vpop.f32.mrb[0].mxu0
      %v3883 = vadd.f32 %v557, %v3882
      %v3884 = vpop.f32.mrb[0].mxu0
      %v3885 = vadd.f32 %v557, %v3884
      %3886 = vdwg.mxu0
      %v3887 = vmax.f32 %v874, 0.0
      %v3888 = vmax.f32 %v876, 0.0
      %v3889 = vmax.f32 %v951, 0.0
      %v3890 = vmax.f32 %v953, 0.0
      %v3891 = vmax.f32 %v1028, 0.0
      %v3892 = vmax.f32 %v1030, 0.0
      %v3893 = vmax.f32 %v1105, 0.0
      %v3894 = vmax.f32 %v1107, 0.0
      %v3895 = vmax.f32 %v1182, 0.0
      %v3896 = vmax.f32 %v1184, 0.0
      %v3897 = vmax.f32 %v1259, 0.0
      %v3898 = vmax.f32 %v1261, 0.0
      %v3899 = vmax.f32 %v1336, 0.0
      %v3900 = vmax.f32 %v1338, 0.0
      %v3901 = vmax.f32 %v1413, 0.0
      %v3902 = vmax.f32 %v1415, 0.0
      %v3903 = vmax.f32 %v1490, 0.0
      %v3904 = vmax.f32 %v1492, 0.0
      %v3905 = vmax.f32 %v1567, 0.0
      %v3906 = vmax.f32 %v1569, 0.0
      %v3907 = vmax.f32 %v1644, 0.0
      %v3908 = vmax.f32 %v1646, 0.0
      %v3909 = vmax.f32 %v1721, 0.0
      %v3910 = vmax.f32 %v1723, 0.0
      %v3911 = vmax.f32 %v1798, 0.0
      %v3912 = vmax.f32 %v1800, 0.0
      %v3913 = vmax.f32 %v1875, 0.0
      %v3914 = vmax.f32 %v1877, 0.0
      %v3915 = vmax.f32 %v1952, 0.0
      %v3916 = vmax.f32 %v1954, 0.0
      %v3917 = vmax.f32 %v2029, 0.0
      %v3918 = vmax.f32 %v2031, 0.0
      %v3919 = vmax.f32 %v2106, 0.0
      %v3920 = vmax.f32 %v2108, 0.0
      %v3921 = vmax.f32 %v2183, 0.0
      %v3922 = vmax.f32 %v2185, 0.0
      %v3923 = vmax.f32 %v2260, 0.0
      %v3924 = vmax.f32 %v2262, 0.0
      %v3925 = vmax.f32 %v2337, 0.0
      %v3926 = vmax.f32 %v2339, 0.0
      %v3927 = vmax.f32 %v2414, 0.0
      %v3928 = vmax.f32 %v2416, 0.0
      %v3929 = vmax.f32 %v2491, 0.0
      %v3930 = vmax.f32 %v2493, 0.0
      %v3931 = vmax.f32 %v2568, 0.0
      %v3932 = vmax.f32 %v2570, 0.0
      %v3933 = vmax.f32 %v2645, 0.0
      %v3934 = vmax.f32 %v2647, 0.0
      %v3935 = vmax.f32 %v2722, 0.0
      %v3936 = vmax.f32 %v2724, 0.0
      %v3937 = vmax.f32 %v2799, 0.0
      %v3938 = vmax.f32 %v2801, 0.0
      %v3939 = vmax.f32 %v2876, 0.0
      %v3940 = vmax.f32 %v2878, 0.0
      %v3941 = vmax.f32 %v2953, 0.0
      %v3942 = vmax.f32 %v2955, 0.0
      %v3943 = vmax.f32 %v3030, 0.0
      %v3944 = vmax.f32 %v3032, 0.0
      %v3945 = vmax.f32 %v3107, 0.0
      %v3946 = vmax.f32 %v3109, 0.0
      %v3947 = vmax.f32 %v3184, 0.0
      %v3948 = vmax.f32 %v3186, 0.0
      %v3949 = vmax.f32 %v3261, 0.0
      %v3950 = vmax.f32 %v3263, 0.0
      %v3951 = vmax.f32 %v3338, 0.0
      %v3952 = vmax.f32 %v3340, 0.0
      %v3953 = vmax.f32 %v3415, 0.0
      %v3954 = vmax.f32 %v3417, 0.0
      %v3955 = vmax.f32 %v3492, 0.0
      %v3956 = vmax.f32 %v3494, 0.0
      %v3957 = vmax.f32 %v3569, 0.0
      %v3958 = vmax.f32 %v3571, 0.0
      %v3959 = vmax.f32 %v3646, 0.0
      %v3960 = vmax.f32 %v3648, 0.0
      %v3961 = vmax.f32 %v3723, 0.0
      %v3962 = vmax.f32 %v3725, 0.0
      %v3963 = vmax.f32 %v3800, 0.0
      %v3964 = vmax.f32 %v3802, 0.0
      %v3965 = vmax.f32 %v3877, 0.0
      %v3966 = vmax.f32 %v3879, 0.0
      %v3967 = vmax.f32 %v880, 0.0
      %v3968 = vmax.f32 %v882, 0.0
      %v3969 = vmax.f32 %v957, 0.0
      %v3970 = vmax.f32 %v959, 0.0
      %v3971 = vmax.f32 %v1034, 0.0
      %v3972 = vmax.f32 %v1036, 0.0
      %v3973 = vmax.f32 %v1111, 0.0
      %v3974 = vmax.f32 %v1113, 0.0
      %v3975 = vmax.f32 %v1188, 0.0
      %v3976 = vmax.f32 %v1190, 0.0
      %v3977 = vmax.f32 %v1265, 0.0
      %v3978 = vmax.f32 %v1267, 0.0
      %v3979 = vmax.f32 %v1342, 0.0
      %v3980 = vmax.f32 %v1344, 0.0
      %v3981 = vmax.f32 %v1419, 0.0
      %v3982 = vmax.f32 %v1421, 0.0
      %v3983 = vmax.f32 %v1496, 0.0
      %v3984 = vmax.f32 %v1498, 0.0
      %v3985 = vmax.f32 %v1573, 0.0
      %v3986 = vmax.f32 %v1575, 0.0
      %v3987 = vmax.f32 %v1650, 0.0
      %v3988 = vmax.f32 %v1652, 0.0
      %v3989 = vmax.f32 %v1727, 0.0
      %v3990 = vmax.f32 %v1729, 0.0
      %v3991 = vmax.f32 %v1804, 0.0
      %v3992 = vmax.f32 %v1806, 0.0
      %v3993 = vmax.f32 %v1881, 0.0
      %v3994 = vmax.f32 %v1883, 0.0
      %v3995 = vmax.f32 %v1958, 0.0
      %v3996 = vmax.f32 %v1960, 0.0
      %v3997 = vmax.f32 %v2035, 0.0
      %v3998 = vmax.f32 %v2037, 0.0
      %v3999 = vmax.f32 %v2112, 0.0
      %v4000 = vmax.f32 %v2114, 0.0
      %v4001 = vmax.f32 %v2189, 0.0
      %v4002 = vmax.f32 %v2191, 0.0
      %v4003 = vmax.f32 %v2266, 0.0
      %v4004 = vmax.f32 %v2268, 0.0
      %v4005 = vmax.f32 %v2343, 0.0
      %v4006 = vmax.f32 %v2345, 0.0
      %v4007 = vmax.f32 %v2420, 0.0
      %v4008 = vmax.f32 %v2422, 0.0
      %v4009 = vmax.f32 %v2497, 0.0
      %v4010 = vmax.f32 %v2499, 0.0
      %v4011 = vmax.f32 %v2574, 0.0
      %v4012 = vmax.f32 %v2576, 0.0
      %v4013 = vmax.f32 %v2651, 0.0
      %v4014 = vmax.f32 %v2653, 0.0
      %v4015 = vmax.f32 %v2728, 0.0
      %v4016 = vmax.f32 %v2730, 0.0
      %v4017 = vmax.f32 %v2805, 0.0
      %v4018 = vmax.f32 %v2807, 0.0
      %v4019 = vmax.f32 %v2882, 0.0
      %v4020 = vmax.f32 %v2884, 0.0
      %v4021 = vmax.f32 %v2959, 0.0
      %v4022 = vmax.f32 %v2961, 0.0
      %v4023 = vmax.f32 %v3036, 0.0
      %v4024 = vmax.f32 %v3038, 0.0
      %v4025 = vmax.f32 %v3113, 0.0
      %v4026 = vmax.f32 %v3115, 0.0
      %v4027 = vmax.f32 %v3190, 0.0
      %v4028 = vmax.f32 %v3192, 0.0
      %v4029 = vmax.f32 %v3267, 0.0
      %v4030 = vmax.f32 %v3269, 0.0
      %v4031 = vmax.f32 %v3344, 0.0
      %v4032 = vmax.f32 %v3346, 0.0
      %v4033 = vmax.f32 %v3421, 0.0
      %v4034 = vmax.f32 %v3423, 0.0
      %v4035 = vmax.f32 %v3498, 0.0
      %v4036 = vmax.f32 %v3500, 0.0
      %v4037 = vmax.f32 %v3575, 0.0
      %v4038 = vmax.f32 %v3577, 0.0
      %v4039 = vmax.f32 %v3652, 0.0
      %v4040 = vmax.f32 %v3654, 0.0
      %v4041 = vmax.f32 %v3729, 0.0
      %v4042 = vmax.f32 %v3731, 0.0
      %v4043 = vmax.f32 %v3806, 0.0
      %v4044 = vmax.f32 %v3808, 0.0
      %v4045 = vmax.f32 %v3883, 0.0
      %v4046 = vmax.f32 %v3885, 0.0
      %4047 = vmatprep.subr.mxu0 0.0
      %4048 = vmatpush1.msra.mxu0 1.0
      %4049 = vmatprep.subr.mxu0 0.0
      %4050 = vmatpush1.msra.mxu0 1.0
      %4051 = vmatprep.subr.mxu0 0.0
      %4052 = vmatpush1.msra.mxu0 1.0
      %4053 = vmatprep.subr.mxu0 0.0
      %4054 = vmatpush1.msra.mxu0 1.0
      %4055 = vmatprep.subr.mxu0 0.0
      %4056 = vmatpush1.msra.mxu0 1.0
      %4057 = vmatprep.subr.mxu0 0.0
      %4058 = vmatpush1.msra.mxu0 1.0
      %4059 = vmatprep.subr.mxu0 0.0
      %4060 = vmatpush1.msra.mxu0 1.0
      %4061 = vmatprep.subr.mxu0 0.0
      %4062 = vmatpush1.msra.mxu0 1.0
      %4063 = vmatprep.subr.mxu0 0.0
      %4064 = vmatpush1.msra.mxu0 1.0
      %4065 = vmatprep.subr.mxu0 0.0
      %4066 = vmatpush1.msra.mxu0 1.0
      %4067 = vmatprep.subr.mxu0 0.0
      %4068 = vmatpush1.msra.mxu0 1.0
      %4069 = vmatprep.subr.mxu0 0.0
      %4070 = vmatpush1.msra.mxu0 1.0
      %4071 = vmatprep.subr.mxu0 0.0
      %4072 = vmatpush1.msra.mxu0 1.0
      %4073 = vmatprep.subr.mxu0 0.0
      %4074 = vmatpush1.msra.mxu0 1.0
      %4075 = vmatprep.subr.mxu0 0.0
      %4076 = vmatpush1.msra.mxu0 1.0
      %4077 = vmatprep.subr.mxu0 0.0
      %4078 = vmatpush1.msra.mxu0 1.0
      %4079 = vmatprep.subr.mxu0 0.0
      %4080 = vmatpush1.msra.mxu0 1.0
      %4081 = vmatprep.subr.mxu0 0.0
      %4082 = vmatpush1.msra.mxu0 1.0
      %4083 = vmatprep.subr.mxu0 0.0
      %4084 = vmatpush1.msra.mxu0 1.0
      %4085 = vmatprep.subr.mxu0 0.0
      %4086 = vmatpush1.msra.mxu0 1.0
      %4087 = vmatprep.subr.mxu0 0.0
      %4088 = vmatpush1.msra.mxu0 1.0
      %4089 = vmatprep.subr.mxu0 0.0
      %4090 = vmatpush1.msra.mxu0 1.0
      %4091 = vmatprep.subr.mxu0 0.0
      %4092 = vmatpush1.msra.mxu0 1.0
      %4093 = vmatprep.subr.mxu0 0.0
      %4094 = vmatpush1.msra.mxu0 1.0
      %4095 = vmatprep.subr.mxu0 0.0
      %4096 = vmatpush1.msra.mxu0 1.0
      %4097 = vmatprep.subr.mxu0 0.0
      %4098 = vmatpush1.msra.mxu0 1.0
      %4099 = vmatprep.subr.mxu0 0.0
      %4100 = vmatpush1.msra.mxu0 1.0
      %4101 = vmatprep.subr.mxu0 0.0
      %4102 = vmatpush1.msra.mxu0 1.0
      %4103 = vmatprep.subr.mxu0 0.0
      %4104 = vmatpush1.msra.mxu0 1.0
      %4105 = vmatprep.subr.mxu0 0.0
      %4106 = vmatpush1.msra.mxu0 1.0
      %4107 = vmatprep.subr.mxu0 0.0
      %4108 = vmatpush1.msra.mxu0 1.0
      %4109 = vmatprep.subr.mxu0 0.0
      %4110 = vmatpush1.msra.mxu0 1.0
      %4111 = vmatprep.mubr.f32.mxu0 %v3888
      %4112 = vmatmul.mubr.f32.gmra.mrb[0].mxu0 %v3887
      %v4113 = vpop.f32.mrb[0].mxu0
      %v4114 = vadd.f32 0.0, %v4113
      %v4115 = vpop.f32.mrb[0].mxu0
      %4116 = vmatprep.mubr.f32.mxu0 %v3968
      %4117 = vmatmul.mubr.f32.gmra.mrb[0].mxu0 %v3967
      %v4118 = vpop.f32.mrb[0].mxu0
      %v4119 = vadd.f32 0.0, %v4118
      %v4120 = vpop.f32.mrb[0].mxu0
      %4121 = vdwg.mxu0
      %4122 = vmatprep.subr.mxu0 0.0
      %4123 = vmatpush1.msra.mxu0 1.0
      %4124 = vmatprep.subr.mxu0 0.0
      %4125 = vmatpush1.msra.mxu0 1.0
      %4126 = vmatprep.subr.mxu0 0.0
      %4127 = vmatpush1.msra.mxu0 1.0
      %4128 = vmatprep.subr.mxu0 0.0
      %4129 = vmatpush1.msra.mxu0 1.0
      %4130 = vmatprep.subr.mxu0 0.0
      %4131 = vmatpush1.msra.mxu0 1.0
      %4132 = vmatprep.subr.mxu0 0.0
      %4133 = vmatpush1.msra.mxu0 1.0
      %4134 = vmatprep.subr.mxu0 0.0
      %4135 = vmatpush1.msra.mxu0 1.0
      %4136 = vmatprep.subr.mxu0 0.0
      %4137 = vmatpush1.msra.mxu0 1.0
      %4138 = vmatprep.subr.mxu0 0.0
      %4139 = vmatpush1.msra.mxu0 1.0
      %4140 = vmatprep.subr.mxu0 0.0
      %4141 = vmatpush1.msra.mxu0 1.0
      %4142 = vmatprep.subr.mxu0 0.0
      %4143 = vmatpush1.msra.mxu0 1.0
      %4144 = vmatprep.subr.mxu0 0.0
      %4145 = vmatpush1.msra.mxu0 1.0
      %4146 = vmatprep.subr.mxu0 0.0
      %4147 = vmatpush1.msra.mxu0 1.0
      %4148 = vmatprep.subr.mxu0 0.0
      %4149 = vmatpush1.msra.mxu0 1.0
      %4150 = vmatprep.subr.mxu0 0.0
      %4151 = vmatpush1.msra.mxu0 1.0
      %4152 = vmatprep.subr.mxu0 0.0
      %4153 = vmatpush1.msra.mxu0 1.0
      %4154 = vmatprep.subr.mxu0 0.0
      %4155 = vmatpush1.msra.mxu0 1.0
      %4156 = vmatprep.subr.mxu0 0.0
      %4157 = vmatpush1.msra.mxu0 1.0
      %4158 = vmatprep.subr.mxu0 0.0
      %4159 = vmatpush1.msra.mxu0 1.0
      %4160 = vmatprep.subr.mxu0 0.0
      %4161 = vmatpush1.msra.mxu0 1.0
      %4162 = vmatprep.subr.mxu0 0.0
      %4163 = vmatpush1.msra.mxu0 1.0
      %4164 = vmatprep.subr.mxu0 0.0
      %4165 = vmatpush1.msra.mxu0 1.0
      %4166 = vmatprep.subr.mxu0 0.0
      %4167 = vmatpush1.msra.mxu0 1.0
      %4168 = vmatprep.subr.mxu0 0.0
      %4169 = vmatpush1.msra.mxu0 1.0
      %4170 = vmatprep.subr.mxu0 0.0
      %4171 = vmatpush1.msra.mxu0 1.0
      %4172 = vmatprep.subr.mxu0 0.0
      %4173 = vmatpush1.msra.mxu0 1.0
      %4174 = vmatprep.subr.mxu0 0.0
      %4175 = vmatpush1.msra.mxu0 1.0
      %4176 = vmatprep.subr.mxu0 0.0
      %4177 = vmatpush1.msra.mxu0 1.0
      %4178 = vmatprep.subr.mxu0 0.0
      %4179 = vmatpush1.msra.mxu0 1.0
      %4180 = vmatprep.subr.mxu0 0.0
      %4181 = vmatpush1.msra.mxu0 1.0
      %4182 = vmatprep.subr.mxu0 0.0
      %4183 = vmatpush1.msra.mxu0 1.0
      %4184 = vmatprep.subr.mxu0 0.0
      %4185 = vmatpush1.msra.mxu0 1.0
      %4186 = vmatprep.mubr.f32.mxu0 %v3890
      %4187 = vmatmul.mubr.f32.gmra.mrb[0].mxu0 %v3889
      %v4188 = vpop.f32.mrb[0].mxu0
      %v4189 = vadd.f32 %v4114, %v4188
      %v4190 = vpop.f32.mrb[0].mxu0
      %4191 = vmatprep.mubr.f32.mxu0 %v3970
      %4192 = vmatmul.mubr.f32.gmra.mrb[0].mxu0 %v3969
      %v4193 = vpop.f32.mrb[0].mxu0
      %v4194 = vadd.f32 %v4119, %v4193
      %v4195 = vpop.f32.mrb[0].mxu0
      %4196 = vdwg.mxu0
      %4197 = vmatprep.subr.mxu0 0.0
      %4198 = vmatpush1.msra.mxu0 1.0
      %4199 = vmatprep.subr.mxu0 0.0
      %4200 = vmatpush1.msra.mxu0 1.0
      %4201 = vmatprep.subr.mxu0 0.0
      %4202 = vmatpush1.msra.mxu0 1.0
      %4203 = vmatprep.subr.mxu0 0.0
      %4204 = vmatpush1.msra.mxu0 1.0
      %4205 = vmatprep.subr.mxu0 0.0
      %4206 = vmatpush1.msra.mxu0 1.0
      %4207 = vmatprep.subr.mxu0 0.0
      %4208 = vmatpush1.msra.mxu0 1.0
      %4209 = vmatprep.subr.mxu0 0.0
      %4210 = vmatpush1.msra.mxu0 1.0
      %4211 = vmatprep.subr.mxu0 0.0
      %4212 = vmatpush1.msra.mxu0 1.0
      %4213 = vmatprep.subr.mxu0 0.0
      %4214 = vmatpush1.msra.mxu0 1.0
      %4215 = vmatprep.subr.mxu0 0.0
      %4216 = vmatpush1.msra.mxu0 1.0
      %4217 = vmatprep.subr.mxu0 0.0
      %4218 = vmatpush1.msra.mxu0 1.0
      %4219 = vmatprep.subr.mxu0 0.0
      %4220 = vmatpush1.msra.mxu0 1.0
      %4221 = vmatprep.subr.mxu0 0.0
      %4222 = vmatpush1.msra.mxu0 1.0
      %4223 = vmatprep.subr.mxu0 0.0
      %4224 = vmatpush1.msra.mxu0 1.0
      %4225 = vmatprep.subr.mxu0 0.0
      %4226 = vmatpush1.msra.mxu0 1.0
      %4227 = vmatprep.subr.mxu0 0.0
      %4228 = vmatpush1.msra.mxu0 1.0
      %4229 = vmatprep.subr.mxu0 0.0
      %4230 = vmatpush1.msra.mxu0 1.0
      %4231 = vmatprep.subr.mxu0 0.0
      %4232 = vmatpush1.msra.mxu0 1.0
      %4233 = vmatprep.subr.mxu0 0.0
      %4234 = vmatpush1.msra.mxu0 1.0
      %4235 = vmatprep.subr.mxu0 0.0
      %4236 = vmatpush1.msra.mxu0 1.0
      %4237 = vmatprep.subr.mxu0 0.0
      %4238 = vmatpush1.msra.mxu0 1.0
      %4239 = vmatprep.subr.mxu0 0.0
      %4240 = vmatpush1.msra.mxu0 1.0
      %4241 = vmatprep.subr.mxu0 0.0
      %4242 = vmatpush1.msra.mxu0 1.0
      %4243 = vmatprep.subr.mxu0 0.0
      %4244 = vmatpush1.msra.mxu0 1.0
      %4245 = vmatprep.subr.mxu0 0.0
      %4246 = vmatpush1.msra.mxu0 1.0
      %4247 = vmatprep.subr.mxu0 0.0
      %4248 = vmatpush1.msra.mxu0 1.0
      %4249 = vmatprep.subr.mxu0 0.0
      %4250 = vmatpush1.msra.mxu0 1.0
      %4251 = vmatprep.subr.mxu0 0.0
      %4252 = vmatpush1.msra.mxu0 1.0
      %4253 = vmatprep.subr.mxu0 0.0
      %4254 = vmatpush1.msra.mxu0 1.0
      %4255 = vmatprep.subr.mxu0 0.0
      %4256 = vmatpush1.msra.mxu0 1.0
      %4257 = vmatprep.subr.mxu0 0.0
      %4258 = vmatpush1.msra.mxu0 1.0
      %4259 = vmatprep.subr.mxu0 0.0
      %4260 = vmatpush1.msra.mxu0 1.0
      %4261 = vmatprep.mubr.f32.mxu0 %v3892
      %4262 = vmatmul.mubr.f32.gmra.mrb[0].mxu0 %v3891
      %v4263 = vpop.f32.mrb[0].mxu0
      %v4264 = vadd.f32 %v4189, %v4263
      %v4265 = vpop.f32.mrb[0].mxu0
      %4266 = vmatprep.mubr.f32.mxu0 %v3972
      %4267 = vmatmul.mubr.f32.gmra.mrb[0].mxu0 %v3971
      %v4268 = vpop.f32.mrb[0].mxu0
      %v4269 = vadd.f32 %v4194, %v4268
      %v4270 = vpop.f32.mrb[0].mxu0
      %4271 = vdwg.mxu0
      %4272 = vmatprep.subr.mxu0 0.0
      %4273 = vmatpush1.msra.mxu0 1.0
      %4274 = vmatprep.subr.mxu0 0.0
      %4275 = vmatpush1.msra.mxu0 1.0
      %4276 = vmatprep.subr.mxu0 0.0
      %4277 = vmatpush1.msra.mxu0 1.0
      %4278 = vmatprep.subr.mxu0 0.0
      %4279 = vmatpush1.msra.mxu0 1.0
      %4280 = vmatprep.subr.mxu0 0.0
      %4281 = vmatpush1.msra.mxu0 1.0
      %4282 = vmatprep.subr.mxu0 0.0
      %4283 = vmatpush1.msra.mxu0 1.0
      %4284 = vmatprep.subr.mxu0 0.0
      %4285 = vmatpush1.msra.mxu0 1.0
      %4286 = vmatprep.subr.mxu0 0.0
      %4287 = vmatpush1.msra.mxu0 1.0
      %4288 = vmatprep.subr.mxu0 0.0
      %4289 = vmatpush1.msra.mxu0 1.0
      %4290 = vmatprep.subr.mxu0 0.0
      %4291 = vmatpush1.msra.mxu0 1.0
      %4292 = vmatprep.subr.mxu0 0.0
      %4293 = vmatpush1.msra.mxu0 1.0
      %4294 = vmatprep.subr.mxu0 0.0
      %4295 = vmatpush1.msra.mxu0 1.0
      %4296 = vmatprep.subr.mxu0 0.0
      %4297 = vmatpush1.msra.mxu0 1.0
      %4298 = vmatprep.subr.mxu0 0.0
      %4299 = vmatpush1.msra.mxu0 1.0
      %4300 = vmatprep.subr.mxu0 0.0
      %4301 = vmatpush1.msra.mxu0 1.0
      %4302 = vmatprep.subr.mxu0 0.0
      %4303 = vmatpush1.msra.mxu0 1.0
      %4304 = vmatprep.subr.mxu0 0.0
      %4305 = vmatpush1.msra.mxu0 1.0
      %4306 = vmatprep.subr.mxu0 0.0
      %4307 = vmatpush1.msra.mxu0 1.0
      %4308 = vmatprep.subr.mxu0 0.0
      %4309 = vmatpush1.msra.mxu0 1.0
      %4310 = vmatprep.subr.mxu0 0.0
      %4311 = vmatpush1.msra.mxu0 1.0
      %4312 = vmatprep.subr.mxu0 0.0
      %4313 = vmatpush1.msra.mxu0 1.0
      %4314 = vmatprep.subr.mxu0 0.0
      %4315 = vmatpush1.msra.mxu0 1.0
      %4316 = vmatprep.subr.mxu0 0.0
      %4317 = vmatpush1.msra.mxu0 1.0
      %4318 = vmatprep.subr.mxu0 0.0
      %4319 = vmatpush1.msra.mxu0 1.0
      %4320 = vmatprep.subr.mxu0 0.0
      %4321 = vmatpush1.msra.mxu0 1.0
      %4322 = vmatprep.subr.mxu0 0.0
      %4323 = vmatpush1.msra.mxu0 1.0
      %4324 = vmatprep.subr.mxu0 0.0
      %4325 = vmatpush1.msra.mxu0 1.0
      %4326 = vmatprep.subr.mxu0 0.0
      %4327 = vmatpush1.msra.mxu0 1.0
      %4328 = vmatprep.subr.mxu0 0.0
      %4329 = vmatpush1.msra.mxu0 1.0
      %4330 = vmatprep.subr.mxu0 0.0
      %4331 = vmatpush1.msra.mxu0 1.0
      %4332 = vmatprep.subr.mxu0 0.0
      %4333 = vmatpush1.msra.mxu0 1.0
      %4334 = vmatprep.subr.mxu0 0.0
      %4335 = vmatpush1.msra.mxu0 1.0
      %4336 = vmatprep.mubr.f32.mxu0 %v3894
      %4337 = vmatmul.mubr.f32.gmra.mrb[0].mxu0 %v3893
      %v4338 = vpop.f32.mrb[0].mxu0
      %v4339 = vadd.f32 %v4264, %v4338
      %v4340 = vpop.f32.mrb[0].mxu0
      %4341 = vmatprep.mubr.f32.mxu0 %v3974
      %4342 = vmatmul.mubr.f32.gmra.mrb[0].mxu0 %v3973
      %v4343 = vpop.f32.mrb[0].mxu0
      %v4344 = vadd.f32 %v4269, %v4343
      %v4345 = vpop.f32.mrb[0].mxu0
      %4346 = vdwg.mxu0
      %4347 = vmatprep.subr.mxu0 0.0
      %4348 = vmatpush1.msra.mxu0 1.0
      %4349 = vmatprep.subr.mxu0 0.0
      %4350 = vmatpush1.msra.mxu0 1.0
      %4351 = vmatprep.subr.mxu0 0.0
      %4352 = vmatpush1.msra.mxu0 1.0
      %4353 = vmatprep.subr.mxu0 0.0
      %4354 = vmatpush1.msra.mxu0 1.0
      %4355 = vmatprep.subr.mxu0 0.0
      %4356 = vmatpush1.msra.mxu0 1.0
      %4357 = vmatprep.subr.mxu0 0.0
      %4358 = vmatpush1.msra.mxu0 1.0
      %4359 = vmatprep.subr.mxu0 0.0
      %4360 = vmatpush1.msra.mxu0 1.0
      %4361 = vmatprep.subr.mxu0 0.0
      %4362 = vmatpush1.msra.mxu0 1.0
      %4363 = vmatprep.subr.mxu0 0.0
      %4364 = vmatpush1.msra.mxu0 1.0
      %4365 = vmatprep.subr.mxu0 0.0
      %4366 = vmatpush1.msra.mxu0 1.0
      %4367 = vmatprep.subr.mxu0 0.0
      %4368 = vmatpush1.msra.mxu0 1.0
      %4369 = vmatprep.subr.mxu0 0.0
      %4370 = vmatpush1.msra.mxu0 1.0
      %4371 = vmatprep.subr.mxu0 0.0
      %4372 = vmatpush1.msra.mxu0 1.0
      %4373 = vmatprep.subr.mxu0 0.0
      %4374 = vmatpush1.msra.mxu0 1.0
      %4375 = vmatprep.subr.mxu0 0.0
      %4376 = vmatpush1.msra.mxu0 1.0
      %4377 = vmatprep.subr.mxu0 0.0
      %4378 = vmatpush1.msra.mxu0 1.0
      %4379 = vmatprep.subr.mxu0 0.0
      %4380 = vmatpush1.msra.mxu0 1.0
      %4381 = vmatprep.subr.mxu0 0.0
      %4382 = vmatpush1.msra.mxu0 1.0
      %4383 = vmatprep.subr.mxu0 0.0
      %4384 = vmatpush1.msra.mxu0 1.0
      %4385 = vmatprep.subr.mxu0 0.0
      %4386 = vmatpush1.msra.mxu0 1.0
      %4387 = vmatprep.subr.mxu0 0.0
      %4388 = vmatpush1.msra.mxu0 1.0
      %4389 = vmatprep.subr.mxu0 0.0
      %4390 = vmatpush1.msra.mxu0 1.0
      %4391 = vmatprep.subr.mxu0 0.0
      %4392 = vmatpush1.msra.mxu0 1.0
      %4393 = vmatprep.subr.mxu0 0.0
      %4394 = vmatpush1.msra.mxu0 1.0
      %4395 = vmatprep.subr.mxu0 0.0
      %4396 = vmatpush1.msra.mxu0 1.0
      %4397 = vmatprep.subr.mxu0 0.0
      %4398 = vmatpush1.msra.mxu0 1.0
      %4399 = vmatprep.subr.mxu0 0.0
      %4400 = vmatpush1.msra.mxu0 1.0
      %4401 = vmatprep.subr.mxu0 0.0
      %4402 = vmatpush1.msra.mxu0 1.0
      %4403 = vmatprep.subr.mxu0 0.0
      %4404 = vmatpush1.msra.mxu0 1.0
      %4405 = vmatprep.subr.mxu0 0.0
      %4406 = vmatpush1.msra.mxu0 1.0
      %4407 = vmatprep.subr.mxu0 0.0
      %4408 = vmatpush1.msra.mxu0 1.0
      %4409 = vmatprep.subr.mxu0 0.0
      %4410 = vmatpush1.msra.mxu0 1.0
      %4411 = vmatprep.mubr.f32.mxu0 %v3896
      %4412 = vmatmul.mubr.f32.gmra.mrb[0].mxu0 %v3895
      %v4413 = vpop.f32.mrb[0].mxu0
      %v4414 = vadd.f32 %v4339, %v4413
      %v4415 = vpop.f32.mrb[0].mxu0
      %4416 = vmatprep.mubr.f32.mxu0 %v3976
      %4417 = vmatmul.mubr.f32.gmra.mrb[0].mxu0 %v3975
      %v4418 = vpop.f32.mrb[0].mxu0
      %v4419 = vadd.f32 %v4344, %v4418
      %v4420 = vpop.f32.mrb[0].mxu0
      %4421 = vdwg.mxu0
      %4422 = vmatprep.subr.mxu0 0.0
      %4423 = vmatpush1.msra.mxu0 1.0
      %4424 = vmatprep.subr.mxu0 0.0
      %4425 = vmatpush1.msra.mxu0 1.0
      %4426 = vmatprep.subr.mxu0 0.0
      %4427 = vmatpush1.msra.mxu0 1.0
      %4428 = vmatprep.subr.mxu0 0.0
      %4429 = vmatpush1.msra.mxu0 1.0
      %4430 = vmatprep.subr.mxu0 0.0
      %4431 = vmatpush1.msra.mxu0 1.0
      %4432 = vmatprep.subr.mxu0 0.0
      %4433 = vmatpush1.msra.mxu0 1.0
      %4434 = vmatprep.subr.mxu0 0.0
      %4435 = vmatpush1.msra.mxu0 1.0
      %4436 = vmatprep.subr.mxu0 0.0
      %4437 = vmatpush1.msra.mxu0 1.0
      %4438 = vmatprep.subr.mxu0 0.0
      %4439 = vmatpush1.msra.mxu0 1.0
      %4440 = vmatprep.subr.mxu0 0.0
      %4441 = vmatpush1.msra.mxu0 1.0
      %4442 = vmatprep.subr.mxu0 0.0
      %4443 = vmatpush1.msra.mxu0 1.0
      %4444 = vmatprep.subr.mxu0 0.0
      %4445 = vmatpush1.msra.mxu0 1.0
      %4446 = vmatprep.subr.mxu0 0.0
      %4447 = vmatpush1.msra.mxu0 1.0
      %4448 = vmatprep.subr.mxu0 0.0
      %4449 = vmatpush1.msra.mxu0 1.0
      %4450 = vmatprep.subr.mxu0 0.0
      %4451 = vmatpush1.msra.mxu0 1.0
      %4452 = vmatprep.subr.mxu0 0.0
      %4453 = vmatpush1.msra.mxu0 1.0
      %4454 = vmatprep.subr.mxu0 0.0
      %4455 = vmatpush1.msra.mxu0 1.0
      %4456 = vmatprep.subr.mxu0 0.0
      %4457 = vmatpush1.msra.mxu0 1.0
      %4458 = vmatprep.subr.mxu0 0.0
      %4459 = vmatpush1.msra.mxu0 1.0
      %4460 = vmatprep.subr.mxu0 0.0
      %4461 = vmatpush1.msra.mxu0 1.0
      %4462 = vmatprep.subr.mxu0 0.0
      %4463 = vmatpush1.msra.mxu0 1.0
      %4464 = vmatprep.subr.mxu0 0.0
      %4465 = vmatpush1.msra.mxu0 1.0
      %4466 = vmatprep.subr.mxu0 0.0
      %4467 = vmatpush1.msra.mxu0 1.0
      %4468 = vmatprep.subr.mxu0 0.0
      %4469 = vmatpush1.msra.mxu0 1.0
      %4470 = vmatprep.subr.mxu0 0.0
      %4471 = vmatpush1.msra.mxu0 1.0
      %4472 = vmatprep.subr.mxu0 0.0
      %4473 = vmatpush1.msra.mxu0 1.0
      %4474 = vmatprep.subr.mxu0 0.0
      %4475 = vmatpush1.msra.mxu0 1.0
      %4476 = vmatprep.subr.mxu0 0.0
      %4477 = vmatpush1.msra.mxu0 1.0
      %4478 = vmatprep.subr.mxu0 0.0
      %4479 = vmatpush1.msra.mxu0 1.0
      %4480 = vmatprep.subr.mxu0 0.0
      %4481 = vmatpush1.msra.mxu0 1.0
      %4482 = vmatprep.subr.mxu0 0.0
      %4483 = vmatpush1.msra.mxu0 1.0
      %4484 = vmatprep.subr.mxu0 0.0
      %4485 = vmatpush1.msra.mxu0 1.0
      %4486 = vmatprep.mubr.f32.mxu0 %v3898
      %4487 = vmatmul.mubr.f32.gmra.mrb[0].mxu0 %v3897
      %v4488 = vpop.f32.mrb[0].mxu0
      %v4489 = vadd.f32 %v4414, %v4488
      %v4490 = vpop.f32.mrb[0].mxu0
      %4491 = vmatprep.mubr.f32.mxu0 %v3978
      %4492 = vmatmul.mubr.f32.gmra.mrb[0].mxu0 %v3977
      %v4493 = vpop.f32.mrb[0].mxu0
      %v4494 = vadd.f32 %v4419, %v4493
      %v4495 = vpop.f32.mrb[0].mxu0
      %4496 = vdwg.mxu0
      %4497 = vmatprep.subr.mxu0 0.0
      %4498 = vmatpush1.msra.mxu0 1.0
      %4499 = vmatprep.subr.mxu0 0.0
      %4500 = vmatpush1.msra.mxu0 1.0
      %4501 = vmatprep.subr.mxu0 0.0
      %4502 = vmatpush1.msra.mxu0 1.0
      %4503 = vmatprep.subr.mxu0 0.0
      %4504 = vmatpush1.msra.mxu0 1.0
      %4505 = vmatprep.subr.mxu0 0.0
      %4506 = vmatpush1.msra.mxu0 1.0
      %4507 = vmatprep.subr.mxu0 0.0
      %4508 = vmatpush1.msra.mxu0 1.0
      %4509 = vmatprep.subr.mxu0 0.0
      %4510 = vmatpush1.msra.mxu0 1.0
      %4511 = vmatprep.subr.mxu0 0.0
      %4512 = vmatpush1.msra.mxu0 1.0
      %4513 = vmatprep.subr.mxu0 0.0
      %4514 = vmatpush1.msra.mxu0 1.0
      %4515 = vmatprep.subr.mxu0 0.0
      %4516 = vmatpush1.msra.mxu0 1.0
      %4517 = vmatprep.subr.mxu0 0.0
      %4518 = vmatpush1.msra.mxu0 1.0
      %4519 = vmatprep.subr.mxu0 0.0
      %4520 = vmatpush1.msra.mxu0 1.0
      %4521 = vmatprep.subr.mxu0 0.0
      %4522 = vmatpush1.msra.mxu0 1.0
      %4523 = vmatprep.subr.mxu0 0.0
      %4524 = vmatpush1.msra.mxu0 1.0
      %4525 = vmatprep.subr.mxu0 0.0
      %4526 = vmatpush1.msra.mxu0 1.0
      %4527 = vmatprep.subr.mxu0 0.0
      %4528 = vmatpush1.msra.mxu0 1.0
      %4529 = vmatprep.subr.mxu0 0.0
      %4530 = vmatpush1.msra.mxu0 1.0
      %4531 = vmatprep.subr.mxu0 0.0
      %4532 = vmatpush1.msra.mxu0 1.0
      %4533 = vmatprep.subr.mxu0 0.0
      %4534 = vmatpush1.msra.mxu0 1.0
      %4535 = vmatprep.subr.mxu0 0.0
      %4536 = vmatpush1.msra.mxu0 1.0
      %4537 = vmatprep.subr.mxu0 0.0
      %4538 = vmatpush1.msra.mxu0 1.0
      %4539 = vmatprep.subr.mxu0 0.0
      %4540 = vmatpush1.msra.mxu0 1.0
      %4541 = vmatprep.subr.mxu0 0.0
      %4542 = vmatpush1.msra.mxu0 1.0
      %4543 = vmatprep.subr.mxu0 0.0
      %4544 = vmatpush1.msra.mxu0 1.0
      %4545 = vmatprep.subr.mxu0 0.0
      %4546 = vmatpush1.msra.mxu0 1.0
      %4547 = vmatprep.subr.mxu0 0.0
      %4548 = vmatpush1.msra.mxu0 1.0
      %4549 = vmatprep.subr.mxu0 0.0
      %4550 = vmatpush1.msra.mxu0 1.0
      %4551 = vmatprep.subr.mxu0 0.0
      %4552 = vmatpush1.msra.mxu0 1.0
      %4553 = vmatprep.subr.mxu0 0.0
      %4554 = vmatpush1.msra.mxu0 1.0
      %4555 = vmatprep.subr.mxu0 0.0
      %4556 = vmatpush1.msra.mxu0 1.0
      %4557 = vmatprep.subr.mxu0 0.0
      %4558 = vmatpush1.msra.mxu0 1.0
      %4559 = vmatprep.subr.mxu0 0.0
      %4560 = vmatpush1.msra.mxu0 1.0
      %4561 = vmatprep.mubr.f32.mxu0 %v3900
      %4562 = vmatmul.mubr.f32.gmra.mrb[0].mxu0 %v3899
      %v4563 = vpop.f32.mrb[0].mxu0
      %v4564 = vadd.f32 %v4489, %v4563
      %v4565 = vpop.f32.mrb[0].mxu0
      %4566 = vmatprep.mubr.f32.mxu0 %v3980
      %4567 = vmatmul.mubr.f32.gmra.mrb[0].mxu0 %v3979
      %v4568 = vpop.f32.mrb[0].mxu0
      %v4569 = vadd.f32 %v4494, %v4568
      %v4570 = vpop.f32.mrb[0].mxu0
      %4571 = vdwg.mxu0
      %4572 = vmatprep.subr.mxu0 0.0
      %4573 = vmatpush1.msra.mxu0 1.0
      %4574 = vmatprep.subr.mxu0 0.0
      %4575 = vmatpush1.msra.mxu0 1.0
      %4576 = vmatprep.subr.mxu0 0.0
      %4577 = vmatpush1.msra.mxu0 1.0
      %4578 = vmatprep.subr.mxu0 0.0
      %4579 = vmatpush1.msra.mxu0 1.0
      %4580 = vmatprep.subr.mxu0 0.0
      %4581 = vmatpush1.msra.mxu0 1.0
      %4582 = vmatprep.subr.mxu0 0.0
      %4583 = vmatpush1.msra.mxu0 1.0
      %4584 = vmatprep.subr.mxu0 0.0
      %4585 = vmatpush1.msra.mxu0 1.0
      %4586 = vmatprep.subr.mxu0 0.0
      %4587 = vmatpush1.msra.mxu0 1.0
      %4588 = vmatprep.subr.mxu0 0.0
      %4589 = vmatpush1.msra.mxu0 1.0
      %4590 = vmatprep.subr.mxu0 0.0
      %4591 = vmatpush1.msra.mxu0 1.0
      %4592 = vmatprep.subr.mxu0 0.0
      %4593 = vmatpush1.msra.mxu0 1.0
      %4594 = vmatprep.subr.mxu0 0.0
      %4595 = vmatpush1.msra.mxu0 1.0
      %4596 = vmatprep.subr.mxu0 0.0
      %4597 = vmatpush1.msra.mxu0 1.0
      %4598 = vmatprep.subr.mxu0 0.0
      %4599 = vmatpush1.msra.mxu0 1.0
      %4600 = vmatprep.subr.mxu0 0.0
      %4601 = vmatpush1.msra.mxu0 1.0
      %4602 = vmatprep.subr.mxu0 0.0
      %4603 = vmatpush1.msra.mxu0 1.0
      %4604 = vmatprep.subr.mxu0 0.0
      %4605 = vmatpush1.msra.mxu0 1.0
      %4606 = vmatprep.subr.mxu0 0.0
      %4607 = vmatpush1.msra.mxu0 1.0
      %4608 = vmatprep.subr.mxu0 0.0
      %4609 = vmatpush1.msra.mxu0 1.0
      %4610 = vmatprep.subr.mxu0 0.0
      %4611 = vmatpush1.msra.mxu0 1.0
      %4612 = vmatprep.subr.mxu0 0.0
      %4613 = vmatpush1.msra.mxu0 1.0
      %4614 = vmatprep.subr.mxu0 0.0
      %4615 = vmatpush1.msra.mxu0 1.0
      %4616 = vmatprep.subr.mxu0 0.0
      %4617 = vmatpush1.msra.mxu0 1.0
      %4618 = vmatprep.subr.mxu0 0.0
      %4619 = vmatpush1.msra.mxu0 1.0
      %4620 = vmatprep.subr.mxu0 0.0
      %4621 = vmatpush1.msra.mxu0 1.0
      %4622 = vmatprep.subr.mxu0 0.0
      %4623 = vmatpush1.msra.mxu0 1.0
      %4624 = vmatprep.subr.mxu0 0.0
      %4625 = vmatpush1.msra.mxu0 1.0
      %4626 = vmatprep.subr.mxu0 0.0
      %4627 = vmatpush1.msra.mxu0 1.0
      %4628 = vmatprep.subr.mxu0 0.0
      %4629 = vmatpush1.msra.mxu0 1.0
      %4630 = vmatprep.subr.mxu0 0.0
      %4631 = vmatpush1.msra.mxu0 1.0
      %4632 = vmatprep.subr.mxu0 0.0
      %4633 = vmatpush1.msra.mxu0 1.0
      %4634 = vmatprep.subr.mxu0 0.0
      %4635 = vmatpush1.msra.mxu0 1.0
      %4636 = vmatprep.mubr.f32.mxu0 %v3902
      %4637 = vmatmul.mubr.f32.gmra.mrb[0].mxu0 %v3901
      %v4638 = vpop.f32.mrb[0].mxu0
      %v4639 = vadd.f32 %v4564, %v4638
      %v4640 = vpop.f32.mrb[0].mxu0
      %4641 = vmatprep.mubr.f32.mxu0 %v3982
      %4642 = vmatmul.mubr.f32.gmra.mrb[0].mxu0 %v3981
      %v4643 = vpop.f32.mrb[0].mxu0
      %v4644 = vadd.f32 %v4569, %v4643
      %v4645 = vpop.f32.mrb[0].mxu0
      %4646 = vdwg.mxu0
      %4647 = vmatprep.subr.mxu0 0.0
      %4648 = vmatpush1.msra.mxu0 1.0
      %4649 = vmatprep.subr.mxu0 0.0
      %4650 = vmatpush1.msra.mxu0 1.0
      %4651 = vmatprep.subr.mxu0 0.0
      %4652 = vmatpush1.msra.mxu0 1.0
      %4653 = vmatprep.subr.mxu0 0.0
      %4654 = vmatpush1.msra.mxu0 1.0
      %4655 = vmatprep.subr.mxu0 0.0
      %4656 = vmatpush1.msra.mxu0 1.0
      %4657 = vmatprep.subr.mxu0 0.0
      %4658 = vmatpush1.msra.mxu0 1.0
      %4659 = vmatprep.subr.mxu0 0.0
      %4660 = vmatpush1.msra.mxu0 1.0
      %4661 = vmatprep.subr.mxu0 0.0
      %4662 = vmatpush1.msra.mxu0 1.0
      %4663 = vmatprep.subr.mxu0 0.0
      %4664 = vmatpush1.msra.mxu0 1.0
      %4665 = vmatprep.subr.mxu0 0.0
      %4666 = vmatpush1.msra.mxu0 1.0
      %4667 = vmatprep.subr.mxu0 0.0
      %4668 = vmatpush1.msra.mxu0 1.0
      %4669 = vmatprep.subr.mxu0 0.0
      %4670 = vmatpush1.msra.mxu0 1.0
      %4671 = vmatprep.subr.mxu0 0.0
      %4672 = vmatpush1.msra.mxu0 1.0
      %4673 = vmatprep.subr.mxu0 0.0
      %4674 = vmatpush1.msra.mxu0 1.0
      %4675 = vmatprep.subr.mxu0 0.0
      %4676 = vmatpush1.msra.mxu0 1.0
      %4677 = vmatprep.subr.mxu0 0.0
      %4678 = vmatpush1.msra.mxu0 1.0
      %4679 = vmatprep.subr.mxu0 0.0
      %4680 = vmatpush1.msra.mxu0 1.0
      %4681 = vmatprep.subr.mxu0 0.0
      %4682 = vmatpush1.msra.mxu0 1.0
      %4683 = vmatprep.subr.mxu0 0.0
      %4684 = vmatpush1.msra.mxu0 1.0
      %4685 = vmatprep.subr.mxu0 0.0
      %4686 = vmatpush1.msra.mxu0 1.0
      %4687 = vmatprep.subr.mxu0 0.0
      %4688 = vmatpush1.msra.mxu0 1.0
      %4689 = vmatprep.subr.mxu0 0.0
      %4690 = vmatpush1.msra.mxu0 1.0
      %4691 = vmatprep.subr.mxu0 0.0
      %4692 = vmatpush1.msra.mxu0 1.0
      %4693 = vmatprep.subr.mxu0 0.0
      %4694 = vmatpush1.msra.mxu0 1.0
      %4695 = vmatprep.subr.mxu0 0.0
      %4696 = vmatpush1.msra.mxu0 1.0
      %4697 = vmatprep.subr.mxu0 0.0
      %4698 = vmatpush1.msra.mxu0 1.0
      %4699 = vmatprep.subr.mxu0 0.0
      %4700 = vmatpush1.msra.mxu0 1.0
      %4701 = vmatprep.subr.mxu0 0.0
      %4702 = vmatpush1.msra.mxu0 1.0
      %4703 = vmatprep.subr.mxu0 0.0
      %4704 = vmatpush1.msra.mxu0 1.0
      %4705 = vmatprep.subr.mxu0 0.0
      %4706 = vmatpush1.msra.mxu0 1.0
      %4707 = vmatprep.subr.mxu0 0.0
      %4708 = vmatpush1.msra.mxu0 1.0
      %4709 = vmatprep.subr.mxu0 0.0
      %4710 = vmatpush1.msra.mxu0 1.0
      %4711 = vmatprep.mubr.f32.mxu0 %v3904
      %4712 = vmatmul.mubr.f32.gmra.mrb[0].mxu0 %v3903
      %v4713 = vpop.f32.mrb[0].mxu0
      %v4714 = vadd.f32 %v4639, %v4713
      %v4715 = vpop.f32.mrb[0].mxu0
      %4716 = vmatprep.mubr.f32.mxu0 %v3984
      %4717 = vmatmul.mubr.f32.gmra.mrb[0].mxu0 %v3983
      %v4718 = vpop.f32.mrb[0].mxu0
      %v4719 = vadd.f32 %v4644, %v4718
      %v4720 = vpop.f32.mrb[0].mxu0
      %4721 = vdwg.mxu0
      %4722 = vmatprep.subr.mxu0 0.0
      %4723 = vmatpush1.msra.mxu0 1.0
      %4724 = vmatprep.subr.mxu0 0.0
      %4725 = vmatpush1.msra.mxu0 1.0
      %4726 = vmatprep.subr.mxu0 0.0
      %4727 = vmatpush1.msra.mxu0 1.0
      %4728 = vmatprep.subr.mxu0 0.0
      %4729 = vmatpush1.msra.mxu0 1.0
      %4730 = vmatprep.subr.mxu0 0.0
      %4731 = vmatpush1.msra.mxu0 1.0
      %4732 = vmatprep.subr.mxu0 0.0
      %4733 = vmatpush1.msra.mxu0 1.0
      %4734 = vmatprep.subr.mxu0 0.0
      %4735 = vmatpush1.msra.mxu0 1.0
      %4736 = vmatprep.subr.mxu0 0.0
      %4737 = vmatpush1.msra.mxu0 1.0
      %4738 = vmatprep.subr.mxu0 0.0
      %4739 = vmatpush1.msra.mxu0 1.0
      %4740 = vmatprep.subr.mxu0 0.0
      %4741 = vmatpush1.msra.mxu0 1.0
      %4742 = vmatprep.subr.mxu0 0.0
      %4743 = vmatpush1.msra.mxu0 1.0
      %4744 = vmatprep.subr.mxu0 0.0
      %4745 = vmatpush1.msra.mxu0 1.0
      %4746 = vmatprep.subr.mxu0 0.0
      %4747 = vmatpush1.msra.mxu0 1.0
      %4748 = vmatprep.subr.mxu0 0.0
      %4749 = vmatpush1.msra.mxu0 1.0
      %4750 = vmatprep.subr.mxu0 0.0
      %4751 = vmatpush1.msra.mxu0 1.0
      %4752 = vmatprep.subr.mxu0 0.0
      %4753 = vmatpush1.msra.mxu0 1.0
      %4754 = vmatprep.subr.mxu0 0.0
      %4755 = vmatpush1.msra.mxu0 1.0
      %4756 = vmatprep.subr.mxu0 0.0
      %4757 = vmatpush1.msra.mxu0 1.0
      %4758 = vmatprep.subr.mxu0 0.0
      %4759 = vmatpush1.msra.mxu0 1.0
      %4760 = vmatprep.subr.mxu0 0.0
      %4761 = vmatpush1.msra.mxu0 1.0
      %4762 = vmatprep.subr.mxu0 0.0
      %4763 = vmatpush1.msra.mxu0 1.0
      %4764 = vmatprep.subr.mxu0 0.0
      %4765 = vmatpush1.msra.mxu0 1.0
      %4766 = vmatprep.subr.mxu0 0.0
      %4767 = vmatpush1.msra.mxu0 1.0
      %4768 = vmatprep.subr.mxu0 0.0
      %4769 = vmatpush1.msra.mxu0 1.0
      %4770 = vmatprep.subr.mxu0 0.0
      %4771 = vmatpush1.msra.mxu0 1.0
      %4772 = vmatprep.subr.mxu0 0.0
      %4773 = vmatpush1.msra.mxu0 1.0
      %4774 = vmatprep.subr.mxu0 0.0
      %4775 = vmatpush1.msra.mxu0 1.0
      %4776 = vmatprep.subr.mxu0 0.0
      %4777 = vmatpush1.msra.mxu0 1.0
      %4778 = vmatprep.subr.mxu0 0.0
      %4779 = vmatpush1.msra.mxu0 1.0
      %4780 = vmatprep.subr.mxu0 0.0
      %4781 = vmatpush1.msra.mxu0 1.0
      %4782 = vmatprep.subr.mxu0 0.0
      %4783 = vmatpush1.msra.mxu0 1.0
      %4784 = vmatprep.subr.mxu0 0.0
      %4785 = vmatpush1.msra.mxu0 1.0
      %4786 = vmatprep.mubr.f32.mxu0 %v3906
      %4787 = vmatmul.mubr.f32.gmra.mrb[0].mxu0 %v3905
      %v4788 = vpop.f32.mrb[0].mxu0
      %v4789 = vadd.f32 %v4714, %v4788
      %v4790 = vpop.f32.mrb[0].mxu0
      %4791 = vmatprep.mubr.f32.mxu0 %v3986
      %4792 = vmatmul.mubr.f32.gmra.mrb[0].mxu0 %v3985
      %v4793 = vpop.f32.mrb[0].mxu0
      %v4794 = vadd.f32 %v4719, %v4793
      %v4795 = vpop.f32.mrb[0].mxu0
      %4796 = vdwg.mxu0
      %4797 = vmatprep.subr.mxu0 0.0
      %4798 = vmatpush1.msra.mxu0 1.0
      %4799 = vmatprep.subr.mxu0 0.0
      %4800 = vmatpush1.msra.mxu0 1.0
      %4801 = vmatprep.subr.mxu0 0.0
      %4802 = vmatpush1.msra.mxu0 1.0
      %4803 = vmatprep.subr.mxu0 0.0
      %4804 = vmatpush1.msra.mxu0 1.0
      %4805 = vmatprep.subr.mxu0 0.0
      %4806 = vmatpush1.msra.mxu0 1.0
      %4807 = vmatprep.subr.mxu0 0.0
      %4808 = vmatpush1.msra.mxu0 1.0
      %4809 = vmatprep.subr.mxu0 0.0
      %4810 = vmatpush1.msra.mxu0 1.0
      %4811 = vmatprep.subr.mxu0 0.0
      %4812 = vmatpush1.msra.mxu0 1.0
      %4813 = vmatprep.subr.mxu0 0.0
      %4814 = vmatpush1.msra.mxu0 1.0
      %4815 = vmatprep.subr.mxu0 0.0
      %4816 = vmatpush1.msra.mxu0 1.0
      %4817 = vmatprep.subr.mxu0 0.0
      %4818 = vmatpush1.msra.mxu0 1.0
      %4819 = vmatprep.subr.mxu0 0.0
      %4820 = vmatpush1.msra.mxu0 1.0
      %4821 = vmatprep.subr.mxu0 0.0
      %4822 = vmatpush1.msra.mxu0 1.0
      %4823 = vmatprep.subr.mxu0 0.0
      %4824 = vmatpush1.msra.mxu0 1.0
      %4825 = vmatprep.subr.mxu0 0.0
      %4826 = vmatpush1.msra.mxu0 1.0
      %4827 = vmatprep.subr.mxu0 0.0
      %4828 = vmatpush1.msra.mxu0 1.0
      %4829 = vmatprep.subr.mxu0 0.0
      %4830 = vmatpush1.msra.mxu0 1.0
      %4831 = vmatprep.subr.mxu0 0.0
      %4832 = vmatpush1.msra.mxu0 1.0
      %4833 = vmatprep.subr.mxu0 0.0
      %4834 = vmatpush1.msra.mxu0 1.0
      %4835 = vmatprep.subr.mxu0 0.0
      %4836 = vmatpush1.msra.mxu0 1.0
      %4837 = vmatprep.subr.mxu0 0.0
      %4838 = vmatpush1.msra.mxu0 1.0
      %4839 = vmatprep.subr.mxu0 0.0
      %4840 = vmatpush1.msra.mxu0 1.0
      %4841 = vmatprep.subr.mxu0 0.0
      %4842 = vmatpush1.msra.mxu0 1.0
      %4843 = vmatprep.subr.mxu0 0.0
      %4844 = vmatpush1.msra.mxu0 1.0
      %4845 = vmatprep.subr.mxu0 0.0
      %4846 = vmatpush1.msra.mxu0 1.0
      %4847 = vmatprep.subr.mxu0 0.0
      %4848 = vmatpush1.msra.mxu0 1.0
      %4849 = vmatprep.subr.mxu0 0.0
      %4850 = vmatpush1.msra.mxu0 1.0
      %4851 = vmatprep.subr.mxu0 0.0
      %4852 = vmatpush1.msra.mxu0 1.0
      %4853 = vmatprep.subr.mxu0 0.0
      %4854 = vmatpush1.msra.mxu0 1.0
      %4855 = vmatprep.subr.mxu0 0.0
      %4856 = vmatpush1.msra.mxu0 1.0
      %4857 = vmatprep.subr.mxu0 0.0
      %4858 = vmatpush1.msra.mxu0 1.0
      %4859 = vmatprep.subr.mxu0 0.0
      %4860 = vmatpush1.msra.mxu0 1.0
      %4861 = vmatprep.mubr.f32.mxu0 %v3908
      %4862 = vmatmul.mubr.f32.gmra.mrb[0].mxu0 %v3907
      %v4863 = vpop.f32.mrb[0].mxu0
      %v4864 = vadd.f32 %v4789, %v4863
      %v4865 = vpop.f32.mrb[0].mxu0
      %4866 = vmatprep.mubr.f32.mxu0 %v3988
      %4867 = vmatmul.mubr.f32.gmra.mrb[0].mxu0 %v3987
      %v4868 = vpop.f32.mrb[0].mxu0
      %v4869 = vadd.f32 %v4794, %v4868
      %v4870 = vpop.f32.mrb[0].mxu0
      %4871 = vdwg.mxu0
      %4872 = vmatprep.subr.mxu0 0.0
      %4873 = vmatpush1.msra.mxu0 1.0
      %4874 = vmatprep.subr.mxu0 0.0
      %4875 = vmatpush1.msra.mxu0 1.0
      %4876 = vmatprep.subr.mxu0 0.0
      %4877 = vmatpush1.msra.mxu0 1.0
      %4878 = vmatprep.subr.mxu0 0.0
      %4879 = vmatpush1.msra.mxu0 1.0
      %4880 = vmatprep.subr.mxu0 0.0
      %4881 = vmatpush1.msra.mxu0 1.0
      %4882 = vmatprep.subr.mxu0 0.0
      %4883 = vmatpush1.msra.mxu0 1.0
      %4884 = vmatprep.subr.mxu0 0.0
      %4885 = vmatpush1.msra.mxu0 1.0
      %4886 = vmatprep.subr.mxu0 0.0
      %4887 = vmatpush1.msra.mxu0 1.0
      %4888 = vmatprep.subr.mxu0 0.0
      %4889 = vmatpush1.msra.mxu0 1.0
      %4890 = vmatprep.subr.mxu0 0.0
      %4891 = vmatpush1.msra.mxu0 1.0
      %4892 = vmatprep.subr.mxu0 0.0
      %4893 = vmatpush1.msra.mxu0 1.0
      %4894 = vmatprep.subr.mxu0 0.0
      %4895 = vmatpush1.msra.mxu0 1.0
      %4896 = vmatprep.subr.mxu0 0.0
      %4897 = vmatpush1.msra.mxu0 1.0
      %4898 = vmatprep.subr.mxu0 0.0
      %4899 = vmatpush1.msra.mxu0 1.0
      %4900 = vmatprep.subr.mxu0 0.0
      %4901 = vmatpush1.msra.mxu0 1.0
      %4902 = vmatprep.subr.mxu0 0.0
      %4903 = vmatpush1.msra.mxu0 1.0
      %4904 = vmatprep.subr.mxu0 0.0
      %4905 = vmatpush1.msra.mxu0 1.0
      %4906 = vmatprep.subr.mxu0 0.0
      %4907 = vmatpush1.msra.mxu0 1.0
      %4908 = vmatprep.subr.mxu0 0.0
      %4909 = vmatpush1.msra.mxu0 1.0
      %4910 = vmatprep.subr.mxu0 0.0
      %4911 = vmatpush1.msra.mxu0 1.0
      %4912 = vmatprep.subr.mxu0 0.0
      %4913 = vmatpush1.msra.mxu0 1.0
      %4914 = vmatprep.subr.mxu0 0.0
      %4915 = vmatpush1.msra.mxu0 1.0
      %4916 = vmatprep.subr.mxu0 0.0
      %4917 = vmatpush1.msra.mxu0 1.0
      %4918 = vmatprep.subr.mxu0 0.0
      %4919 = vmatpush1.msra.mxu0 1.0
      %4920 = vmatprep.subr.mxu0 0.0
      %4921 = vmatpush1.msra.mxu0 1.0
      %4922 = vmatprep.subr.mxu0 0.0
      %4923 = vmatpush1.msra.mxu0 1.0
      %4924 = vmatprep.subr.mxu0 0.0
      %4925 = vmatpush1.msra.mxu0 1.0
      %4926 = vmatprep.subr.mxu0 0.0
      %4927 = vmatpush1.msra.mxu0 1.0
      %4928 = vmatprep.subr.mxu0 0.0
      %4929 = vmatpush1.msra.mxu0 1.0
      %4930 = vmatprep.subr.mxu0 0.0
      %4931 = vmatpush1.msra.mxu0 1.0
      %4932 = vmatprep.subr.mxu0 0.0
      %4933 = vmatpush1.msra.mxu0 1.0
      %4934 = vmatprep.subr.mxu0 0.0
      %4935 = vmatpush1.msra.mxu0 1.0
      %4936 = vmatprep.mubr.f32.mxu0 %v3910
      %4937 = vmatmul.mubr.f32.gmra.mrb[0].mxu0 %v3909
      %v4938 = vpop.f32.mrb[0].mxu0
      %v4939 = vadd.f32 %v4864, %v4938
      %v4940 = vpop.f32.mrb[0].mxu0
      %4941 = vmatprep.mubr.f32.mxu0 %v3990
      %4942 = vmatmul.mubr.f32.gmra.mrb[0].mxu0 %v3989
      %v4943 = vpop.f32.mrb[0].mxu0
      %v4944 = vadd.f32 %v4869, %v4943
      %v4945 = vpop.f32.mrb[0].mxu0
      %4946 = vdwg.mxu0
      %4947 = vmatprep.subr.mxu0 0.0
      %4948 = vmatpush1.msra.mxu0 1.0
      %4949 = vmatprep.subr.mxu0 0.0
      %4950 = vmatpush1.msra.mxu0 1.0
      %4951 = vmatprep.subr.mxu0 0.0
      %4952 = vmatpush1.msra.mxu0 1.0
      %4953 = vmatprep.subr.mxu0 0.0
      %4954 = vmatpush1.msra.mxu0 1.0
      %4955 = vmatprep.subr.mxu0 0.0
      %4956 = vmatpush1.msra.mxu0 1.0
      %4957 = vmatprep.subr.mxu0 0.0
      %4958 = vmatpush1.msra.mxu0 1.0
      %4959 = vmatprep.subr.mxu0 0.0
      %4960 = vmatpush1.msra.mxu0 1.0
      %4961 = vmatprep.subr.mxu0 0.0
      %4962 = vmatpush1.msra.mxu0 1.0
      %4963 = vmatprep.subr.mxu0 0.0
      %4964 = vmatpush1.msra.mxu0 1.0
      %4965 = vmatprep.subr.mxu0 0.0
      %4966 = vmatpush1.msra.mxu0 1.0
      %4967 = vmatprep.subr.mxu0 0.0
      %4968 = vmatpush1.msra.mxu0 1.0
      %4969 = vmatprep.subr.mxu0 0.0
      %4970 = vmatpush1.msra.mxu0 1.0
      %4971 = vmatprep.subr.mxu0 0.0
      %4972 = vmatpush1.msra.mxu0 1.0
      %4973 = vmatprep.subr.mxu0 0.0
      %4974 = vmatpush1.msra.mxu0 1.0
      %4975 = vmatprep.subr.mxu0 0.0
      %4976 = vmatpush1.msra.mxu0 1.0
      %4977 = vmatprep.subr.mxu0 0.0
      %4978 = vmatpush1.msra.mxu0 1.0
      %4979 = vmatprep.subr.mxu0 0.0
      %4980 = vmatpush1.msra.mxu0 1.0
      %4981 = vmatprep.subr.mxu0 0.0
      %4982 = vmatpush1.msra.mxu0 1.0
      %4983 = vmatprep.subr.mxu0 0.0
      %4984 = vmatpush1.msra.mxu0 1.0
      %4985 = vmatprep.subr.mxu0 0.0
      %4986 = vmatpush1.msra.mxu0 1.0
      %4987 = vmatprep.subr.mxu0 0.0
      %4988 = vmatpush1.msra.mxu0 1.0
      %4989 = vmatprep.subr.mxu0 0.0
      %4990 = vmatpush1.msra.mxu0 1.0
      %4991 = vmatprep.subr.mxu0 0.0
      %4992 = vmatpush1.msra.mxu0 1.0
      %4993 = vmatprep.subr.mxu0 0.0
      %4994 = vmatpush1.msra.mxu0 1.0
      %4995 = vmatprep.subr.mxu0 0.0
      %4996 = vmatpush1.msra.mxu0 1.0
      %4997 = vmatprep.subr.mxu0 0.0
      %4998 = vmatpush1.msra.mxu0 1.0
      %4999 = vmatprep.subr.mxu0 0.0
      %5000 = vmatpush1.msra.mxu0 1.0
      %5001 = vmatprep.subr.mxu0 0.0
      %5002 = vmatpush1.msra.mxu0 1.0
      %5003 = vmatprep.subr.mxu0 0.0
      %5004 = vmatpush1.msra.mxu0 1.0
      %5005 = vmatprep.subr.mxu0 0.0
      %5006 = vmatpush1.msra.mxu0 1.0
      %5007 = vmatprep.subr.mxu0 0.0
      %5008 = vmatpush1.msra.mxu0 1.0
      %5009 = vmatprep.subr.mxu0 0.0
      %5010 = vmatpush1.msra.mxu0 1.0
      %5011 = vmatprep.mubr.f32.mxu0 %v3912
      %5012 = vmatmul.mubr.f32.gmra.mrb[0].mxu0 %v3911
      %v5013 = vpop.f32.mrb[0].mxu0
      %v5014 = vadd.f32 %v4939, %v5013
      %v5015 = vpop.f32.mrb[0].mxu0
      %5016 = vmatprep.mubr.f32.mxu0 %v3992
      %5017 = vmatmul.mubr.f32.gmra.mrb[0].mxu0 %v3991
      %v5018 = vpop.f32.mrb[0].mxu0
      %v5019 = vadd.f32 %v4944, %v5018
      %v5020 = vpop.f32.mrb[0].mxu0
      %5021 = vdwg.mxu0
      %5022 = vmatprep.subr.mxu0 0.0
      %5023 = vmatpush1.msra.mxu0 1.0
      %5024 = vmatprep.subr.mxu0 0.0
      %5025 = vmatpush1.msra.mxu0 1.0
      %5026 = vmatprep.subr.mxu0 0.0
      %5027 = vmatpush1.msra.mxu0 1.0
      %5028 = vmatprep.subr.mxu0 0.0
      %5029 = vmatpush1.msra.mxu0 1.0
      %5030 = vmatprep.subr.mxu0 0.0
      %5031 = vmatpush1.msra.mxu0 1.0
      %5032 = vmatprep.subr.mxu0 0.0
      %5033 = vmatpush1.msra.mxu0 1.0
      %5034 = vmatprep.subr.mxu0 0.0
      %5035 = vmatpush1.msra.mxu0 1.0
      %5036 = vmatprep.subr.mxu0 0.0
      %5037 = vmatpush1.msra.mxu0 1.0
      %5038 = vmatprep.subr.mxu0 0.0
      %5039 = vmatpush1.msra.mxu0 1.0
      %5040 = vmatprep.subr.mxu0 0.0
      %5041 = vmatpush1.msra.mxu0 1.0
      %5042 = vmatprep.subr.mxu0 0.0
      %5043 = vmatpush1.msra.mxu0 1.0
      %5044 = vmatprep.subr.mxu0 0.0
      %5045 = vmatpush1.msra.mxu0 1.0
      %5046 = vmatprep.subr.mxu0 0.0
      %5047 = vmatpush1.msra.mxu0 1.0
      %5048 = vmatprep.subr.mxu0 0.0
      %5049 = vmatpush1.msra.mxu0 1.0
      %5050 = vmatprep.subr.mxu0 0.0
      %5051 = vmatpush1.msra.mxu0 1.0
      %5052 = vmatprep.subr.mxu0 0.0
      %5053 = vmatpush1.msra.mxu0 1.0
      %5054 = vmatprep.subr.mxu0 0.0
      %5055 = vmatpush1.msra.mxu0 1.0
      %5056 = vmatprep.subr.mxu0 0.0
      %5057 = vmatpush1.msra.mxu0 1.0
      %5058 = vmatprep.subr.mxu0 0.0
      %5059 = vmatpush1.msra.mxu0 1.0
      %5060 = vmatprep.subr.mxu0 0.0
      %5061 = vmatpush1.msra.mxu0 1.0
      %5062 = vmatprep.subr.mxu0 0.0
      %5063 = vmatpush1.msra.mxu0 1.0
      %5064 = vmatprep.subr.mxu0 0.0
      %5065 = vmatpush1.msra.mxu0 1.0
      %5066 = vmatprep.subr.mxu0 0.0
      %5067 = vmatpush1.msra.mxu0 1.0
      %5068 = vmatprep.subr.mxu0 0.0
      %5069 = vmatpush1.msra.mxu0 1.0
      %5070 = vmatprep.subr.mxu0 0.0
      %5071 = vmatpush1.msra.mxu0 1.0
      %5072 = vmatprep.subr.mxu0 0.0
      %5073 = vmatpush1.msra.mxu0 1.0
      %5074 = vmatprep.subr.mxu0 0.0
      %5075 = vmatpush1.msra.mxu0 1.0
      %5076 = vmatprep.subr.mxu0 0.0
      %5077 = vmatpush1.msra.mxu0 1.0
      %5078 = vmatprep.subr.mxu0 0.0
      %5079 = vmatpush1.msra.mxu0 1.0
      %5080 = vmatprep.subr.mxu0 0.0
      %5081 = vmatpush1.msra.mxu0 1.0
      %5082 = vmatprep.subr.mxu0 0.0
      %5083 = vmatpush1.msra.mxu0 1.0
      %5084 = vmatprep.subr.mxu0 0.0
      %5085 = vmatpush1.msra.mxu0 1.0
      %5086 = vmatprep.mubr.f32.mxu0 %v3914
      %5087 = vmatmul.mubr.f32.gmra.mrb[0].mxu0 %v3913
      %v5088 = vpop.f32.mrb[0].mxu0
      %v5089 = vadd.f32 %v5014, %v5088
      %v5090 = vpop.f32.mrb[0].mxu0
      %5091 = vmatprep.mubr.f32.mxu0 %v3994
      %5092 = vmatmul.mubr.f32.gmra.mrb[0].mxu0 %v3993
      %v5093 = vpop.f32.mrb[0].mxu0
      %v5094 = vadd.f32 %v5019, %v5093
      %v5095 = vpop.f32.mrb[0].mxu0
      %5096 = vdwg.mxu0
      %5097 = vmatprep.subr.mxu0 0.0
      %5098 = vmatpush1.msra.mxu0 1.0
      %5099 = vmatprep.subr.mxu0 0.0
      %5100 = vmatpush1.msra.mxu0 1.0
      %5101 = vmatprep.subr.mxu0 0.0
      %5102 = vmatpush1.msra.mxu0 1.0
      %5103 = vmatprep.subr.mxu0 0.0
      %5104 = vmatpush1.msra.mxu0 1.0
      %5105 = vmatprep.subr.mxu0 0.0
      %5106 = vmatpush1.msra.mxu0 1.0
      %5107 = vmatprep.subr.mxu0 0.0
      %5108 = vmatpush1.msra.mxu0 1.0
      %5109 = vmatprep.subr.mxu0 0.0
      %5110 = vmatpush1.msra.mxu0 1.0
      %5111 = vmatprep.subr.mxu0 0.0
      %5112 = vmatpush1.msra.mxu0 1.0
      %5113 = vmatprep.subr.mxu0 0.0
      %5114 = vmatpush1.msra.mxu0 1.0
      %5115 = vmatprep.subr.mxu0 0.0
      %5116 = vmatpush1.msra.mxu0 1.0
      %5117 = vmatprep.subr.mxu0 0.0
      %5118 = vmatpush1.msra.mxu0 1.0
      %5119 = vmatprep.subr.mxu0 0.0
      %5120 = vmatpush1.msra.mxu0 1.0
      %5121 = vmatprep.subr.mxu0 0.0
      %5122 = vmatpush1.msra.mxu0 1.0
      %5123 = vmatprep.subr.mxu0 0.0
      %5124 = vmatpush1.msra.mxu0 1.0
      %5125 = vmatprep.subr.mxu0 0.0
      %5126 = vmatpush1.msra.mxu0 1.0
      %5127 = vmatprep.subr.mxu0 0.0
      %5128 = vmatpush1.msra.mxu0 1.0
      %5129 = vmatprep.subr.mxu0 0.0
      %5130 = vmatpush1.msra.mxu0 1.0
      %5131 = vmatprep.subr.mxu0 0.0
      %5132 = vmatpush1.msra.mxu0 1.0
      %5133 = vmatprep.subr.mxu0 0.0
      %5134 = vmatpush1.msra.mxu0 1.0
      %5135 = vmatprep.subr.mxu0 0.0
      %5136 = vmatpush1.msra.mxu0 1.0
      %5137 = vmatprep.subr.mxu0 0.0
      %5138 = vmatpush1.msra.mxu0 1.0
      %5139 = vmatprep.subr.mxu0 0.0
      %5140 = vmatpush1.msra.mxu0 1.0
      %5141 = vmatprep.subr.mxu0 0.0
      %5142 = vmatpush1.msra.mxu0 1.0
      %5143 = vmatprep.subr.mxu0 0.0
      %5144 = vmatpush1.msra.mxu0 1.0
      %5145 = vmatprep.subr.mxu0 0.0
      %5146 = vmatpush1.msra.mxu0 1.0
      %5147 = vmatprep.subr.mxu0 0.0
      %5148 = vmatpush1.msra.mxu0 1.0
      %5149 = vmatprep.subr.mxu0 0.0
      %5150 = vmatpush1.msra.mxu0 1.0
      %5151 = vmatprep.subr.mxu0 0.0
      %5152 = vmatpush1.msra.mxu0 1.0
      %5153 = vmatprep.subr.mxu0 0.0
      %5154 = vmatpush1.msra.mxu0 1.0
      %5155 = vmatprep.subr.mxu0 0.0
      %5156 = vmatpush1.msra.mxu0 1.0
      %5157 = vmatprep.subr.mxu0 0.0
      %5158 = vmatpush1.msra.mxu0 1.0
      %5159 = vmatprep.subr.mxu0 0.0
      %5160 = vmatpush1.msra.mxu0 1.0
      %5161 = vmatprep.mubr.f32.mxu0 %v3916
      %5162 = vmatmul.mubr.f32.gmra.mrb[0].mxu0 %v3915
      %v5163 = vpop.f32.mrb[0].mxu0
      %v5164 = vadd.f32 %v5089, %v5163
      %v5165 = vpop.f32.mrb[0].mxu0
      %5166 = vmatprep.mubr.f32.mxu0 %v3996
      %5167 = vmatmul.mubr.f32.gmra.mrb[0].mxu0 %v3995
      %v5168 = vpop.f32.mrb[0].mxu0
      %v5169 = vadd.f32 %v5094, %v5168
      %v5170 = vpop.f32.mrb[0].mxu0
      %5171 = vdwg.mxu0
      %5172 = vmatprep.subr.mxu0 0.0
      %5173 = vmatpush1.msra.mxu0 1.0
      %5174 = vmatprep.subr.mxu0 0.0
      %5175 = vmatpush1.msra.mxu0 1.0
      %5176 = vmatprep.subr.mxu0 0.0
      %5177 = vmatpush1.msra.mxu0 1.0
      %5178 = vmatprep.subr.mxu0 0.0
      %5179 = vmatpush1.msra.mxu0 1.0
      %5180 = vmatprep.subr.mxu0 0.0
      %5181 = vmatpush1.msra.mxu0 1.0
      %5182 = vmatprep.subr.mxu0 0.0
      %5183 = vmatpush1.msra.mxu0 1.0
      %5184 = vmatprep.subr.mxu0 0.0
      %5185 = vmatpush1.msra.mxu0 1.0
      %5186 = vmatprep.subr.mxu0 0.0
      %5187 = vmatpush1.msra.mxu0 1.0
      %5188 = vmatprep.subr.mxu0 0.0
      %5189 = vmatpush1.msra.mxu0 1.0
      %5190 = vmatprep.subr.mxu0 0.0
      %5191 = vmatpush1.msra.mxu0 1.0
      %5192 = vmatprep.subr.mxu0 0.0
      %5193 = vmatpush1.msra.mxu0 1.0
      %5194 = vmatprep.subr.mxu0 0.0
      %5195 = vmatpush1.msra.mxu0 1.0
      %5196 = vmatprep.subr.mxu0 0.0
      %5197 = vmatpush1.msra.mxu0 1.0
      %5198 = vmatprep.subr.mxu0 0.0
      %5199 = vmatpush1.msra.mxu0 1.0
      %5200 = vmatprep.subr.mxu0 0.0
      %5201 = vmatpush1.msra.mxu0 1.0
      %5202 = vmatprep.subr.mxu0 0.0
      %5203 = vmatpush1.msra.mxu0 1.0
      %5204 = vmatprep.subr.mxu0 0.0
      %5205 = vmatpush1.msra.mxu0 1.0
      %5206 = vmatprep.subr.mxu0 0.0
      %5207 = vmatpush1.msra.mxu0 1.0
      %5208 = vmatprep.subr.mxu0 0.0
      %5209 = vmatpush1.msra.mxu0 1.0
      %5210 = vmatprep.subr.mxu0 0.0
      %5211 = vmatpush1.msra.mxu0 1.0
      %5212 = vmatprep.subr.mxu0 0.0
      %5213 = vmatpush1.msra.mxu0 1.0
      %5214 = vmatprep.subr.mxu0 0.0
      %5215 = vmatpush1.msra.mxu0 1.0
      %5216 = vmatprep.subr.mxu0 0.0
      %5217 = vmatpush1.msra.mxu0 1.0
      %5218 = vmatprep.subr.mxu0 0.0
      %5219 = vmatpush1.msra.mxu0 1.0
      %5220 = vmatprep.subr.mxu0 0.0
      %5221 = vmatpush1.msra.mxu0 1.0
      %5222 = vmatprep.subr.mxu0 0.0
      %5223 = vmatpush1.msra.mxu0 1.0
      %5224 = vmatprep.subr.mxu0 0.0
      %5225 = vmatpush1.msra.mxu0 1.0
      %5226 = vmatprep.subr.mxu0 0.0
      %5227 = vmatpush1.msra.mxu0 1.0
      %5228 = vmatprep.subr.mxu0 0.0
      %5229 = vmatpush1.msra.mxu0 1.0
      %5230 = vmatprep.subr.mxu0 0.0
      %5231 = vmatpush1.msra.mxu0 1.0
      %5232 = vmatprep.subr.mxu0 0.0
      %5233 = vmatpush1.msra.mxu0 1.0
      %5234 = vmatprep.subr.mxu0 0.0
      %5235 = vmatpush1.msra.mxu0 1.0
      %5236 = vmatprep.mubr.f32.mxu0 %v3918
      %5237 = vmatmul.mubr.f32.gmra.mrb[0].mxu0 %v3917
      %v5238 = vpop.f32.mrb[0].mxu0
      %v5239 = vadd.f32 %v5164, %v5238
      %v5240 = vpop.f32.mrb[0].mxu0
      %5241 = vmatprep.mubr.f32.mxu0 %v3998
      %5242 = vmatmul.mubr.f32.gmra.mrb[0].mxu0 %v3997
      %v5243 = vpop.f32.mrb[0].mxu0
      %v5244 = vadd.f32 %v5169, %v5243
      %v5245 = vpop.f32.mrb[0].mxu0
      %5246 = vdwg.mxu0
      %5247 = vmatprep.subr.mxu0 0.0
      %5248 = vmatpush1.msra.mxu0 1.0
      %5249 = vmatprep.subr.mxu0 0.0
      %5250 = vmatpush1.msra.mxu0 1.0
      %5251 = vmatprep.subr.mxu0 0.0
      %5252 = vmatpush1.msra.mxu0 1.0
      %5253 = vmatprep.subr.mxu0 0.0
      %5254 = vmatpush1.msra.mxu0 1.0
      %5255 = vmatprep.subr.mxu0 0.0
      %5256 = vmatpush1.msra.mxu0 1.0
      %5257 = vmatprep.subr.mxu0 0.0
      %5258 = vmatpush1.msra.mxu0 1.0
      %5259 = vmatprep.subr.mxu0 0.0
      %5260 = vmatpush1.msra.mxu0 1.0
      %5261 = vmatprep.subr.mxu0 0.0
      %5262 = vmatpush1.msra.mxu0 1.0
      %5263 = vmatprep.subr.mxu0 0.0
      %5264 = vmatpush1.msra.mxu0 1.0
      %5265 = vmatprep.subr.mxu0 0.0
      %5266 = vmatpush1.msra.mxu0 1.0
      %5267 = vmatprep.subr.mxu0 0.0
      %5268 = vmatpush1.msra.mxu0 1.0
      %5269 = vmatprep.subr.mxu0 0.0
      %5270 = vmatpush1.msra.mxu0 1.0
      %5271 = vmatprep.subr.mxu0 0.0
      %5272 = vmatpush1.msra.mxu0 1.0
      %5273 = vmatprep.subr.mxu0 0.0
      %5274 = vmatpush1.msra.mxu0 1.0
      %5275 = vmatprep.subr.mxu0 0.0
      %5276 = vmatpush1.msra.mxu0 1.0
      %5277 = vmatprep.subr.mxu0 0.0
      %5278 = vmatpush1.msra.mxu0 1.0
      %5279 = vmatprep.subr.mxu0 0.0
      %5280 = vmatpush1.msra.mxu0 1.0
      %5281 = vmatprep.subr.mxu0 0.0
      %5282 = vmatpush1.msra.mxu0 1.0
      %5283 = vmatprep.subr.mxu0 0.0
      %5284 = vmatpush1.msra.mxu0 1.0
      %5285 = vmatprep.subr.mxu0 0.0
      %5286 = vmatpush1.msra.mxu0 1.0
      %5287 = vmatprep.subr.mxu0 0.0
      %5288 = vmatpush1.msra.mxu0 1.0
      %5289 = vmatprep.subr.mxu0 0.0
      %5290 = vmatpush1.msra.mxu0 1.0
      %5291 = vmatprep.subr.mxu0 0.0
      %5292 = vmatpush1.msra.mxu0 1.0
      %5293 = vmatprep.subr.mxu0 0.0
      %5294 = vmatpush1.msra.mxu0 1.0
      %5295 = vmatprep.subr.mxu0 0.0
      %5296 = vmatpush1.msra.mxu0 1.0
      %5297 = vmatprep.subr.mxu0 0.0
      %5298 = vmatpush1.msra.mxu0 1.0
      %5299 = vmatprep.subr.mxu0 0.0
      %5300 = vmatpush1.msra.mxu0 1.0
      %5301 = vmatprep.subr.mxu0 0.0
      %5302 = vmatpush1.msra.mxu0 1.0
      %5303 = vmatprep.subr.mxu0 0.0
      %5304 = vmatpush1.msra.mxu0 1.0
      %5305 = vmatprep.subr.mxu0 0.0
      %5306 = vmatpush1.msra.mxu0 1.0
      %5307 = vmatprep.subr.mxu0 0.0
      %5308 = vmatpush1.msra.mxu0 1.0
      %5309 = vmatprep.subr.mxu0 0.0
      %5310 = vmatpush1.msra.mxu0 1.0
      %5311 = vmatprep.mubr.f32.mxu0 %v3920
      %5312 = vmatmul.mubr.f32.gmra.mrb[0].mxu0 %v3919
      %v5313 = vpop.f32.mrb[0].mxu0
      %v5314 = vadd.f32 %v5239, %v5313
      %v5315 = vpop.f32.mrb[0].mxu0
      %5316 = vmatprep.mubr.f32.mxu0 %v4000
      %5317 = vmatmul.mubr.f32.gmra.mrb[0].mxu0 %v3999
      %v5318 = vpop.f32.mrb[0].mxu0
      %v5319 = vadd.f32 %v5244, %v5318
      %v5320 = vpop.f32.mrb[0].mxu0
      %5321 = vdwg.mxu0
      %5322 = vmatprep.subr.mxu0 0.0
      %5323 = vmatpush1.msra.mxu0 1.0
      %5324 = vmatprep.subr.mxu0 0.0
      %5325 = vmatpush1.msra.mxu0 1.0
      %5326 = vmatprep.subr.mxu0 0.0
      %5327 = vmatpush1.msra.mxu0 1.0
      %5328 = vmatprep.subr.mxu0 0.0
      %5329 = vmatpush1.msra.mxu0 1.0
      %5330 = vmatprep.subr.mxu0 0.0
      %5331 = vmatpush1.msra.mxu0 1.0
      %5332 = vmatprep.subr.mxu0 0.0
      %5333 = vmatpush1.msra.mxu0 1.0
      %5334 = vmatprep.subr.mxu0 0.0
      %5335 = vmatpush1.msra.mxu0 1.0
      %5336 = vmatprep.subr.mxu0 0.0
      %5337 = vmatpush1.msra.mxu0 1.0
      %5338 = vmatprep.subr.mxu0 0.0
      %5339 = vmatpush1.msra.mxu0 1.0
      %5340 = vmatprep.subr.mxu0 0.0
      %5341 = vmatpush1.msra.mxu0 1.0
      %5342 = vmatprep.subr.mxu0 0.0
      %5343 = vmatpush1.msra.mxu0 1.0
      %5344 = vmatprep.subr.mxu0 0.0
      %5345 = vmatpush1.msra.mxu0 1.0
      %5346 = vmatprep.subr.mxu0 0.0
      %5347 = vmatpush1.msra.mxu0 1.0
      %5348 = vmatprep.subr.mxu0 0.0
      %5349 = vmatpush1.msra.mxu0 1.0
      %5350 = vmatprep.subr.mxu0 0.0
      %5351 = vmatpush1.msra.mxu0 1.0
      %5352 = vmatprep.subr.mxu0 0.0
      %5353 = vmatpush1.msra.mxu0 1.0
      %5354 = vmatprep.subr.mxu0 0.0
      %5355 = vmatpush1.msra.mxu0 1.0
      %5356 = vmatprep.subr.mxu0 0.0
      %5357 = vmatpush1.msra.mxu0 1.0
      %5358 = vmatprep.subr.mxu0 0.0
      %5359 = vmatpush1.msra.mxu0 1.0
      %5360 = vmatprep.subr.mxu0 0.0
      %5361 = vmatpush1.msra.mxu0 1.0
      %5362 = vmatprep.subr.mxu0 0.0
      %5363 = vmatpush1.msra.mxu0 1.0
      %5364 = vmatprep.subr.mxu0 0.0
      %5365 = vmatpush1.msra.mxu0 1.0
      %5366 = vmatprep.subr.mxu0 0.0
      %5367 = vmatpush1.msra.mxu0 1.0
      %5368 = vmatprep.subr.mxu0 0.0
      %5369 = vmatpush1.msra.mxu0 1.0
      %5370 = vmatprep.subr.mxu0 0.0
      %5371 = vmatpush1.msra.mxu0 1.0
      %5372 = vmatprep.subr.mxu0 0.0
      %5373 = vmatpush1.msra.mxu0 1.0
      %5374 = vmatprep.subr.mxu0 0.0
      %5375 = vmatpush1.msra.mxu0 1.0
      %5376 = vmatprep.subr.mxu0 0.0
      %5377 = vmatpush1.msra.mxu0 1.0
      %5378 = vmatprep.subr.mxu0 0.0
      %5379 = vmatpush1.msra.mxu0 1.0
      %5380 = vmatprep.subr.mxu0 0.0
      %5381 = vmatpush1.msra.mxu0 1.0
      %5382 = vmatprep.subr.mxu0 0.0
      %5383 = vmatpush1.msra.mxu0 1.0
      %5384 = vmatprep.subr.mxu0 0.0
      %5385 = vmatpush1.msra.mxu0 1.0
      %5386 = vmatprep.mubr.f32.mxu0 %v3922
      %5387 = vmatmul.mubr.f32.gmra.mrb[0].mxu0 %v3921
      %v5388 = vpop.f32.mrb[0].mxu0
      %v5389 = vadd.f32 %v5314, %v5388
      %v5390 = vpop.f32.mrb[0].mxu0
      %5391 = vmatprep.mubr.f32.mxu0 %v4002
      %5392 = vmatmul.mubr.f32.gmra.mrb[0].mxu0 %v4001
      %v5393 = vpop.f32.mrb[0].mxu0
      %v5394 = vadd.f32 %v5319, %v5393
      %v5395 = vpop.f32.mrb[0].mxu0
      %5396 = vdwg.mxu0
      %5397 = vmatprep.subr.mxu0 0.0
      %5398 = vmatpush1.msra.mxu0 1.0
      %5399 = vmatprep.subr.mxu0 0.0
      %5400 = vmatpush1.msra.mxu0 1.0
      %5401 = vmatprep.subr.mxu0 0.0
      %5402 = vmatpush1.msra.mxu0 1.0
      %5403 = vmatprep.subr.mxu0 0.0
      %5404 = vmatpush1.msra.mxu0 1.0
      %5405 = vmatprep.subr.mxu0 0.0
      %5406 = vmatpush1.msra.mxu0 1.0
      %5407 = vmatprep.subr.mxu0 0.0
      %5408 = vmatpush1.msra.mxu0 1.0
      %5409 = vmatprep.subr.mxu0 0.0
      %5410 = vmatpush1.msra.mxu0 1.0
      %5411 = vmatprep.subr.mxu0 0.0
      %5412 = vmatpush1.msra.mxu0 1.0
      %5413 = vmatprep.subr.mxu0 0.0
      %5414 = vmatpush1.msra.mxu0 1.0
      %5415 = vmatprep.subr.mxu0 0.0
      %5416 = vmatpush1.msra.mxu0 1.0
      %5417 = vmatprep.subr.mxu0 0.0
      %5418 = vmatpush1.msra.mxu0 1.0
      %5419 = vmatprep.subr.mxu0 0.0
      %5420 = vmatpush1.msra.mxu0 1.0
      %5421 = vmatprep.subr.mxu0 0.0
      %5422 = vmatpush1.msra.mxu0 1.0
      %5423 = vmatprep.subr.mxu0 0.0
      %5424 = vmatpush1.msra.mxu0 1.0
      %5425 = vmatprep.subr.mxu0 0.0
      %5426 = vmatpush1.msra.mxu0 1.0
      %5427 = vmatprep.subr.mxu0 0.0
      %5428 = vmatpush1.msra.mxu0 1.0
      %5429 = vmatprep.subr.mxu0 0.0
      %5430 = vmatpush1.msra.mxu0 1.0
      %5431 = vmatprep.subr.mxu0 0.0
      %5432 = vmatpush1.msra.mxu0 1.0
      %5433 = vmatprep.subr.mxu0 0.0
      %5434 = vmatpush1.msra.mxu0 1.0
      %5435 = vmatprep.subr.mxu0 0.0
      %5436 = vmatpush1.msra.mxu0 1.0
      %5437 = vmatprep.subr.mxu0 0.0
      %5438 = vmatpush1.msra.mxu0 1.0
      %5439 = vmatprep.subr.mxu0 0.0
      %5440 = vmatpush1.msra.mxu0 1.0
      %5441 = vmatprep.subr.mxu0 0.0
      %5442 = vmatpush1.msra.mxu0 1.0
      %5443 = vmatprep.subr.mxu0 0.0
      %5444 = vmatpush1.msra.mxu0 1.0
      %5445 = vmatprep.subr.mxu0 0.0
      %5446 = vmatpush1.msra.mxu0 1.0
      %5447 = vmatprep.subr.mxu0 0.0
      %5448 = vmatpush1.msra.mxu0 1.0
      %5449 = vmatprep.subr.mxu0 0.0
      %5450 = vmatpush1.msra.mxu0 1.0
      %5451 = vmatprep.subr.mxu0 0.0
      %5452 = vmatpush1.msra.mxu0 1.0
      %5453 = vmatprep.subr.mxu0 0.0
      %5454 = vmatpush1.msra.mxu0 1.0
      %5455 = vmatprep.subr.mxu0 0.0
      %5456 = vmatpush1.msra.mxu0 1.0
      %5457 = vmatprep.subr.mxu0 0.0
      %5458 = vmatpush1.msra.mxu0 1.0
      %5459 = vmatprep.subr.mxu0 0.0
      %5460 = vmatpush1.msra.mxu0 1.0
      %5461 = vmatprep.mubr.f32.mxu0 %v3924
      %5462 = vmatmul.mubr.f32.gmra.mrb[0].mxu0 %v3923
      %v5463 = vpop.f32.mrb[0].mxu0
      %v5464 = vadd.f32 %v5389, %v5463
      %v5465 = vpop.f32.mrb[0].mxu0
      %5466 = vmatprep.mubr.f32.mxu0 %v4004
      %5467 = vmatmul.mubr.f32.gmra.mrb[0].mxu0 %v4003
      %v5468 = vpop.f32.mrb[0].mxu0
      %v5469 = vadd.f32 %v5394, %v5468
      %v5470 = vpop.f32.mrb[0].mxu0
      %5471 = vdwg.mxu0
      %5472 = vmatprep.subr.mxu0 0.0
      %5473 = vmatpush1.msra.mxu0 1.0
      %5474 = vmatprep.subr.mxu0 0.0
      %5475 = vmatpush1.msra.mxu0 1.0
      %5476 = vmatprep.subr.mxu0 0.0
      %5477 = vmatpush1.msra.mxu0 1.0
      %5478 = vmatprep.subr.mxu0 0.0
      %5479 = vmatpush1.msra.mxu0 1.0
      %5480 = vmatprep.subr.mxu0 0.0
      %5481 = vmatpush1.msra.mxu0 1.0
      %5482 = vmatprep.subr.mxu0 0.0
      %5483 = vmatpush1.msra.mxu0 1.0
      %5484 = vmatprep.subr.mxu0 0.0
      %5485 = vmatpush1.msra.mxu0 1.0
      %5486 = vmatprep.subr.mxu0 0.0
      %5487 = vmatpush1.msra.mxu0 1.0
      %5488 = vmatprep.subr.mxu0 0.0
      %5489 = vmatpush1.msra.mxu0 1.0
      %5490 = vmatprep.subr.mxu0 0.0
      %5491 = vmatpush1.msra.mxu0 1.0
      %5492 = vmatprep.subr.mxu0 0.0
      %5493 = vmatpush1.msra.mxu0 1.0
      %5494 = vmatprep.subr.mxu0 0.0
      %5495 = vmatpush1.msra.mxu0 1.0
      %5496 = vmatprep.subr.mxu0 0.0
      %5497 = vmatpush1.msra.mxu0 1.0
      %5498 = vmatprep.subr.mxu0 0.0
      %5499 = vmatpush1.msra.mxu0 1.0
      %5500 = vmatprep.subr.mxu0 0.0
      %5501 = vmatpush1.msra.mxu0 1.0
      %5502 = vmatprep.subr.mxu0 0.0
      %5503 = vmatpush1.msra.mxu0 1.0
      %5504 = vmatprep.subr.mxu0 0.0
      %5505 = vmatpush1.msra.mxu0 1.0
      %5506 = vmatprep.subr.mxu0 0.0
      %5507 = vmatpush1.msra.mxu0 1.0
      %5508 = vmatprep.subr.mxu0 0.0
      %5509 = vmatpush1.msra.mxu0 1.0
      %5510 = vmatprep.subr.mxu0 0.0
      %5511 = vmatpush1.msra.mxu0 1.0
      %5512 = vmatprep.subr.mxu0 0.0
      %5513 = vmatpush1.msra.mxu0 1.0
      %5514 = vmatprep.subr.mxu0 0.0
      %5515 = vmatpush1.msra.mxu0 1.0
      %5516 = vmatprep.subr.mxu0 0.0
      %5517 = vmatpush1.msra.mxu0 1.0
      %5518 = vmatprep.subr.mxu0 0.0
      %5519 = vmatpush1.msra.mxu0 1.0
      %5520 = vmatprep.subr.mxu0 0.0
      %5521 = vmatpush1.msra.mxu0 1.0
      %5522 = vmatprep.subr.mxu0 0.0
      %5523 = vmatpush1.msra.mxu0 1.0
      %5524 = vmatprep.subr.mxu0 0.0
      %5525 = vmatpush1.msra.mxu0 1.0
      %5526 = vmatprep.subr.mxu0 0.0
      %5527 = vmatpush1.msra.mxu0 1.0
      %5528 = vmatprep.subr.mxu0 0.0
      %5529 = vmatpush1.msra.mxu0 1.0
      %5530 = vmatprep.subr.mxu0 0.0
      %5531 = vmatpush1.msra.mxu0 1.0
      %5532 = vmatprep.subr.mxu0 0.0
      %5533 = vmatpush1.msra.mxu0 1.0
      %5534 = vmatprep.subr.mxu0 0.0
      %5535 = vmatpush1.msra.mxu0 1.0
      %5536 = vmatprep.mubr.f32.mxu0 %v3926
      %5537 = vmatmul.mubr.f32.gmra.mrb[0].mxu0 %v3925
      %v5538 = vpop.f32.mrb[0].mxu0
      %v5539 = vadd.f32 %v5464, %v5538
      %v5540 = vpop.f32.mrb[0].mxu0
      %5541 = vmatprep.mubr.f32.mxu0 %v4006
      %5542 = vmatmul.mubr.f32.gmra.mrb[0].mxu0 %v4005
      %v5543 = vpop.f32.mrb[0].mxu0
      %v5544 = vadd.f32 %v5469, %v5543
      %v5545 = vpop.f32.mrb[0].mxu0
      %5546 = vdwg.mxu0
      %5547 = vmatprep.subr.mxu0 0.0
      %5548 = vmatpush1.msra.mxu0 1.0
      %5549 = vmatprep.subr.mxu0 0.0
      %5550 = vmatpush1.msra.mxu0 1.0
      %5551 = vmatprep.subr.mxu0 0.0
      %5552 = vmatpush1.msra.mxu0 1.0
      %5553 = vmatprep.subr.mxu0 0.0
      %5554 = vmatpush1.msra.mxu0 1.0
      %5555 = vmatprep.subr.mxu0 0.0
      %5556 = vmatpush1.msra.mxu0 1.0
      %5557 = vmatprep.subr.mxu0 0.0
      %5558 = vmatpush1.msra.mxu0 1.0
      %5559 = vmatprep.subr.mxu0 0.0
      %5560 = vmatpush1.msra.mxu0 1.0
      %5561 = vmatprep.subr.mxu0 0.0
      %5562 = vmatpush1.msra.mxu0 1.0
      %5563 = vmatprep.subr.mxu0 0.0
      %5564 = vmatpush1.msra.mxu0 1.0
      %5565 = vmatprep.subr.mxu0 0.0
      %5566 = vmatpush1.msra.mxu0 1.0
      %5567 = vmatprep.subr.mxu0 0.0
      %5568 = vmatpush1.msra.mxu0 1.0
      %5569 = vmatprep.subr.mxu0 0.0
      %5570 = vmatpush1.msra.mxu0 1.0
      %5571 = vmatprep.subr.mxu0 0.0
      %5572 = vmatpush1.msra.mxu0 1.0
      %5573 = vmatprep.subr.mxu0 0.0
      %5574 = vmatpush1.msra.mxu0 1.0
      %5575 = vmatprep.subr.mxu0 0.0
      %5576 = vmatpush1.msra.mxu0 1.0
      %5577 = vmatprep.subr.mxu0 0.0
      %5578 = vmatpush1.msra.mxu0 1.0
      %5579 = vmatprep.subr.mxu0 0.0
      %5580 = vmatpush1.msra.mxu0 1.0
      %5581 = vmatprep.subr.mxu0 0.0
      %5582 = vmatpush1.msra.mxu0 1.0
      %5583 = vmatprep.subr.mxu0 0.0
      %5584 = vmatpush1.msra.mxu0 1.0
      %5585 = vmatprep.subr.mxu0 0.0
      %5586 = vmatpush1.msra.mxu0 1.0
      %5587 = vmatprep.subr.mxu0 0.0
      %5588 = vmatpush1.msra.mxu0 1.0
      %5589 = vmatprep.subr.mxu0 0.0
      %5590 = vmatpush1.msra.mxu0 1.0
      %5591 = vmatprep.subr.mxu0 0.0
      %5592 = vmatpush1.msra.mxu0 1.0
      %5593 = vmatprep.subr.mxu0 0.0
      %5594 = vmatpush1.msra.mxu0 1.0
      %5595 = vmatprep.subr.mxu0 0.0
      %5596 = vmatpush1.msra.mxu0 1.0
      %5597 = vmatprep.subr.mxu0 0.0
      %5598 = vmatpush1.msra.mxu0 1.0
      %5599 = vmatprep.subr.mxu0 0.0
      %5600 = vmatpush1.msra.mxu0 1.0
      %5601 = vmatprep.subr.mxu0 0.0
      %5602 = vmatpush1.msra.mxu0 1.0
      %5603 = vmatprep.subr.mxu0 0.0
      %5604 = vmatpush1.msra.mxu0 1.0
      %5605 = vmatprep.subr.mxu0 0.0
      %5606 = vmatpush1.msra.mxu0 1.0
      %5607 = vmatprep.subr.mxu0 0.0
      %5608 = vmatpush1.msra.mxu0 1.0
      %5609 = vmatprep.subr.mxu0 0.0
      %5610 = vmatpush1.msra.mxu0 1.0
      %5611 = vmatprep.mubr.f32.mxu0 %v3928
      %5612 = vmatmul.mubr.f32.gmra.mrb[0].mxu0 %v3927
      %v5613 = vpop.f32.mrb[0].mxu0
      %v5614 = vadd.f32 %v5539, %v5613
      %v5615 = vpop.f32.mrb[0].mxu0
      %5616 = vmatprep.mubr.f32.mxu0 %v4008
      %5617 = vmatmul.mubr.f32.gmra.mrb[0].mxu0 %v4007
      %v5618 = vpop.f32.mrb[0].mxu0
      %v5619 = vadd.f32 %v5544, %v5618
      %v5620 = vpop.f32.mrb[0].mxu0
      %5621 = vdwg.mxu0
      %5622 = vmatprep.subr.mxu0 0.0
      %5623 = vmatpush1.msra.mxu0 1.0
      %5624 = vmatprep.subr.mxu0 0.0
      %5625 = vmatpush1.msra.mxu0 1.0
      %5626 = vmatprep.subr.mxu0 0.0
      %5627 = vmatpush1.msra.mxu0 1.0
      %5628 = vmatprep.subr.mxu0 0.0
      %5629 = vmatpush1.msra.mxu0 1.0
      %5630 = vmatprep.subr.mxu0 0.0
      %5631 = vmatpush1.msra.mxu0 1.0
      %5632 = vmatprep.subr.mxu0 0.0
      %5633 = vmatpush1.msra.mxu0 1.0
      %5634 = vmatprep.subr.mxu0 0.0
      %5635 = vmatpush1.msra.mxu0 1.0
      %5636 = vmatprep.subr.mxu0 0.0
      %5637 = vmatpush1.msra.mxu0 1.0
      %5638 = vmatprep.subr.mxu0 0.0
      %5639 = vmatpush1.msra.mxu0 1.0
      %5640 = vmatprep.subr.mxu0 0.0
      %5641 = vmatpush1.msra.mxu0 1.0
      %5642 = vmatprep.subr.mxu0 0.0
      %5643 = vmatpush1.msra.mxu0 1.0
      %5644 = vmatprep.subr.mxu0 0.0
      %5645 = vmatpush1.msra.mxu0 1.0
      %5646 = vmatprep.subr.mxu0 0.0
      %5647 = vmatpush1.msra.mxu0 1.0
      %5648 = vmatprep.subr.mxu0 0.0
      %5649 = vmatpush1.msra.mxu0 1.0
      %5650 = vmatprep.subr.mxu0 0.0
      %5651 = vmatpush1.msra.mxu0 1.0
      %5652 = vmatprep.subr.mxu0 0.0
      %5653 = vmatpush1.msra.mxu0 1.0
      %5654 = vmatprep.subr.mxu0 0.0
      %5655 = vmatpush1.msra.mxu0 1.0
      %5656 = vmatprep.subr.mxu0 0.0
      %5657 = vmatpush1.msra.mxu0 1.0
      %5658 = vmatprep.subr.mxu0 0.0
      %5659 = vmatpush1.msra.mxu0 1.0
      %5660 = vmatprep.subr.mxu0 0.0
      %5661 = vmatpush1.msra.mxu0 1.0
      %5662 = vmatprep.subr.mxu0 0.0
      %5663 = vmatpush1.msra.mxu0 1.0
      %5664 = vmatprep.subr.mxu0 0.0
      %5665 = vmatpush1.msra.mxu0 1.0
      %5666 = vmatprep.subr.mxu0 0.0
      %5667 = vmatpush1.msra.mxu0 1.0
      %5668 = vmatprep.subr.mxu0 0.0
      %5669 = vmatpush1.msra.mxu0 1.0
      %5670 = vmatprep.subr.mxu0 0.0
      %5671 = vmatpush1.msra.mxu0 1.0
      %5672 = vmatprep.subr.mxu0 0.0
      %5673 = vmatpush1.msra.mxu0 1.0
      %5674 = vmatprep.subr.mxu0 0.0
      %5675 = vmatpush1.msra.mxu0 1.0
      %5676 = vmatprep.subr.mxu0 0.0
      %5677 = vmatpush1.msra.mxu0 1.0
      %5678 = vmatprep.subr.mxu0 0.0
      %5679 = vmatpush1.msra.mxu0 1.0
      %5680 = vmatprep.subr.mxu0 0.0
      %5681 = vmatpush1.msra.mxu0 1.0
      %5682 = vmatprep.subr.mxu0 0.0
      %5683 = vmatpush1.msra.mxu0 1.0
      %5684 = vmatprep.subr.mxu0 0.0
      %5685 = vmatpush1.msra.mxu0 1.0
      %5686 = vmatprep.mubr.f32.mxu0 %v3930
      %5687 = vmatmul.mubr.f32.gmra.mrb[0].mxu0 %v3929
      %v5688 = vpop.f32.mrb[0].mxu0
      %v5689 = vadd.f32 %v5614, %v5688
      %v5690 = vpop.f32.mrb[0].mxu0
      %5691 = vmatprep.mubr.f32.mxu0 %v4010
      %5692 = vmatmul.mubr.f32.gmra.mrb[0].mxu0 %v4009
      %v5693 = vpop.f32.mrb[0].mxu0
      %v5694 = vadd.f32 %v5619, %v5693
      %v5695 = vpop.f32.mrb[0].mxu0
      %5696 = vdwg.mxu0
      %5697 = vmatprep.subr.mxu0 0.0
      %5698 = vmatpush1.msra.mxu0 1.0
      %5699 = vmatprep.subr.mxu0 0.0
      %5700 = vmatpush1.msra.mxu0 1.0
      %5701 = vmatprep.subr.mxu0 0.0
      %5702 = vmatpush1.msra.mxu0 1.0
      %5703 = vmatprep.subr.mxu0 0.0
      %5704 = vmatpush1.msra.mxu0 1.0
      %5705 = vmatprep.subr.mxu0 0.0
      %5706 = vmatpush1.msra.mxu0 1.0
      %5707 = vmatprep.subr.mxu0 0.0
      %5708 = vmatpush1.msra.mxu0 1.0
      %5709 = vmatprep.subr.mxu0 0.0
      %5710 = vmatpush1.msra.mxu0 1.0
      %5711 = vmatprep.subr.mxu0 0.0
      %5712 = vmatpush1.msra.mxu0 1.0
      %5713 = vmatprep.subr.mxu0 0.0
      %5714 = vmatpush1.msra.mxu0 1.0
      %5715 = vmatprep.subr.mxu0 0.0
      %5716 = vmatpush1.msra.mxu0 1.0
      %5717 = vmatprep.subr.mxu0 0.0
      %5718 = vmatpush1.msra.mxu0 1.0
      %5719 = vmatprep.subr.mxu0 0.0
      %5720 = vmatpush1.msra.mxu0 1.0
      %5721 = vmatprep.subr.mxu0 0.0
      %5722 = vmatpush1.msra.mxu0 1.0
      %5723 = vmatprep.subr.mxu0 0.0
      %5724 = vmatpush1.msra.mxu0 1.0
      %5725 = vmatprep.subr.mxu0 0.0
      %5726 = vmatpush1.msra.mxu0 1.0
      %5727 = vmatprep.subr.mxu0 0.0
      %5728 = vmatpush1.msra.mxu0 1.0
      %5729 = vmatprep.subr.mxu0 0.0
      %5730 = vmatpush1.msra.mxu0 1.0
      %5731 = vmatprep.subr.mxu0 0.0
      %5732 = vmatpush1.msra.mxu0 1.0
      %5733 = vmatprep.subr.mxu0 0.0
      %5734 = vmatpush1.msra.mxu0 1.0
      %5735 = vmatprep.subr.mxu0 0.0
      %5736 = vmatpush1.msra.mxu0 1.0
      %5737 = vmatprep.subr.mxu0 0.0
      %5738 = vmatpush1.msra.mxu0 1.0
      %5739 = vmatprep.subr.mxu0 0.0
      %5740 = vmatpush1.msra.mxu0 1.0
      %5741 = vmatprep.subr.mxu0 0.0
      %5742 = vmatpush1.msra.mxu0 1.0
      %5743 = vmatprep.subr.mxu0 0.0
      %5744 = vmatpush1.msra.mxu0 1.0
      %5745 = vmatprep.subr.mxu0 0.0
      %5746 = vmatpush1.msra.mxu0 1.0
      %5747 = vmatprep.subr.mxu0 0.0
      %5748 = vmatpush1.msra.mxu0 1.0
      %5749 = vmatprep.subr.mxu0 0.0
      %5750 = vmatpush1.msra.mxu0 1.0
      %5751 = vmatprep.subr.mxu0 0.0
      %5752 = vmatpush1.msra.mxu0 1.0
      %5753 = vmatprep.subr.mxu0 0.0
      %5754 = vmatpush1.msra.mxu0 1.0
      %5755 = vmatprep.subr.mxu0 0.0
      %5756 = vmatpush1.msra.mxu0 1.0
      %5757 = vmatprep.subr.mxu0 0.0
      %5758 = vmatpush1.msra.mxu0 1.0
      %5759 = vmatprep.subr.mxu0 0.0
      %5760 = vmatpush1.msra.mxu0 1.0
      %5761 = vmatprep.mubr.f32.mxu0 %v3932
      %5762 = vmatmul.mubr.f32.gmra.mrb[0].mxu0 %v3931
      %v5763 = vpop.f32.mrb[0].mxu0
      %v5764 = vadd.f32 %v5689, %v5763
      %v5765 = vpop.f32.mrb[0].mxu0
      %5766 = vmatprep.mubr.f32.mxu0 %v4012
      %5767 = vmatmul.mubr.f32.gmra.mrb[0].mxu0 %v4011
      %v5768 = vpop.f32.mrb[0].mxu0
      %v5769 = vadd.f32 %v5694, %v5768
      %v5770 = vpop.f32.mrb[0].mxu0
      %5771 = vdwg.mxu0
      %5772 = vmatprep.subr.mxu0 0.0
      %5773 = vmatpush1.msra.mxu0 1.0
      %5774 = vmatprep.subr.mxu0 0.0
      %5775 = vmatpush1.msra.mxu0 1.0
      %5776 = vmatprep.subr.mxu0 0.0
      %5777 = vmatpush1.msra.mxu0 1.0
      %5778 = vmatprep.subr.mxu0 0.0
      %5779 = vmatpush1.msra.mxu0 1.0
      %5780 = vmatprep.subr.mxu0 0.0
      %5781 = vmatpush1.msra.mxu0 1.0
      %5782 = vmatprep.subr.mxu0 0.0
      %5783 = vmatpush1.msra.mxu0 1.0
      %5784 = vmatprep.subr.mxu0 0.0
      %5785 = vmatpush1.msra.mxu0 1.0
      %5786 = vmatprep.subr.mxu0 0.0
      %5787 = vmatpush1.msra.mxu0 1.0
      %5788 = vmatprep.subr.mxu0 0.0
      %5789 = vmatpush1.msra.mxu0 1.0
      %5790 = vmatprep.subr.mxu0 0.0
      %5791 = vmatpush1.msra.mxu0 1.0
      %5792 = vmatprep.subr.mxu0 0.0
      %5793 = vmatpush1.msra.mxu0 1.0
      %5794 = vmatprep.subr.mxu0 0.0
      %5795 = vmatpush1.msra.mxu0 1.0
      %5796 = vmatprep.subr.mxu0 0.0
      %5797 = vmatpush1.msra.mxu0 1.0
      %5798 = vmatprep.subr.mxu0 0.0
      %5799 = vmatpush1.msra.mxu0 1.0
      %5800 = vmatprep.subr.mxu0 0.0
      %5801 = vmatpush1.msra.mxu0 1.0
      %5802 = vmatprep.subr.mxu0 0.0
      %5803 = vmatpush1.msra.mxu0 1.0
      %5804 = vmatprep.subr.mxu0 0.0
      %5805 = vmatpush1.msra.mxu0 1.0
      %5806 = vmatprep.subr.mxu0 0.0
      %5807 = vmatpush1.msra.mxu0 1.0
      %5808 = vmatprep.subr.mxu0 0.0
      %5809 = vmatpush1.msra.mxu0 1.0
      %5810 = vmatprep.subr.mxu0 0.0
      %5811 = vmatpush1.msra.mxu0 1.0
      %5812 = vmatprep.subr.mxu0 0.0
      %5813 = vmatpush1.msra.mxu0 1.0
      %5814 = vmatprep.subr.mxu0 0.0
      %5815 = vmatpush1.msra.mxu0 1.0
      %5816 = vmatprep.subr.mxu0 0.0
      %5817 = vmatpush1.msra.mxu0 1.0
      %5818 = vmatprep.subr.mxu0 0.0
      %5819 = vmatpush1.msra.mxu0 1.0
      %5820 = vmatprep.subr.mxu0 0.0
      %5821 = vmatpush1.msra.mxu0 1.0
      %5822 = vmatprep.subr.mxu0 0.0
      %5823 = vmatpush1.msra.mxu0 1.0
      %5824 = vmatprep.subr.mxu0 0.0
      %5825 = vmatpush1.msra.mxu0 1.0
      %5826 = vmatprep.subr.mxu0 0.0
      %5827 = vmatpush1.msra.mxu0 1.0
      %5828 = vmatprep.subr.mxu0 0.0
      %5829 = vmatpush1.msra.mxu0 1.0
      %5830 = vmatprep.subr.mxu0 0.0
      %5831 = vmatpush1.msra.mxu0 1.0
      %5832 = vmatprep.subr.mxu0 0.0
      %5833 = vmatpush1.msra.mxu0 1.0
      %5834 = vmatprep.subr.mxu0 0.0
      %5835 = vmatpush1.msra.mxu0 1.0
      %5836 = vmatprep.mubr.f32.mxu0 %v3934
      %5837 = vmatmul.mubr.f32.gmra.mrb[0].mxu0 %v3933
      %v5838 = vpop.f32.mrb[0].mxu0
      %v5839 = vadd.f32 %v5764, %v5838
      %v5840 = vpop.f32.mrb[0].mxu0
      %5841 = vmatprep.mubr.f32.mxu0 %v4014
      %5842 = vmatmul.mubr.f32.gmra.mrb[0].mxu0 %v4013
      %v5843 = vpop.f32.mrb[0].mxu0
      %v5844 = vadd.f32 %v5769, %v5843
      %v5845 = vpop.f32.mrb[0].mxu0
      %5846 = vdwg.mxu0
      %5847 = vmatprep.subr.mxu0 0.0
      %5848 = vmatpush1.msra.mxu0 1.0
      %5849 = vmatprep.subr.mxu0 0.0
      %5850 = vmatpush1.msra.mxu0 1.0
      %5851 = vmatprep.subr.mxu0 0.0
      %5852 = vmatpush1.msra.mxu0 1.0
      %5853 = vmatprep.subr.mxu0 0.0
      %5854 = vmatpush1.msra.mxu0 1.0
      %5855 = vmatprep.subr.mxu0 0.0
      %5856 = vmatpush1.msra.mxu0 1.0
      %5857 = vmatprep.subr.mxu0 0.0
      %5858 = vmatpush1.msra.mxu0 1.0
      %5859 = vmatprep.subr.mxu0 0.0
      %5860 = vmatpush1.msra.mxu0 1.0
      %5861 = vmatprep.subr.mxu0 0.0
      %5862 = vmatpush1.msra.mxu0 1.0
      %5863 = vmatprep.subr.mxu0 0.0
      %5864 = vmatpush1.msra.mxu0 1.0
      %5865 = vmatprep.subr.mxu0 0.0
      %5866 = vmatpush1.msra.mxu0 1.0
      %5867 = vmatprep.subr.mxu0 0.0
      %5868 = vmatpush1.msra.mxu0 1.0
      %5869 = vmatprep.subr.mxu0 0.0
      %5870 = vmatpush1.msra.mxu0 1.0
      %5871 = vmatprep.subr.mxu0 0.0
      %5872 = vmatpush1.msra.mxu0 1.0
      %5873 = vmatprep.subr.mxu0 0.0
      %5874 = vmatpush1.msra.mxu0 1.0
      %5875 = vmatprep.subr.mxu0 0.0
      %5876 = vmatpush1.msra.mxu0 1.0
      %5877 = vmatprep.subr.mxu0 0.0
      %5878 = vmatpush1.msra.mxu0 1.0
      %5879 = vmatprep.subr.mxu0 0.0
      %5880 = vmatpush1.msra.mxu0 1.0
      %5881 = vmatprep.subr.mxu0 0.0
      %5882 = vmatpush1.msra.mxu0 1.0
      %5883 = vmatprep.subr.mxu0 0.0
      %5884 = vmatpush1.msra.mxu0 1.0
      %5885 = vmatprep.subr.mxu0 0.0
      %5886 = vmatpush1.msra.mxu0 1.0
      %5887 = vmatprep.subr.mxu0 0.0
      %5888 = vmatpush1.msra.mxu0 1.0
      %5889 = vmatprep.subr.mxu0 0.0
      %5890 = vmatpush1.msra.mxu0 1.0
      %5891 = vmatprep.subr.mxu0 0.0
      %5892 = vmatpush1.msra.mxu0 1.0
      %5893 = vmatprep.subr.mxu0 0.0
      %5894 = vmatpush1.msra.mxu0 1.0
      %5895 = vmatprep.subr.mxu0 0.0
      %5896 = vmatpush1.msra.mxu0 1.0
      %5897 = vmatprep.subr.mxu0 0.0
      %5898 = vmatpush1.msra.mxu0 1.0
      %5899 = vmatprep.subr.mxu0 0.0
      %5900 = vmatpush1.msra.mxu0 1.0
      %5901 = vmatprep.subr.mxu0 0.0
      %5902 = vmatpush1.msra.mxu0 1.0
      %5903 = vmatprep.subr.mxu0 0.0
      %5904 = vmatpush1.msra.mxu0 1.0
      %5905 = vmatprep.subr.mxu0 0.0
      %5906 = vmatpush1.msra.mxu0 1.0
      %5907 = vmatprep.subr.mxu0 0.0
      %5908 = vmatpush1.msra.mxu0 1.0
      %5909 = vmatprep.subr.mxu0 0.0
      %5910 = vmatpush1.msra.mxu0 1.0
      %5911 = vmatprep.mubr.f32.mxu0 %v3936
      %5912 = vmatmul.mubr.f32.gmra.mrb[0].mxu0 %v3935
      %v5913 = vpop.f32.mrb[0].mxu0
      %v5914 = vadd.f32 %v5839, %v5913
      %v5915 = vpop.f32.mrb[0].mxu0
      %5916 = vmatprep.mubr.f32.mxu0 %v4016
      %5917 = vmatmul.mubr.f32.gmra.mrb[0].mxu0 %v4015
      %v5918 = vpop.f32.mrb[0].mxu0
      %v5919 = vadd.f32 %v5844, %v5918
      %v5920 = vpop.f32.mrb[0].mxu0
      %5921 = vdwg.mxu0
      %5922 = vmatprep.subr.mxu0 0.0
      %5923 = vmatpush1.msra.mxu0 1.0
      %5924 = vmatprep.subr.mxu0 0.0
      %5925 = vmatpush1.msra.mxu0 1.0
      %5926 = vmatprep.subr.mxu0 0.0
      %5927 = vmatpush1.msra.mxu0 1.0
      %5928 = vmatprep.subr.mxu0 0.0
      %5929 = vmatpush1.msra.mxu0 1.0
      %5930 = vmatprep.subr.mxu0 0.0
      %5931 = vmatpush1.msra.mxu0 1.0
      %5932 = vmatprep.subr.mxu0 0.0
      %5933 = vmatpush1.msra.mxu0 1.0
      %5934 = vmatprep.subr.mxu0 0.0
      %5935 = vmatpush1.msra.mxu0 1.0
      %5936 = vmatprep.subr.mxu0 0.0
      %5937 = vmatpush1.msra.mxu0 1.0
      %5938 = vmatprep.subr.mxu0 0.0
      %5939 = vmatpush1.msra.mxu0 1.0
      %5940 = vmatprep.subr.mxu0 0.0
      %5941 = vmatpush1.msra.mxu0 1.0
      %5942 = vmatprep.subr.mxu0 0.0
      %5943 = vmatpush1.msra.mxu0 1.0
      %5944 = vmatprep.subr.mxu0 0.0
      %5945 = vmatpush1.msra.mxu0 1.0
      %5946 = vmatprep.subr.mxu0 0.0
      %5947 = vmatpush1.msra.mxu0 1.0
      %5948 = vmatprep.subr.mxu0 0.0
      %5949 = vmatpush1.msra.mxu0 1.0
      %5950 = vmatprep.subr.mxu0 0.0
      %5951 = vmatpush1.msra.mxu0 1.0
      %5952 = vmatprep.subr.mxu0 0.0
      %5953 = vmatpush1.msra.mxu0 1.0
      %5954 = vmatprep.subr.mxu0 0.0
      %5955 = vmatpush1.msra.mxu0 1.0
      %5956 = vmatprep.subr.mxu0 0.0
      %5957 = vmatpush1.msra.mxu0 1.0
      %5958 = vmatprep.subr.mxu0 0.0
      %5959 = vmatpush1.msra.mxu0 1.0
      %5960 = vmatprep.subr.mxu0 0.0
      %5961 = vmatpush1.msra.mxu0 1.0
      %5962 = vmatprep.subr.mxu0 0.0
      %5963 = vmatpush1.msra.mxu0 1.0
      %5964 = vmatprep.subr.mxu0 0.0
      %5965 = vmatpush1.msra.mxu0 1.0
      %5966 = vmatprep.subr.mxu0 0.0
      %5967 = vmatpush1.msra.mxu0 1.0
      %5968 = vmatprep.subr.mxu0 0.0
      %5969 = vmatpush1.msra.mxu0 1.0
      %5970 = vmatprep.subr.mxu0 0.0
      %5971 = vmatpush1.msra.mxu0 1.0
      %5972 = vmatprep.subr.mxu0 0.0
      %5973 = vmatpush1.msra.mxu0 1.0
      %5974 = vmatprep.subr.mxu0 0.0
      %5975 = vmatpush1.msra.mxu0 1.0
      %5976 = vmatprep.subr.mxu0 0.0
      %5977 = vmatpush1.msra.mxu0 1.0
      %5978 = vmatprep.subr.mxu0 0.0
      %5979 = vmatpush1.msra.mxu0 1.0
      %5980 = vmatprep.subr.mxu0 0.0
      %5981 = vmatpush1.msra.mxu0 1.0
      %5982 = vmatprep.subr.mxu0 0.0
      %5983 = vmatpush1.msra.mxu0 1.0
      %5984 = vmatprep.subr.mxu0 0.0
      %5985 = vmatpush1.msra.mxu0 1.0
      %5986 = vmatprep.mubr.f32.mxu0 %v3938
      %5987 = vmatmul.mubr.f32.gmra.mrb[0].mxu0 %v3937
      %v5988 = vpop.f32.mrb[0].mxu0
      %v5989 = vadd.f32 %v5914, %v5988
      %v5990 = vpop.f32.mrb[0].mxu0
      %5991 = vmatprep.mubr.f32.mxu0 %v4018
      %5992 = vmatmul.mubr.f32.gmra.mrb[0].mxu0 %v4017
      %v5993 = vpop.f32.mrb[0].mxu0
      %v5994 = vadd.f32 %v5919, %v5993
      %v5995 = vpop.f32.mrb[0].mxu0
      %5996 = vdwg.mxu0
      %5997 = vmatprep.subr.mxu0 0.0
      %5998 = vmatpush1.msra.mxu0 1.0
      %5999 = vmatprep.subr.mxu0 0.0
      %6000 = vmatpush1.msra.mxu0 1.0
      %6001 = vmatprep.subr.mxu0 0.0
      %6002 = vmatpush1.msra.mxu0 1.0
      %6003 = vmatprep.subr.mxu0 0.0
      %6004 = vmatpush1.msra.mxu0 1.0
      %6005 = vmatprep.subr.mxu0 0.0
      %6006 = vmatpush1.msra.mxu0 1.0
      %6007 = vmatprep.subr.mxu0 0.0
      %6008 = vmatpush1.msra.mxu0 1.0
      %6009 = vmatprep.subr.mxu0 0.0
      %6010 = vmatpush1.msra.mxu0 1.0
      %6011 = vmatprep.subr.mxu0 0.0
      %6012 = vmatpush1.msra.mxu0 1.0
      %6013 = vmatprep.subr.mxu0 0.0
      %6014 = vmatpush1.msra.mxu0 1.0
      %6015 = vmatprep.subr.mxu0 0.0
      %6016 = vmatpush1.msra.mxu0 1.0
      %6017 = vmatprep.subr.mxu0 0.0
      %6018 = vmatpush1.msra.mxu0 1.0
      %6019 = vmatprep.subr.mxu0 0.0
      %6020 = vmatpush1.msra.mxu0 1.0
      %6021 = vmatprep.subr.mxu0 0.0
      %6022 = vmatpush1.msra.mxu0 1.0
      %6023 = vmatprep.subr.mxu0 0.0
      %6024 = vmatpush1.msra.mxu0 1.0
      %6025 = vmatprep.subr.mxu0 0.0
      %6026 = vmatpush1.msra.mxu0 1.0
      %6027 = vmatprep.subr.mxu0 0.0
      %6028 = vmatpush1.msra.mxu0 1.0
      %6029 = vmatprep.subr.mxu0 0.0
      %6030 = vmatpush1.msra.mxu0 1.0
      %6031 = vmatprep.subr.mxu0 0.0
      %6032 = vmatpush1.msra.mxu0 1.0
      %6033 = vmatprep.subr.mxu0 0.0
      %6034 = vmatpush1.msra.mxu0 1.0
      %6035 = vmatprep.subr.mxu0 0.0
      %6036 = vmatpush1.msra.mxu0 1.0
      %6037 = vmatprep.subr.mxu0 0.0
      %6038 = vmatpush1.msra.mxu0 1.0
      %6039 = vmatprep.subr.mxu0 0.0
      %6040 = vmatpush1.msra.mxu0 1.0
      %6041 = vmatprep.subr.mxu0 0.0
      %6042 = vmatpush1.msra.mxu0 1.0
      %6043 = vmatprep.subr.mxu0 0.0
      %6044 = vmatpush1.msra.mxu0 1.0
      %6045 = vmatprep.subr.mxu0 0.0
      %6046 = vmatpush1.msra.mxu0 1.0
      %6047 = vmatprep.subr.mxu0 0.0
      %6048 = vmatpush1.msra.mxu0 1.0
      %6049 = vmatprep.subr.mxu0 0.0
      %6050 = vmatpush1.msra.mxu0 1.0
      %6051 = vmatprep.subr.mxu0 0.0
      %6052 = vmatpush1.msra.mxu0 1.0
      %6053 = vmatprep.subr.mxu0 0.0
      %6054 = vmatpush1.msra.mxu0 1.0
      %6055 = vmatprep.subr.mxu0 0.0
      %6056 = vmatpush1.msra.mxu0 1.0
      %6057 = vmatprep.subr.mxu0 0.0
      %6058 = vmatpush1.msra.mxu0 1.0
      %6059 = vmatprep.subr.mxu0 0.0
      %6060 = vmatpush1.msra.mxu0 1.0
      %6061 = vmatprep.mubr.f32.mxu0 %v3940
      %6062 = vmatmul.mubr.f32.gmra.mrb[0].mxu0 %v3939
      %v6063 = vpop.f32.mrb[0].mxu0
      %v6064 = vadd.f32 %v5989, %v6063
      %v6065 = vpop.f32.mrb[0].mxu0
      %6066 = vmatprep.mubr.f32.mxu0 %v4020
      %6067 = vmatmul.mubr.f32.gmra.mrb[0].mxu0 %v4019
      %v6068 = vpop.f32.mrb[0].mxu0
      %v6069 = vadd.f32 %v5994, %v6068
      %v6070 = vpop.f32.mrb[0].mxu0
      %6071 = vdwg.mxu0
      %6072 = vmatprep.subr.mxu0 0.0
      %6073 = vmatpush1.msra.mxu0 1.0
      %6074 = vmatprep.subr.mxu0 0.0
      %6075 = vmatpush1.msra.mxu0 1.0
      %6076 = vmatprep.subr.mxu0 0.0
      %6077 = vmatpush1.msra.mxu0 1.0
      %6078 = vmatprep.subr.mxu0 0.0
      %6079 = vmatpush1.msra.mxu0 1.0
      %6080 = vmatprep.subr.mxu0 0.0
      %6081 = vmatpush1.msra.mxu0 1.0
      %6082 = vmatprep.subr.mxu0 0.0
      %6083 = vmatpush1.msra.mxu0 1.0
      %6084 = vmatprep.subr.mxu0 0.0
      %6085 = vmatpush1.msra.mxu0 1.0
      %6086 = vmatprep.subr.mxu0 0.0
      %6087 = vmatpush1.msra.mxu0 1.0
      %6088 = vmatprep.subr.mxu0 0.0
      %6089 = vmatpush1.msra.mxu0 1.0
      %6090 = vmatprep.subr.mxu0 0.0
      %6091 = vmatpush1.msra.mxu0 1.0
      %6092 = vmatprep.subr.mxu0 0.0
      %6093 = vmatpush1.msra.mxu0 1.0
      %6094 = vmatprep.subr.mxu0 0.0
      %6095 = vmatpush1.msra.mxu0 1.0
      %6096 = vmatprep.subr.mxu0 0.0
      %6097 = vmatpush1.msra.mxu0 1.0
      %6098 = vmatprep.subr.mxu0 0.0
      %6099 = vmatpush1.msra.mxu0 1.0
      %6100 = vmatprep.subr.mxu0 0.0
      %6101 = vmatpush1.msra.mxu0 1.0
      %6102 = vmatprep.subr.mxu0 0.0
      %6103 = vmatpush1.msra.mxu0 1.0
      %6104 = vmatprep.subr.mxu0 0.0
      %6105 = vmatpush1.msra.mxu0 1.0
      %6106 = vmatprep.subr.mxu0 0.0
      %6107 = vmatpush1.msra.mxu0 1.0
      %6108 = vmatprep.subr.mxu0 0.0
      %6109 = vmatpush1.msra.mxu0 1.0
      %6110 = vmatprep.subr.mxu0 0.0
      %6111 = vmatpush1.msra.mxu0 1.0
      %6112 = vmatprep.subr.mxu0 0.0
      %6113 = vmatpush1.msra.mxu0 1.0
      %6114 = vmatprep.subr.mxu0 0.0
      %6115 = vmatpush1.msra.mxu0 1.0
      %6116 = vmatprep.subr.mxu0 0.0
      %6117 = vmatpush1.msra.mxu0 1.0
      %6118 = vmatprep.subr.mxu0 0.0
      %6119 = vmatpush1.msra.mxu0 1.0
      %6120 = vmatprep.subr.mxu0 0.0
      %6121 = vmatpush1.msra.mxu0 1.0
      %6122 = vmatprep.subr.mxu0 0.0
      %6123 = vmatpush1.msra.mxu0 1.0
      %6124 = vmatprep.subr.mxu0 0.0
      %6125 = vmatpush1.msra.mxu0 1.0
      %6126 = vmatprep.subr.mxu0 0.0
      %6127 = vmatpush1.msra.mxu0 1.0
      %6128 = vmatprep.subr.mxu0 0.0
      %6129 = vmatpush1.msra.mxu0 1.0
      %6130 = vmatprep.subr.mxu0 0.0
      %6131 = vmatpush1.msra.mxu0 1.0
      %6132 = vmatprep.subr.mxu0 0.0
      %6133 = vmatpush1.msra.mxu0 1.0
      %6134 = vmatprep.subr.mxu0 0.0
      %6135 = vmatpush1.msra.mxu0 1.0
      %6136 = vmatprep.mubr.f32.mxu0 %v3942
      %6137 = vmatmul.mubr.f32.gmra.mrb[0].mxu0 %v3941
      %v6138 = vpop.f32.mrb[0].mxu0
      %v6139 = vadd.f32 %v6064, %v6138
      %v6140 = vpop.f32.mrb[0].mxu0
      %6141 = vmatprep.mubr.f32.mxu0 %v4022
      %6142 = vmatmul.mubr.f32.gmra.mrb[0].mxu0 %v4021
      %v6143 = vpop.f32.mrb[0].mxu0
      %v6144 = vadd.f32 %v6069, %v6143
      %v6145 = vpop.f32.mrb[0].mxu0
      %6146 = vdwg.mxu0
      %6147 = vmatprep.subr.mxu0 0.0
      %6148 = vmatpush1.msra.mxu0 1.0
      %6149 = vmatprep.subr.mxu0 0.0
      %6150 = vmatpush1.msra.mxu0 1.0
      %6151 = vmatprep.subr.mxu0 0.0
      %6152 = vmatpush1.msra.mxu0 1.0
      %6153 = vmatprep.subr.mxu0 0.0
      %6154 = vmatpush1.msra.mxu0 1.0
      %6155 = vmatprep.subr.mxu0 0.0
      %6156 = vmatpush1.msra.mxu0 1.0
      %6157 = vmatprep.subr.mxu0 0.0
      %6158 = vmatpush1.msra.mxu0 1.0
      %6159 = vmatprep.subr.mxu0 0.0
      %6160 = vmatpush1.msra.mxu0 1.0
      %6161 = vmatprep.subr.mxu0 0.0
      %6162 = vmatpush1.msra.mxu0 1.0
      %6163 = vmatprep.subr.mxu0 0.0
      %6164 = vmatpush1.msra.mxu0 1.0
      %6165 = vmatprep.subr.mxu0 0.0
      %6166 = vmatpush1.msra.mxu0 1.0
      %6167 = vmatprep.subr.mxu0 0.0
      %6168 = vmatpush1.msra.mxu0 1.0
      %6169 = vmatprep.subr.mxu0 0.0
      %6170 = vmatpush1.msra.mxu0 1.0
      %6171 = vmatprep.subr.mxu0 0.0
      %6172 = vmatpush1.msra.mxu0 1.0
      %6173 = vmatprep.subr.mxu0 0.0
      %6174 = vmatpush1.msra.mxu0 1.0
      %6175 = vmatprep.subr.mxu0 0.0
      %6176 = vmatpush1.msra.mxu0 1.0
      %6177 = vmatprep.subr.mxu0 0.0
      %6178 = vmatpush1.msra.mxu0 1.0
      %6179 = vmatprep.subr.mxu0 0.0
      %6180 = vmatpush1.msra.mxu0 1.0
      %6181 = vmatprep.subr.mxu0 0.0
      %6182 = vmatpush1.msra.mxu0 1.0
      %6183 = vmatprep.subr.mxu0 0.0
      %6184 = vmatpush1.msra.mxu0 1.0
      %6185 = vmatprep.subr.mxu0 0.0
      %6186 = vmatpush1.msra.mxu0 1.0
      %6187 = vmatprep.subr.mxu0 0.0
      %6188 = vmatpush1.msra.mxu0 1.0
      %6189 = vmatprep.subr.mxu0 0.0
      %6190 = vmatpush1.msra.mxu0 1.0
      %6191 = vmatprep.subr.mxu0 0.0
      %6192 = vmatpush1.msra.mxu0 1.0
      %6193 = vmatprep.subr.mxu0 0.0
      %6194 = vmatpush1.msra.mxu0 1.0
      %6195 = vmatprep.subr.mxu0 0.0
      %6196 = vmatpush1.msra.mxu0 1.0
      %6197 = vmatprep.subr.mxu0 0.0
      %6198 = vmatpush1.msra.mxu0 1.0
      %6199 = vmatprep.subr.mxu0 0.0
      %6200 = vmatpush1.msra.mxu0 1.0
      %6201 = vmatprep.subr.mxu0 0.0
      %6202 = vmatpush1.msra.mxu0 1.0
      %6203 = vmatprep.subr.mxu0 0.0
      %6204 = vmatpush1.msra.mxu0 1.0
      %6205 = vmatprep.subr.mxu0 0.0
      %6206 = vmatpush1.msra.mxu0 1.0
      %6207 = vmatprep.subr.mxu0 0.0
      %6208 = vmatpush1.msra.mxu0 1.0
      %6209 = vmatprep.subr.mxu0 0.0
      %6210 = vmatpush1.msra.mxu0 1.0
      %6211 = vmatprep.mubr.f32.mxu0 %v3944
      %6212 = vmatmul.mubr.f32.gmra.mrb[0].mxu0 %v3943
      %v6213 = vpop.f32.mrb[0].mxu0
      %v6214 = vadd.f32 %v6139, %v6213
      %v6215 = vpop.f32.mrb[0].mxu0
      %6216 = vmatprep.mubr.f32.mxu0 %v4024
      %6217 = vmatmul.mubr.f32.gmra.mrb[0].mxu0 %v4023
      %v6218 = vpop.f32.mrb[0].mxu0
      %v6219 = vadd.f32 %v6144, %v6218
      %v6220 = vpop.f32.mrb[0].mxu0
      %6221 = vdwg.mxu0
      %6222 = vmatprep.subr.mxu0 0.0
      %6223 = vmatpush1.msra.mxu0 1.0
      %6224 = vmatprep.subr.mxu0 0.0
      %6225 = vmatpush1.msra.mxu0 1.0
      %6226 = vmatprep.subr.mxu0 0.0
      %6227 = vmatpush1.msra.mxu0 1.0
      %6228 = vmatprep.subr.mxu0 0.0
      %6229 = vmatpush1.msra.mxu0 1.0
      %6230 = vmatprep.subr.mxu0 0.0
      %6231 = vmatpush1.msra.mxu0 1.0
      %6232 = vmatprep.subr.mxu0 0.0
      %6233 = vmatpush1.msra.mxu0 1.0
      %6234 = vmatprep.subr.mxu0 0.0
      %6235 = vmatpush1.msra.mxu0 1.0
      %6236 = vmatprep.subr.mxu0 0.0
      %6237 = vmatpush1.msra.mxu0 1.0
      %6238 = vmatprep.subr.mxu0 0.0
      %6239 = vmatpush1.msra.mxu0 1.0
      %6240 = vmatprep.subr.mxu0 0.0
      %6241 = vmatpush1.msra.mxu0 1.0
      %6242 = vmatprep.subr.mxu0 0.0
      %6243 = vmatpush1.msra.mxu0 1.0
      %6244 = vmatprep.subr.mxu0 0.0
      %6245 = vmatpush1.msra.mxu0 1.0
      %6246 = vmatprep.subr.mxu0 0.0
      %6247 = vmatpush1.msra.mxu0 1.0
      %6248 = vmatprep.subr.mxu0 0.0
      %6249 = vmatpush1.msra.mxu0 1.0
      %6250 = vmatprep.subr.mxu0 0.0
      %6251 = vmatpush1.msra.mxu0 1.0
      %6252 = vmatprep.subr.mxu0 0.0
      %6253 = vmatpush1.msra.mxu0 1.0
      %6254 = vmatprep.subr.mxu0 0.0
      %6255 = vmatpush1.msra.mxu0 1.0
      %6256 = vmatprep.subr.mxu0 0.0
      %6257 = vmatpush1.msra.mxu0 1.0
      %6258 = vmatprep.subr.mxu0 0.0
      %6259 = vmatpush1.msra.mxu0 1.0
      %6260 = vmatprep.subr.mxu0 0.0
      %6261 = vmatpush1.msra.mxu0 1.0
      %6262 = vmatprep.subr.mxu0 0.0
      %6263 = vmatpush1.msra.mxu0 1.0
      %6264 = vmatprep.subr.mxu0 0.0
      %6265 = vmatpush1.msra.mxu0 1.0
      %6266 = vmatprep.subr.mxu0 0.0
      %6267 = vmatpush1.msra.mxu0 1.0
      %6268 = vmatprep.subr.mxu0 0.0
      %6269 = vmatpush1.msra.mxu0 1.0
      %6270 = vmatprep.subr.mxu0 0.0
      %6271 = vmatpush1.msra.mxu0 1.0
      %6272 = vmatprep.subr.mxu0 0.0
      %6273 = vmatpush1.msra.mxu0 1.0
      %6274 = vmatprep.subr.mxu0 0.0
      %6275 = vmatpush1.msra.mxu0 1.0
      %6276 = vmatprep.subr.mxu0 0.0
      %6277 = vmatpush1.msra.mxu0 1.0
      %6278 = vmatprep.subr.mxu0 0.0
      %6279 = vmatpush1.msra.mxu0 1.0
      %6280 = vmatprep.subr.mxu0 0.0
      %6281 = vmatpush1.msra.mxu0 1.0
      %6282 = vmatprep.subr.mxu0 0.0
      %6283 = vmatpush1.msra.mxu0 1.0
      %6284 = vmatprep.subr.mxu0 0.0
      %6285 = vmatpush1.msra.mxu0 1.0
      %6286 = vmatprep.mubr.f32.mxu0 %v3946
      %6287 = vmatmul.mubr.f32.gmra.mrb[0].mxu0 %v3945
      %v6288 = vpop.f32.mrb[0].mxu0
      %v6289 = vadd.f32 %v6214, %v6288
      %v6290 = vpop.f32.mrb[0].mxu0
      %6291 = vmatprep.mubr.f32.mxu0 %v4026
      %6292 = vmatmul.mubr.f32.gmra.mrb[0].mxu0 %v4025
      %v6293 = vpop.f32.mrb[0].mxu0
      %v6294 = vadd.f32 %v6219, %v6293
      %v6295 = vpop.f32.mrb[0].mxu0
      %6296 = vdwg.mxu0
      %6297 = vmatprep.subr.mxu0 0.0
      %6298 = vmatpush1.msra.mxu0 1.0
      %6299 = vmatprep.subr.mxu0 0.0
      %6300 = vmatpush1.msra.mxu0 1.0
      %6301 = vmatprep.subr.mxu0 0.0
      %6302 = vmatpush1.msra.mxu0 1.0
      %6303 = vmatprep.subr.mxu0 0.0
      %6304 = vmatpush1.msra.mxu0 1.0
      %6305 = vmatprep.subr.mxu0 0.0
      %6306 = vmatpush1.msra.mxu0 1.0
      %6307 = vmatprep.subr.mxu0 0.0
      %6308 = vmatpush1.msra.mxu0 1.0
      %6309 = vmatprep.subr.mxu0 0.0
      %6310 = vmatpush1.msra.mxu0 1.0
      %6311 = vmatprep.subr.mxu0 0.0
      %6312 = vmatpush1.msra.mxu0 1.0
      %6313 = vmatprep.subr.mxu0 0.0
      %6314 = vmatpush1.msra.mxu0 1.0
      %6315 = vmatprep.subr.mxu0 0.0
      %6316 = vmatpush1.msra.mxu0 1.0
      %6317 = vmatprep.subr.mxu0 0.0
      %6318 = vmatpush1.msra.mxu0 1.0
      %6319 = vmatprep.subr.mxu0 0.0
      %6320 = vmatpush1.msra.mxu0 1.0
      %6321 = vmatprep.subr.mxu0 0.0
      %6322 = vmatpush1.msra.mxu0 1.0
      %6323 = vmatprep.subr.mxu0 0.0
      %6324 = vmatpush1.msra.mxu0 1.0
      %6325 = vmatprep.subr.mxu0 0.0
      %6326 = vmatpush1.msra.mxu0 1.0
      %6327 = vmatprep.subr.mxu0 0.0
      %6328 = vmatpush1.msra.mxu0 1.0
      %6329 = vmatprep.subr.mxu0 0.0
      %6330 = vmatpush1.msra.mxu0 1.0
      %6331 = vmatprep.subr.mxu0 0.0
      %6332 = vmatpush1.msra.mxu0 1.0
      %6333 = vmatprep.subr.mxu0 0.0
      %6334 = vmatpush1.msra.mxu0 1.0
      %6335 = vmatprep.subr.mxu0 0.0
      %6336 = vmatpush1.msra.mxu0 1.0
      %6337 = vmatprep.subr.mxu0 0.0
      %6338 = vmatpush1.msra.mxu0 1.0
      %6339 = vmatprep.subr.mxu0 0.0
      %6340 = vmatpush1.msra.mxu0 1.0
      %6341 = vmatprep.subr.mxu0 0.0
      %6342 = vmatpush1.msra.mxu0 1.0
      %6343 = vmatprep.subr.mxu0 0.0
      %6344 = vmatpush1.msra.mxu0 1.0
      %6345 = vmatprep.subr.mxu0 0.0
      %6346 = vmatpush1.msra.mxu0 1.0
      %6347 = vmatprep.subr.mxu0 0.0
      %6348 = vmatpush1.msra.mxu0 1.0
      %6349 = vmatprep.subr.mxu0 0.0
      %6350 = vmatpush1.msra.mxu0 1.0
      %6351 = vmatprep.subr.mxu0 0.0
      %6352 = vmatpush1.msra.mxu0 1.0
      %6353 = vmatprep.subr.mxu0 0.0
      %6354 = vmatpush1.msra.mxu0 1.0
      %6355 = vmatprep.subr.mxu0 0.0
      %6356 = vmatpush1.msra.mxu0 1.0
      %6357 = vmatprep.subr.mxu0 0.0
      %6358 = vmatpush1.msra.mxu0 1.0
      %6359 = vmatprep.subr.mxu0 0.0
      %6360 = vmatpush1.msra.mxu0 1.0
      %6361 = vmatprep.mubr.f32.mxu0 %v3948
      %6362 = vmatmul.mubr.f32.gmra.mrb[0].mxu0 %v3947
      %v6363 = vpop.f32.mrb[0].mxu0
      %v6364 = vadd.f32 %v6289, %v6363
      %v6365 = vpop.f32.mrb[0].mxu0
      %6366 = vmatprep.mubr.f32.mxu0 %v4028
      %6367 = vmatmul.mubr.f32.gmra.mrb[0].mxu0 %v4027
      %v6368 = vpop.f32.mrb[0].mxu0
      %v6369 = vadd.f32 %v6294, %v6368
      %v6370 = vpop.f32.mrb[0].mxu0
      %6371 = vdwg.mxu0
      %6372 = vmatprep.subr.mxu0 0.0
      %6373 = vmatpush1.msra.mxu0 1.0
      %6374 = vmatprep.subr.mxu0 0.0
      %6375 = vmatpush1.msra.mxu0 1.0
      %6376 = vmatprep.subr.mxu0 0.0
      %6377 = vmatpush1.msra.mxu0 1.0
      %6378 = vmatprep.subr.mxu0 0.0
      %6379 = vmatpush1.msra.mxu0 1.0
      %6380 = vmatprep.subr.mxu0 0.0
      %6381 = vmatpush1.msra.mxu0 1.0
      %6382 = vmatprep.subr.mxu0 0.0
      %6383 = vmatpush1.msra.mxu0 1.0
      %6384 = vmatprep.subr.mxu0 0.0
      %6385 = vmatpush1.msra.mxu0 1.0
      %6386 = vmatprep.subr.mxu0 0.0
      %6387 = vmatpush1.msra.mxu0 1.0
      %6388 = vmatprep.subr.mxu0 0.0
      %6389 = vmatpush1.msra.mxu0 1.0
      %6390 = vmatprep.subr.mxu0 0.0
      %6391 = vmatpush1.msra.mxu0 1.0
      %6392 = vmatprep.subr.mxu0 0.0
      %6393 = vmatpush1.msra.mxu0 1.0
      %6394 = vmatprep.subr.mxu0 0.0
      %6395 = vmatpush1.msra.mxu0 1.0
      %6396 = vmatprep.subr.mxu0 0.0
      %6397 = vmatpush1.msra.mxu0 1.0
      %6398 = vmatprep.subr.mxu0 0.0
      %6399 = vmatpush1.msra.mxu0 1.0
      %6400 = vmatprep.subr.mxu0 0.0
      %6401 = vmatpush1.msra.mxu0 1.0
      %6402 = vmatprep.subr.mxu0 0.0
      %6403 = vmatpush1.msra.mxu0 1.0
      %6404 = vmatprep.subr.mxu0 0.0
      %6405 = vmatpush1.msra.mxu0 1.0
      %6406 = vmatprep.subr.mxu0 0.0
      %6407 = vmatpush1.msra.mxu0 1.0
      %6408 = vmatprep.subr.mxu0 0.0
      %6409 = vmatpush1.msra.mxu0 1.0
      %6410 = vmatprep.subr.mxu0 0.0
      %6411 = vmatpush1.msra.mxu0 1.0
      %6412 = vmatprep.subr.mxu0 0.0
      %6413 = vmatpush1.msra.mxu0 1.0
      %6414 = vmatprep.subr.mxu0 0.0
      %6415 = vmatpush1.msra.mxu0 1.0
      %6416 = vmatprep.subr.mxu0 0.0
      %6417 = vmatpush1.msra.mxu0 1.0
      %6418 = vmatprep.subr.mxu0 0.0
      %6419 = vmatpush1.msra.mxu0 1.0
      %6420 = vmatprep.subr.mxu0 0.0
      %6421 = vmatpush1.msra.mxu0 1.0
      %6422 = vmatprep.subr.mxu0 0.0
      %6423 = vmatpush1.msra.mxu0 1.0
      %6424 = vmatprep.subr.mxu0 0.0
      %6425 = vmatpush1.msra.mxu0 1.0
      %6426 = vmatprep.subr.mxu0 0.0
      %6427 = vmatpush1.msra.mxu0 1.0
      %6428 = vmatprep.subr.mxu0 0.0
      %6429 = vmatpush1.msra.mxu0 1.0
      %6430 = vmatprep.subr.mxu0 0.0
      %6431 = vmatpush1.msra.mxu0 1.0
      %6432 = vmatprep.subr.mxu0 0.0
      %6433 = vmatpush1.msra.mxu0 1.0
      %6434 = vmatprep.subr.mxu0 0.0
      %6435 = vmatpush1.msra.mxu0 1.0
      %6436 = vmatprep.mubr.f32.mxu0 %v3950
      %6437 = vmatmul.mubr.f32.gmra.mrb[0].mxu0 %v3949
      %v6438 = vpop.f32.mrb[0].mxu0
      %v6439 = vadd.f32 %v6364, %v6438
      %v6440 = vpop.f32.mrb[0].mxu0
      %6441 = vmatprep.mubr.f32.mxu0 %v4030
      %6442 = vmatmul.mubr.f32.gmra.mrb[0].mxu0 %v4029
      %v6443 = vpop.f32.mrb[0].mxu0
      %v6444 = vadd.f32 %v6369, %v6443
      %v6445 = vpop.f32.mrb[0].mxu0
      %6446 = vdwg.mxu0
      %6447 = vmatprep.subr.mxu0 0.0
      %6448 = vmatpush1.msra.mxu0 1.0
      %6449 = vmatprep.subr.mxu0 0.0
      %6450 = vmatpush1.msra.mxu0 1.0
      %6451 = vmatprep.subr.mxu0 0.0
      %6452 = vmatpush1.msra.mxu0 1.0
      %6453 = vmatprep.subr.mxu0 0.0
      %6454 = vmatpush1.msra.mxu0 1.0
      %6455 = vmatprep.subr.mxu0 0.0
      %6456 = vmatpush1.msra.mxu0 1.0
      %6457 = vmatprep.subr.mxu0 0.0
      %6458 = vmatpush1.msra.mxu0 1.0
      %6459 = vmatprep.subr.mxu0 0.0
      %6460 = vmatpush1.msra.mxu0 1.0
      %6461 = vmatprep.subr.mxu0 0.0
      %6462 = vmatpush1.msra.mxu0 1.0
      %6463 = vmatprep.subr.mxu0 0.0
      %6464 = vmatpush1.msra.mxu0 1.0
      %6465 = vmatprep.subr.mxu0 0.0
      %6466 = vmatpush1.msra.mxu0 1.0
      %6467 = vmatprep.subr.mxu0 0.0
      %6468 = vmatpush1.msra.mxu0 1.0
      %6469 = vmatprep.subr.mxu0 0.0
      %6470 = vmatpush1.msra.mxu0 1.0
      %6471 = vmatprep.subr.mxu0 0.0
      %6472 = vmatpush1.msra.mxu0 1.0
      %6473 = vmatprep.subr.mxu0 0.0
      %6474 = vmatpush1.msra.mxu0 1.0
      %6475 = vmatprep.subr.mxu0 0.0
      %6476 = vmatpush1.msra.mxu0 1.0
      %6477 = vmatprep.subr.mxu0 0.0
      %6478 = vmatpush1.msra.mxu0 1.0
      %6479 = vmatprep.subr.mxu0 0.0
      %6480 = vmatpush1.msra.mxu0 1.0
      %6481 = vmatprep.subr.mxu0 0.0
      %6482 = vmatpush1.msra.mxu0 1.0
      %6483 = vmatprep.subr.mxu0 0.0
      %6484 = vmatpush1.msra.mxu0 1.0
      %6485 = vmatprep.subr.mxu0 0.0
      %6486 = vmatpush1.msra.mxu0 1.0
      %6487 = vmatprep.subr.mxu0 0.0
      %6488 = vmatpush1.msra.mxu0 1.0
      %6489 = vmatprep.subr.mxu0 0.0
      %6490 = vmatpush1.msra.mxu0 1.0
      %6491 = vmatprep.subr.mxu0 0.0
      %6492 = vmatpush1.msra.mxu0 1.0
      %6493 = vmatprep.subr.mxu0 0.0
      %6494 = vmatpush1.msra.mxu0 1.0
      %6495 = vmatprep.subr.mxu0 0.0
      %6496 = vmatpush1.msra.mxu0 1.0
      %6497 = vmatprep.subr.mxu0 0.0
      %6498 = vmatpush1.msra.mxu0 1.0
      %6499 = vmatprep.subr.mxu0 0.0
      %6500 = vmatpush1.msra.mxu0 1.0
      %6501 = vmatprep.subr.mxu0 0.0
      %6502 = vmatpush1.msra.mxu0 1.0
      %6503 = vmatprep.subr.mxu0 0.0
      %6504 = vmatpush1.msra.mxu0 1.0
      %6505 = vmatprep.subr.mxu0 0.0
      %6506 = vmatpush1.msra.mxu0 1.0
      %6507 = vmatprep.subr.mxu0 0.0
      %6508 = vmatpush1.msra.mxu0 1.0
      %6509 = vmatprep.subr.mxu0 0.0
      %6510 = vmatpush1.msra.mxu0 1.0
      %6511 = vmatprep.mubr.f32.mxu0 %v3952
      %6512 = vmatmul.mubr.f32.gmra.mrb[0].mxu0 %v3951
      %v6513 = vpop.f32.mrb[0].mxu0
      %v6514 = vadd.f32 %v6439, %v6513
      %v6515 = vpop.f32.mrb[0].mxu0
      %6516 = vmatprep.mubr.f32.mxu0 %v4032
      %6517 = vmatmul.mubr.f32.gmra.mrb[0].mxu0 %v4031
      %v6518 = vpop.f32.mrb[0].mxu0
      %v6519 = vadd.f32 %v6444, %v6518
      %v6520 = vpop.f32.mrb[0].mxu0
      %6521 = vdwg.mxu0
      %6522 = vmatprep.subr.mxu0 0.0
      %6523 = vmatpush1.msra.mxu0 1.0
      %6524 = vmatprep.subr.mxu0 0.0
      %6525 = vmatpush1.msra.mxu0 1.0
      %6526 = vmatprep.subr.mxu0 0.0
      %6527 = vmatpush1.msra.mxu0 1.0
      %6528 = vmatprep.subr.mxu0 0.0
      %6529 = vmatpush1.msra.mxu0 1.0
      %6530 = vmatprep.subr.mxu0 0.0
      %6531 = vmatpush1.msra.mxu0 1.0
      %6532 = vmatprep.subr.mxu0 0.0
      %6533 = vmatpush1.msra.mxu0 1.0
      %6534 = vmatprep.subr.mxu0 0.0
      %6535 = vmatpush1.msra.mxu0 1.0
      %6536 = vmatprep.subr.mxu0 0.0
      %6537 = vmatpush1.msra.mxu0 1.0
      %6538 = vmatprep.subr.mxu0 0.0
      %6539 = vmatpush1.msra.mxu0 1.0
      %6540 = vmatprep.subr.mxu0 0.0
      %6541 = vmatpush1.msra.mxu0 1.0
      %6542 = vmatprep.subr.mxu0 0.0
      %6543 = vmatpush1.msra.mxu0 1.0
      %6544 = vmatprep.subr.mxu0 0.0
      %6545 = vmatpush1.msra.mxu0 1.0
      %6546 = vmatprep.subr.mxu0 0.0
      %6547 = vmatpush1.msra.mxu0 1.0
      %6548 = vmatprep.subr.mxu0 0.0
      %6549 = vmatpush1.msra.mxu0 1.0
      %6550 = vmatprep.subr.mxu0 0.0
      %6551 = vmatpush1.msra.mxu0 1.0
      %6552 = vmatprep.subr.mxu0 0.0
      %6553 = vmatpush1.msra.mxu0 1.0
      %6554 = vmatprep.subr.mxu0 0.0
      %6555 = vmatpush1.msra.mxu0 1.0
      %6556 = vmatprep.subr.mxu0 0.0
      %6557 = vmatpush1.msra.mxu0 1.0
      %6558 = vmatprep.subr.mxu0 0.0
      %6559 = vmatpush1.msra.mxu0 1.0
      %6560 = vmatprep.subr.mxu0 0.0
      %6561 = vmatpush1.msra.mxu0 1.0
      %6562 = vmatprep.subr.mxu0 0.0
      %6563 = vmatpush1.msra.mxu0 1.0
      %6564 = vmatprep.subr.mxu0 0.0
      %6565 = vmatpush1.msra.mxu0 1.0
      %6566 = vmatprep.subr.mxu0 0.0
      %6567 = vmatpush1.msra.mxu0 1.0
      %6568 = vmatprep.subr.mxu0 0.0
      %6569 = vmatpush1.msra.mxu0 1.0
      %6570 = vmatprep.subr.mxu0 0.0
      %6571 = vmatpush1.msra.mxu0 1.0
      %6572 = vmatprep.subr.mxu0 0.0
      %6573 = vmatpush1.msra.mxu0 1.0
      %6574 = vmatprep.subr.mxu0 0.0
      %6575 = vmatpush1.msra.mxu0 1.0
      %6576 = vmatprep.subr.mxu0 0.0
      %6577 = vmatpush1.msra.mxu0 1.0
      %6578 = vmatprep.subr.mxu0 0.0
      %6579 = vmatpush1.msra.mxu0 1.0
      %6580 = vmatprep.subr.mxu0 0.0
      %6581 = vmatpush1.msra.mxu0 1.0
      %6582 = vmatprep.subr.mxu0 0.0
      %6583 = vmatpush1.msra.mxu0 1.0
      %6584 = vmatprep.subr.mxu0 0.0
      %6585 = vmatpush1.msra.mxu0 1.0
      %6586 = vmatprep.mubr.f32.mxu0 %v3954
      %6587 = vmatmul.mubr.f32.gmra.mrb[0].mxu0 %v3953
      %v6588 = vpop.f32.mrb[0].mxu0
      %v6589 = vadd.f32 %v6514, %v6588
      %v6590 = vpop.f32.mrb[0].mxu0
      %6591 = vmatprep.mubr.f32.mxu0 %v4034
      %6592 = vmatmul.mubr.f32.gmra.mrb[0].mxu0 %v4033
      %v6593 = vpop.f32.mrb[0].mxu0
      %v6594 = vadd.f32 %v6519, %v6593
      %v6595 = vpop.f32.mrb[0].mxu0
      %6596 = vdwg.mxu0
      %6597 = vmatprep.subr.mxu0 0.0
      %6598 = vmatpush1.msra.mxu0 1.0
      %6599 = vmatprep.subr.mxu0 0.0
      %6600 = vmatpush1.msra.mxu0 1.0
      %6601 = vmatprep.subr.mxu0 0.0
      %6602 = vmatpush1.msra.mxu0 1.0
      %6603 = vmatprep.subr.mxu0 0.0
      %6604 = vmatpush1.msra.mxu0 1.0
      %6605 = vmatprep.subr.mxu0 0.0
      %6606 = vmatpush1.msra.mxu0 1.0
      %6607 = vmatprep.subr.mxu0 0.0
      %6608 = vmatpush1.msra.mxu0 1.0
      %6609 = vmatprep.subr.mxu0 0.0
      %6610 = vmatpush1.msra.mxu0 1.0
      %6611 = vmatprep.subr.mxu0 0.0
      %6612 = vmatpush1.msra.mxu0 1.0
      %6613 = vmatprep.subr.mxu0 0.0
      %6614 = vmatpush1.msra.mxu0 1.0
      %6615 = vmatprep.subr.mxu0 0.0
      %6616 = vmatpush1.msra.mxu0 1.0
      %6617 = vmatprep.subr.mxu0 0.0
      %6618 = vmatpush1.msra.mxu0 1.0
      %6619 = vmatprep.subr.mxu0 0.0
      %6620 = vmatpush1.msra.mxu0 1.0
      %6621 = vmatprep.subr.mxu0 0.0
      %6622 = vmatpush1.msra.mxu0 1.0
      %6623 = vmatprep.subr.mxu0 0.0
      %6624 = vmatpush1.msra.mxu0 1.0
      %6625 = vmatprep.subr.mxu0 0.0
      %6626 = vmatpush1.msra.mxu0 1.0
      %6627 = vmatprep.subr.mxu0 0.0
      %6628 = vmatpush1.msra.mxu0 1.0
      %6629 = vmatprep.subr.mxu0 0.0
      %6630 = vmatpush1.msra.mxu0 1.0
      %6631 = vmatprep.subr.mxu0 0.0
      %6632 = vmatpush1.msra.mxu0 1.0
      %6633 = vmatprep.subr.mxu0 0.0
      %6634 = vmatpush1.msra.mxu0 1.0
      %6635 = vmatprep.subr.mxu0 0.0
      %6636 = vmatpush1.msra.mxu0 1.0
      %6637 = vmatprep.subr.mxu0 0.0
      %6638 = vmatpush1.msra.mxu0 1.0
      %6639 = vmatprep.subr.mxu0 0.0
      %6640 = vmatpush1.msra.mxu0 1.0
      %6641 = vmatprep.subr.mxu0 0.0
      %6642 = vmatpush1.msra.mxu0 1.0
      %6643 = vmatprep.subr.mxu0 0.0
      %6644 = vmatpush1.msra.mxu0 1.0
      %6645 = vmatprep.subr.mxu0 0.0
      %6646 = vmatpush1.msra.mxu0 1.0
      %6647 = vmatprep.subr.mxu0 0.0
      %6648 = vmatpush1.msra.mxu0 1.0
      %6649 = vmatprep.subr.mxu0 0.0
      %6650 = vmatpush1.msra.mxu0 1.0
      %6651 = vmatprep.subr.mxu0 0.0
      %6652 = vmatpush1.msra.mxu0 1.0
      %6653 = vmatprep.subr.mxu0 0.0
      %6654 = vmatpush1.msra.mxu0 1.0
      %6655 = vmatprep.subr.mxu0 0.0
      %6656 = vmatpush1.msra.mxu0 1.0
      %6657 = vmatprep.subr.mxu0 0.0
      %6658 = vmatpush1.msra.mxu0 1.0
      %6659 = vmatprep.subr.mxu0 0.0
      %6660 = vmatpush1.msra.mxu0 1.0
      %6661 = vmatprep.mubr.f32.mxu0 %v3956
      %6662 = vmatmul.mubr.f32.gmra.mrb[0].mxu0 %v3955
      %v6663 = vpop.f32.mrb[0].mxu0
      %v6664 = vadd.f32 %v6589, %v6663
      %v6665 = vpop.f32.mrb[0].mxu0
      %6666 = vmatprep.mubr.f32.mxu0 %v4036
      %6667 = vmatmul.mubr.f32.gmra.mrb[0].mxu0 %v4035
      %v6668 = vpop.f32.mrb[0].mxu0
      %v6669 = vadd.f32 %v6594, %v6668
      %v6670 = vpop.f32.mrb[0].mxu0
      %6671 = vdwg.mxu0
      %6672 = vmatprep.subr.mxu0 0.0
      %6673 = vmatpush1.msra.mxu0 1.0
      %6674 = vmatprep.subr.mxu0 0.0
      %6675 = vmatpush1.msra.mxu0 1.0
      %6676 = vmatprep.subr.mxu0 0.0
      %6677 = vmatpush1.msra.mxu0 1.0
      %6678 = vmatprep.subr.mxu0 0.0
      %6679 = vmatpush1.msra.mxu0 1.0
      %6680 = vmatprep.subr.mxu0 0.0
      %6681 = vmatpush1.msra.mxu0 1.0
      %6682 = vmatprep.subr.mxu0 0.0
      %6683 = vmatpush1.msra.mxu0 1.0
      %6684 = vmatprep.subr.mxu0 0.0
      %6685 = vmatpush1.msra.mxu0 1.0
      %6686 = vmatprep.subr.mxu0 0.0
      %6687 = vmatpush1.msra.mxu0 1.0
      %6688 = vmatprep.subr.mxu0 0.0
      %6689 = vmatpush1.msra.mxu0 1.0
      %6690 = vmatprep.subr.mxu0 0.0
      %6691 = vmatpush1.msra.mxu0 1.0
      %6692 = vmatprep.subr.mxu0 0.0
      %6693 = vmatpush1.msra.mxu0 1.0
      %6694 = vmatprep.subr.mxu0 0.0
      %6695 = vmatpush1.msra.mxu0 1.0
      %6696 = vmatprep.subr.mxu0 0.0
      %6697 = vmatpush1.msra.mxu0 1.0
      %6698 = vmatprep.subr.mxu0 0.0
      %6699 = vmatpush1.msra.mxu0 1.0
      %6700 = vmatprep.subr.mxu0 0.0
      %6701 = vmatpush1.msra.mxu0 1.0
      %6702 = vmatprep.subr.mxu0 0.0
      %6703 = vmatpush1.msra.mxu0 1.0
      %6704 = vmatprep.subr.mxu0 0.0
      %6705 = vmatpush1.msra.mxu0 1.0
      %6706 = vmatprep.subr.mxu0 0.0
      %6707 = vmatpush1.msra.mxu0 1.0
      %6708 = vmatprep.subr.mxu0 0.0
      %6709 = vmatpush1.msra.mxu0 1.0
      %6710 = vmatprep.subr.mxu0 0.0
      %6711 = vmatpush1.msra.mxu0 1.0
      %6712 = vmatprep.subr.mxu0 0.0
      %6713 = vmatpush1.msra.mxu0 1.0
      %6714 = vmatprep.subr.mxu0 0.0
      %6715 = vmatpush1.msra.mxu0 1.0
      %6716 = vmatprep.subr.mxu0 0.0
      %6717 = vmatpush1.msra.mxu0 1.0
      %6718 = vmatprep.subr.mxu0 0.0
      %6719 = vmatpush1.msra.mxu0 1.0
      %6720 = vmatprep.subr.mxu0 0.0
      %6721 = vmatpush1.msra.mxu0 1.0
      %6722 = vmatprep.subr.mxu0 0.0
      %6723 = vmatpush1.msra.mxu0 1.0
      %6724 = vmatprep.subr.mxu0 0.0
      %6725 = vmatpush1.msra.mxu0 1.0
      %6726 = vmatprep.subr.mxu0 0.0
      %6727 = vmatpush1.msra.mxu0 1.0
      %6728 = vmatprep.subr.mxu0 0.0
      %6729 = vmatpush1.msra.mxu0 1.0
      %6730 = vmatprep.subr.mxu0 0.0
      %6731 = vmatpush1.msra.mxu0 1.0
      %6732 = vmatprep.subr.mxu0 0.0
      %6733 = vmatpush1.msra.mxu0 1.0
      %6734 = vmatprep.subr.mxu0 0.0
      %6735 = vmatpush1.msra.mxu0 1.0
      %6736 = vmatprep.mubr.f32.mxu0 %v3958
      %6737 = vmatmul.mubr.f32.gmra.mrb[0].mxu0 %v3957
      %v6738 = vpop.f32.mrb[0].mxu0
      %v6739 = vadd.f32 %v6664, %v6738
      %v6740 = vpop.f32.mrb[0].mxu0
      %6741 = vmatprep.mubr.f32.mxu0 %v4038
      %6742 = vmatmul.mubr.f32.gmra.mrb[0].mxu0 %v4037
      %v6743 = vpop.f32.mrb[0].mxu0
      %v6744 = vadd.f32 %v6669, %v6743
      %v6745 = vpop.f32.mrb[0].mxu0
      %6746 = vdwg.mxu0
      %6747 = vmatprep.subr.mxu0 0.0
      %6748 = vmatpush1.msra.mxu0 1.0
      %6749 = vmatprep.subr.mxu0 0.0
      %6750 = vmatpush1.msra.mxu0 1.0
      %6751 = vmatprep.subr.mxu0 0.0
      %6752 = vmatpush1.msra.mxu0 1.0
      %6753 = vmatprep.subr.mxu0 0.0
      %6754 = vmatpush1.msra.mxu0 1.0
      %6755 = vmatprep.subr.mxu0 0.0
      %6756 = vmatpush1.msra.mxu0 1.0
      %6757 = vmatprep.subr.mxu0 0.0
      %6758 = vmatpush1.msra.mxu0 1.0
      %6759 = vmatprep.subr.mxu0 0.0
      %6760 = vmatpush1.msra.mxu0 1.0
      %6761 = vmatprep.subr.mxu0 0.0
      %6762 = vmatpush1.msra.mxu0 1.0
      %6763 = vmatprep.subr.mxu0 0.0
      %6764 = vmatpush1.msra.mxu0 1.0
      %6765 = vmatprep.subr.mxu0 0.0
      %6766 = vmatpush1.msra.mxu0 1.0
      %6767 = vmatprep.subr.mxu0 0.0
      %6768 = vmatpush1.msra.mxu0 1.0
      %6769 = vmatprep.subr.mxu0 0.0
      %6770 = vmatpush1.msra.mxu0 1.0
      %6771 = vmatprep.subr.mxu0 0.0
      %6772 = vmatpush1.msra.mxu0 1.0
      %6773 = vmatprep.subr.mxu0 0.0
      %6774 = vmatpush1.msra.mxu0 1.0
      %6775 = vmatprep.subr.mxu0 0.0
      %6776 = vmatpush1.msra.mxu0 1.0
      %6777 = vmatprep.subr.mxu0 0.0
      %6778 = vmatpush1.msra.mxu0 1.0
      %6779 = vmatprep.subr.mxu0 0.0
      %6780 = vmatpush1.msra.mxu0 1.0
      %6781 = vmatprep.subr.mxu0 0.0
      %6782 = vmatpush1.msra.mxu0 1.0
      %6783 = vmatprep.subr.mxu0 0.0
      %6784 = vmatpush1.msra.mxu0 1.0
      %6785 = vmatprep.subr.mxu0 0.0
      %6786 = vmatpush1.msra.mxu0 1.0
      %6787 = vmatprep.subr.mxu0 0.0
      %6788 = vmatpush1.msra.mxu0 1.0
      %6789 = vmatprep.subr.mxu0 0.0
      %6790 = vmatpush1.msra.mxu0 1.0
      %6791 = vmatprep.subr.mxu0 0.0
      %6792 = vmatpush1.msra.mxu0 1.0
      %6793 = vmatprep.subr.mxu0 0.0
      %6794 = vmatpush1.msra.mxu0 1.0
      %6795 = vmatprep.subr.mxu0 0.0
      %6796 = vmatpush1.msra.mxu0 1.0
      %6797 = vmatprep.subr.mxu0 0.0
      %6798 = vmatpush1.msra.mxu0 1.0
      %6799 = vmatprep.subr.mxu0 0.0
      %6800 = vmatpush1.msra.mxu0 1.0
      %6801 = vmatprep.subr.mxu0 0.0
      %6802 = vmatpush1.msra.mxu0 1.0
      %6803 = vmatprep.subr.mxu0 0.0
      %6804 = vmatpush1.msra.mxu0 1.0
      %6805 = vmatprep.subr.mxu0 0.0
      %6806 = vmatpush1.msra.mxu0 1.0
      %6807 = vmatprep.subr.mxu0 0.0
      %6808 = vmatpush1.msra.mxu0 1.0
      %6809 = vmatprep.subr.mxu0 0.0
      %6810 = vmatpush1.msra.mxu0 1.0
      %6811 = vmatprep.mubr.f32.mxu0 %v3960
      %6812 = vmatmul.mubr.f32.gmra.mrb[0].mxu0 %v3959
      %v6813 = vpop.f32.mrb[0].mxu0
      %v6814 = vadd.f32 %v6739, %v6813
      %v6815 = vpop.f32.mrb[0].mxu0
      %6816 = vmatprep.mubr.f32.mxu0 %v4040
      %6817 = vmatmul.mubr.f32.gmra.mrb[0].mxu0 %v4039
      %v6818 = vpop.f32.mrb[0].mxu0
      %v6819 = vadd.f32 %v6744, %v6818
      %v6820 = vpop.f32.mrb[0].mxu0
      %6821 = vdwg.mxu0
      %6822 = vmatprep.subr.mxu0 0.0
      %6823 = vmatpush1.msra.mxu0 1.0
      %6824 = vmatprep.subr.mxu0 0.0
      %6825 = vmatpush1.msra.mxu0 1.0
      %6826 = vmatprep.subr.mxu0 0.0
      %6827 = vmatpush1.msra.mxu0 1.0
      %6828 = vmatprep.subr.mxu0 0.0
      %6829 = vmatpush1.msra.mxu0 1.0
      %6830 = vmatprep.subr.mxu0 0.0
      %6831 = vmatpush1.msra.mxu0 1.0
      %6832 = vmatprep.subr.mxu0 0.0
      %6833 = vmatpush1.msra.mxu0 1.0
      %6834 = vmatprep.subr.mxu0 0.0
      %6835 = vmatpush1.msra.mxu0 1.0
      %6836 = vmatprep.subr.mxu0 0.0
      %6837 = vmatpush1.msra.mxu0 1.0
      %6838 = vmatprep.subr.mxu0 0.0
      %6839 = vmatpush1.msra.mxu0 1.0
      %6840 = vmatprep.subr.mxu0 0.0
      %6841 = vmatpush1.msra.mxu0 1.0
      %6842 = vmatprep.subr.mxu0 0.0
      %6843 = vmatpush1.msra.mxu0 1.0
      %6844 = vmatprep.subr.mxu0 0.0
      %6845 = vmatpush1.msra.mxu0 1.0
      %6846 = vmatprep.subr.mxu0 0.0
      %6847 = vmatpush1.msra.mxu0 1.0
      %6848 = vmatprep.subr.mxu0 0.0
      %6849 = vmatpush1.msra.mxu0 1.0
      %6850 = vmatprep.subr.mxu0 0.0
      %6851 = vmatpush1.msra.mxu0 1.0
      %6852 = vmatprep.subr.mxu0 0.0
      %6853 = vmatpush1.msra.mxu0 1.0
      %6854 = vmatprep.subr.mxu0 0.0
      %6855 = vmatpush1.msra.mxu0 1.0
      %6856 = vmatprep.subr.mxu0 0.0
      %6857 = vmatpush1.msra.mxu0 1.0
      %6858 = vmatprep.subr.mxu0 0.0
      %6859 = vmatpush1.msra.mxu0 1.0
      %6860 = vmatprep.subr.mxu0 0.0
      %6861 = vmatpush1.msra.mxu0 1.0
      %6862 = vmatprep.subr.mxu0 0.0
      %6863 = vmatpush1.msra.mxu0 1.0
      %6864 = vmatprep.subr.mxu0 0.0
      %6865 = vmatpush1.msra.mxu0 1.0
      %6866 = vmatprep.subr.mxu0 0.0
      %6867 = vmatpush1.msra.mxu0 1.0
      %6868 = vmatprep.subr.mxu0 0.0
      %6869 = vmatpush1.msra.mxu0 1.0
      %6870 = vmatprep.subr.mxu0 0.0
      %6871 = vmatpush1.msra.mxu0 1.0
      %6872 = vmatprep.subr.mxu0 0.0
      %6873 = vmatpush1.msra.mxu0 1.0
      %6874 = vmatprep.subr.mxu0 0.0
      %6875 = vmatpush1.msra.mxu0 1.0
      %6876 = vmatprep.subr.mxu0 0.0
      %6877 = vmatpush1.msra.mxu0 1.0
      %6878 = vmatprep.subr.mxu0 0.0
      %6879 = vmatpush1.msra.mxu0 1.0
      %6880 = vmatprep.subr.mxu0 0.0
      %6881 = vmatpush1.msra.mxu0 1.0
      %6882 = vmatprep.subr.mxu0 0.0
      %6883 = vmatpush1.msra.mxu0 1.0
      %6884 = vmatprep.subr.mxu0 0.0
      %6885 = vmatpush1.msra.mxu0 1.0
      %6886 = vmatprep.mubr.f32.mxu0 %v3962
      %6887 = vmatmul.mubr.f32.gmra.mrb[0].mxu0 %v3961
      %v6888 = vpop.f32.mrb[0].mxu0
      %v6889 = vadd.f32 %v6814, %v6888
      %v6890 = vpop.f32.mrb[0].mxu0
      %6891 = vmatprep.mubr.f32.mxu0 %v4042
      %6892 = vmatmul.mubr.f32.gmra.mrb[0].mxu0 %v4041
      %v6893 = vpop.f32.mrb[0].mxu0
      %v6894 = vadd.f32 %v6819, %v6893
      %v6895 = vpop.f32.mrb[0].mxu0
      %6896 = vdwg.mxu0
      %6897 = vmatprep.subr.mxu0 0.0
      %6898 = vmatpush1.msra.mxu0 1.0
      %6899 = vmatprep.subr.mxu0 0.0
      %6900 = vmatpush1.msra.mxu0 1.0
      %6901 = vmatprep.subr.mxu0 0.0
      %6902 = vmatpush1.msra.mxu0 1.0
      %6903 = vmatprep.subr.mxu0 0.0
      %6904 = vmatpush1.msra.mxu0 1.0
      %6905 = vmatprep.subr.mxu0 0.0
      %6906 = vmatpush1.msra.mxu0 1.0
      %6907 = vmatprep.subr.mxu0 0.0
      %6908 = vmatpush1.msra.mxu0 1.0
      %6909 = vmatprep.subr.mxu0 0.0
      %6910 = vmatpush1.msra.mxu0 1.0
      %6911 = vmatprep.subr.mxu0 0.0
      %6912 = vmatpush1.msra.mxu0 1.0
      %6913 = vmatprep.subr.mxu0 0.0
      %6914 = vmatpush1.msra.mxu0 1.0
      %6915 = vmatprep.subr.mxu0 0.0
      %6916 = vmatpush1.msra.mxu0 1.0
      %6917 = vmatprep.subr.mxu0 0.0
      %6918 = vmatpush1.msra.mxu0 1.0
      %6919 = vmatprep.subr.mxu0 0.0
      %6920 = vmatpush1.msra.mxu0 1.0
      %6921 = vmatprep.subr.mxu0 0.0
      %6922 = vmatpush1.msra.mxu0 1.0
      %6923 = vmatprep.subr.mxu0 0.0
      %6924 = vmatpush1.msra.mxu0 1.0
      %6925 = vmatprep.subr.mxu0 0.0
      %6926 = vmatpush1.msra.mxu0 1.0
      %6927 = vmatprep.subr.mxu0 0.0
      %6928 = vmatpush1.msra.mxu0 1.0
      %6929 = vmatprep.subr.mxu0 0.0
      %6930 = vmatpush1.msra.mxu0 1.0
      %6931 = vmatprep.subr.mxu0 0.0
      %6932 = vmatpush1.msra.mxu0 1.0
      %6933 = vmatprep.subr.mxu0 0.0
      %6934 = vmatpush1.msra.mxu0 1.0
      %6935 = vmatprep.subr.mxu0 0.0
      %6936 = vmatpush1.msra.mxu0 1.0
      %6937 = vmatprep.subr.mxu0 0.0
      %6938 = vmatpush1.msra.mxu0 1.0
      %6939 = vmatprep.subr.mxu0 0.0
      %6940 = vmatpush1.msra.mxu0 1.0
      %6941 = vmatprep.subr.mxu0 0.0
      %6942 = vmatpush1.msra.mxu0 1.0
      %6943 = vmatprep.subr.mxu0 0.0
      %6944 = vmatpush1.msra.mxu0 1.0
      %6945 = vmatprep.subr.mxu0 0.0
      %6946 = vmatpush1.msra.mxu0 1.0
      %6947 = vmatprep.subr.mxu0 0.0
      %6948 = vmatpush1.msra.mxu0 1.0
      %6949 = vmatprep.subr.mxu0 0.0
      %6950 = vmatpush1.msra.mxu0 1.0
      %6951 = vmatprep.subr.mxu0 0.0
      %6952 = vmatpush1.msra.mxu0 1.0
      %6953 = vmatprep.subr.mxu0 0.0
      %6954 = vmatpush1.msra.mxu0 1.0
      %6955 = vmatprep.subr.mxu0 0.0
      %6956 = vmatpush1.msra.mxu0 1.0
      %6957 = vmatprep.subr.mxu0 0.0
      %6958 = vmatpush1.msra.mxu0 1.0
      %6959 = vmatprep.subr.mxu0 0.0
      %6960 = vmatpush1.msra.mxu0 1.0
      %6961 = vmatprep.mubr.f32.mxu0 %v3964
      %6962 = vmatmul.mubr.f32.gmra.mrb[0].mxu0 %v3963
      %v6963 = vpop.f32.mrb[0].mxu0
      %v6964 = vadd.f32 %v6889, %v6963
      %v6965 = vpop.f32.mrb[0].mxu0
      %6966 = vmatprep.mubr.f32.mxu0 %v4044
      %6967 = vmatmul.mubr.f32.gmra.mrb[0].mxu0 %v4043
      %v6968 = vpop.f32.mrb[0].mxu0
      %v6969 = vadd.f32 %v6894, %v6968
      %v6970 = vpop.f32.mrb[0].mxu0
      %6971 = vdwg.mxu0
      %6972 = vmatprep.subr.mxu0 0.0
      %6973 = vmatpush1.msra.mxu0 1.0
      %6974 = vmatprep.subr.mxu0 0.0
      %6975 = vmatpush1.msra.mxu0 1.0
      %6976 = vmatprep.subr.mxu0 0.0
      %6977 = vmatpush1.msra.mxu0 1.0
      %6978 = vmatprep.subr.mxu0 0.0
      %6979 = vmatpush1.msra.mxu0 1.0
      %6980 = vmatprep.subr.mxu0 0.0
      %6981 = vmatpush1.msra.mxu0 1.0
      %6982 = vmatprep.subr.mxu0 0.0
      %6983 = vmatpush1.msra.mxu0 1.0
      %6984 = vmatprep.subr.mxu0 0.0
      %6985 = vmatpush1.msra.mxu0 1.0
      %6986 = vmatprep.subr.mxu0 0.0
      %6987 = vmatpush1.msra.mxu0 1.0
      %6988 = vmatprep.subr.mxu0 0.0
      %6989 = vmatpush1.msra.mxu0 1.0
      %6990 = vmatprep.subr.mxu0 0.0
      %6991 = vmatpush1.msra.mxu0 1.0
      %6992 = vmatprep.subr.mxu0 0.0
      %6993 = vmatpush1.msra.mxu0 1.0
      %6994 = vmatprep.subr.mxu0 0.0
      %6995 = vmatpush1.msra.mxu0 1.0
      %6996 = vmatprep.subr.mxu0 0.0
      %6997 = vmatpush1.msra.mxu0 1.0
      %6998 = vmatprep.subr.mxu0 0.0
      %6999 = vmatpush1.msra.mxu0 1.0
      %7000 = vmatprep.subr.mxu0 0.0
      %7001 = vmatpush1.msra.mxu0 1.0
      %7002 = vmatprep.subr.mxu0 0.0
      %7003 = vmatpush1.msra.mxu0 1.0
      %7004 = vmatprep.subr.mxu0 0.0
      %7005 = vmatpush1.msra.mxu0 1.0
      %7006 = vmatprep.subr.mxu0 0.0
      %7007 = vmatpush1.msra.mxu0 1.0
      %7008 = vmatprep.subr.mxu0 0.0
      %7009 = vmatpush1.msra.mxu0 1.0
      %7010 = vmatprep.subr.mxu0 0.0
      %7011 = vmatpush1.msra.mxu0 1.0
      %7012 = vmatprep.subr.mxu0 0.0
      %7013 = vmatpush1.msra.mxu0 1.0
      %7014 = vmatprep.subr.mxu0 0.0
      %7015 = vmatpush1.msra.mxu0 1.0
      %7016 = vmatprep.subr.mxu0 0.0
      %7017 = vmatpush1.msra.mxu0 1.0
      %7018 = vmatprep.subr.mxu0 0.0
      %7019 = vmatpush1.msra.mxu0 1.0
      %7020 = vmatprep.subr.mxu0 0.0
      %7021 = vmatpush1.msra.mxu0 1.0
      %7022 = vmatprep.subr.mxu0 0.0
      %7023 = vmatpush1.msra.mxu0 1.0
      %7024 = vmatprep.subr.mxu0 0.0
      %7025 = vmatpush1.msra.mxu0 1.0
      %7026 = vmatprep.subr.mxu0 0.0
      %7027 = vmatpush1.msra.mxu0 1.0
      %7028 = vmatprep.subr.mxu0 0.0
      %7029 = vmatpush1.msra.mxu0 1.0
      %7030 = vmatprep.subr.mxu0 0.0
      %7031 = vmatpush1.msra.mxu0 1.0
      %7032 = vmatprep.subr.mxu0 0.0
      %7033 = vmatpush1.msra.mxu0 1.0
      %7034 = vmatprep.subr.mxu0 0.0
      %7035 = vmatpush1.msra.mxu0 1.0
      %7036 = vmatprep.mubr.f32.mxu0 %v3966
      %7037 = vmatmul.mubr.f32.gmra.mrb[0].mxu0 %v3965
      %v7038 = vpop.f32.mrb[0].mxu0
      %v7039 = vadd.f32 %v6964, %v7038
      %v7040 = vpop.f32.mrb[0].mxu0
      %7041 = vmatprep.mubr.f32.mxu0 %v4046
      %7042 = vmatmul.mubr.f32.gmra.mrb[0].mxu0 %v4045
      %v7043 = vpop.f32.mrb[0].mxu0
      %v7044 = vadd.f32 %v6969, %v7043
      %v7045 = vpop.f32.mrb[0].mxu0
      %7046 = vdwg.mxu0
      %v7047 = vld [vmem:[%s3] sm:$0xff]
      %v7048 = vld [vmem:[%s3 + $0x8] sm:$0x3]
      %v7049 = vld [vmem:[%s4] sm:$0xff]
      %v7050 = vld [vmem:[%s4 + $0x8] sm:$0x3]
      %vm7051 = vcmask 130048
      %v7053 = vsel %vm7051, %v7047, 0
      %v7056 = vsel %vm7051, %v7048, 0
      %7058 = vmatprep.subr.mxu0 0.0
      %7059 = vmatpush1.msra.mxu0 %v7039
      %7060 = vmatprep.subr.mxu0 0.0
      %7061 = vmatpush1.msra.mxu0 %v7044
      %7062 = vmatprep.subr.mxu0 0.0
      %7063 = vmatpush1.msra.mxu0 0.0
      %7064 = vmatprep.subr.mxu0 0.0
      %7065 = vmatpush1.msra.mxu0 0.0
      %7066 = vmatprep.subr.mxu0 0.0
      %7067 = vmatpush1.msra.mxu0 0.0
      %7068 = vmatprep.subr.mxu0 0.0
      %7069 = vmatpush1.msra.mxu0 0.0
      %7070 = vmatprep.subr.mxu0 0.0
      %7071 = vmatpush1.msra.mxu0 0.0
      %7072 = vmatprep.subr.mxu0 0.0
      %7073 = vmatpush1.msra.mxu0 0.0
      %7074 = vmatprep.subr.mxu0 0.0
      %7075 = vmatpush1.msra.mxu0 0.0
      %7076 = vmatprep.subr.mxu0 0.0
      %7077 = vmatpush1.msra.mxu0 0.0
      %7078 = vmatprep.subr.mxu0 0.0
      %7079 = vmatpush1.msra.mxu0 0.0
      %7080 = vmatprep.subr.mxu0 0.0
      %7081 = vmatpush1.msra.mxu0 0.0
      %7082 = vmatprep.subr.mxu0 0.0
      %7083 = vmatpush1.msra.mxu0 0.0
      %7084 = vmatprep.subr.mxu0 0.0
      %7085 = vmatpush1.msra.mxu0 0.0
      %7086 = vmatprep.subr.mxu0 0.0
      %7087 = vmatpush1.msra.mxu0 0.0
      %7088 = vmatprep.subr.mxu0 0.0
      %7089 = vmatpush1.msra.mxu0 0.0
      %7090 = vmatprep.subr.mxu0 0.0
      %7091 = vmatpush1.msra.mxu0 0.0
      %7092 = vmatprep.subr.mxu0 0.0
      %7093 = vmatpush1.msra.mxu0 0.0
      %7094 = vmatprep.subr.mxu0 0.0
      %7095 = vmatpush1.msra.mxu0 0.0
      %7096 = vmatprep.subr.mxu0 0.0
      %7097 = vmatpush1.msra.mxu0 0.0
      %7098 = vmatprep.subr.mxu0 0.0
      %7099 = vmatpush1.msra.mxu0 0.0
      %7100 = vmatprep.subr.mxu0 0.0
      %7101 = vmatpush1.msra.mxu0 0.0
      %7102 = vmatprep.subr.mxu0 0.0
      %7103 = vmatpush1.msra.mxu0 0.0
      %7104 = vmatprep.subr.mxu0 0.0
      %7105 = vmatpush1.msra.mxu0 0.0
      %7106 = vmatprep.subr.mxu0 0.0
      %7107 = vmatpush1.msra.mxu0 0.0
      %7108 = vmatprep.subr.mxu0 0.0
      %7109 = vmatpush1.msra.mxu0 0.0
      %7110 = vmatprep.subr.mxu0 0.0
      %7111 = vmatpush1.msra.mxu0 0.0
      %7112 = vmatprep.subr.mxu0 0.0
      %7113 = vmatpush1.msra.mxu0 0.0
      %7114 = vmatprep.subr.mxu0 0.0
      %7115 = vmatpush1.msra.mxu0 0.0
      %7116 = vmatprep.subr.mxu0 0.0
      %7117 = vmatpush1.msra.mxu0 0.0
      %7118 = vmatprep.subr.mxu0 0.0
      %7119 = vmatpush1.msra.mxu0 0.0
      %7120 = vmatprep.subr.mxu0 0.0
      %7121 = vmatpush1.msra.mxu0 0.0
      %7122 = vmatprep.mubr.f32.mxu0 0.0
      %7123 = vmatmul.mubr.f32.gmra.mrb[0].mxu0 %v7053
      %v7124 = vpop.f32.mrb[0].mxu0
      %v7125 = vadd.f32 %v7049, %v7124
      %v7126 = vpop.f32.mrb[0].mxu0
      %7127 = vmatprep.mubr.f32.mxu0 0.0
      %7128 = vmatmul.mubr.f32.gmra.mrb[0].mxu0 %v7056
      %v7129 = vpop.f32.mrb[0].mxu0
      %v7130 = vadd.f32 %v7050, %v7129
      %v7131 = vpop.f32.mrb[0].mxu0
      %7132 = vdwg.mxu0
      %vm7133 = vcmask 7168
      %7134 = vst.msk [vmem:[%s224] sm:$0xff] %vm7133, %v7125
      %vm7135 = vcmask 1024
      %7136 = vst.msk [vmem:[%s224 + $0x8] sm:$0x3] %vm7135, %v7130
      %p7137 = scmp.lt.s32.totalorder %s16, 1
      %s7138 = scalar_select %p7137, %s16, 1
      %s7139 = smul.addr %s7138, 2
      %s7140 = smul.addr %s7139, 8
      %s7141 = scalar_lea.vmem %s5, %s7140
      // Predicated region
      $region41: #{tpu_custom_call.1} parent=39 // pred_check
        %p7142 = pneg %p144
      $region42: #{tpu_custom_call.1} parent=39 // pred_check_branch
        %7144 = sbr.rel (%p7142) target = $region44
      $region43: #{tpu_custom_call.1} parent=39 // pred_region
        _
      $region44: #{tpu_custom_call.1} parent=39 // pred_fallthru
        _
    $region40: #{tpu_custom_call.1} parent=5 // pred_fallthru
      _
    %p7145 = scmp.le.s32.totalorder 2, %s11
    // Predicated region
    $region45: #{tpu_custom_call.1} parent=5 // pred_check
      %p7146 = pneg %p7145
    $region46: #{tpu_custom_call.1} parent=5 // pred_check_branch
      %7148 = sbr.rel (%p7146) target = $region48
    $region47: #{tpu_custom_call.1} parent=5 // pred_region
      %s7149 = ssub.s32 %s11, 2
      // Predicated region
      $region49: #{tpu_custom_call.1} parent=47 // pred_check
        %p7150 = pneg %p150
      $region50: #{tpu_custom_call.1} parent=47 // pred_check_branch
        %7152 = sbr.rel (%p7150) target = $region52
      $region51: #{tpu_custom_call.1} parent=47 // pred_region
        %p7153 = scmp.lt.s32.totalorder %s17, 1
        %s7154 = scalar_select %p7153, %s17, 1
        %s7155 = smul.addr %s7154, 2
        %s7156 = smul.addr %s7155, 8
        %s7157 = scalar_lea.vmem %s5, %s7156
      $region52: #{tpu_custom_call.1} parent=47 // pred_fallthru
        _
    $region48: #{tpu_custom_call.1} parent=5 // pred_fallthru
      _
  $region6: #{tpu_custom_call.1} parent=0 // loop_footer
    %s15 = sadd.s32 1, %s11
  $region7: #{tpu_custom_call.1} parent=0 // loop_footer_branch
    %10 = sbr.rel target = $region3
  $region8: #{tpu_custom_call.1} parent=0 // loop_exit
    _

</llo_original>
